<compile_context>
chip_gen: v5e
topology: v5e:2x2
jax: 0.10.0
libtpu: 0.0.40
codegen_flags: <defaults>
</compile_context>

<pallas_src>
import jax
import jax.numpy as jnp
from jax import lax
from jax.experimental import pallas as pl
from jax.experimental.pallas import tpu as pltpu

H = W = 32
NPIX = H * W            # 1024 flattened spatial positions (lane axis)
C_IN, C1, C2 = 3, 4, 8
N_CLS, N_PAD = 10, 16


# ------------------------------ fused kernel -------------------------------

def _fused_cnn_kernel(x_ref, w1_ref, b1_ref, w2_ref, b2_ref, fcw_ref, fcb_ref,
                      o_ref):
    f32 = jnp.float32

    # Flattened position index and derived grid coordinates (all lane vectors).
    idx = lax.broadcasted_iota(jnp.int32, (1, NPIX), 1)
    r0 = jnp.right_shift(idx, 5)                        # y  in the 32x32 grid
    c0 = jnp.bitwise_and(idx, 31)                       # x  in the 32x32 grid
    r1 = jnp.right_shift(idx, 6)                        # y1 in the 16x16 grid
    c1 = jnp.right_shift(jnp.bitwise_and(idx, 63), 1)   # x1 in the 16x16 grid

    def shifted(v, s):
        # result[:, p] = v[:, (p + s) mod NPIX]; callers gate wrapped reads to 0.
        if s == 0:
            return v
        return pltpu.roll(v, shift=(-s) % NPIX, axis=1)

    def tap_gate(dy, dx, r, c, extent):
        # 1.0 where the (dy,dx)-shifted neighbour lies inside [0, extent)^2,
        # 0.0 where conv zero-padding applies.  None if always valid.
        g = None
        for cond in ((r >= 1) if dy == -1 else None,
                     (r <= extent - 2) if dy == 1 else None,
                     (c >= 1) if dx == -1 else None,
                     (c <= extent - 2) if dx == 1 else None):
            if cond is not None:
                g = cond if g is None else jnp.logical_and(g, cond)
        return None if g is None else g.astype(f32)

    def conv3x3(v, w_taps_ref, stride, r, c, extent, cout):
        # v: [Cin, NPIX], valid on the `stride`-embedded anchor grid.
        acc = jnp.zeros((cout, NPIX), f32)
        for t in range(9):
            dy, dx = t // 3 - 1, t % 3 - 1
            xs = shifted(v, stride * (W * dy + dx))
            gate = tap_gate(dy, dx, r, c, extent)
            if gate is not None:
                xs = xs * gate                        # zero-padding semantics
            acc = acc + jnp.dot(w_taps_ref[t], xs,    # [cout,cin]@[cin,NPIX]
                                preferred_element_type=f32)
        return acc

    def maxpool2(v, stride):
        # 2x2 / stride-2 max pool of a `stride`-embedded activation; result is
        # valid on the (2*stride)-embedded anchors (other lanes are unused).
        out = v
        for s in (stride, stride * W, stride * W + stride):
            out = jnp.maximum(out, shifted(v, s))
        return out

    x = x_ref[0]                                                  # [3, 1024]

    y1 = conv3x3(x, w1_ref, 1, r0, c0, 32, C1) + b1_ref[...]      # [4, 1024]
    y1 = jnp.maximum(y1, 0.0)
    p1 = maxpool2(y1, 1)                       # valid on the 16x16 anchor set

    y2 = conv3x3(p1, w2_ref, 2, r1, c1, 16, C2) + b2_ref[...]     # [8, 1024]
    y2 = jnp.maximum(y2, 0.0)
    p2 = maxpool2(y2, 2)                       # valid on the 8x8 anchor set

    # fc: weights were pre-scattered onto the 8x8 anchors (zero elsewhere), so
    # non-anchor garbage lanes in p2 contribute exactly 0.
    out = fcb_ref[...]                                            # [1, 16]
    for c in range(C2):
        out = out + jnp.dot(p2[c:c + 1, :], fcw_ref[c],
                            preferred_element_type=f32)
    o_ref[0] = out


# ------------------------------ wrapper ------------------------------------

def poor_cnn_forward_pallas(x_nchw, prep):
    B = x_nchw.shape[0]
    assert x_nchw.shape[1:] == (C_IN, H, W), x_nchw.shape
    x_flat = x_nchw.reshape(B, C_IN, NPIX).astype(jnp.float32)
    vmem = pltpu.MemorySpace.VMEM

    out = pl.pallas_call(
        _fused_cnn_kernel,
        out_shape=jax.ShapeDtypeStruct((B, 1, N_PAD), jnp.float32),
        grid=(B,),
        in_specs=[
            pl.BlockSpec((1, C_IN, NPIX), lambda b: (b, 0, 0), memory_space=vmem),
            pl.BlockSpec((9, C1, C_IN), lambda b: (0, 0, 0), memory_space=vmem),
            pl.BlockSpec((C1, 1), lambda b: (0, 0), memory_space=vmem),
            pl.BlockSpec((9, C2, C1), lambda b: (0, 0, 0), memory_space=vmem),
            pl.BlockSpec((C2, 1), lambda b: (0, 0), memory_space=vmem),
            pl.BlockSpec((C2, NPIX, N_PAD), lambda b: (0, 0, 0), memory_space=vmem),
            pl.BlockSpec((1, N_PAD), lambda b: (0, 0), memory_space=vmem),
        ],
        out_specs=pl.BlockSpec((1, 1, N_PAD), lambda b: (b, 0, 0),
                               memory_space=vmem),
        compiler_params=pltpu.CompilerParams(
            dimension_semantics=("parallel",)),
    )(x_flat, prep["w1"], prep["b1"], prep["w2"], prep["b2"],
      prep["fcw"], prep["fcb"])
    return out[:, 0, :N_CLS]


# ------------------------------ parameters ---------------------------------

def init_params(key):
    """PyTorch-layout parameters with uniform(+-1/sqrt(fan_in)) init."""
    ks = jax.random.split(key, 6)

    def u(k, shape, fan_in):
        bound = 1.0 / (fan_in ** 0.5)
        return jax.random.uniform(k, shape, jnp.float32, -bound, bound)

    return dict(
        w1=u(ks[0], (C1, C_IN, 3, 3), 27),     # [Cout, Cin, kh, kw]
        b1=u(ks[1], (C1,), 27),
        w2=u(ks[2], (C2, C1, 3, 3), 36),
        b2=u(ks[3], (C2,), 36),
        fcw=u(ks[4], (N_CLS, 512), 512),       # torch Linear: [out, in]
        fcb=u(ks[5], (N_CLS,), 512),
    )


def prepare_params(params):
    """One-time re-layout of the PyTorch-style params for the fused kernel."""
    w1 = jnp.transpose(params["w1"], (2, 3, 0, 1)).reshape(9, C1, C_IN)
    w2 = jnp.transpose(params["w2"], (2, 3, 0, 1)).reshape(9, C2, C1)
    b1 = params["b1"].reshape(C1, 1)
    b2 = params["b2"].reshape(C2, 1)

    # fc weight [10, 512] -> [512, 10] -> scatter onto the level-2 anchor
    # positions p = 128*y + 4*x of the 1024-lane grid (zero everywhere else),
    # with the out-dim padded 10 -> 16.
    fcw_t = jnp.transpose(params["fcw"], (1, 0)).reshape(C2, 8, 8, N_CLS)
    fcw_t = jnp.pad(fcw_t, ((0, 0), (0, 0), (0, 0), (0, N_PAD - N_CLS)))
    emb = jnp.zeros((C2, H, W, N_PAD), jnp.float32)
    emb = emb.at[:, 0::4, 0::4, :].set(fcw_t)
    fcw_emb = emb.reshape(C2, NPIX, N_PAD)
    fcb = jnp.pad(params["fcb"], (0, N_PAD - N_CLS)).reshape(1, N_PAD)

    return dict(w1=w1, b1=b1, w2=w2, b2=b2, fcw=fcw_emb, fcb=fcb)


# ------------------------------ reference ----------------------------------

def reference_forward(x, params):
    """Pure-JAX reference matching the PyTorch module."""
    B = x.shape[0]
    hi = lax.Precision.HIGHEST
    y = lax.conv_general_dilated(x, params["w1"], (1, 1), ((1, 1), (1, 1)),
                                 dimension_numbers=("NCHW", "OIHW", "NCHW"),
                                 precision=hi)
    y = jnp.maximum(y + params["b1"][None, :, None, None], 0.0)
    y = y.reshape(B, C1, 16, 2, 16, 2).max(axis=(3, 5))
    y = lax.conv_general_dilated(y, params["w2"], (1, 1), ((1, 1), (1, 1)),
                                 dimension_numbers=("NCHW", "OIHW", "NCHW"),
                                 precision=hi)
    y = jnp.maximum(y + params["b2"][None, :, None, None], 0.0)
    y = y.reshape(B, C2, 8, 2, 8, 2).max(axis=(3, 5))
    flat = y.reshape(B, 8 * 8 * 8)                    # NCHW flatten, like .view
    return jnp.dot(flat, params["fcw"].T, precision=hi) + params["fcb"]


# ------------------------------ main ----------------------------------------

if __name__ == "__main__":
    key = jax.random.PRNGKey(0)
    k_x, k_p = jax.random.split(key)

    # fc1 expects 8*8*8 features => input spatial must be 32x32 (NCHW).
    x = jax.random.normal(k_x, (2, C_IN, H, W), dtype=jnp.float32)
    params = init_params(k_p)
    prep = prepare_params(params)

    out = jax.jit(poor_cnn_forward_pallas)(x, prep)
    out = jax.block_until_ready(out)
    assert out.shape == (2, N_CLS), out.shape

    ref = jax.jit(reference_forward)(x, params)
    err = float(jnp.max(jnp.abs(out - ref)))
    assert err < 5e-3, f"max |pallas - reference| = {err}"

    print("KERNEL_OK")
</pallas_src>

<mosaic_0001>
module attributes {stable_mosaic.version = 11 : i64} {
  func.func @_fused_cnn_kernel(%arg0: i32, %arg1: memref<1x3x1024xf32, #tpu.memory_space<vmem>>, %arg2: memref<9x4x3xf32, #tpu.memory_space<vmem>>, %arg3: memref<4x1xf32, #tpu.memory_space<vmem>>, %arg4: memref<9x8x4xf32, #tpu.memory_space<vmem>>, %arg5: memref<8x1xf32, #tpu.memory_space<vmem>>, %arg6: memref<8x1024x16xf32, #tpu.memory_space<vmem>>, %arg7: memref<1x16xf32, #tpu.memory_space<vmem>>, %arg8: memref<1x1x16xf32, #tpu.memory_space<vmem>>) attributes {dimension_semantics = [#tpu.dimension_semantics<parallel>], iteration_bounds = array<i64: 2>, scalar_prefetch = 0 : i64, scratch_operands = 0 : i64, tpu.core_type = #tpu.core_type<tc>, window_params = [{transform_indices = @transform_0, window_bounds = array<i64: 1, 3, 1024>}, {pipeline_mode = #tpu.pipeline_mode<synchronous>, transform_indices = @transform_1, window_bounds = array<i64: 9, 4, 3>}, {pipeline_mode = #tpu.pipeline_mode<synchronous>, transform_indices = @transform_2, window_bounds = array<i64: 4, 1>}, {pipeline_mode = #tpu.pipeline_mode<synchronous>, transform_indices = @transform_3, window_bounds = array<i64: 9, 8, 4>}, {pipeline_mode = #tpu.pipeline_mode<synchronous>, transform_indices = @transform_4, window_bounds = array<i64: 8, 1>}, {pipeline_mode = #tpu.pipeline_mode<synchronous>, transform_indices = @transform_5, window_bounds = array<i64: 8, 1024, 16>}, {pipeline_mode = #tpu.pipeline_mode<synchronous>, transform_indices = @transform_6, window_bounds = array<i64: 1, 16>}, {transform_indices = @transform_7, window_bounds = array<i64: 1, 1, 16>}]} {
    %0 = tpu.iota {dimensions = array<i32: 1>} : vector<1x1024xi32>
    %c5_i32 = arith.constant 5 : i32
    %1 = vector.broadcast %c5_i32 : i32 to vector<1x1024xi32>
    %2 = arith.shrsi %0, %1 : vector<1x1024xi32>
    %c31_i32 = arith.constant 31 : i32
    %3 = vector.broadcast %c31_i32 : i32 to vector<1x1024xi32>
    %4 = arith.andi %0, %3 : vector<1x1024xi32>
    %c6_i32 = arith.constant 6 : i32
    %5 = vector.broadcast %c6_i32 : i32 to vector<1x1024xi32>
    %6 = arith.shrsi %0, %5 : vector<1x1024xi32>
    %c63_i32 = arith.constant 63 : i32
    %7 = vector.broadcast %c63_i32 : i32 to vector<1x1024xi32>
    %8 = arith.andi %0, %7 : vector<1x1024xi32>
    %c1_i32 = arith.constant 1 : i32
    %9 = vector.broadcast %c1_i32 : i32 to vector<1x1024xi32>
    %10 = arith.shrsi %8, %9 : vector<1x1024xi32>
    %c0 = arith.constant 0 : index
    %c0_0 = arith.constant 0 : index
    %c0_1 = arith.constant 0 : index
    %11 = vector.load %arg1[%c0, %c0_0, %c0_1] : memref<1x3x1024xf32, #tpu.memory_space<vmem>>, vector<1x3x1024xf32>
    %12 = vector.shape_cast %11 : vector<1x3x1024xf32> to vector<3x1024xf32>
    %cst = arith.constant 0.000000e+00 : f32
    %13 = vector.broadcast %cst : f32 to vector<4x1024xf32>
    %c33_i32 = arith.constant 33 : i32
    %14 = tpu.dynamic_rotate %12 by %c33_i32 dim 1 : vector<3x1024xf32>, i32 -> vector<3x1024xf32>
    %c1_i32_2 = arith.constant 1 : i32
    %15 = vector.broadcast %c1_i32_2 : i32 to vector<1x1024xi32>
    %16 = arith.cmpi sge, %2, %15 : vector<1x1024xi32>
    %c1_i32_3 = arith.constant 1 : i32
    %17 = vector.broadcast %c1_i32_3 : i32 to vector<1x1024xi32>
    %18 = arith.cmpi sge, %4, %17 : vector<1x1024xi32>
    %19 = arith.andi %16, %18 : vector<1x1024xi1>
    %20 = arith.extui %19 : vector<1x1024xi1> to vector<1x1024xi32>
    %21 = arith.sitofp %20 : vector<1x1024xi32> to vector<1x1024xf32>
    %22 = vector.broadcast %21 : vector<1x1024xf32> to vector<3x1024xf32>
    %23 = arith.mulf %14, %22 : vector<3x1024xf32>
    %c0_4 = arith.constant 0 : index
    %c0_5 = arith.constant 0 : index
    %c0_6 = arith.constant 0 : index
    %24 = vector.load %arg2[%c0_4, %c0_5, %c0_6] : memref<9x4x3xf32, #tpu.memory_space<vmem>>, vector<1x4x3xf32>
    %25 = vector.shape_cast %24 : vector<1x4x3xf32> to vector<4x3xf32>
    %cst_7 = arith.constant dense<0.000000e+00> : vector<4x1024xf32>
    %26 = tpu.matmul %25, %23, %cst_7 {dimension_numbers = #tpu.dot_dimension_numbers<[1], [0], [0], [1], [0, 0, 1, 1], [], []>} : vector<4x3xf32>, vector<3x1024xf32>, vector<4x1024xf32> -> vector<4x1024xf32>
    %27 = arith.addf %13, %26 : vector<4x1024xf32>
    %c32_i32 = arith.constant 32 : i32
    %28 = tpu.dynamic_rotate %12 by %c32_i32 dim 1 : vector<3x1024xf32>, i32 -> vector<3x1024xf32>
    %c1_i32_8 = arith.constant 1 : i32
    %29 = vector.broadcast %c1_i32_8 : i32 to vector<1x1024xi32>
    %30 = arith.cmpi sge, %2, %29 : vector<1x1024xi32>
    %31 = arith.extui %30 : vector<1x1024xi1> to vector<1x1024xi32>
    %32 = arith.sitofp %31 : vector<1x1024xi32> to vector<1x1024xf32>
    %33 = vector.broadcast %32 : vector<1x1024xf32> to vector<3x1024xf32>
    %34 = arith.mulf %28, %33 : vector<3x1024xf32>
    %c1 = arith.constant 1 : index
    %c0_9 = arith.constant 0 : index
    %c0_10 = arith.constant 0 : index
    %35 = vector.load %arg2[%c1, %c0_9, %c0_10] : memref<9x4x3xf32, #tpu.memory_space<vmem>>, vector<1x4x3xf32>
    %36 = vector.shape_cast %35 : vector<1x4x3xf32> to vector<4x3xf32>
    %cst_11 = arith.constant dense<0.000000e+00> : vector<4x1024xf32>
    %37 = tpu.matmul %36, %34, %cst_11 {dimension_numbers = #tpu.dot_dimension_numbers<[1], [0], [0], [1], [0, 0, 1, 1], [], []>} : vector<4x3xf32>, vector<3x1024xf32>, vector<4x1024xf32> -> vector<4x1024xf32>
    %38 = arith.addf %27, %37 : vector<4x1024xf32>
    %c31_i32_12 = arith.constant 31 : i32
    %39 = tpu.dynamic_rotate %12 by %c31_i32_12 dim 1 : vector<3x1024xf32>, i32 -> vector<3x1024xf32>
    %c1_i32_13 = arith.constant 1 : i32
    %40 = vector.broadcast %c1_i32_13 : i32 to vector<1x1024xi32>
    %41 = arith.cmpi sge, %2, %40 : vector<1x1024xi32>
    %c30_i32 = arith.constant 30 : i32
    %42 = vector.broadcast %c30_i32 : i32 to vector<1x1024xi32>
    %43 = arith.cmpi sle, %4, %42 : vector<1x1024xi32>
    %44 = arith.andi %41, %43 : vector<1x1024xi1>
    %45 = arith.extui %44 : vector<1x1024xi1> to vector<1x1024xi32>
    %46 = arith.sitofp %45 : vector<1x1024xi32> to vector<1x1024xf32>
    %47 = vector.broadcast %46 : vector<1x1024xf32> to vector<3x1024xf32>
    %48 = arith.mulf %39, %47 : vector<3x1024xf32>
    %c2 = arith.constant 2 : index
    %c0_14 = arith.constant 0 : index
    %c0_15 = arith.constant 0 : index
    %49 = vector.load %arg2[%c2, %c0_14, %c0_15] : memref<9x4x3xf32, #tpu.memory_space<vmem>>, vector<1x4x3xf32>
    %50 = vector.shape_cast %49 : vector<1x4x3xf32> to vector<4x3xf32>
    %cst_16 = arith.constant dense<0.000000e+00> : vector<4x1024xf32>
    %51 = tpu.matmul %50, %48, %cst_16 {dimension_numbers = #tpu.dot_dimension_numbers<[1], [0], [0], [1], [0, 0, 1, 1], [], []>} : vector<4x3xf32>, vector<3x1024xf32>, vector<4x1024xf32> -> vector<4x1024xf32>
    %52 = arith.addf %38, %51 : vector<4x1024xf32>
    %c1_i32_17 = arith.constant 1 : i32
    %53 = tpu.dynamic_rotate %12 by %c1_i32_17 dim 1 : vector<3x1024xf32>, i32 -> vector<3x1024xf32>
    %c1_i32_18 = arith.constant 1 : i32
    %54 = vector.broadcast %c1_i32_18 : i32 to vector<1x1024xi32>
    %55 = arith.cmpi sge, %4, %54 : vector<1x1024xi32>
    %56 = arith.extui %55 : vector<1x1024xi1> to vector<1x1024xi32>
    %57 = arith.sitofp %56 : vector<1x1024xi32> to vector<1x1024xf32>
    %58 = vector.broadcast %57 : vector<1x1024xf32> to vector<3x1024xf32>
    %59 = arith.mulf %53, %58 : vector<3x1024xf32>
    %c3 = arith.constant 3 : index
    %c0_19 = arith.constant 0 : index
    %c0_20 = arith.constant 0 : index
    %60 = vector.load %arg2[%c3, %c0_19, %c0_20] : memref<9x4x3xf32, #tpu.memory_space<vmem>>, vector<1x4x3xf32>
    %61 = vector.shape_cast %60 : vector<1x4x3xf32> to vector<4x3xf32>
    %cst_21 = arith.constant dense<0.000000e+00> : vector<4x1024xf32>
    %62 = tpu.matmul %61, %59, %cst_21 {dimension_numbers = #tpu.dot_dimension_numbers<[1], [0], [0], [1], [0, 0, 1, 1], [], []>} : vector<4x3xf32>, vector<3x1024xf32>, vector<4x1024xf32> -> vector<4x1024xf32>
    %63 = arith.addf %52, %62 : vector<4x1024xf32>
    %c4 = arith.constant 4 : index
    %c0_22 = arith.constant 0 : index
    %c0_23 = arith.constant 0 : index
    %64 = vector.load %arg2[%c4, %c0_22, %c0_23] : memref<9x4x3xf32, #tpu.memory_space<vmem>>, vector<1x4x3xf32>
    %65 = vector.shape_cast %64 : vector<1x4x3xf32> to vector<4x3xf32>
    %cst_24 = arith.constant dense<0.000000e+00> : vector<4x1024xf32>
    %66 = tpu.matmul %65, %12, %cst_24 {dimension_numbers = #tpu.dot_dimension_numbers<[1], [0], [0], [1], [0, 0, 1, 1], [], []>} : vector<4x3xf32>, vector<3x1024xf32>, vector<4x1024xf32> -> vector<4x1024xf32>
    %67 = arith.addf %63, %66 : vector<4x1024xf32>
    %c1023_i32 = arith.constant 1023 : i32
    %68 = tpu.dynamic_rotate %12 by %c1023_i32 dim 1 : vector<3x1024xf32>, i32 -> vector<3x1024xf32>
    %c30_i32_25 = arith.constant 30 : i32
    %69 = vector.broadcast %c30_i32_25 : i32 to vector<1x1024xi32>
    %70 = arith.cmpi sle, %4, %69 : vector<1x1024xi32>
    %71 = arith.extui %70 : vector<1x1024xi1> to vector<1x1024xi32>
    %72 = arith.sitofp %71 : vector<1x1024xi32> to vector<1x1024xf32>
    %73 = vector.broadcast %72 : vector<1x1024xf32> to vector<3x1024xf32>
    %74 = arith.mulf %68, %73 : vector<3x1024xf32>
    %c5 = arith.constant 5 : index
    %c0_26 = arith.constant 0 : index
    %c0_27 = arith.constant 0 : index
    %75 = vector.load %arg2[%c5, %c0_26, %c0_27] : memref<9x4x3xf32, #tpu.memory_space<vmem>>, vector<1x4x3xf32>
    %76 = vector.shape_cast %75 : vector<1x4x3xf32> to vector<4x3xf32>
    %cst_28 = arith.constant dense<0.000000e+00> : vector<4x1024xf32>
    %77 = tpu.matmul %76, %74, %cst_28 {dimension_numbers = #tpu.dot_dimension_numbers<[1], [0], [0], [1], [0, 0, 1, 1], [], []>} : vector<4x3xf32>, vector<3x1024xf32>, vector<4x1024xf32> -> vector<4x1024xf32>
    %78 = arith.addf %67, %77 : vector<4x1024xf32>
    %c993_i32 = arith.constant 993 : i32
    %79 = tpu.dynamic_rotate %12 by %c993_i32 dim 1 : vector<3x1024xf32>, i32 -> vector<3x1024xf32>
    %c30_i32_29 = arith.constant 30 : i32
    %80 = vector.broadcast %c30_i32_29 : i32 to vector<1x1024xi32>
    %81 = arith.cmpi sle, %2, %80 : vector<1x1024xi32>
    %c1_i32_30 = arith.constant 1 : i32
    %82 = vector.broadcast %c1_i32_30 : i32 to vector<1x1024xi32>
    %83 = arith.cmpi sge, %4, %82 : vector<1x1024xi32>
    %84 = arith.andi %81, %83 : vector<1x1024xi1>
    %85 = arith.extui %84 : vector<1x1024xi1> to vector<1x1024xi32>
    %86 = arith.sitofp %85 : vector<1x1024xi32> to vector<1x1024xf32>
    %87 = vector.broadcast %86 : vector<1x1024xf32> to vector<3x1024xf32>
    %88 = arith.mulf %79, %87 : vector<3x1024xf32>
    %c6 = arith.constant 6 : index
    %c0_31 = arith.constant 0 : index
    %c0_32 = arith.constant 0 : index
    %89 = vector.load %arg2[%c6, %c0_31, %c0_32] : memref<9x4x3xf32, #tpu.memory_space<vmem>>, vector<1x4x3xf32>
    %90 = vector.shape_cast %89 : vector<1x4x3xf32> to vector<4x3xf32>
    %cst_33 = arith.constant dense<0.000000e+00> : vector<4x1024xf32>
    %91 = tpu.matmul %90, %88, %cst_33 {dimension_numbers = #tpu.dot_dimension_numbers<[1], [0], [0], [1], [0, 0, 1, 1], [], []>} : vector<4x3xf32>, vector<3x1024xf32>, vector<4x1024xf32> -> vector<4x1024xf32>
    %92 = arith.addf %78, %91 : vector<4x1024xf32>
    %c992_i32 = arith.constant 992 : i32
    %93 = tpu.dynamic_rotate %12 by %c992_i32 dim 1 : vector<3x1024xf32>, i32 -> vector<3x1024xf32>
    %c30_i32_34 = arith.constant 30 : i32
    %94 = vector.broadcast %c30_i32_34 : i32 to vector<1x1024xi32>
    %95 = arith.cmpi sle, %2, %94 : vector<1x1024xi32>
    %96 = arith.extui %95 : vector<1x1024xi1> to vector<1x1024xi32>
    %97 = arith.sitofp %96 : vector<1x1024xi32> to vector<1x1024xf32>
    %98 = vector.broadcast %97 : vector<1x1024xf32> to vector<3x1024xf32>
    %99 = arith.mulf %93, %98 : vector<3x1024xf32>
    %c7 = arith.constant 7 : index
    %c0_35 = arith.constant 0 : index
    %c0_36 = arith.constant 0 : index
    %100 = vector.load %arg2[%c7, %c0_35, %c0_36] : memref<9x4x3xf32, #tpu.memory_space<vmem>>, vector<1x4x3xf32>
    %101 = vector.shape_cast %100 : vector<1x4x3xf32> to vector<4x3xf32>
    %cst_37 = arith.constant dense<0.000000e+00> : vector<4x1024xf32>
    %102 = tpu.matmul %101, %99, %cst_37 {dimension_numbers = #tpu.dot_dimension_numbers<[1], [0], [0], [1], [0, 0, 1, 1], [], []>} : vector<4x3xf32>, vector<3x1024xf32>, vector<4x1024xf32> -> vector<4x1024xf32>
    %103 = arith.addf %92, %102 : vector<4x1024xf32>
    %c991_i32 = arith.constant 991 : i32
    %104 = tpu.dynamic_rotate %12 by %c991_i32 dim 1 : vector<3x1024xf32>, i32 -> vector<3x1024xf32>
    %c30_i32_38 = arith.constant 30 : i32
    %105 = vector.broadcast %c30_i32_38 : i32 to vector<1x1024xi32>
    %106 = arith.cmpi sle, %2, %105 : vector<1x1024xi32>
    %c30_i32_39 = arith.constant 30 : i32
    %107 = vector.broadcast %c30_i32_39 : i32 to vector<1x1024xi32>
    %108 = arith.cmpi sle, %4, %107 : vector<1x1024xi32>
    %109 = arith.andi %106, %108 : vector<1x1024xi1>
    %110 = arith.extui %109 : vector<1x1024xi1> to vector<1x1024xi32>
    %111 = arith.sitofp %110 : vector<1x1024xi32> to vector<1x1024xf32>
    %112 = vector.broadcast %111 : vector<1x1024xf32> to vector<3x1024xf32>
    %113 = arith.mulf %104, %112 : vector<3x1024xf32>
    %c8 = arith.constant 8 : index
    %c0_40 = arith.constant 0 : index
    %c0_41 = arith.constant 0 : index
    %114 = vector.load %arg2[%c8, %c0_40, %c0_41] : memref<9x4x3xf32, #tpu.memory_space<vmem>>, vector<1x4x3xf32>
    %115 = vector.shape_cast %114 : vector<1x4x3xf32> to vector<4x3xf32>
    %cst_42 = arith.constant dense<0.000000e+00> : vector<4x1024xf32>
    %116 = tpu.matmul %115, %113, %cst_42 {dimension_numbers = #tpu.dot_dimension_numbers<[1], [0], [0], [1], [0, 0, 1, 1], [], []>} : vector<4x3xf32>, vector<3x1024xf32>, vector<4x1024xf32> -> vector<4x1024xf32>
    %117 = arith.addf %103, %116 : vector<4x1024xf32>
    %c0_43 = arith.constant 0 : index
    %c0_44 = arith.constant 0 : index
    %118 = vector.load %arg3[%c0_43, %c0_44] : memref<4x1xf32, #tpu.memory_space<vmem>>, vector<4x1xf32>
    %119 = vector.broadcast %118 : vector<4x1xf32> to vector<4x1024xf32>
    %120 = arith.addf %117, %119 : vector<4x1024xf32>
    %cst_45 = arith.constant 0.000000e+00 : f32
    %121 = vector.broadcast %cst_45 : f32 to vector<4x1024xf32>
    %122 = arith.maximumf %120, %121 : vector<4x1024xf32>
    %c1023_i32_46 = arith.constant 1023 : i32
    %123 = tpu.dynamic_rotate %122 by %c1023_i32_46 dim 1 : vector<4x1024xf32>, i32 -> vector<4x1024xf32>
    %124 = arith.maximumf %122, %123 : vector<4x1024xf32>
    %c992_i32_47 = arith.constant 992 : i32
    %125 = tpu.dynamic_rotate %122 by %c992_i32_47 dim 1 : vector<4x1024xf32>, i32 -> vector<4x1024xf32>
    %126 = arith.maximumf %124, %125 : vector<4x1024xf32>
    %c991_i32_48 = arith.constant 991 : i32
    %127 = tpu.dynamic_rotate %122 by %c991_i32_48 dim 1 : vector<4x1024xf32>, i32 -> vector<4x1024xf32>
    %128 = arith.maximumf %126, %127 : vector<4x1024xf32>
    %cst_49 = arith.constant 0.000000e+00 : f32
    %129 = vector.broadcast %cst_49 : f32 to vector<8x1024xf32>
    %c66_i32 = arith.constant 66 : i32
    %130 = tpu.dynamic_rotate %128 by %c66_i32 dim 1 : vector<4x1024xf32>, i32 -> vector<4x1024xf32>
    %c1_i32_50 = arith.constant 1 : i32
    %131 = vector.broadcast %c1_i32_50 : i32 to vector<1x1024xi32>
    %132 = arith.cmpi sge, %6, %131 : vector<1x1024xi32>
    %c1_i32_51 = arith.constant 1 : i32
    %133 = vector.broadcast %c1_i32_51 : i32 to vector<1x1024xi32>
    %134 = arith.cmpi sge, %10, %133 : vector<1x1024xi32>
    %135 = arith.andi %132, %134 : vector<1x1024xi1>
    %136 = arith.extui %135 : vector<1x1024xi1> to vector<1x1024xi32>
    %137 = arith.sitofp %136 : vector<1x1024xi32> to vector<1x1024xf32>
    %138 = vector.broadcast %137 : vector<1x1024xf32> to vector<4x1024xf32>
    %139 = arith.mulf %130, %138 : vector<4x1024xf32>
    %c0_52 = arith.constant 0 : index
    %c0_53 = arith.constant 0 : index
    %c0_54 = arith.constant 0 : index
    %140 = vector.load %arg4[%c0_52, %c0_53, %c0_54] : memref<9x8x4xf32, #tpu.memory_space<vmem>>, vector<1x8x4xf32>
    %141 = vector.shape_cast %140 : vector<1x8x4xf32> to vector<8x4xf32>
    %cst_55 = arith.constant dense<0.000000e+00> : vector<8x1024xf32>
    %142 = tpu.matmul %141, %139, %cst_55 {dimension_numbers = #tpu.dot_dimension_numbers<[1], [0], [0], [1], [0, 0, 1, 1], [], []>} : vector<8x4xf32>, vector<4x1024xf32>, vector<8x1024xf32> -> vector<8x1024xf32>
    %143 = arith.addf %129, %142 : vector<8x1024xf32>
    %c64_i32 = arith.constant 64 : i32
    %144 = tpu.dynamic_rotate %128 by %c64_i32 dim 1 : vector<4x1024xf32>, i32 -> vector<4x1024xf32>
    %c1_i32_56 = arith.constant 1 : i32
    %145 = vector.broadcast %c1_i32_56 : i32 to vector<1x1024xi32>
    %146 = arith.cmpi sge, %6, %145 : vector<1x1024xi32>
    %147 = arith.extui %146 : vector<1x1024xi1> to vector<1x1024xi32>
    %148 = arith.sitofp %147 : vector<1x1024xi32> to vector<1x1024xf32>
    %149 = vector.broadcast %148 : vector<1x1024xf32> to vector<4x1024xf32>
    %150 = arith.mulf %144, %149 : vector<4x1024xf32>
    %c1_57 = arith.constant 1 : index
    %c0_58 = arith.constant 0 : index
    %c0_59 = arith.constant 0 : index
    %151 = vector.load %arg4[%c1_57, %c0_58, %c0_59] : memref<9x8x4xf32, #tpu.memory_space<vmem>>, vector<1x8x4xf32>
    %152 = vector.shape_cast %151 : vector<1x8x4xf32> to vector<8x4xf32>
    %cst_60 = arith.constant dense<0.000000e+00> : vector<8x1024xf32>
    %153 = tpu.matmul %152, %150, %cst_60 {dimension_numbers = #tpu.dot_dimension_numbers<[1], [0], [0], [1], [0, 0, 1, 1], [], []>} : vector<8x4xf32>, vector<4x1024xf32>, vector<8x1024xf32> -> vector<8x1024xf32>
    %154 = arith.addf %143, %153 : vector<8x1024xf32>
    %c62_i32 = arith.constant 62 : i32
    %155 = tpu.dynamic_rotate %128 by %c62_i32 dim 1 : vector<4x1024xf32>, i32 -> vector<4x1024xf32>
    %c1_i32_61 = arith.constant 1 : i32
    %156 = vector.broadcast %c1_i32_61 : i32 to vector<1x1024xi32>
    %157 = arith.cmpi sge, %6, %156 : vector<1x1024xi32>
    %c14_i32 = arith.constant 14 : i32
    %158 = vector.broadcast %c14_i32 : i32 to vector<1x1024xi32>
    %159 = arith.cmpi sle, %10, %158 : vector<1x1024xi32>
    %160 = arith.andi %157, %159 : vector<1x1024xi1>
    %161 = arith.extui %160 : vector<1x1024xi1> to vector<1x1024xi32>
    %162 = arith.sitofp %161 : vector<1x1024xi32> to vector<1x1024xf32>
    %163 = vector.broadcast %162 : vector<1x1024xf32> to vector<4x1024xf32>
    %164 = arith.mulf %155, %163 : vector<4x1024xf32>
    %c2_62 = arith.constant 2 : index
    %c0_63 = arith.constant 0 : index
    %c0_64 = arith.constant 0 : index
    %165 = vector.load %arg4[%c2_62, %c0_63, %c0_64] : memref<9x8x4xf32, #tpu.memory_space<vmem>>, vector<1x8x4xf32>
    %166 = vector.shape_cast %165 : vector<1x8x4xf32> to vector<8x4xf32>
    %cst_65 = arith.constant dense<0.000000e+00> : vector<8x1024xf32>
    %167 = tpu.matmul %166, %164, %cst_65 {dimension_numbers = #tpu.dot_dimension_numbers<[1], [0], [0], [1], [0, 0, 1, 1], [], []>} : vector<8x4xf32>, vector<4x1024xf32>, vector<8x1024xf32> -> vector<8x1024xf32>
    %168 = arith.addf %154, %167 : vector<8x1024xf32>
    %c2_i32 = arith.constant 2 : i32
    %169 = tpu.dynamic_rotate %128 by %c2_i32 dim 1 : vector<4x1024xf32>, i32 -> vector<4x1024xf32>
    %c1_i32_66 = arith.constant 1 : i32
    %170 = vector.broadcast %c1_i32_66 : i32 to vector<1x1024xi32>
    %171 = arith.cmpi sge, %10, %170 : vector<1x1024xi32>
    %172 = arith.extui %171 : vector<1x1024xi1> to vector<1x1024xi32>
    %173 = arith.sitofp %172 : vector<1x1024xi32> to vector<1x1024xf32>
    %174 = vector.broadcast %173 : vector<1x1024xf32> to vector<4x1024xf32>
    %175 = arith.mulf %169, %174 : vector<4x1024xf32>
    %c3_67 = arith.constant 3 : index
    %c0_68 = arith.constant 0 : index
    %c0_69 = arith.constant 0 : index
    %176 = vector.load %arg4[%c3_67, %c0_68, %c0_69] : memref<9x8x4xf32, #tpu.memory_space<vmem>>, vector<1x8x4xf32>
    %177 = vector.shape_cast %176 : vector<1x8x4xf32> to vector<8x4xf32>
    %cst_70 = arith.constant dense<0.000000e+00> : vector<8x1024xf32>
    %178 = tpu.matmul %177, %175, %cst_70 {dimension_numbers = #tpu.dot_dimension_numbers<[1], [0], [0], [1], [0, 0, 1, 1], [], []>} : vector<8x4xf32>, vector<4x1024xf32>, vector<8x1024xf32> -> vector<8x1024xf32>
    %179 = arith.addf %168, %178 : vector<8x1024xf32>
    %c4_71 = arith.constant 4 : index
    %c0_72 = arith.constant 0 : index
    %c0_73 = arith.constant 0 : index
    %180 = vector.load %arg4[%c4_71, %c0_72, %c0_73] : memref<9x8x4xf32, #tpu.memory_space<vmem>>, vector<1x8x4xf32>
    %181 = vector.shape_cast %180 : vector<1x8x4xf32> to vector<8x4xf32>
    %cst_74 = arith.constant dense<0.000000e+00> : vector<8x1024xf32>
    %182 = tpu.matmul %181, %128, %cst_74 {dimension_numbers = #tpu.dot_dimension_numbers<[1], [0], [0], [1], [0, 0, 1, 1], [], []>} : vector<8x4xf32>, vector<4x1024xf32>, vector<8x1024xf32> -> vector<8x1024xf32>
    %183 = arith.addf %179, %182 : vector<8x1024xf32>
    %c1022_i32 = arith.constant 1022 : i32
    %184 = tpu.dynamic_rotate %128 by %c1022_i32 dim 1 : vector<4x1024xf32>, i32 -> vector<4x1024xf32>
    %c14_i32_75 = arith.constant 14 : i32
    %185 = vector.broadcast %c14_i32_75 : i32 to vector<1x1024xi32>
    %186 = arith.cmpi sle, %10, %185 : vector<1x1024xi32>
    %187 = arith.extui %186 : vector<1x1024xi1> to vector<1x1024xi32>
    %188 = arith.sitofp %187 : vector<1x1024xi32> to vector<1x1024xf32>
    %189 = vector.broadcast %188 : vector<1x1024xf32> to vector<4x1024xf32>
    %190 = arith.mulf %184, %189 : vector<4x1024xf32>
    %c5_76 = arith.constant 5 : index
    %c0_77 = arith.constant 0 : index
    %c0_78 = arith.constant 0 : index
    %191 = vector.load %arg4[%c5_76, %c0_77, %c0_78] : memref<9x8x4xf32, #tpu.memory_space<vmem>>, vector<1x8x4xf32>
    %192 = vector.shape_cast %191 : vector<1x8x4xf32> to vector<8x4xf32>
    %cst_79 = arith.constant dense<0.000000e+00> : vector<8x1024xf32>
    %193 = tpu.matmul %192, %190, %cst_79 {dimension_numbers = #tpu.dot_dimension_numbers<[1], [0], [0], [1], [0, 0, 1, 1], [], []>} : vector<8x4xf32>, vector<4x1024xf32>, vector<8x1024xf32> -> vector<8x1024xf32>
    %194 = arith.addf %183, %193 : vector<8x1024xf32>
    %c962_i32 = arith.constant 962 : i32
    %195 = tpu.dynamic_rotate %128 by %c962_i32 dim 1 : vector<4x1024xf32>, i32 -> vector<4x1024xf32>
    %c14_i32_80 = arith.constant 14 : i32
    %196 = vector.broadcast %c14_i32_80 : i32 to vector<1x1024xi32>
    %197 = arith.cmpi sle, %6, %196 : vector<1x1024xi32>
    %c1_i32_81 = arith.constant 1 : i32
    %198 = vector.broadcast %c1_i32_81 : i32 to vector<1x1024xi32>
    %199 = arith.cmpi sge, %10, %198 : vector<1x1024xi32>
    %200 = arith.andi %197, %199 : vector<1x1024xi1>
    %201 = arith.extui %200 : vector<1x1024xi1> to vector<1x1024xi32>
    %202 = arith.sitofp %201 : vector<1x1024xi32> to vector<1x1024xf32>
    %203 = vector.broadcast %202 : vector<1x1024xf32> to vector<4x1024xf32>
    %204 = arith.mulf %195, %203 : vector<4x1024xf32>
    %c6_82 = arith.constant 6 : index
    %c0_83 = arith.constant 0 : index
    %c0_84 = arith.constant 0 : index
    %205 = vector.load %arg4[%c6_82, %c0_83, %c0_84] : memref<9x8x4xf32, #tpu.memory_space<vmem>>, vector<1x8x4xf32>
    %206 = vector.shape_cast %205 : vector<1x8x4xf32> to vector<8x4xf32>
    %cst_85 = arith.constant dense<0.000000e+00> : vector<8x1024xf32>
    %207 = tpu.matmul %206, %204, %cst_85 {dimension_numbers = #tpu.dot_dimension_numbers<[1], [0], [0], [1], [0, 0, 1, 1], [], []>} : vector<8x4xf32>, vector<4x1024xf32>, vector<8x1024xf32> -> vector<8x1024xf32>
    %208 = arith.addf %194, %207 : vector<8x1024xf32>
    %c960_i32 = arith.constant 960 : i32
    %209 = tpu.dynamic_rotate %128 by %c960_i32 dim 1 : vector<4x1024xf32>, i32 -> vector<4x1024xf32>
    %c14_i32_86 = arith.constant 14 : i32
    %210 = vector.broadcast %c14_i32_86 : i32 to vector<1x1024xi32>
    %211 = arith.cmpi sle, %6, %210 : vector<1x1024xi32>
    %212 = arith.extui %211 : vector<1x1024xi1> to vector<1x1024xi32>
    %213 = arith.sitofp %212 : vector<1x1024xi32> to vector<1x1024xf32>
    %214 = vector.broadcast %213 : vector<1x1024xf32> to vector<4x1024xf32>
    %215 = arith.mulf %209, %214 : vector<4x1024xf32>
    %c7_87 = arith.constant 7 : index
    %c0_88 = arith.constant 0 : index
    %c0_89 = arith.constant 0 : index
    %216 = vector.load %arg4[%c7_87, %c0_88, %c0_89] : memref<9x8x4xf32, #tpu.memory_space<vmem>>, vector<1x8x4xf32>
    %217 = vector.shape_cast %216 : vector<1x8x4xf32> to vector<8x4xf32>
    %cst_90 = arith.constant dense<0.000000e+00> : vector<8x1024xf32>
    %218 = tpu.matmul %217, %215, %cst_90 {dimension_numbers = #tpu.dot_dimension_numbers<[1], [0], [0], [1], [0, 0, 1, 1], [], []>} : vector<8x4xf32>, vector<4x1024xf32>, vector<8x1024xf32> -> vector<8x1024xf32>
    %219 = arith.addf %208, %218 : vector<8x1024xf32>
    %c958_i32 = arith.constant 958 : i32
    %220 = tpu.dynamic_rotate %128 by %c958_i32 dim 1 : vector<4x1024xf32>, i32 -> vector<4x1024xf32>
    %c14_i32_91 = arith.constant 14 : i32
    %221 = vector.broadcast %c14_i32_91 : i32 to vector<1x1024xi32>
    %222 = arith.cmpi sle, %6, %221 : vector<1x1024xi32>
    %c14_i32_92 = arith.constant 14 : i32
    %223 = vector.broadcast %c14_i32_92 : i32 to vector<1x1024xi32>
    %224 = arith.cmpi sle, %10, %223 : vector<1x1024xi32>
    %225 = arith.andi %222, %224 : vector<1x1024xi1>
    %226 = arith.extui %225 : vector<1x1024xi1> to vector<1x1024xi32>
    %227 = arith.sitofp %226 : vector<1x1024xi32> to vector<1x1024xf32>
    %228 = vector.broadcast %227 : vector<1x1024xf32> to vector<4x1024xf32>
    %229 = arith.mulf %220, %228 : vector<4x1024xf32>
    %c8_93 = arith.constant 8 : index
    %c0_94 = arith.constant 0 : index
    %c0_95 = arith.constant 0 : index
    %230 = vector.load %arg4[%c8_93, %c0_94, %c0_95] : memref<9x8x4xf32, #tpu.memory_space<vmem>>, vector<1x8x4xf32>
    %231 = vector.shape_cast %230 : vector<1x8x4xf32> to vector<8x4xf32>
    %cst_96 = arith.constant dense<0.000000e+00> : vector<8x1024xf32>
    %232 = tpu.matmul %231, %229, %cst_96 {dimension_numbers = #tpu.dot_dimension_numbers<[1], [0], [0], [1], [0, 0, 1, 1], [], []>} : vector<8x4xf32>, vector<4x1024xf32>, vector<8x1024xf32> -> vector<8x1024xf32>
    %233 = arith.addf %219, %232 : vector<8x1024xf32>
    %c0_97 = arith.constant 0 : index
    %c0_98 = arith.constant 0 : index
    %234 = vector.load %arg5[%c0_97, %c0_98] : memref<8x1xf32, #tpu.memory_space<vmem>>, vector<8x1xf32>
    %235 = vector.broadcast %234 : vector<8x1xf32> to vector<8x1024xf32>
    %236 = arith.addf %233, %235 : vector<8x1024xf32>
    %cst_99 = arith.constant 0.000000e+00 : f32
    %237 = vector.broadcast %cst_99 : f32 to vector<8x1024xf32>
    %238 = arith.maximumf %236, %237 : vector<8x1024xf32>
    %c1022_i32_100 = arith.constant 1022 : i32
    %239 = tpu.dynamic_rotate %238 by %c1022_i32_100 dim 1 : vector<8x1024xf32>, i32 -> vector<8x1024xf32>
    %240 = arith.maximumf %238, %239 : vector<8x1024xf32>
    %c960_i32_101 = arith.constant 960 : i32
    %241 = tpu.dynamic_rotate %238 by %c960_i32_101 dim 1 : vector<8x1024xf32>, i32 -> vector<8x1024xf32>
    %242 = arith.maximumf %240, %241 : vector<8x1024xf32>
    %c958_i32_102 = arith.constant 958 : i32
    %243 = tpu.dynamic_rotate %238 by %c958_i32_102 dim 1 : vector<8x1024xf32>, i32 -> vector<8x1024xf32>
    %244 = arith.maximumf %242, %243 : vector<8x1024xf32>
    %c0_103 = arith.constant 0 : index
    %c0_104 = arith.constant 0 : index
    %245 = vector.load %arg7[%c0_103, %c0_104] : memref<1x16xf32, #tpu.memory_space<vmem>>, vector<1x16xf32>
    %246 = vector.extract_strided_slice %244 {offsets = [0, 0], sizes = [1, 1024], strides = [1, 1]} : vector<8x1024xf32> to vector<1x1024xf32>
    %c0_105 = arith.constant 0 : index
    %c0_106 = arith.constant 0 : index
    %c0_107 = arith.constant 0 : index
    %247 = vector.load %arg6[%c0_105, %c0_106, %c0_107] : memref<8x1024x16xf32, #tpu.memory_space<vmem>>, vector<1x1024x16xf32>
    %248 = vector.shape_cast %247 : vector<1x1024x16xf32> to vector<1024x16xf32>
    %cst_108 = arith.constant dense<0.000000e+00> : vector<1x16xf32>
    %249 = tpu.matmul %246, %248, %cst_108 {dimension_numbers = #tpu.dot_dimension_numbers<[1], [0], [0], [1], [0, 0, 1, 1], [], []>} : vector<1x1024xf32>, vector<1024x16xf32>, vector<1x16xf32> -> vector<1x16xf32>
    %250 = arith.addf %245, %249 : vector<1x16xf32>
    %251 = vector.extract_strided_slice %244 {offsets = [1, 0], sizes = [1, 1024], strides = [1, 1]} : vector<8x1024xf32> to vector<1x1024xf32>
    %c1_109 = arith.constant 1 : index
    %c0_110 = arith.constant 0 : index
    %c0_111 = arith.constant 0 : index
    %252 = vector.load %arg6[%c1_109, %c0_110, %c0_111] : memref<8x1024x16xf32, #tpu.memory_space<vmem>>, vector<1x1024x16xf32>
    %253 = vector.shape_cast %252 : vector<1x1024x16xf32> to vector<1024x16xf32>
    %cst_112 = arith.constant dense<0.000000e+00> : vector<1x16xf32>
    %254 = tpu.matmul %251, %253, %cst_112 {dimension_numbers = #tpu.dot_dimension_numbers<[1], [0], [0], [1], [0, 0, 1, 1], [], []>} : vector<1x1024xf32>, vector<1024x16xf32>, vector<1x16xf32> -> vector<1x16xf32>
    %255 = arith.addf %250, %254 : vector<1x16xf32>
    %256 = vector.extract_strided_slice %244 {offsets = [2, 0], sizes = [1, 1024], strides = [1, 1]} : vector<8x1024xf32> to vector<1x1024xf32>
    %c2_113 = arith.constant 2 : index
    %c0_114 = arith.constant 0 : index
    %c0_115 = arith.constant 0 : index
    %257 = vector.load %arg6[%c2_113, %c0_114, %c0_115] : memref<8x1024x16xf32, #tpu.memory_space<vmem>>, vector<1x1024x16xf32>
    %258 = vector.shape_cast %257 : vector<1x1024x16xf32> to vector<1024x16xf32>
    %cst_116 = arith.constant dense<0.000000e+00> : vector<1x16xf32>
    %259 = tpu.matmul %256, %258, %cst_116 {dimension_numbers = #tpu.dot_dimension_numbers<[1], [0], [0], [1], [0, 0, 1, 1], [], []>} : vector<1x1024xf32>, vector<1024x16xf32>, vector<1x16xf32> -> vector<1x16xf32>
    %260 = arith.addf %255, %259 : vector<1x16xf32>
    %261 = vector.extract_strided_slice %244 {offsets = [3, 0], sizes = [1, 1024], strides = [1, 1]} : vector<8x1024xf32> to vector<1x1024xf32>
    %c3_117 = arith.constant 3 : index
    %c0_118 = arith.constant 0 : index
    %c0_119 = arith.constant 0 : index
    %262 = vector.load %arg6[%c3_117, %c0_118, %c0_119] : memref<8x1024x16xf32, #tpu.memory_space<vmem>>, vector<1x1024x16xf32>
    %263 = vector.shape_cast %262 : vector<1x1024x16xf32> to vector<1024x16xf32>
    %cst_120 = arith.constant dense<0.000000e+00> : vector<1x16xf32>
    %264 = tpu.matmul %261, %263, %cst_120 {dimension_numbers = #tpu.dot_dimension_numbers<[1], [0], [0], [1], [0, 0, 1, 1], [], []>} : vector<1x1024xf32>, vector<1024x16xf32>, vector<1x16xf32> -> vector<1x16xf32>
    %265 = arith.addf %260, %264 : vector<1x16xf32>
    %266 = vector.extract_strided_slice %244 {offsets = [4, 0], sizes = [1, 1024], strides = [1, 1]} : vector<8x1024xf32> to vector<1x1024xf32>
    %c4_121 = arith.constant 4 : index
    %c0_122 = arith.constant 0 : index
    %c0_123 = arith.constant 0 : index
    %267 = vector.load %arg6[%c4_121, %c0_122, %c0_123] : memref<8x1024x16xf32, #tpu.memory_space<vmem>>, vector<1x1024x16xf32>
    %268 = vector.shape_cast %267 : vector<1x1024x16xf32> to vector<1024x16xf32>
    %cst_124 = arith.constant dense<0.000000e+00> : vector<1x16xf32>
    %269 = tpu.matmul %266, %268, %cst_124 {dimension_numbers = #tpu.dot_dimension_numbers<[1], [0], [0], [1], [0, 0, 1, 1], [], []>} : vector<1x1024xf32>, vector<1024x16xf32>, vector<1x16xf32> -> vector<1x16xf32>
    %270 = arith.addf %265, %269 : vector<1x16xf32>
    %271 = vector.extract_strided_slice %244 {offsets = [5, 0], sizes = [1, 1024], strides = [1, 1]} : vector<8x1024xf32> to vector<1x1024xf32>
    %c5_125 = arith.constant 5 : index
    %c0_126 = arith.constant 0 : index
    %c0_127 = arith.constant 0 : index
    %272 = vector.load %arg6[%c5_125, %c0_126, %c0_127] : memref<8x1024x16xf32, #tpu.memory_space<vmem>>, vector<1x1024x16xf32>
    %273 = vector.shape_cast %272 : vector<1x1024x16xf32> to vector<1024x16xf32>
    %cst_128 = arith.constant dense<0.000000e+00> : vector<1x16xf32>
    %274 = tpu.matmul %271, %273, %cst_128 {dimension_numbers = #tpu.dot_dimension_numbers<[1], [0], [0], [1], [0, 0, 1, 1], [], []>} : vector<1x1024xf32>, vector<1024x16xf32>, vector<1x16xf32> -> vector<1x16xf32>
    %275 = arith.addf %270, %274 : vector<1x16xf32>
    %276 = vector.extract_strided_slice %244 {offsets = [6, 0], sizes = [1, 1024], strides = [1, 1]} : vector<8x1024xf32> to vector<1x1024xf32>
    %c6_129 = arith.constant 6 : index
    %c0_130 = arith.constant 0 : index
    %c0_131 = arith.constant 0 : index
    %277 = vector.load %arg6[%c6_129, %c0_130, %c0_131] : memref<8x1024x16xf32, #tpu.memory_space<vmem>>, vector<1x1024x16xf32>
    %278 = vector.shape_cast %277 : vector<1x1024x16xf32> to vector<1024x16xf32>
    %cst_132 = arith.constant dense<0.000000e+00> : vector<1x16xf32>
    %279 = tpu.matmul %276, %278, %cst_132 {dimension_numbers = #tpu.dot_dimension_numbers<[1], [0], [0], [1], [0, 0, 1, 1], [], []>} : vector<1x1024xf32>, vector<1024x16xf32>, vector<1x16xf32> -> vector<1x16xf32>
    %280 = arith.addf %275, %279 : vector<1x16xf32>
    %281 = vector.extract_strided_slice %244 {offsets = [7, 0], sizes = [1, 1024], strides = [1, 1]} : vector<8x1024xf32> to vector<1x1024xf32>
    %c7_133 = arith.constant 7 : index
    %c0_134 = arith.constant 0 : index
    %c0_135 = arith.constant 0 : index
    %282 = vector.load %arg6[%c7_133, %c0_134, %c0_135] : memref<8x1024x16xf32, #tpu.memory_space<vmem>>, vector<1x1024x16xf32>
    %283 = vector.shape_cast %282 : vector<1x1024x16xf32> to vector<1024x16xf32>
    %cst_136 = arith.constant dense<0.000000e+00> : vector<1x16xf32>
    %284 = tpu.matmul %281, %283, %cst_136 {dimension_numbers = #tpu.dot_dimension_numbers<[1], [0], [0], [1], [0, 0, 1, 1], [], []>} : vector<1x1024xf32>, vector<1024x16xf32>, vector<1x16xf32> -> vector<1x16xf32>
    %285 = arith.addf %280, %284 : vector<1x16xf32>
    %c0_137 = arith.constant 0 : index
    %c0_138 = arith.constant 0 : index
    %c0_139 = arith.constant 0 : index
    %286 = vector.load %arg8[%c0_137, %c0_138, %c0_139] : memref<1x1x16xf32, #tpu.memory_space<vmem>>, vector<1x1x16xf32>
    %287 = vector.shape_cast %286 : vector<1x1x16xf32> to vector<1x16xf32>
    %288 = vector.shape_cast %285 : vector<1x16xf32> to vector<1x1x16xf32>
    tpu.vector_store %arg8[%c0_137, %c0_138, %c0_139], %288 {strides = array<i32>} : memref<1x1x16xf32, #tpu.memory_space<vmem>>, vector<1x1x16xf32>,
    return
  }
  func.func @transform_0(%arg0: i32) -> (i32, i32, i32) {
    %c0_i32 = arith.constant 0 : i32
    %c0_i32_0 = arith.constant 0 : i32
    %c0_i32_1 = arith.constant 0 : i32
    return %arg0, %c0_i32, %c0_i32_0 : i32, i32, i32
  }
  func.func @transform_1(%arg0: i32) -> (i32, i32, i32) {
    %c0_i32 = arith.constant 0 : i32
    %c0_i32_0 = arith.constant 0 : i32
    %c0_i32_1 = arith.constant 0 : i32
    %c0_i32_2 = arith.constant 0 : i32
    return %c0_i32, %c0_i32_0, %c0_i32_1 : i32, i32, i32
  }
  func.func @transform_2(%arg0: i32) -> (i32, i32) {
    %c0_i32 = arith.constant 0 : i32
    %c0_i32_0 = arith.constant 0 : i32
    %c0_i32_1 = arith.constant 0 : i32
    return %c0_i32, %c0_i32_0 : i32, i32
  }
  func.func @transform_3(%arg0: i32) -> (i32, i32, i32) {
    %c0_i32 = arith.constant 0 : i32
    %c0_i32_0 = arith.constant 0 : i32
    %c0_i32_1 = arith.constant 0 : i32
    %c0_i32_2 = arith.constant 0 : i32
    return %c0_i32, %c0_i32_0, %c0_i32_1 : i32, i32, i32
  }
  func.func @transform_4(%arg0: i32) -> (i32, i32) {
    %c0_i32 = arith.constant 0 : i32
    %c0_i32_0 = arith.constant 0 : i32
    %c0_i32_1 = arith.constant 0 : i32
    return %c0_i32, %c0_i32_0 : i32, i32
  }
  func.func @transform_5(%arg0: i32) -> (i32, i32, i32) {
    %c0_i32 = arith.constant 0 : i32
    %c0_i32_0 = arith.constant 0 : i32
    %c0_i32_1 = arith.constant 0 : i32
    %c0_i32_2 = arith.constant 0 : i32
    return %c0_i32, %c0_i32_0, %c0_i32_1 : i32, i32, i32
  }
  func.func @transform_6(%arg0: i32) -> (i32, i32) {
    %c0_i32 = arith.constant 0 : i32
    %c0_i32_0 = arith.constant 0 : i32
    %c0_i32_1 = arith.constant 0 : i32
    return %c0_i32, %c0_i32_0 : i32, i32
  }
  func.func @transform_7(%arg0: i32) -> (i32, i32, i32) {
    %c0_i32 = arith.constant 0 : i32
    %c0_i32_0 = arith.constant 0 : i32
    %c0_i32_1 = arith.constant 0 : i32
    return %arg0, %c0_i32, %c0_i32_0 : i32, i32, i32
  }
}

</mosaic_0001>

<llo_original>
// kernel: poor_cnn_forward_pallas.1
$region0: #{poor_cnn_forward_pallas.1}
  #allocation0 [shape = 'u32[]', space=smem, size = 0x4, offset = 0x4, fixed_abs, tag = 'smem constant byte address 0x4 - core index']
  #allocation1 [shape = 'u32[72,128]{1,0:T(1,128)}', space=vmem, size = 0x9000, scoped, tag = 'internal scratch']
  %s0 = inlined_call_operand.vmem [shape: f32[2,3,1024], index: 0, kind: input, shape index: {}]
  %s1 = inlined_call_operand.vmem [shape: f32[9,4,3], index: 1, kind: input, shape index: {}]
  %s2 = inlined_call_operand.vmem [shape: f32[4,1], index: 2, kind: input, shape index: {}]
  %s3 = inlined_call_operand.vmem [shape: f32[9,8,4], index: 3, kind: input, shape index: {}]
  %s4 = inlined_call_operand.vmem [shape: f32[8,1], index: 4, kind: input, shape index: {}]
  %s5 = inlined_call_operand.vmem [shape: f32[8,1024,16], index: 5, kind: input, shape index: {}]
  %s6 = inlined_call_operand.vmem [shape: f32[1,16], index: 6, kind: input, shape index: {}]
  %s7 = inlined_call_operand.hbm [shape: f32[2,1,16], index: 7, kind: output, shape index: {}]
  %s8 = sld [smem:[#allocation0]]
  $region61: #{poor_cnn_forward_pallas.1} parent=0
    _
  %s10 = ssub.s32 1, %s8
  %s11 = scalar_select 0, %s10, %s8
  $region1: #{poor_cnn_forward_pallas.1} parent=0
    #allocation2 [shape = 'u8[1024]{0}', space=vmem, size = 0x400, scoped, tag = 'output window, operand 0']
    #allocation3 [shape = 's32[2]{0}', space=sflag, size = 0x8, scoped, tag = 'scoped memory for poor_cnn_forward_pallas.1']
    %12 = vsyncpa [#allocation3], 0
    %s13 = scalar_lea.sflag [#allocation3], 1
    %14 = vsyncpa %s13, 0
    loop: start=0, step=1, limit=4
    $region2: #{poor_cnn_forward_pallas.1} parent=1 // loop_pre_header
      _
    $region3: #{poor_cnn_forward_pallas.1} parent=1 // loop_header
      %s16 = sphi 0, %s20
      %p17 = scmp.ge.s32.totalorder %s16, 4
      %s26 = sphi 0, %s28
      %s29 = sphi 0, %s26
      %s30 = sphi 0, %s29
      %s46 = sphi 0, %s30
      %s50 = sphi 0, %s50
      %s52 = sphi 0, %s50
      %s53 = sphi 0, %s52
      %s67 = sphi 0, %s53
      %s71 = sphi 0, %s71
      %s73 = sphi 0, %s71
      %s74 = sphi 0, %s73
      %s88 = sphi 0, %s74
      %s92 = sphi 0, %s92
      %s94 = sphi 0, %s92
      %s95 = sphi 0, %s94
      %s109 = sphi 0, %s95
      %s113 = sphi 0, %s113
      %s115 = sphi 0, %s113
      %s116 = sphi 0, %s115
      %s130 = sphi 0, %s116
      %s134 = sphi 0, %s134
      %s136 = sphi 0, %s134
      %s137 = sphi 0, %s136
      %s151 = sphi 0, %s137
      %s155 = sphi 0, %s155
      %s157 = sphi 0, %s155
      %s158 = sphi 0, %s157
      %s172 = sphi 0, %s158
      %s178 = sphi 0, %s180
      %s181 = sphi 0, %s178
      %s182 = sphi 0, %s181
      %s198 = sphi 0, %s182
    $region4: #{poor_cnn_forward_pallas.1} parent=1 // loop_header_branch
      %19 = sbr.rel (%p17) target = $region8
    $region5: #{poor_cnn_forward_pallas.1} parent=1 // loop_body
      %s21 = ssub.s32 %s16, 1
      %s22 = ssub.s32 %s16, 2
      %s23 = sadd.s32 %s16, 1
      %s24 = ssub.s32 %s16, %s23
      %p25 = scmp.eq.s32.totalorder %s24, 0
      %s27 = sadd.s32 %s26, 1
      %s28 = scalar_select %p25, %s26, %s27
      %p31 = pneg %p25
      %p32 = scmp.eq.s32.totalorder %s16, 1
      %p33 = por %p31, %p32
      %p34 = scmp.ne.s32.totalorder %s26, %s29
      %p35 = scmp.eq.s32.totalorder %s16, 0
      %p36 = por %p34, %p35
      %p37 = scmp.ne.s32.totalorder %s26, %s29
      %p38 = scmp.eq.s32.totalorder %s21, 1
      %p39 = por %p37, %p38
      %p40 = scmp.ne.s32.totalorder %s29, %s30
      %p41 = scmp.eq.s32.totalorder %s21, 0
      %p42 = por %p40, %p41
      %p43 = scmp.ne.s32.totalorder %s29, %s30
      %p44 = scmp.eq.s32.totalorder %s22, 1
      %p45 = por %p43, %p44
      %p47 = scmp.ne.s32.totalorder %s30, %s46
      %p48 = scmp.eq.s32.totalorder %s22, 0
      %p49 = por %p47, %p48
      %s51 = sadd.s32 %s50, 1
      %p54 = scmp.eq.s32.totalorder %s16, 1
      %p55 = scmp.ne.s32.totalorder %s50, %s52
      %p56 = scmp.eq.s32.totalorder %s16, 0
      %p57 = por %p55, %p56
      %p58 = scmp.ne.s32.totalorder %s50, %s52
      %p59 = scmp.eq.s32.totalorder %s21, 1
      %p60 = por %p58, %p59
      %p61 = scmp.ne.s32.totalorder %s52, %s53
      %p62 = scmp.eq.s32.totalorder %s21, 0
      %p63 = por %p61, %p62
      %p64 = scmp.ne.s32.totalorder %s52, %s53
      %p65 = scmp.eq.s32.totalorder %s22, 1
      %p66 = por %p64, %p65
      %p68 = scmp.ne.s32.totalorder %s53, %s67
      %p69 = scmp.eq.s32.totalorder %s22, 0
      %p70 = por %p68, %p69
      %s72 = sadd.s32 %s71, 1
      %p75 = scmp.eq.s32.totalorder %s16, 1
      %p76 = scmp.ne.s32.totalorder %s71, %s73
      %p77 = scmp.eq.s32.totalorder %s16, 0
      %p78 = por %p76, %p77
      %p79 = scmp.ne.s32.totalorder %s71, %s73
      %p80 = scmp.eq.s32.totalorder %s21, 1
      %p81 = por %p79, %p80
      %p82 = scmp.ne.s32.totalorder %s73, %s74
      %p83 = scmp.eq.s32.totalorder %s21, 0
      %p84 = por %p82, %p83
      %p85 = scmp.ne.s32.totalorder %s73, %s74
      %p86 = scmp.eq.s32.totalorder %s22, 1
      %p87 = por %p85, %p86
      %p89 = scmp.ne.s32.totalorder %s74, %s88
      %p90 = scmp.eq.s32.totalorder %s22, 0
      %p91 = por %p89, %p90
      %s93 = sadd.s32 %s92, 1
      %p96 = scmp.eq.s32.totalorder %s16, 1
      %p97 = scmp.ne.s32.totalorder %s92, %s94
      %p98 = scmp.eq.s32.totalorder %s16, 0
      %p99 = por %p97, %p98
      %p100 = scmp.ne.s32.totalorder %s92, %s94
      %p101 = scmp.eq.s32.totalorder %s21, 1
      %p102 = por %p100, %p101
      %p103 = scmp.ne.s32.totalorder %s94, %s95
      %p104 = scmp.eq.s32.totalorder %s21, 0
      %p105 = por %p103, %p104
      %p106 = scmp.ne.s32.totalorder %s94, %s95
      %p107 = scmp.eq.s32.totalorder %s22, 1
      %p108 = por %p106, %p107
      %p110 = scmp.ne.s32.totalorder %s95, %s109
      %p111 = scmp.eq.s32.totalorder %s22, 0
      %p112 = por %p110, %p111
      %s114 = sadd.s32 %s113, 1
      %p117 = scmp.eq.s32.totalorder %s16, 1
      %p118 = scmp.ne.s32.totalorder %s113, %s115
      %p119 = scmp.eq.s32.totalorder %s16, 0
      %p120 = por %p118, %p119
      %p121 = scmp.ne.s32.totalorder %s113, %s115
      %p122 = scmp.eq.s32.totalorder %s21, 1
      %p123 = por %p121, %p122
      %p124 = scmp.ne.s32.totalorder %s115, %s116
      %p125 = scmp.eq.s32.totalorder %s21, 0
      %p126 = por %p124, %p125
      %p127 = scmp.ne.s32.totalorder %s115, %s116
      %p128 = scmp.eq.s32.totalorder %s22, 1
      %p129 = por %p127, %p128
      %p131 = scmp.ne.s32.totalorder %s116, %s130
      %p132 = scmp.eq.s32.totalorder %s22, 0
      %p133 = por %p131, %p132
      %s135 = sadd.s32 %s134, 1
      %p138 = scmp.eq.s32.totalorder %s16, 1
      %p139 = scmp.ne.s32.totalorder %s134, %s136
      %p140 = scmp.eq.s32.totalorder %s16, 0
      %p141 = por %p139, %p140
      %p142 = scmp.ne.s32.totalorder %s134, %s136
      %p143 = scmp.eq.s32.totalorder %s21, 1
      %p144 = por %p142, %p143
      %p145 = scmp.ne.s32.totalorder %s136, %s137
      %p146 = scmp.eq.s32.totalorder %s21, 0
      %p147 = por %p145, %p146
      %p148 = scmp.ne.s32.totalorder %s136, %s137
      %p149 = scmp.eq.s32.totalorder %s22, 1
      %p150 = por %p148, %p149
      %p152 = scmp.ne.s32.totalorder %s137, %s151
      %p153 = scmp.eq.s32.totalorder %s22, 0
      %p154 = por %p152, %p153
      %s156 = sadd.s32 %s155, 1
      %p159 = scmp.eq.s32.totalorder %s16, 1
      %p160 = scmp.ne.s32.totalorder %s155, %s157
      %p161 = scmp.eq.s32.totalorder %s16, 0
      %p162 = por %p160, %p161
      %p163 = scmp.ne.s32.totalorder %s155, %s157
      %p164 = scmp.eq.s32.totalorder %s21, 1
      %p165 = por %p163, %p164
      %p166 = scmp.ne.s32.totalorder %s157, %s158
      %p167 = scmp.eq.s32.totalorder %s21, 0
      %p168 = por %p166, %p167
      %p169 = scmp.ne.s32.totalorder %s157, %s158
      %p170 = scmp.eq.s32.totalorder %s22, 1
      %p171 = por %p169, %p170
      %p173 = scmp.ne.s32.totalorder %s158, %s172
      %p174 = scmp.eq.s32.totalorder %s22, 0
      %p175 = por %p173, %p174
      %s176 = ssub.s32 %s16, %s23
      %p177 = scmp.eq.s32.totalorder %s176, 0
      %s179 = sadd.s32 %s178, 1
      %s180 = scalar_select %p177, %s178, %s179
      %p183 = pneg %p177
      %p184 = scmp.eq.s32.totalorder %s16, 1
      %p185 = por %p183, %p184
      %p186 = scmp.ne.s32.totalorder %s178, %s181
      %p187 = scmp.eq.s32.totalorder %s16, 0
      %p188 = por %p186, %p187
      %p189 = scmp.ne.s32.totalorder %s178, %s181
      %p190 = scmp.eq.s32.totalorder %s21, 1
      %p191 = por %p189, %p190
      %p192 = scmp.ne.s32.totalorder %s181, %s182
      %p193 = scmp.eq.s32.totalorder %s21, 0
      %p194 = por %p192, %p193
      %p195 = scmp.ne.s32.totalorder %s181, %s182
      %p196 = scmp.eq.s32.totalorder %s22, 1
      %p197 = por %p195, %p196
      %p199 = scmp.ne.s32.totalorder %s182, %s198
      %p200 = scmp.eq.s32.totalorder %s22, 0
      %p201 = por %p199, %p200
      %p202 = scmp.le.s32.totalorder 1, %s16
      %p203 = scmp.lt.s32.totalorder %s16, 3
      %p204 = pnand %p202, %p203
      %p205 = pneg %p204
      // Predicated region
      $region9: #{poor_cnn_forward_pallas.1} parent=5 // pred_check
        _
      $region10: #{poor_cnn_forward_pallas.1} parent=5 // pred_check_branch
        %207 = sbr.rel (%p204) target = $region12
      $region11: #{poor_cnn_forward_pallas.1} parent=5 // pred_region
        %s208 = ssub.s32 %s16, 1
        // Predicated region
        $region13: #{poor_cnn_forward_pallas.1} parent=11 // pred_check
          %p209 = pneg %p63
        $region14: #{poor_cnn_forward_pallas.1} parent=11 // pred_check_branch
          %211 = sbr.rel (%p209) target = $region16
        $region15: #{poor_cnn_forward_pallas.1} parent=11 // pred_region
          _
        $region16: #{poor_cnn_forward_pallas.1} parent=11 // pred_fallthru
          _
        // Predicated region
        $region17: #{poor_cnn_forward_pallas.1} parent=11 // pred_check
          %p212 = pneg %p84
        $region18: #{poor_cnn_forward_pallas.1} parent=11 // pred_check_branch
          %214 = sbr.rel (%p212) target = $region20
        $region19: #{poor_cnn_forward_pallas.1} parent=11 // pred_region
          _
        $region20: #{poor_cnn_forward_pallas.1} parent=11 // pred_fallthru
          _
        // Predicated region
        $region21: #{poor_cnn_forward_pallas.1} parent=11 // pred_check
          %p215 = pneg %p105
        $region22: #{poor_cnn_forward_pallas.1} parent=11 // pred_check_branch
          %217 = sbr.rel (%p215) target = $region24
        $region23: #{poor_cnn_forward_pallas.1} parent=11 // pred_region
          _
        $region24: #{poor_cnn_forward_pallas.1} parent=11 // pred_fallthru
          _
        // Predicated region
        $region25: #{poor_cnn_forward_pallas.1} parent=11 // pred_check
          %p218 = pneg %p126
        $region26: #{poor_cnn_forward_pallas.1} parent=11 // pred_check_branch
          %220 = sbr.rel (%p218) target = $region28
        $region27: #{poor_cnn_forward_pallas.1} parent=11 // pred_region
          _
        $region28: #{poor_cnn_forward_pallas.1} parent=11 // pred_fallthru
          _
        // Predicated region
        $region29: #{poor_cnn_forward_pallas.1} parent=11 // pred_check
          %p221 = pneg %p147
        $region30: #{poor_cnn_forward_pallas.1} parent=11 // pred_check_branch
          %223 = sbr.rel (%p221) target = $region32
        $region31: #{poor_cnn_forward_pallas.1} parent=11 // pred_region
          _
        $region32: #{poor_cnn_forward_pallas.1} parent=11 // pred_fallthru
          _
        // Predicated region
        $region33: #{poor_cnn_forward_pallas.1} parent=11 // pred_check
          %p224 = pneg %p168
        $region34: #{poor_cnn_forward_pallas.1} parent=11 // pred_check_branch
          %226 = sbr.rel (%p224) target = $region36
        $region35: #{poor_cnn_forward_pallas.1} parent=11 // pred_region
          _
        $region36: #{poor_cnn_forward_pallas.1} parent=11 // pred_fallthru
          _
      $region12: #{poor_cnn_forward_pallas.1} parent=5 // pred_fallthru
        _
      %p227 = scmp.lt.s32.totalorder %s16, 2
      // Predicated region
      $region37: #{poor_cnn_forward_pallas.1} parent=5 // pred_check
        %p228 = pneg %p227
      $region38: #{poor_cnn_forward_pallas.1} parent=5 // pred_check_branch
        %230 = sbr.rel (%p228) target = $region40
      $region39: #{poor_cnn_forward_pallas.1} parent=5 // pred_region
        // Predicated region
        $region41: #{poor_cnn_forward_pallas.1} parent=39 // pred_check
          %p231 = pneg %p36
        $region42: #{poor_cnn_forward_pallas.1} parent=39 // pred_check_branch
          %233 = sbr.rel (%p231) target = $region44
        $region43: #{poor_cnn_forward_pallas.1} parent=39 // pred_region
          %p234 = scmp.lt.s32.totalorder %s16, 1
          %s235 = scalar_select %p234, %s16, 1
          %s236 = smul.addr %s235, 8
          %s237 = smul.addr %s236, 4
          %s238 = scalar_lea.vmem %s0, %s237
        $region44: #{poor_cnn_forward_pallas.1} parent=39 // pred_fallthru
          _
      $region40: #{poor_cnn_forward_pallas.1} parent=5 // pred_fallthru
        _
      %p239 = scmp.le.s32.totalorder 1, %s16
      %p240 = scmp.lt.s32.totalorder %s16, 3
      %p241 = pnand %p239, %p240
      %p242 = pneg %p241
      // Predicated region
      $region45: #{poor_cnn_forward_pallas.1} parent=5 // pred_check
        _
      $region46: #{poor_cnn_forward_pallas.1} parent=5 // pred_check_branch
        %244 = sbr.rel (%p241) target = $region48
      $region47: #{poor_cnn_forward_pallas.1} parent=5 // pred_region
        %s245 = ssub.s32 %s16, 1
        %p246 = scmp.lt.s32.totalorder %s21, 1
        %s247 = scalar_select %p246, %s21, 1
        %s248 = smul.addr %s247, 8
        %s249 = smul.addr %s248, 4
        %s250 = scalar_lea.vmem %s0, %s249
        %p251 = pneg %p42
        %p252 = pneg %p39
        %p253 = pneg %p63
        %p254 = pneg %p60
        %p255 = pneg %p84
        %p256 = pneg %p81
        %p257 = pneg %p105
        %p258 = pneg %p102
        %p259 = pneg %p126
        %p260 = pneg %p123
        %p261 = pneg %p147
        %p262 = pneg %p144
        %p263 = pneg %p168
        %p264 = pneg %p165
        %p265 = pneg %p194
        %p266 = pneg %p191
        %s267 = sand.u32 %s181, 1
        %s268 = scalar_lea.sflag [#allocation3], %s267
        %s269 = sand.u32 %s181, 1
        %s270 = scalar_lea.vmem [#allocation2], %s269
        %p271 = scmp.lt.s32.totalorder %s21, 1
        %s272 = scalar_select %p271, %s21, 1
        %s273 = smul.addr %s272, 8
        %s274 = smul.addr %s273, 4
        %s275 = scalar_lea.vmem %s0, %s274
        %v276 = vlaneseq
        %v277 = vand.u32 %v276, 127
        %v278 = vadd.s32 %v277, 128
        %v279 = vadd.s32 %v277, 256
        %v280 = vadd.s32 %v277, 384
        %v281 = vadd.s32 %v277, 512
        %v282 = vadd.s32 %v277, 640
        %v283 = vadd.s32 %v277, 768
        %v284 = vadd.s32 %v277, 896
        %v285 = vshra.s32 %v277, 5
        %v286 = vshra.s32 %v278, 5
        %v287 = vshra.s32 %v279, 5
        %v288 = vshra.s32 %v280, 5
        %v289 = vshra.s32 %v281, 5
        %v290 = vshra.s32 %v282, 5
        %v291 = vshra.s32 %v283, 5
        %v292 = vshra.s32 %v284, 5
        %v293 = vand.u32 %v277, 31
        %v294 = vand.u32 %v278, 31
        %v295 = vand.u32 %v279, 31
        %v296 = vand.u32 %v280, 31
        %v297 = vand.u32 %v281, 31
        %v298 = vand.u32 %v282, 31
        %v299 = vand.u32 %v283, 31
        %v300 = vand.u32 %v284, 31
        %v301 = vshra.s32 %v277, 6
        %v302 = vshra.s32 %v278, 6
        %v303 = vshra.s32 %v279, 6
        %v304 = vshra.s32 %v280, 6
        %v305 = vshra.s32 %v281, 6
        %v306 = vshra.s32 %v282, 6
        %v307 = vshra.s32 %v283, 6
        %v308 = vshra.s32 %v284, 6
        %v309 = vand.u32 %v277, 63
        %v310 = vand.u32 %v278, 63
        %v311 = vand.u32 %v279, 63
        %v312 = vand.u32 %v280, 63
        %v313 = vand.u32 %v281, 63
        %v314 = vand.u32 %v282, 63
        %v315 = vand.u32 %v283, 63
        %v316 = vand.u32 %v284, 63
        %v317 = vshra.s32 %v309, 1
        %v318 = vshra.s32 %v310, 1
        %v319 = vshra.s32 %v311, 1
        %v320 = vshra.s32 %v312, 1
        %v321 = vshra.s32 %v313, 1
        %v322 = vshra.s32 %v314, 1
        %v323 = vshra.s32 %v315, 1
        %v324 = vshra.s32 %v316, 1
        %v325 = vld [vmem:[%s275] sm:$0x77]
        %v326 = vld [vmem:[%s275 + $0x8] sm:$0x77]
        %v327 = vld [vmem:[%s275 + $0x10] sm:$0x77]
        %v328 = vld [vmem:[%s275 + $0x18] sm:$0x77]
        %333 = vst [vmem:[#allocation1] ss:$2 sm:$0xff] %v325
        %s334 = scalar_lea.vmem [#allocation1], 16
        %335 = vst [vmem:[%s334] ss:$2 sm:$0xff] %v326
        %s336 = scalar_lea.vmem [#allocation1], 32
        %337 = vst [vmem:[%s336] ss:$2 sm:$0xff] %v327
        %s338 = scalar_lea.vmem [#allocation1], 48
        %339 = vst [vmem:[%s338] ss:$2 sm:$0xff] %v328
        %v340 = vld.sshfl [vmem:[#allocation1] sm:$0xff pattern:$0x75316420]
        %v341 = vld.sshfl [vmem:[#allocation1 + $0x8] sm:$0xff pattern:$0x75316420]
        %v342 = vld.sshfl [vmem:[#allocation1 + $0x10] sm:$0xff pattern:$0x75316420]
        %v343 = vld.sshfl [vmem:[#allocation1 + $0x18] sm:$0xff pattern:$0x75316420]
        %v344 = vld.sshfl [vmem:[#allocation1 + $0x20] sm:$0xff pattern:$0x75316420]
        %v345 = vld.sshfl [vmem:[#allocation1 + $0x28] sm:$0xff pattern:$0x75316420]
        %v346 = vld.sshfl [vmem:[#allocation1 + $0x30] sm:$0xff pattern:$0x75316420]
        %v347 = vld.sshfl [vmem:[#allocation1 + $0x38] sm:$0xff pattern:$0x75316420]
        %356 = vrot.lane.b32.xlu0 %v340, 33
        %v357 = vpop.permute.xlu0 %356
        %358 = vrot.lane.b32.xlu0 %v341, 33
        %v359 = vpop.permute.xlu0 %358
        %360 = vrot.lane.b32.xlu0 %v342, 33
        %v361 = vpop.permute.xlu0 %360
        %362 = vrot.lane.b32.xlu0 %v343, 33
        %v363 = vpop.permute.xlu0 %362
        %364 = vrot.lane.b32.xlu0 %v344, 33
        %v365 = vpop.permute.xlu0 %364
        %366 = vrot.lane.b32.xlu0 %v345, 33
        %v367 = vpop.permute.xlu0 %366
        %368 = vrot.lane.b32.xlu0 %v346, 33
        %v369 = vpop.permute.xlu0 %368
        %370 = vrot.lane.b32.xlu0 %v347, 33
        %v371 = vpop.permute.xlu0 %370
        %vm372 = vcmp.lt.s32.totalorder %v277, 33
        %v373 = vsel %vm372, %v369, %v371
        %v374 = vsel %vm372, %v367, %v369
        %v375 = vsel %vm372, %v365, %v367
        %v376 = vsel %vm372, %v363, %v365
        %v377 = vsel %vm372, %v361, %v363
        %v378 = vsel %vm372, %v359, %v361
        %v379 = vsel %vm372, %v357, %v359
        %v380 = vsel %vm372, %v371, %v357
        %vm381 = vcmp.ge.s32.totalorder %v285, 1
        %vm382 = vcmp.ge.s32.totalorder %v286, 1
        %vm383 = vcmp.ge.s32.totalorder %v287, 1
        %vm384 = vcmp.ge.s32.totalorder %v288, 1
        %vm385 = vcmp.ge.s32.totalorder %v289, 1
        %vm386 = vcmp.ge.s32.totalorder %v290, 1
        %vm387 = vcmp.ge.s32.totalorder %v291, 1
        %vm388 = vcmp.ge.s32.totalorder %v292, 1
        %vm389 = vcmp.ge.s32.totalorder %v293, 1
        %vm390 = vcmp.ge.s32.totalorder %v294, 1
        %vm391 = vcmp.ge.s32.totalorder %v295, 1
        %vm392 = vcmp.ge.s32.totalorder %v296, 1
        %vm393 = vcmp.ge.s32.totalorder %v297, 1
        %vm394 = vcmp.ge.s32.totalorder %v298, 1
        %vm395 = vcmp.ge.s32.totalorder %v299, 1
        %vm396 = vcmp.ge.s32.totalorder %v300, 1
        %vm397 = vmand %vm381, %vm389
        %vm398 = vmand %vm382, %vm390
        %vm399 = vmand %vm383, %vm391
        %vm400 = vmand %vm384, %vm392
        %vm401 = vmand %vm385, %vm393
        %vm402 = vmand %vm386, %vm394
        %vm403 = vmand %vm387, %vm395
        %vm404 = vmand %vm388, %vm396
        %v405 = vsel %vm397, 1, 0
        %v406 = vsel %vm398, 1, 0
        %v407 = vsel %vm399, 1, 0
        %v408 = vsel %vm400, 1, 0
        %v409 = vsel %vm401, 1, 0
        %v410 = vsel %vm402, 1, 0
        %v411 = vsel %vm403, 1, 0
        %v412 = vsel %vm404, 1, 0
        %v413 = vcvt.s32.f32 %v405
        %v414 = vcvt.s32.f32 %v406
        %v415 = vcvt.s32.f32 %v407
        %v416 = vcvt.s32.f32 %v408
        %v417 = vcvt.s32.f32 %v409
        %v418 = vcvt.s32.f32 %v410
        %v419 = vcvt.s32.f32 %v411
        %v420 = vcvt.s32.f32 %v412
        %v421 = vmul.f32 %v380, %v413
        %v422 = vmul.f32 %v379, %v414
        %v423 = vmul.f32 %v378, %v415
        %v424 = vmul.f32 %v377, %v416
        %v425 = vmul.f32 %v376, %v417
        %v426 = vmul.f32 %v375, %v418
        %v427 = vmul.f32 %v374, %v419
        %v428 = vmul.f32 %v373, %v420
        %v429 = vld [vmem:[%s1] sm:$0xf]
        %430 = vst [vmem:[#allocation1] ss:$2 sm:$0xff] %v325
        %s431 = scalar_lea.vmem [#allocation1], 16
        %432 = vst [vmem:[%s431] ss:$2 sm:$0xff] %v326
        %s433 = scalar_lea.vmem [#allocation1], 32
        %434 = vst [vmem:[%s433] ss:$2 sm:$0xff] %v327
        %s435 = scalar_lea.vmem [#allocation1], 48
        %436 = vst [vmem:[%s435] ss:$2 sm:$0xff] %v328
        %v437 = vld.sshfl [vmem:[#allocation1] sm:$0xff pattern:$0x75316420]
        %v438 = vld.sshfl [vmem:[#allocation1 + $0x8] sm:$0xff pattern:$0x75316420]
        %v439 = vld.sshfl [vmem:[#allocation1 + $0x10] sm:$0xff pattern:$0x75316420]
        %v440 = vld.sshfl [vmem:[#allocation1 + $0x18] sm:$0xff pattern:$0x75316420]
        %v441 = vld.sshfl [vmem:[#allocation1 + $0x20] sm:$0xff pattern:$0x75316420]
        %v442 = vld.sshfl [vmem:[#allocation1 + $0x28] sm:$0xff pattern:$0x75316420]
        %v443 = vld.sshfl [vmem:[#allocation1 + $0x30] sm:$0xff pattern:$0x75316420]
        %v444 = vld.sshfl [vmem:[#allocation1 + $0x38] sm:$0xff pattern:$0x75316420]
        %453 = vrot.lane.b32.xlu0 %v437, 32
        %v454 = vpop.permute.xlu0 %453
        %455 = vrot.lane.b32.xlu0 %v438, 32
        %v456 = vpop.permute.xlu0 %455
        %457 = vrot.lane.b32.xlu0 %v439, 32
        %v458 = vpop.permute.xlu0 %457
        %459 = vrot.lane.b32.xlu0 %v440, 32
        %v460 = vpop.permute.xlu0 %459
        %461 = vrot.lane.b32.xlu0 %v441, 32
        %v462 = vpop.permute.xlu0 %461
        %463 = vrot.lane.b32.xlu0 %v442, 32
        %v464 = vpop.permute.xlu0 %463
        %465 = vrot.lane.b32.xlu0 %v443, 32
        %v466 = vpop.permute.xlu0 %465
        %467 = vrot.lane.b32.xlu0 %v444, 32
        %v468 = vpop.permute.xlu0 %467
        %vm469 = vcmp.lt.s32.totalorder %v277, 32
        %v470 = vsel %vm469, %v466, %v468
        %v471 = vsel %vm469, %v464, %v466
        %v472 = vsel %vm469, %v462, %v464
        %v473 = vsel %vm469, %v460, %v462
        %v474 = vsel %vm469, %v458, %v460
        %v475 = vsel %vm469, %v456, %v458
        %v476 = vsel %vm469, %v454, %v456
        %v477 = vsel %vm469, %v468, %v454
        %v478 = vsel %vm381, 1, 0
        %v479 = vsel %vm382, 1, 0
        %v480 = vsel %vm383, 1, 0
        %v481 = vsel %vm384, 1, 0
        %v482 = vsel %vm385, 1, 0
        %v483 = vsel %vm386, 1, 0
        %v484 = vsel %vm387, 1, 0
        %v485 = vsel %vm388, 1, 0
        %v486 = vcvt.s32.f32 %v478
        %v487 = vcvt.s32.f32 %v479
        %v488 = vcvt.s32.f32 %v480
        %v489 = vcvt.s32.f32 %v481
        %v490 = vcvt.s32.f32 %v482
        %v491 = vcvt.s32.f32 %v483
        %v492 = vcvt.s32.f32 %v484
        %v493 = vcvt.s32.f32 %v485
        %v494 = vmul.f32 %v477, %v486
        %v495 = vmul.f32 %v476, %v487
        %v496 = vmul.f32 %v475, %v488
        %v497 = vmul.f32 %v474, %v489
        %v498 = vmul.f32 %v473, %v490
        %v499 = vmul.f32 %v472, %v491
        %v500 = vmul.f32 %v471, %v492
        %v501 = vmul.f32 %v470, %v493
        %s502 = scalar_lea.vmem %s1, 4
        %v503 = vld [vmem:[%s502] sm:$0xf]
        %vm504 = vcmask 23552
        %v506 = vsel %vm504, %v503, 0
        %vm508 = vcmask 1042432
        %v510 = vsel %vm508, %v494, 0
        %v513 = vsel %vm508, %v495, 0
        %v516 = vsel %vm508, %v496, 0
        %v519 = vsel %vm508, %v497, 0
        %v522 = vsel %vm508, %v498, 0
        %v525 = vsel %vm508, %v499, 0
        %v528 = vsel %vm508, %v500, 0
        %v531 = vsel %vm508, %v501, 0
        %533 = vmatpush.msra.mxu0 0.0
        %534 = vmatpush.msra.mxu0 0.0
        %535 = vmatpush.msra.mxu0 0.0
        %536 = vmatpush.msra.mxu0 0.0
        %537 = vmatpush.msra.mxu0 0.0
        %538 = vmatpush.msra.mxu0 0.0
        %539 = vmatpush.msra.mxu0 0.0
        %540 = vmatpush.msra.mxu0 0.0
        %541 = vmatpush.msra.mxu0 0.0
        %542 = vmatpush.msra.mxu0 0.0
        %543 = vmatpush.msra.mxu0 0.0
        %544 = vmatpush.msra.mxu0 0.0
        %545 = vmatpush.msra.mxu0 0.0
        %546 = vmatpush.msra.mxu0 0.0
        %547 = vmatpush.msra.mxu0 0.0
        %548 = vmatpush.msra.mxu0 %v510
        %549 = vmatmul.f32.gmra.mxu0 %v506
        %v550 = vpop.f32.mrf.mxu0
        %v551 = vadd.f32 0.0, %v550
        %552 = vdwg.mxu0
        %553 = vmatpush.msra.mxu0 0.0
        %554 = vmatpush.msra.mxu0 0.0
        %555 = vmatpush.msra.mxu0 0.0
        %556 = vmatpush.msra.mxu0 0.0
        %557 = vmatpush.msra.mxu0 0.0
        %558 = vmatpush.msra.mxu0 0.0
        %559 = vmatpush.msra.mxu0 0.0
        %560 = vmatpush.msra.mxu0 0.0
        %561 = vmatpush.msra.mxu0 0.0
        %562 = vmatpush.msra.mxu0 0.0
        %563 = vmatpush.msra.mxu0 0.0
        %564 = vmatpush.msra.mxu0 0.0
        %565 = vmatpush.msra.mxu0 0.0
        %566 = vmatpush.msra.mxu0 0.0
        %567 = vmatpush.msra.mxu0 0.0
        %568 = vmatpush.msra.mxu0 %v513
        %569 = vmatmul.f32.gmra.mxu0 %v506
        %v570 = vpop.f32.mrf.mxu0
        %v571 = vadd.f32 0.0, %v570
        %572 = vdwg.mxu0
        %573 = vmatpush.msra.mxu0 0.0
        %574 = vmatpush.msra.mxu0 0.0
        %575 = vmatpush.msra.mxu0 0.0
        %576 = vmatpush.msra.mxu0 0.0
        %577 = vmatpush.msra.mxu0 0.0
        %578 = vmatpush.msra.mxu0 0.0
        %579 = vmatpush.msra.mxu0 0.0
        %580 = vmatpush.msra.mxu0 0.0
        %581 = vmatpush.msra.mxu0 0.0
        %582 = vmatpush.msra.mxu0 0.0
        %583 = vmatpush.msra.mxu0 0.0
        %584 = vmatpush.msra.mxu0 0.0
        %585 = vmatpush.msra.mxu0 0.0
        %586 = vmatpush.msra.mxu0 0.0
        %587 = vmatpush.msra.mxu0 0.0
        %588 = vmatpush.msra.mxu0 %v516
        %589 = vmatmul.f32.gmra.mxu0 %v506
        %v590 = vpop.f32.mrf.mxu0
        %v591 = vadd.f32 0.0, %v590
        %592 = vdwg.mxu0
        %593 = vmatpush.msra.mxu0 0.0
        %594 = vmatpush.msra.mxu0 0.0
        %595 = vmatpush.msra.mxu0 0.0
        %596 = vmatpush.msra.mxu0 0.0
        %597 = vmatpush.msra.mxu0 0.0
        %598 = vmatpush.msra.mxu0 0.0
        %599 = vmatpush.msra.mxu0 0.0
        %600 = vmatpush.msra.mxu0 0.0
        %601 = vmatpush.msra.mxu0 0.0
        %602 = vmatpush.msra.mxu0 0.0
        %603 = vmatpush.msra.mxu0 0.0
        %604 = vmatpush.msra.mxu0 0.0
        %605 = vmatpush.msra.mxu0 0.0
        %606 = vmatpush.msra.mxu0 0.0
        %607 = vmatpush.msra.mxu0 0.0
        %608 = vmatpush.msra.mxu0 %v519
        %609 = vmatmul.f32.gmra.mxu0 %v506
        %v610 = vpop.f32.mrf.mxu0
        %v611 = vadd.f32 0.0, %v610
        %612 = vdwg.mxu0
        %613 = vmatpush.msra.mxu0 0.0
        %614 = vmatpush.msra.mxu0 0.0
        %615 = vmatpush.msra.mxu0 0.0
        %616 = vmatpush.msra.mxu0 0.0
        %617 = vmatpush.msra.mxu0 0.0
        %618 = vmatpush.msra.mxu0 0.0
        %619 = vmatpush.msra.mxu0 0.0
        %620 = vmatpush.msra.mxu0 0.0
        %621 = vmatpush.msra.mxu0 0.0
        %622 = vmatpush.msra.mxu0 0.0
        %623 = vmatpush.msra.mxu0 0.0
        %624 = vmatpush.msra.mxu0 0.0
        %625 = vmatpush.msra.mxu0 0.0
        %626 = vmatpush.msra.mxu0 0.0
        %627 = vmatpush.msra.mxu0 0.0
        %628 = vmatpush.msra.mxu0 %v522
        %629 = vmatmul.f32.gmra.mxu0 %v506
        %v630 = vpop.f32.mrf.mxu0
        %v631 = vadd.f32 0.0, %v630
        %632 = vdwg.mxu0
        %633 = vmatpush.msra.mxu0 0.0
        %634 = vmatpush.msra.mxu0 0.0
        %635 = vmatpush.msra.mxu0 0.0
        %636 = vmatpush.msra.mxu0 0.0
        %637 = vmatpush.msra.mxu0 0.0
        %638 = vmatpush.msra.mxu0 0.0
        %639 = vmatpush.msra.mxu0 0.0
        %640 = vmatpush.msra.mxu0 0.0
        %641 = vmatpush.msra.mxu0 0.0
        %642 = vmatpush.msra.mxu0 0.0
        %643 = vmatpush.msra.mxu0 0.0
        %644 = vmatpush.msra.mxu0 0.0
        %645 = vmatpush.msra.mxu0 0.0
        %646 = vmatpush.msra.mxu0 0.0
        %647 = vmatpush.msra.mxu0 0.0
        %648 = vmatpush.msra.mxu0 %v525
        %649 = vmatmul.f32.gmra.mxu0 %v506
        %v650 = vpop.f32.mrf.mxu0
        %v651 = vadd.f32 0.0, %v650
        %652 = vdwg.mxu0
        %653 = vmatpush.msra.mxu0 0.0
        %654 = vmatpush.msra.mxu0 0.0
        %655 = vmatpush.msra.mxu0 0.0
        %656 = vmatpush.msra.mxu0 0.0
        %657 = vmatpush.msra.mxu0 0.0
        %658 = vmatpush.msra.mxu0 0.0
        %659 = vmatpush.msra.mxu0 0.0
        %660 = vmatpush.msra.mxu0 0.0
        %661 = vmatpush.msra.mxu0 0.0
        %662 = vmatpush.msra.mxu0 0.0
        %663 = vmatpush.msra.mxu0 0.0
        %664 = vmatpush.msra.mxu0 0.0
        %665 = vmatpush.msra.mxu0 0.0
        %666 = vmatpush.msra.mxu0 0.0
        %667 = vmatpush.msra.mxu0 0.0
        %668 = vmatpush.msra.mxu0 %v528
        %669 = vmatmul.f32.gmra.mxu0 %v506
        %v670 = vpop.f32.mrf.mxu0
        %v671 = vadd.f32 0.0, %v670
        %672 = vdwg.mxu0
        %673 = vmatpush.msra.mxu0 0.0
        %674 = vmatpush.msra.mxu0 0.0
        %675 = vmatpush.msra.mxu0 0.0
        %676 = vmatpush.msra.mxu0 0.0
        %677 = vmatpush.msra.mxu0 0.0
        %678 = vmatpush.msra.mxu0 0.0
        %679 = vmatpush.msra.mxu0 0.0
        %680 = vmatpush.msra.mxu0 0.0
        %681 = vmatpush.msra.mxu0 0.0
        %682 = vmatpush.msra.mxu0 0.0
        %683 = vmatpush.msra.mxu0 0.0
        %684 = vmatpush.msra.mxu0 0.0
        %685 = vmatpush.msra.mxu0 0.0
        %686 = vmatpush.msra.mxu0 0.0
        %687 = vmatpush.msra.mxu0 0.0
        %688 = vmatpush.msra.mxu0 %v531
        %689 = vmatmul.f32.gmra.mxu0 %v506
        %v690 = vpop.f32.mrf.mxu0
        %v691 = vadd.f32 0.0, %v690
        %692 = vdwg.mxu0
        %v694 = vsel %vm504, %v429, 0
        %v697 = vsel %vm508, %v421, 0
        %v700 = vsel %vm508, %v422, 0
        %v703 = vsel %vm508, %v423, 0
        %v706 = vsel %vm508, %v424, 0
        %v709 = vsel %vm508, %v425, 0
        %v712 = vsel %vm508, %v426, 0
        %v715 = vsel %vm508, %v427, 0
        %v718 = vsel %vm508, %v428, 0
        %720 = vmatpush.msra.mxu0 0.0
        %721 = vmatpush.msra.mxu0 0.0
        %722 = vmatpush.msra.mxu0 0.0
        %723 = vmatpush.msra.mxu0 0.0
        %724 = vmatpush.msra.mxu0 0.0
        %725 = vmatpush.msra.mxu0 0.0
        %726 = vmatpush.msra.mxu0 0.0
        %727 = vmatpush.msra.mxu0 0.0
        %728 = vmatpush.msra.mxu0 0.0
        %729 = vmatpush.msra.mxu0 0.0
        %730 = vmatpush.msra.mxu0 0.0
        %731 = vmatpush.msra.mxu0 0.0
        %732 = vmatpush.msra.mxu0 0.0
        %733 = vmatpush.msra.mxu0 0.0
        %734 = vmatpush.msra.mxu0 0.0
        %735 = vmatpush.msra.mxu0 %v697
        %736 = vmatmul.f32.gmra.mxu0 %v694
        %v737 = vpop.f32.mrf.mxu0
        %v738 = vadd.f32 %v551, %v737
        %739 = vdwg.mxu0
        %740 = vmatpush.msra.mxu0 0.0
        %741 = vmatpush.msra.mxu0 0.0
        %742 = vmatpush.msra.mxu0 0.0
        %743 = vmatpush.msra.mxu0 0.0
        %744 = vmatpush.msra.mxu0 0.0
        %745 = vmatpush.msra.mxu0 0.0
        %746 = vmatpush.msra.mxu0 0.0
        %747 = vmatpush.msra.mxu0 0.0
        %748 = vmatpush.msra.mxu0 0.0
        %749 = vmatpush.msra.mxu0 0.0
        %750 = vmatpush.msra.mxu0 0.0
        %751 = vmatpush.msra.mxu0 0.0
        %752 = vmatpush.msra.mxu0 0.0
        %753 = vmatpush.msra.mxu0 0.0
        %754 = vmatpush.msra.mxu0 0.0
        %755 = vmatpush.msra.mxu0 %v700
        %756 = vmatmul.f32.gmra.mxu0 %v694
        %v757 = vpop.f32.mrf.mxu0
        %v758 = vadd.f32 %v571, %v757
        %759 = vdwg.mxu0
        %760 = vmatpush.msra.mxu0 0.0
        %761 = vmatpush.msra.mxu0 0.0
        %762 = vmatpush.msra.mxu0 0.0
        %763 = vmatpush.msra.mxu0 0.0
        %764 = vmatpush.msra.mxu0 0.0
        %765 = vmatpush.msra.mxu0 0.0
        %766 = vmatpush.msra.mxu0 0.0
        %767 = vmatpush.msra.mxu0 0.0
        %768 = vmatpush.msra.mxu0 0.0
        %769 = vmatpush.msra.mxu0 0.0
        %770 = vmatpush.msra.mxu0 0.0
        %771 = vmatpush.msra.mxu0 0.0
        %772 = vmatpush.msra.mxu0 0.0
        %773 = vmatpush.msra.mxu0 0.0
        %774 = vmatpush.msra.mxu0 0.0
        %775 = vmatpush.msra.mxu0 %v703
        %776 = vmatmul.f32.gmra.mxu0 %v694
        %v777 = vpop.f32.mrf.mxu0
        %v778 = vadd.f32 %v591, %v777
        %779 = vdwg.mxu0
        %780 = vmatpush.msra.mxu0 0.0
        %781 = vmatpush.msra.mxu0 0.0
        %782 = vmatpush.msra.mxu0 0.0
        %783 = vmatpush.msra.mxu0 0.0
        %784 = vmatpush.msra.mxu0 0.0
        %785 = vmatpush.msra.mxu0 0.0
        %786 = vmatpush.msra.mxu0 0.0
        %787 = vmatpush.msra.mxu0 0.0
        %788 = vmatpush.msra.mxu0 0.0
        %789 = vmatpush.msra.mxu0 0.0
        %790 = vmatpush.msra.mxu0 0.0
        %791 = vmatpush.msra.mxu0 0.0
        %792 = vmatpush.msra.mxu0 0.0
        %793 = vmatpush.msra.mxu0 0.0
        %794 = vmatpush.msra.mxu0 0.0
        %795 = vmatpush.msra.mxu0 %v706
        %796 = vmatmul.f32.gmra.mxu0 %v694
        %v797 = vpop.f32.mrf.mxu0
        %v798 = vadd.f32 %v611, %v797
        %799 = vdwg.mxu0
        %800 = vmatpush.msra.mxu0 0.0
        %801 = vmatpush.msra.mxu0 0.0
        %802 = vmatpush.msra.mxu0 0.0
        %803 = vmatpush.msra.mxu0 0.0
        %804 = vmatpush.msra.mxu0 0.0
        %805 = vmatpush.msra.mxu0 0.0
        %806 = vmatpush.msra.mxu0 0.0
        %807 = vmatpush.msra.mxu0 0.0
        %808 = vmatpush.msra.mxu0 0.0
        %809 = vmatpush.msra.mxu0 0.0
        %810 = vmatpush.msra.mxu0 0.0
        %811 = vmatpush.msra.mxu0 0.0
        %812 = vmatpush.msra.mxu0 0.0
        %813 = vmatpush.msra.mxu0 0.0
        %814 = vmatpush.msra.mxu0 0.0
        %815 = vmatpush.msra.mxu0 %v709
        %816 = vmatmul.f32.gmra.mxu0 %v694
        %v817 = vpop.f32.mrf.mxu0
        %v818 = vadd.f32 %v631, %v817
        %819 = vdwg.mxu0
        %820 = vmatpush.msra.mxu0 0.0
        %821 = vmatpush.msra.mxu0 0.0
        %822 = vmatpush.msra.mxu0 0.0
        %823 = vmatpush.msra.mxu0 0.0
        %824 = vmatpush.msra.mxu0 0.0
        %825 = vmatpush.msra.mxu0 0.0
        %826 = vmatpush.msra.mxu0 0.0
        %827 = vmatpush.msra.mxu0 0.0
        %828 = vmatpush.msra.mxu0 0.0
        %829 = vmatpush.msra.mxu0 0.0
        %830 = vmatpush.msra.mxu0 0.0
        %831 = vmatpush.msra.mxu0 0.0
        %832 = vmatpush.msra.mxu0 0.0
        %833 = vmatpush.msra.mxu0 0.0
        %834 = vmatpush.msra.mxu0 0.0
        %835 = vmatpush.msra.mxu0 %v712
        %836 = vmatmul.f32.gmra.mxu0 %v694
        %v837 = vpop.f32.mrf.mxu0
        %v838 = vadd.f32 %v651, %v837
        %839 = vdwg.mxu0
        %840 = vmatpush.msra.mxu0 0.0
        %841 = vmatpush.msra.mxu0 0.0
        %842 = vmatpush.msra.mxu0 0.0
        %843 = vmatpush.msra.mxu0 0.0
        %844 = vmatpush.msra.mxu0 0.0
        %845 = vmatpush.msra.mxu0 0.0
        %846 = vmatpush.msra.mxu0 0.0
        %847 = vmatpush.msra.mxu0 0.0
        %848 = vmatpush.msra.mxu0 0.0
        %849 = vmatpush.msra.mxu0 0.0
        %850 = vmatpush.msra.mxu0 0.0
        %851 = vmatpush.msra.mxu0 0.0
        %852 = vmatpush.msra.mxu0 0.0
        %853 = vmatpush.msra.mxu0 0.0
        %854 = vmatpush.msra.mxu0 0.0
        %855 = vmatpush.msra.mxu0 %v715
        %856 = vmatmul.f32.gmra.mxu0 %v694
        %v857 = vpop.f32.mrf.mxu0
        %v858 = vadd.f32 %v671, %v857
        %859 = vdwg.mxu0
        %860 = vmatpush.msra.mxu0 0.0
        %861 = vmatpush.msra.mxu0 0.0
        %862 = vmatpush.msra.mxu0 0.0
        %863 = vmatpush.msra.mxu0 0.0
        %864 = vmatpush.msra.mxu0 0.0
        %865 = vmatpush.msra.mxu0 0.0
        %866 = vmatpush.msra.mxu0 0.0
        %867 = vmatpush.msra.mxu0 0.0
        %868 = vmatpush.msra.mxu0 0.0
        %869 = vmatpush.msra.mxu0 0.0
        %870 = vmatpush.msra.mxu0 0.0
        %871 = vmatpush.msra.mxu0 0.0
        %872 = vmatpush.msra.mxu0 0.0
        %873 = vmatpush.msra.mxu0 0.0
        %874 = vmatpush.msra.mxu0 0.0
        %875 = vmatpush.msra.mxu0 %v718
        %876 = vmatmul.f32.gmra.mxu0 %v694
        %v877 = vpop.f32.mrf.mxu0
        %v878 = vadd.f32 %v691, %v877
        %879 = vdwg.mxu0
        %880 = vst [vmem:[#allocation1] ss:$2 sm:$0xff] %v325
        %s881 = scalar_lea.vmem [#allocation1], 16
        %882 = vst [vmem:[%s881] ss:$2 sm:$0xff] %v326
        %s883 = scalar_lea.vmem [#allocation1], 32
        %884 = vst [vmem:[%s883] ss:$2 sm:$0xff] %v327
        %s885 = scalar_lea.vmem [#allocation1], 48
        %886 = vst [vmem:[%s885] ss:$2 sm:$0xff] %v328
        %v887 = vld.sshfl [vmem:[#allocation1] sm:$0xff pattern:$0x75316420]
        %v888 = vld.sshfl [vmem:[#allocation1 + $0x8] sm:$0xff pattern:$0x75316420]
        %v889 = vld.sshfl [vmem:[#allocation1 + $0x10] sm:$0xff pattern:$0x75316420]
        %v890 = vld.sshfl [vmem:[#allocation1 + $0x18] sm:$0xff pattern:$0x75316420]
        %v891 = vld.sshfl [vmem:[#allocation1 + $0x20] sm:$0xff pattern:$0x75316420]
        %v892 = vld.sshfl [vmem:[#allocation1 + $0x28] sm:$0xff pattern:$0x75316420]
        %v893 = vld.sshfl [vmem:[#allocation1 + $0x30] sm:$0xff pattern:$0x75316420]
        %v894 = vld.sshfl [vmem:[#allocation1 + $0x38] sm:$0xff pattern:$0x75316420]
        %903 = vrot.lane.b32.xlu0 %v887, 31
        %v904 = vpop.permute.xlu0 %903
        %905 = vrot.lane.b32.xlu0 %v888, 31
        %v906 = vpop.permute.xlu0 %905
        %907 = vrot.lane.b32.xlu0 %v889, 31
        %v908 = vpop.permute.xlu0 %907
        %909 = vrot.lane.b32.xlu0 %v890, 31
        %v910 = vpop.permute.xlu0 %909
        %911 = vrot.lane.b32.xlu0 %v891, 31
        %v912 = vpop.permute.xlu0 %911
        %913 = vrot.lane.b32.xlu0 %v892, 31
        %v914 = vpop.permute.xlu0 %913
        %915 = vrot.lane.b32.xlu0 %v893, 31
        %v916 = vpop.permute.xlu0 %915
        %917 = vrot.lane.b32.xlu0 %v894, 31
        %v918 = vpop.permute.xlu0 %917
        %vm919 = vcmp.lt.s32.totalorder %v277, 31
        %v920 = vsel %vm919, %v916, %v918
        %v921 = vsel %vm919, %v914, %v916
        %v922 = vsel %vm919, %v912, %v914
        %v923 = vsel %vm919, %v910, %v912
        %v924 = vsel %vm919, %v908, %v910
        %v925 = vsel %vm919, %v906, %v908
        %v926 = vsel %vm919, %v904, %v906
        %v927 = vsel %vm919, %v918, %v904
        %vm928 = vcmp.le.s32.totalorder %v293, 30
        %vm929 = vcmp.le.s32.totalorder %v294, 30
        %vm930 = vcmp.le.s32.totalorder %v295, 30
        %vm931 = vcmp.le.s32.totalorder %v296, 30
        %vm932 = vcmp.le.s32.totalorder %v297, 30
        %vm933 = vcmp.le.s32.totalorder %v298, 30
        %vm934 = vcmp.le.s32.totalorder %v299, 30
        %vm935 = vcmp.le.s32.totalorder %v300, 30
        %vm936 = vmand %vm381, %vm928
        %vm937 = vmand %vm382, %vm929
        %vm938 = vmand %vm383, %vm930
        %vm939 = vmand %vm384, %vm931
        %vm940 = vmand %vm385, %vm932
        %vm941 = vmand %vm386, %vm933
        %vm942 = vmand %vm387, %vm934
        %vm943 = vmand %vm388, %vm935
        %v944 = vsel %vm936, 1, 0
        %v945 = vsel %vm937, 1, 0
        %v946 = vsel %vm938, 1, 0
        %v947 = vsel %vm939, 1, 0
        %v948 = vsel %vm940, 1, 0
        %v949 = vsel %vm941, 1, 0
        %v950 = vsel %vm942, 1, 0
        %v951 = vsel %vm943, 1, 0
        %v952 = vcvt.s32.f32 %v944
        %v953 = vcvt.s32.f32 %v945
        %v954 = vcvt.s32.f32 %v946
        %v955 = vcvt.s32.f32 %v947
        %v956 = vcvt.s32.f32 %v948
        %v957 = vcvt.s32.f32 %v949
        %v958 = vcvt.s32.f32 %v950
        %v959 = vcvt.s32.f32 %v951
        %v960 = vmul.f32 %v927, %v952
        %v961 = vmul.f32 %v926, %v953
        %v962 = vmul.f32 %v925, %v954
        %v963 = vmul.f32 %v924, %v955
        %v964 = vmul.f32 %v923, %v956
        %v965 = vmul.f32 %v922, %v957
        %v966 = vmul.f32 %v921, %v958
        %v967 = vmul.f32 %v920, %v959
        %s968 = scalar_lea.vmem %s1, 8
        %v969 = vld [vmem:[%s968] sm:$0xf]
        %v971 = vsel %vm504, %v969, 0
        %v974 = vsel %vm508, %v960, 0
        %v977 = vsel %vm508, %v961, 0
        %v980 = vsel %vm508, %v962, 0
        %v983 = vsel %vm508, %v963, 0
        %v986 = vsel %vm508, %v964, 0
        %v989 = vsel %vm508, %v965, 0
        %v992 = vsel %vm508, %v966, 0
        %v995 = vsel %vm508, %v967, 0
        %997 = vmatpush.msra.mxu0 0.0
        %998 = vmatpush.msra.mxu0 0.0
        %999 = vmatpush.msra.mxu0 0.0
        %1000 = vmatpush.msra.mxu0 0.0
        %1001 = vmatpush.msra.mxu0 0.0
        %1002 = vmatpush.msra.mxu0 0.0
        %1003 = vmatpush.msra.mxu0 0.0
        %1004 = vmatpush.msra.mxu0 0.0
        %1005 = vmatpush.msra.mxu0 0.0
        %1006 = vmatpush.msra.mxu0 0.0
        %1007 = vmatpush.msra.mxu0 0.0
        %1008 = vmatpush.msra.mxu0 0.0
        %1009 = vmatpush.msra.mxu0 0.0
        %1010 = vmatpush.msra.mxu0 0.0
        %1011 = vmatpush.msra.mxu0 0.0
        %1012 = vmatpush.msra.mxu0 %v974
        %1013 = vmatmul.f32.gmra.mxu0 %v971
        %v1014 = vpop.f32.mrf.mxu0
        %v1015 = vadd.f32 0.0, %v1014
        %1016 = vdwg.mxu0
        %1017 = vmatpush.msra.mxu0 0.0
        %1018 = vmatpush.msra.mxu0 0.0
        %1019 = vmatpush.msra.mxu0 0.0
        %1020 = vmatpush.msra.mxu0 0.0
        %1021 = vmatpush.msra.mxu0 0.0
        %1022 = vmatpush.msra.mxu0 0.0
        %1023 = vmatpush.msra.mxu0 0.0
        %1024 = vmatpush.msra.mxu0 0.0
        %1025 = vmatpush.msra.mxu0 0.0
        %1026 = vmatpush.msra.mxu0 0.0
        %1027 = vmatpush.msra.mxu0 0.0
        %1028 = vmatpush.msra.mxu0 0.0
        %1029 = vmatpush.msra.mxu0 0.0
        %1030 = vmatpush.msra.mxu0 0.0
        %1031 = vmatpush.msra.mxu0 0.0
        %1032 = vmatpush.msra.mxu0 %v977
        %1033 = vmatmul.f32.gmra.mxu0 %v971
        %v1034 = vpop.f32.mrf.mxu0
        %v1035 = vadd.f32 0.0, %v1034
        %1036 = vdwg.mxu0
        %1037 = vmatpush.msra.mxu0 0.0
        %1038 = vmatpush.msra.mxu0 0.0
        %1039 = vmatpush.msra.mxu0 0.0
        %1040 = vmatpush.msra.mxu0 0.0
        %1041 = vmatpush.msra.mxu0 0.0
        %1042 = vmatpush.msra.mxu0 0.0
        %1043 = vmatpush.msra.mxu0 0.0
        %1044 = vmatpush.msra.mxu0 0.0
        %1045 = vmatpush.msra.mxu0 0.0
        %1046 = vmatpush.msra.mxu0 0.0
        %1047 = vmatpush.msra.mxu0 0.0
        %1048 = vmatpush.msra.mxu0 0.0
        %1049 = vmatpush.msra.mxu0 0.0
        %1050 = vmatpush.msra.mxu0 0.0
        %1051 = vmatpush.msra.mxu0 0.0
        %1052 = vmatpush.msra.mxu0 %v980
        %1053 = vmatmul.f32.gmra.mxu0 %v971
        %v1054 = vpop.f32.mrf.mxu0
        %v1055 = vadd.f32 0.0, %v1054
        %1056 = vdwg.mxu0
        %1057 = vmatpush.msra.mxu0 0.0
        %1058 = vmatpush.msra.mxu0 0.0
        %1059 = vmatpush.msra.mxu0 0.0
        %1060 = vmatpush.msra.mxu0 0.0
        %1061 = vmatpush.msra.mxu0 0.0
        %1062 = vmatpush.msra.mxu0 0.0
        %1063 = vmatpush.msra.mxu0 0.0
        %1064 = vmatpush.msra.mxu0 0.0
        %1065 = vmatpush.msra.mxu0 0.0
        %1066 = vmatpush.msra.mxu0 0.0
        %1067 = vmatpush.msra.mxu0 0.0
        %1068 = vmatpush.msra.mxu0 0.0
        %1069 = vmatpush.msra.mxu0 0.0
        %1070 = vmatpush.msra.mxu0 0.0
        %1071 = vmatpush.msra.mxu0 0.0
        %1072 = vmatpush.msra.mxu0 %v983
        %1073 = vmatmul.f32.gmra.mxu0 %v971
        %v1074 = vpop.f32.mrf.mxu0
        %v1075 = vadd.f32 0.0, %v1074
        %1076 = vdwg.mxu0
        %1077 = vmatpush.msra.mxu0 0.0
        %1078 = vmatpush.msra.mxu0 0.0
        %1079 = vmatpush.msra.mxu0 0.0
        %1080 = vmatpush.msra.mxu0 0.0
        %1081 = vmatpush.msra.mxu0 0.0
        %1082 = vmatpush.msra.mxu0 0.0
        %1083 = vmatpush.msra.mxu0 0.0
        %1084 = vmatpush.msra.mxu0 0.0
        %1085 = vmatpush.msra.mxu0 0.0
        %1086 = vmatpush.msra.mxu0 0.0
        %1087 = vmatpush.msra.mxu0 0.0
        %1088 = vmatpush.msra.mxu0 0.0
        %1089 = vmatpush.msra.mxu0 0.0
        %1090 = vmatpush.msra.mxu0 0.0
        %1091 = vmatpush.msra.mxu0 0.0
        %1092 = vmatpush.msra.mxu0 %v986
        %1093 = vmatmul.f32.gmra.mxu0 %v971
        %v1094 = vpop.f32.mrf.mxu0
        %v1095 = vadd.f32 0.0, %v1094
        %1096 = vdwg.mxu0
        %1097 = vmatpush.msra.mxu0 0.0
        %1098 = vmatpush.msra.mxu0 0.0
        %1099 = vmatpush.msra.mxu0 0.0
        %1100 = vmatpush.msra.mxu0 0.0
        %1101 = vmatpush.msra.mxu0 0.0
        %1102 = vmatpush.msra.mxu0 0.0
        %1103 = vmatpush.msra.mxu0 0.0
        %1104 = vmatpush.msra.mxu0 0.0
        %1105 = vmatpush.msra.mxu0 0.0
        %1106 = vmatpush.msra.mxu0 0.0
        %1107 = vmatpush.msra.mxu0 0.0
        %1108 = vmatpush.msra.mxu0 0.0
        %1109 = vmatpush.msra.mxu0 0.0
        %1110 = vmatpush.msra.mxu0 0.0
        %1111 = vmatpush.msra.mxu0 0.0
        %1112 = vmatpush.msra.mxu0 %v989
        %1113 = vmatmul.f32.gmra.mxu0 %v971
        %v1114 = vpop.f32.mrf.mxu0
        %v1115 = vadd.f32 0.0, %v1114
        %1116 = vdwg.mxu0
        %1117 = vmatpush.msra.mxu0 0.0
        %1118 = vmatpush.msra.mxu0 0.0
        %1119 = vmatpush.msra.mxu0 0.0
        %1120 = vmatpush.msra.mxu0 0.0
        %1121 = vmatpush.msra.mxu0 0.0
        %1122 = vmatpush.msra.mxu0 0.0
        %1123 = vmatpush.msra.mxu0 0.0
        %1124 = vmatpush.msra.mxu0 0.0
        %1125 = vmatpush.msra.mxu0 0.0
        %1126 = vmatpush.msra.mxu0 0.0
        %1127 = vmatpush.msra.mxu0 0.0
        %1128 = vmatpush.msra.mxu0 0.0
        %1129 = vmatpush.msra.mxu0 0.0
        %1130 = vmatpush.msra.mxu0 0.0
        %1131 = vmatpush.msra.mxu0 0.0
        %1132 = vmatpush.msra.mxu0 %v992
        %1133 = vmatmul.f32.gmra.mxu0 %v971
        %v1134 = vpop.f32.mrf.mxu0
        %v1135 = vadd.f32 0.0, %v1134
        %1136 = vdwg.mxu0
        %1137 = vmatpush.msra.mxu0 0.0
        %1138 = vmatpush.msra.mxu0 0.0
        %1139 = vmatpush.msra.mxu0 0.0
        %1140 = vmatpush.msra.mxu0 0.0
        %1141 = vmatpush.msra.mxu0 0.0
        %1142 = vmatpush.msra.mxu0 0.0
        %1143 = vmatpush.msra.mxu0 0.0
        %1144 = vmatpush.msra.mxu0 0.0
        %1145 = vmatpush.msra.mxu0 0.0
        %1146 = vmatpush.msra.mxu0 0.0
        %1147 = vmatpush.msra.mxu0 0.0
        %1148 = vmatpush.msra.mxu0 0.0
        %1149 = vmatpush.msra.mxu0 0.0
        %1150 = vmatpush.msra.mxu0 0.0
        %1151 = vmatpush.msra.mxu0 0.0
        %1152 = vmatpush.msra.mxu0 %v995
        %1153 = vmatmul.f32.gmra.mxu0 %v971
        %v1154 = vpop.f32.mrf.mxu0
        %v1155 = vadd.f32 0.0, %v1154
        %1156 = vdwg.mxu0
        %v1157 = vadd.f32 %v738, %v1015
        %v1158 = vadd.f32 %v758, %v1035
        %v1159 = vadd.f32 %v778, %v1055
        %v1160 = vadd.f32 %v798, %v1075
        %v1161 = vadd.f32 %v818, %v1095
        %v1162 = vadd.f32 %v838, %v1115
        %v1163 = vadd.f32 %v858, %v1135
        %v1164 = vadd.f32 %v878, %v1155
        %1165 = vst [vmem:[#allocation1] ss:$2 sm:$0xff] %v325
        %s1166 = scalar_lea.vmem [#allocation1], 16
        %1167 = vst [vmem:[%s1166] ss:$2 sm:$0xff] %v326
        %s1168 = scalar_lea.vmem [#allocation1], 32
        %1169 = vst [vmem:[%s1168] ss:$2 sm:$0xff] %v327
        %s1170 = scalar_lea.vmem [#allocation1], 48
        %1171 = vst [vmem:[%s1170] ss:$2 sm:$0xff] %v328
        %v1172 = vld.sshfl [vmem:[#allocation1] sm:$0xff pattern:$0x75316420]
        %v1173 = vld.sshfl [vmem:[#allocation1 + $0x8] sm:$0xff pattern:$0x75316420]
        %v1174 = vld.sshfl [vmem:[#allocation1 + $0x10] sm:$0xff pattern:$0x75316420]
        %v1175 = vld.sshfl [vmem:[#allocation1 + $0x18] sm:$0xff pattern:$0x75316420]
        %v1176 = vld.sshfl [vmem:[#allocation1 + $0x20] sm:$0xff pattern:$0x75316420]
        %v1177 = vld.sshfl [vmem:[#allocation1 + $0x28] sm:$0xff pattern:$0x75316420]
        %v1178 = vld.sshfl [vmem:[#allocation1 + $0x30] sm:$0xff pattern:$0x75316420]
        %v1179 = vld.sshfl [vmem:[#allocation1 + $0x38] sm:$0xff pattern:$0x75316420]
        %1188 = vrot.lane.b32.xlu0 %v1172, 1
        %v1189 = vpop.permute.xlu0 %1188
        %1190 = vrot.lane.b32.xlu0 %v1173, 1
        %v1191 = vpop.permute.xlu0 %1190
        %1192 = vrot.lane.b32.xlu0 %v1174, 1
        %v1193 = vpop.permute.xlu0 %1192
        %1194 = vrot.lane.b32.xlu0 %v1175, 1
        %v1195 = vpop.permute.xlu0 %1194
        %1196 = vrot.lane.b32.xlu0 %v1176, 1
        %v1197 = vpop.permute.xlu0 %1196
        %1198 = vrot.lane.b32.xlu0 %v1177, 1
        %v1199 = vpop.permute.xlu0 %1198
        %1200 = vrot.lane.b32.xlu0 %v1178, 1
        %v1201 = vpop.permute.xlu0 %1200
        %1202 = vrot.lane.b32.xlu0 %v1179, 1
        %v1203 = vpop.permute.xlu0 %1202
        %vm1204 = vcmp.lt.s32.totalorder %v277, 1
        %v1205 = vsel %vm1204, %v1201, %v1203
        %v1206 = vsel %vm1204, %v1199, %v1201
        %v1207 = vsel %vm1204, %v1197, %v1199
        %v1208 = vsel %vm1204, %v1195, %v1197
        %v1209 = vsel %vm1204, %v1193, %v1195
        %v1210 = vsel %vm1204, %v1191, %v1193
        %v1211 = vsel %vm1204, %v1189, %v1191
        %v1212 = vsel %vm1204, %v1203, %v1189
        %v1213 = vsel %vm389, 1, 0
        %v1214 = vsel %vm390, 1, 0
        %v1215 = vsel %vm391, 1, 0
        %v1216 = vsel %vm392, 1, 0
        %v1217 = vsel %vm393, 1, 0
        %v1218 = vsel %vm394, 1, 0
        %v1219 = vsel %vm395, 1, 0
        %v1220 = vsel %vm396, 1, 0
        %v1221 = vcvt.s32.f32 %v1213
        %v1222 = vcvt.s32.f32 %v1214
        %v1223 = vcvt.s32.f32 %v1215
        %v1224 = vcvt.s32.f32 %v1216
        %v1225 = vcvt.s32.f32 %v1217
        %v1226 = vcvt.s32.f32 %v1218
        %v1227 = vcvt.s32.f32 %v1219
        %v1228 = vcvt.s32.f32 %v1220
        %v1229 = vmul.f32 %v1212, %v1221
        %v1230 = vmul.f32 %v1211, %v1222
        %v1231 = vmul.f32 %v1210, %v1223
        %v1232 = vmul.f32 %v1209, %v1224
        %v1233 = vmul.f32 %v1208, %v1225
        %v1234 = vmul.f32 %v1207, %v1226
        %v1235 = vmul.f32 %v1206, %v1227
        %v1236 = vmul.f32 %v1205, %v1228
        %s1237 = scalar_lea.vmem %s1, 12
        %v1238 = vld [vmem:[%s1237] sm:$0xf]
        %v1240 = vsel %vm504, %v1238, 0
        %v1243 = vsel %vm508, %v1229, 0
        %v1246 = vsel %vm508, %v1230, 0
        %v1249 = vsel %vm508, %v1231, 0
        %v1252 = vsel %vm508, %v1232, 0
        %v1255 = vsel %vm508, %v1233, 0
        %v1258 = vsel %vm508, %v1234, 0
        %v1261 = vsel %vm508, %v1235, 0
        %v1264 = vsel %vm508, %v1236, 0
        %1266 = vmatpush.msra.mxu0 0.0
        %1267 = vmatpush.msra.mxu0 0.0
        %1268 = vmatpush.msra.mxu0 0.0
        %1269 = vmatpush.msra.mxu0 0.0
        %1270 = vmatpush.msra.mxu0 0.0
        %1271 = vmatpush.msra.mxu0 0.0
        %1272 = vmatpush.msra.mxu0 0.0
        %1273 = vmatpush.msra.mxu0 0.0
        %1274 = vmatpush.msra.mxu0 0.0
        %1275 = vmatpush.msra.mxu0 0.0
        %1276 = vmatpush.msra.mxu0 0.0
        %1277 = vmatpush.msra.mxu0 0.0
        %1278 = vmatpush.msra.mxu0 0.0
        %1279 = vmatpush.msra.mxu0 0.0
        %1280 = vmatpush.msra.mxu0 0.0
        %1281 = vmatpush.msra.mxu0 %v1243
        %1282 = vmatmul.f32.gmra.mxu0 %v1240
        %v1283 = vpop.f32.mrf.mxu0
        %v1284 = vadd.f32 0.0, %v1283
        %1285 = vdwg.mxu0
        %1286 = vmatpush.msra.mxu0 0.0
        %1287 = vmatpush.msra.mxu0 0.0
        %1288 = vmatpush.msra.mxu0 0.0
        %1289 = vmatpush.msra.mxu0 0.0
        %1290 = vmatpush.msra.mxu0 0.0
        %1291 = vmatpush.msra.mxu0 0.0
        %1292 = vmatpush.msra.mxu0 0.0
        %1293 = vmatpush.msra.mxu0 0.0
        %1294 = vmatpush.msra.mxu0 0.0
        %1295 = vmatpush.msra.mxu0 0.0
        %1296 = vmatpush.msra.mxu0 0.0
        %1297 = vmatpush.msra.mxu0 0.0
        %1298 = vmatpush.msra.mxu0 0.0
        %1299 = vmatpush.msra.mxu0 0.0
        %1300 = vmatpush.msra.mxu0 0.0
        %1301 = vmatpush.msra.mxu0 %v1246
        %1302 = vmatmul.f32.gmra.mxu0 %v1240
        %v1303 = vpop.f32.mrf.mxu0
        %v1304 = vadd.f32 0.0, %v1303
        %1305 = vdwg.mxu0
        %1306 = vmatpush.msra.mxu0 0.0
        %1307 = vmatpush.msra.mxu0 0.0
        %1308 = vmatpush.msra.mxu0 0.0
        %1309 = vmatpush.msra.mxu0 0.0
        %1310 = vmatpush.msra.mxu0 0.0
        %1311 = vmatpush.msra.mxu0 0.0
        %1312 = vmatpush.msra.mxu0 0.0
        %1313 = vmatpush.msra.mxu0 0.0
        %1314 = vmatpush.msra.mxu0 0.0
        %1315 = vmatpush.msra.mxu0 0.0
        %1316 = vmatpush.msra.mxu0 0.0
        %1317 = vmatpush.msra.mxu0 0.0
        %1318 = vmatpush.msra.mxu0 0.0
        %1319 = vmatpush.msra.mxu0 0.0
        %1320 = vmatpush.msra.mxu0 0.0
        %1321 = vmatpush.msra.mxu0 %v1249
        %1322 = vmatmul.f32.gmra.mxu0 %v1240
        %v1323 = vpop.f32.mrf.mxu0
        %v1324 = vadd.f32 0.0, %v1323
        %1325 = vdwg.mxu0
        %1326 = vmatpush.msra.mxu0 0.0
        %1327 = vmatpush.msra.mxu0 0.0
        %1328 = vmatpush.msra.mxu0 0.0
        %1329 = vmatpush.msra.mxu0 0.0
        %1330 = vmatpush.msra.mxu0 0.0
        %1331 = vmatpush.msra.mxu0 0.0
        %1332 = vmatpush.msra.mxu0 0.0
        %1333 = vmatpush.msra.mxu0 0.0
        %1334 = vmatpush.msra.mxu0 0.0
        %1335 = vmatpush.msra.mxu0 0.0
        %1336 = vmatpush.msra.mxu0 0.0
        %1337 = vmatpush.msra.mxu0 0.0
        %1338 = vmatpush.msra.mxu0 0.0
        %1339 = vmatpush.msra.mxu0 0.0
        %1340 = vmatpush.msra.mxu0 0.0
        %1341 = vmatpush.msra.mxu0 %v1252
        %1342 = vmatmul.f32.gmra.mxu0 %v1240
        %v1343 = vpop.f32.mrf.mxu0
        %v1344 = vadd.f32 0.0, %v1343
        %1345 = vdwg.mxu0
        %1346 = vmatpush.msra.mxu0 0.0
        %1347 = vmatpush.msra.mxu0 0.0
        %1348 = vmatpush.msra.mxu0 0.0
        %1349 = vmatpush.msra.mxu0 0.0
        %1350 = vmatpush.msra.mxu0 0.0
        %1351 = vmatpush.msra.mxu0 0.0
        %1352 = vmatpush.msra.mxu0 0.0
        %1353 = vmatpush.msra.mxu0 0.0
        %1354 = vmatpush.msra.mxu0 0.0
        %1355 = vmatpush.msra.mxu0 0.0
        %1356 = vmatpush.msra.mxu0 0.0
        %1357 = vmatpush.msra.mxu0 0.0
        %1358 = vmatpush.msra.mxu0 0.0
        %1359 = vmatpush.msra.mxu0 0.0
        %1360 = vmatpush.msra.mxu0 0.0
        %1361 = vmatpush.msra.mxu0 %v1255
        %1362 = vmatmul.f32.gmra.mxu0 %v1240
        %v1363 = vpop.f32.mrf.mxu0
        %v1364 = vadd.f32 0.0, %v1363
        %1365 = vdwg.mxu0
        %1366 = vmatpush.msra.mxu0 0.0
        %1367 = vmatpush.msra.mxu0 0.0
        %1368 = vmatpush.msra.mxu0 0.0
        %1369 = vmatpush.msra.mxu0 0.0
        %1370 = vmatpush.msra.mxu0 0.0
        %1371 = vmatpush.msra.mxu0 0.0
        %1372 = vmatpush.msra.mxu0 0.0
        %1373 = vmatpush.msra.mxu0 0.0
        %1374 = vmatpush.msra.mxu0 0.0
        %1375 = vmatpush.msra.mxu0 0.0
        %1376 = vmatpush.msra.mxu0 0.0
        %1377 = vmatpush.msra.mxu0 0.0
        %1378 = vmatpush.msra.mxu0 0.0
        %1379 = vmatpush.msra.mxu0 0.0
        %1380 = vmatpush.msra.mxu0 0.0
        %1381 = vmatpush.msra.mxu0 %v1258
        %1382 = vmatmul.f32.gmra.mxu0 %v1240
        %v1383 = vpop.f32.mrf.mxu0
        %v1384 = vadd.f32 0.0, %v1383
        %1385 = vdwg.mxu0
        %1386 = vmatpush.msra.mxu0 0.0
        %1387 = vmatpush.msra.mxu0 0.0
        %1388 = vmatpush.msra.mxu0 0.0
        %1389 = vmatpush.msra.mxu0 0.0
        %1390 = vmatpush.msra.mxu0 0.0
        %1391 = vmatpush.msra.mxu0 0.0
        %1392 = vmatpush.msra.mxu0 0.0
        %1393 = vmatpush.msra.mxu0 0.0
        %1394 = vmatpush.msra.mxu0 0.0
        %1395 = vmatpush.msra.mxu0 0.0
        %1396 = vmatpush.msra.mxu0 0.0
        %1397 = vmatpush.msra.mxu0 0.0
        %1398 = vmatpush.msra.mxu0 0.0
        %1399 = vmatpush.msra.mxu0 0.0
        %1400 = vmatpush.msra.mxu0 0.0
        %1401 = vmatpush.msra.mxu0 %v1261
        %1402 = vmatmul.f32.gmra.mxu0 %v1240
        %v1403 = vpop.f32.mrf.mxu0
        %v1404 = vadd.f32 0.0, %v1403
        %1405 = vdwg.mxu0
        %1406 = vmatpush.msra.mxu0 0.0
        %1407 = vmatpush.msra.mxu0 0.0
        %1408 = vmatpush.msra.mxu0 0.0
        %1409 = vmatpush.msra.mxu0 0.0
        %1410 = vmatpush.msra.mxu0 0.0
        %1411 = vmatpush.msra.mxu0 0.0
        %1412 = vmatpush.msra.mxu0 0.0
        %1413 = vmatpush.msra.mxu0 0.0
        %1414 = vmatpush.msra.mxu0 0.0
        %1415 = vmatpush.msra.mxu0 0.0
        %1416 = vmatpush.msra.mxu0 0.0
        %1417 = vmatpush.msra.mxu0 0.0
        %1418 = vmatpush.msra.mxu0 0.0
        %1419 = vmatpush.msra.mxu0 0.0
        %1420 = vmatpush.msra.mxu0 0.0
        %1421 = vmatpush.msra.mxu0 %v1264
        %1422 = vmatmul.f32.gmra.mxu0 %v1240
        %v1423 = vpop.f32.mrf.mxu0
        %v1424 = vadd.f32 0.0, %v1423
        %1425 = vdwg.mxu0
        %v1426 = vadd.f32 %v1157, %v1284
        %v1427 = vadd.f32 %v1158, %v1304
        %v1428 = vadd.f32 %v1159, %v1324
        %v1429 = vadd.f32 %v1160, %v1344
        %v1430 = vadd.f32 %v1161, %v1364
        %v1431 = vadd.f32 %v1162, %v1384
        %v1432 = vadd.f32 %v1163, %v1404
        %v1433 = vadd.f32 %v1164, %v1424
        %s1434 = scalar_lea.vmem %s1, 16
        %v1435 = vld [vmem:[%s1434] sm:$0xf]
        %1436 = vst [vmem:[#allocation1] ss:$2 sm:$0xff] %v325
        %s1437 = scalar_lea.vmem [#allocation1], 16
        %1438 = vst [vmem:[%s1437] ss:$2 sm:$0xff] %v326
        %s1439 = scalar_lea.vmem [#allocation1], 32
        %1440 = vst [vmem:[%s1439] ss:$2 sm:$0xff] %v327
        %s1441 = scalar_lea.vmem [#allocation1], 48
        %1442 = vst [vmem:[%s1441] ss:$2 sm:$0xff] %v328
        %v1443 = vld.sshfl [vmem:[#allocation1] sm:$0xff pattern:$0x75316420]
        %v1444 = vld.sshfl [vmem:[#allocation1 + $0x8] sm:$0xff pattern:$0x75316420]
        %v1445 = vld.sshfl [vmem:[#allocation1 + $0x10] sm:$0xff pattern:$0x75316420]
        %v1446 = vld.sshfl [vmem:[#allocation1 + $0x18] sm:$0xff pattern:$0x75316420]
        %v1447 = vld.sshfl [vmem:[#allocation1 + $0x20] sm:$0xff pattern:$0x75316420]
        %v1448 = vld.sshfl [vmem:[#allocation1 + $0x28] sm:$0xff pattern:$0x75316420]
        %v1449 = vld.sshfl [vmem:[#allocation1 + $0x30] sm:$0xff pattern:$0x75316420]
        %v1450 = vld.sshfl [vmem:[#allocation1 + $0x38] sm:$0xff pattern:$0x75316420]
        %v1452 = vsel %vm504, %v1435, 0
        %v1454 = vsel %vm508, %v1443, 0
        %v1456 = vsel %vm508, %v1444, 0
        %v1458 = vsel %vm508, %v1445, 0
        %v1460 = vsel %vm508, %v1446, 0
        %v1462 = vsel %vm508, %v1447, 0
        %v1464 = vsel %vm508, %v1448, 0
        %v1466 = vsel %vm508, %v1449, 0
        %v1468 = vsel %vm508, %v1450, 0
        %1470 = vmatpush.msra.mxu0 0.0
        %1471 = vmatpush.msra.mxu0 0.0
        %1472 = vmatpush.msra.mxu0 0.0
        %1473 = vmatpush.msra.mxu0 0.0
        %1474 = vmatpush.msra.mxu0 0.0
        %1475 = vmatpush.msra.mxu0 0.0
        %1476 = vmatpush.msra.mxu0 0.0
        %1477 = vmatpush.msra.mxu0 0.0
        %1478 = vmatpush.msra.mxu0 0.0
        %1479 = vmatpush.msra.mxu0 0.0
        %1480 = vmatpush.msra.mxu0 0.0
        %1481 = vmatpush.msra.mxu0 0.0
        %1482 = vmatpush.msra.mxu0 0.0
        %1483 = vmatpush.msra.mxu0 0.0
        %1484 = vmatpush.msra.mxu0 0.0
        %1485 = vmatpush.msra.mxu0 %v1454
        %1486 = vmatmul.f32.gmra.mxu0 %v1452
        %v1487 = vpop.f32.mrf.mxu0
        %v1488 = vadd.f32 0.0, %v1487
        %1489 = vdwg.mxu0
        %1490 = vmatpush.msra.mxu0 0.0
        %1491 = vmatpush.msra.mxu0 0.0
        %1492 = vmatpush.msra.mxu0 0.0
        %1493 = vmatpush.msra.mxu0 0.0
        %1494 = vmatpush.msra.mxu0 0.0
        %1495 = vmatpush.msra.mxu0 0.0
        %1496 = vmatpush.msra.mxu0 0.0
        %1497 = vmatpush.msra.mxu0 0.0
        %1498 = vmatpush.msra.mxu0 0.0
        %1499 = vmatpush.msra.mxu0 0.0
        %1500 = vmatpush.msra.mxu0 0.0
        %1501 = vmatpush.msra.mxu0 0.0
        %1502 = vmatpush.msra.mxu0 0.0
        %1503 = vmatpush.msra.mxu0 0.0
        %1504 = vmatpush.msra.mxu0 0.0
        %1505 = vmatpush.msra.mxu0 %v1456
        %1506 = vmatmul.f32.gmra.mxu0 %v1452
        %v1507 = vpop.f32.mrf.mxu0
        %v1508 = vadd.f32 0.0, %v1507
        %1509 = vdwg.mxu0
        %1510 = vmatpush.msra.mxu0 0.0
        %1511 = vmatpush.msra.mxu0 0.0
        %1512 = vmatpush.msra.mxu0 0.0
        %1513 = vmatpush.msra.mxu0 0.0
        %1514 = vmatpush.msra.mxu0 0.0
        %1515 = vmatpush.msra.mxu0 0.0
        %1516 = vmatpush.msra.mxu0 0.0
        %1517 = vmatpush.msra.mxu0 0.0
        %1518 = vmatpush.msra.mxu0 0.0
        %1519 = vmatpush.msra.mxu0 0.0
        %1520 = vmatpush.msra.mxu0 0.0
        %1521 = vmatpush.msra.mxu0 0.0
        %1522 = vmatpush.msra.mxu0 0.0
        %1523 = vmatpush.msra.mxu0 0.0
        %1524 = vmatpush.msra.mxu0 0.0
        %1525 = vmatpush.msra.mxu0 %v1458
        %1526 = vmatmul.f32.gmra.mxu0 %v1452
        %v1527 = vpop.f32.mrf.mxu0
        %v1528 = vadd.f32 0.0, %v1527
        %1529 = vdwg.mxu0
        %1530 = vmatpush.msra.mxu0 0.0
        %1531 = vmatpush.msra.mxu0 0.0
        %1532 = vmatpush.msra.mxu0 0.0
        %1533 = vmatpush.msra.mxu0 0.0
        %1534 = vmatpush.msra.mxu0 0.0
        %1535 = vmatpush.msra.mxu0 0.0
        %1536 = vmatpush.msra.mxu0 0.0
        %1537 = vmatpush.msra.mxu0 0.0
        %1538 = vmatpush.msra.mxu0 0.0
        %1539 = vmatpush.msra.mxu0 0.0
        %1540 = vmatpush.msra.mxu0 0.0
        %1541 = vmatpush.msra.mxu0 0.0
        %1542 = vmatpush.msra.mxu0 0.0
        %1543 = vmatpush.msra.mxu0 0.0
        %1544 = vmatpush.msra.mxu0 0.0
        %1545 = vmatpush.msra.mxu0 %v1460
        %1546 = vmatmul.f32.gmra.mxu0 %v1452
        %v1547 = vpop.f32.mrf.mxu0
        %v1548 = vadd.f32 0.0, %v1547
        %1549 = vdwg.mxu0
        %1550 = vmatpush.msra.mxu0 0.0
        %1551 = vmatpush.msra.mxu0 0.0
        %1552 = vmatpush.msra.mxu0 0.0
        %1553 = vmatpush.msra.mxu0 0.0
        %1554 = vmatpush.msra.mxu0 0.0
        %1555 = vmatpush.msra.mxu0 0.0
        %1556 = vmatpush.msra.mxu0 0.0
        %1557 = vmatpush.msra.mxu0 0.0
        %1558 = vmatpush.msra.mxu0 0.0
        %1559 = vmatpush.msra.mxu0 0.0
        %1560 = vmatpush.msra.mxu0 0.0
        %1561 = vmatpush.msra.mxu0 0.0
        %1562 = vmatpush.msra.mxu0 0.0
        %1563 = vmatpush.msra.mxu0 0.0
        %1564 = vmatpush.msra.mxu0 0.0
        %1565 = vmatpush.msra.mxu0 %v1462
        %1566 = vmatmul.f32.gmra.mxu0 %v1452
        %v1567 = vpop.f32.mrf.mxu0
        %v1568 = vadd.f32 0.0, %v1567
        %1569 = vdwg.mxu0
        %1570 = vmatpush.msra.mxu0 0.0
        %1571 = vmatpush.msra.mxu0 0.0
        %1572 = vmatpush.msra.mxu0 0.0
        %1573 = vmatpush.msra.mxu0 0.0
        %1574 = vmatpush.msra.mxu0 0.0
        %1575 = vmatpush.msra.mxu0 0.0
        %1576 = vmatpush.msra.mxu0 0.0
        %1577 = vmatpush.msra.mxu0 0.0
        %1578 = vmatpush.msra.mxu0 0.0
        %1579 = vmatpush.msra.mxu0 0.0
        %1580 = vmatpush.msra.mxu0 0.0
        %1581 = vmatpush.msra.mxu0 0.0
        %1582 = vmatpush.msra.mxu0 0.0
        %1583 = vmatpush.msra.mxu0 0.0
        %1584 = vmatpush.msra.mxu0 0.0
        %1585 = vmatpush.msra.mxu0 %v1464
        %1586 = vmatmul.f32.gmra.mxu0 %v1452
        %v1587 = vpop.f32.mrf.mxu0
        %v1588 = vadd.f32 0.0, %v1587
        %1589 = vdwg.mxu0
        %1590 = vmatpush.msra.mxu0 0.0
        %1591 = vmatpush.msra.mxu0 0.0
        %1592 = vmatpush.msra.mxu0 0.0
        %1593 = vmatpush.msra.mxu0 0.0
        %1594 = vmatpush.msra.mxu0 0.0
        %1595 = vmatpush.msra.mxu0 0.0
        %1596 = vmatpush.msra.mxu0 0.0
        %1597 = vmatpush.msra.mxu0 0.0
        %1598 = vmatpush.msra.mxu0 0.0
        %1599 = vmatpush.msra.mxu0 0.0
        %1600 = vmatpush.msra.mxu0 0.0
        %1601 = vmatpush.msra.mxu0 0.0
        %1602 = vmatpush.msra.mxu0 0.0
        %1603 = vmatpush.msra.mxu0 0.0
        %1604 = vmatpush.msra.mxu0 0.0
        %1605 = vmatpush.msra.mxu0 %v1466
        %1606 = vmatmul.f32.gmra.mxu0 %v1452
        %v1607 = vpop.f32.mrf.mxu0
        %v1608 = vadd.f32 0.0, %v1607
        %1609 = vdwg.mxu0
        %1610 = vmatpush.msra.mxu0 0.0
        %1611 = vmatpush.msra.mxu0 0.0
        %1612 = vmatpush.msra.mxu0 0.0
        %1613 = vmatpush.msra.mxu0 0.0
        %1614 = vmatpush.msra.mxu0 0.0
        %1615 = vmatpush.msra.mxu0 0.0
        %1616 = vmatpush.msra.mxu0 0.0
        %1617 = vmatpush.msra.mxu0 0.0
        %1618 = vmatpush.msra.mxu0 0.0
        %1619 = vmatpush.msra.mxu0 0.0
        %1620 = vmatpush.msra.mxu0 0.0
        %1621 = vmatpush.msra.mxu0 0.0
        %1622 = vmatpush.msra.mxu0 0.0
        %1623 = vmatpush.msra.mxu0 0.0
        %1624 = vmatpush.msra.mxu0 0.0
        %1625 = vmatpush.msra.mxu0 %v1468
        %1626 = vmatmul.f32.gmra.mxu0 %v1452
        %v1627 = vpop.f32.mrf.mxu0
        %v1628 = vadd.f32 0.0, %v1627
        %1629 = vdwg.mxu0
        %v1630 = vadd.f32 %v1426, %v1488
        %v1631 = vadd.f32 %v1427, %v1508
        %v1632 = vadd.f32 %v1428, %v1528
        %v1633 = vadd.f32 %v1429, %v1548
        %v1634 = vadd.f32 %v1430, %v1568
        %v1635 = vadd.f32 %v1431, %v1588
        %v1636 = vadd.f32 %v1432, %v1608
        %v1637 = vadd.f32 %v1433, %v1628
        %1638 = vst [vmem:[#allocation1] ss:$2 sm:$0xff] %v325
        %s1639 = scalar_lea.vmem [#allocation1], 16
        %1640 = vst [vmem:[%s1639] ss:$2 sm:$0xff] %v326
        %s1641 = scalar_lea.vmem [#allocation1], 32
        %1642 = vst [vmem:[%s1641] ss:$2 sm:$0xff] %v327
        %s1643 = scalar_lea.vmem [#allocation1], 48
        %1644 = vst [vmem:[%s1643] ss:$2 sm:$0xff] %v328
        %v1645 = vld.sshfl [vmem:[#allocation1] sm:$0xff pattern:$0x75316420]
        %v1646 = vld.sshfl [vmem:[#allocation1 + $0x8] sm:$0xff pattern:$0x75316420]
        %v1647 = vld.sshfl [vmem:[#allocation1 + $0x10] sm:$0xff pattern:$0x75316420]
        %v1648 = vld.sshfl [vmem:[#allocation1 + $0x18] sm:$0xff pattern:$0x75316420]
        %v1649 = vld.sshfl [vmem:[#allocation1 + $0x20] sm:$0xff pattern:$0x75316420]
        %v1650 = vld.sshfl [vmem:[#allocation1 + $0x28] sm:$0xff pattern:$0x75316420]
        %v1651 = vld.sshfl [vmem:[#allocation1 + $0x30] sm:$0xff pattern:$0x75316420]
        %v1652 = vld.sshfl [vmem:[#allocation1 + $0x38] sm:$0xff pattern:$0x75316420]
        %1661 = vrot.lane.b32.xlu0 %v1645, 127
        %v1662 = vpop.permute.xlu0 %1661
        %1663 = vrot.lane.b32.xlu0 %v1646, 127
        %v1664 = vpop.permute.xlu0 %1663
        %1665 = vrot.lane.b32.xlu0 %v1647, 127
        %v1666 = vpop.permute.xlu0 %1665
        %1667 = vrot.lane.b32.xlu0 %v1648, 127
        %v1668 = vpop.permute.xlu0 %1667
        %1669 = vrot.lane.b32.xlu0 %v1649, 127
        %v1670 = vpop.permute.xlu0 %1669
        %1671 = vrot.lane.b32.xlu0 %v1650, 127
        %v1672 = vpop.permute.xlu0 %1671
        %1673 = vrot.lane.b32.xlu0 %v1651, 127
        %v1674 = vpop.permute.xlu0 %1673
        %1675 = vrot.lane.b32.xlu0 %v1652, 127
        %v1676 = vpop.permute.xlu0 %1675
        %vm1677 = vcmp.lt.s32.totalorder %v277, 127
        %v1678 = vsel %vm1677, %v1674, %v1676
        %v1679 = vsel %vm1677, %v1672, %v1674
        %v1680 = vsel %vm1677, %v1670, %v1672
        %v1681 = vsel %vm1677, %v1668, %v1670
        %v1682 = vsel %vm1677, %v1666, %v1668
        %v1683 = vsel %vm1677, %v1664, %v1666
        %v1684 = vsel %vm1677, %v1662, %v1664
        %v1685 = vsel %vm1677, %v1676, %v1662
        %v1686 = vsel %vm928, 1, 0
        %v1687 = vsel %vm929, 1, 0
        %v1688 = vsel %vm930, 1, 0
        %v1689 = vsel %vm931, 1, 0
        %v1690 = vsel %vm932, 1, 0
        %v1691 = vsel %vm933, 1, 0
        %v1692 = vsel %vm934, 1, 0
        %v1693 = vsel %vm935, 1, 0
        %v1694 = vcvt.s32.f32 %v1686
        %v1695 = vcvt.s32.f32 %v1687
        %v1696 = vcvt.s32.f32 %v1688
        %v1697 = vcvt.s32.f32 %v1689
        %v1698 = vcvt.s32.f32 %v1690
        %v1699 = vcvt.s32.f32 %v1691
        %v1700 = vcvt.s32.f32 %v1692
        %v1701 = vcvt.s32.f32 %v1693
        %v1702 = vmul.f32 %v1684, %v1694
        %v1703 = vmul.f32 %v1683, %v1695
        %v1704 = vmul.f32 %v1682, %v1696
        %v1705 = vmul.f32 %v1681, %v1697
        %v1706 = vmul.f32 %v1680, %v1698
        %v1707 = vmul.f32 %v1679, %v1699
        %v1708 = vmul.f32 %v1678, %v1700
        %v1709 = vmul.f32 %v1685, %v1701
        %s1710 = scalar_lea.vmem %s1, 20
        %v1711 = vld [vmem:[%s1710] sm:$0xf]
        %v1713 = vsel %vm504, %v1711, 0
        %v1716 = vsel %vm508, %v1702, 0
        %v1719 = vsel %vm508, %v1703, 0
        %v1722 = vsel %vm508, %v1704, 0
        %v1725 = vsel %vm508, %v1705, 0
        %v1728 = vsel %vm508, %v1706, 0
        %v1731 = vsel %vm508, %v1707, 0
        %v1734 = vsel %vm508, %v1708, 0
        %v1737 = vsel %vm508, %v1709, 0
        %1739 = vmatpush.msra.mxu0 0.0
        %1740 = vmatpush.msra.mxu0 0.0
        %1741 = vmatpush.msra.mxu0 0.0
        %1742 = vmatpush.msra.mxu0 0.0
        %1743 = vmatpush.msra.mxu0 0.0
        %1744 = vmatpush.msra.mxu0 0.0
        %1745 = vmatpush.msra.mxu0 0.0
        %1746 = vmatpush.msra.mxu0 0.0
        %1747 = vmatpush.msra.mxu0 0.0
        %1748 = vmatpush.msra.mxu0 0.0
        %1749 = vmatpush.msra.mxu0 0.0
        %1750 = vmatpush.msra.mxu0 0.0
        %1751 = vmatpush.msra.mxu0 0.0
        %1752 = vmatpush.msra.mxu0 0.0
        %1753 = vmatpush.msra.mxu0 0.0
        %1754 = vmatpush.msra.mxu0 %v1716
        %1755 = vmatmul.f32.gmra.mxu0 %v1713
        %v1756 = vpop.f32.mrf.mxu0
        %v1757 = vadd.f32 0.0, %v1756
        %1758 = vdwg.mxu0
        %1759 = vmatpush.msra.mxu0 0.0
        %1760 = vmatpush.msra.mxu0 0.0
        %1761 = vmatpush.msra.mxu0 0.0
        %1762 = vmatpush.msra.mxu0 0.0
        %1763 = vmatpush.msra.mxu0 0.0
        %1764 = vmatpush.msra.mxu0 0.0
        %1765 = vmatpush.msra.mxu0 0.0
        %1766 = vmatpush.msra.mxu0 0.0
        %1767 = vmatpush.msra.mxu0 0.0
        %1768 = vmatpush.msra.mxu0 0.0
        %1769 = vmatpush.msra.mxu0 0.0
        %1770 = vmatpush.msra.mxu0 0.0
        %1771 = vmatpush.msra.mxu0 0.0
        %1772 = vmatpush.msra.mxu0 0.0
        %1773 = vmatpush.msra.mxu0 0.0
        %1774 = vmatpush.msra.mxu0 %v1719
        %1775 = vmatmul.f32.gmra.mxu0 %v1713
        %v1776 = vpop.f32.mrf.mxu0
        %v1777 = vadd.f32 0.0, %v1776
        %1778 = vdwg.mxu0
        %1779 = vmatpush.msra.mxu0 0.0
        %1780 = vmatpush.msra.mxu0 0.0
        %1781 = vmatpush.msra.mxu0 0.0
        %1782 = vmatpush.msra.mxu0 0.0
        %1783 = vmatpush.msra.mxu0 0.0
        %1784 = vmatpush.msra.mxu0 0.0
        %1785 = vmatpush.msra.mxu0 0.0
        %1786 = vmatpush.msra.mxu0 0.0
        %1787 = vmatpush.msra.mxu0 0.0
        %1788 = vmatpush.msra.mxu0 0.0
        %1789 = vmatpush.msra.mxu0 0.0
        %1790 = vmatpush.msra.mxu0 0.0
        %1791 = vmatpush.msra.mxu0 0.0
        %1792 = vmatpush.msra.mxu0 0.0
        %1793 = vmatpush.msra.mxu0 0.0
        %1794 = vmatpush.msra.mxu0 %v1722
        %1795 = vmatmul.f32.gmra.mxu0 %v1713
        %v1796 = vpop.f32.mrf.mxu0
        %v1797 = vadd.f32 0.0, %v1796
        %1798 = vdwg.mxu0
        %1799 = vmatpush.msra.mxu0 0.0
        %1800 = vmatpush.msra.mxu0 0.0
        %1801 = vmatpush.msra.mxu0 0.0
        %1802 = vmatpush.msra.mxu0 0.0
        %1803 = vmatpush.msra.mxu0 0.0
        %1804 = vmatpush.msra.mxu0 0.0
        %1805 = vmatpush.msra.mxu0 0.0
        %1806 = vmatpush.msra.mxu0 0.0
        %1807 = vmatpush.msra.mxu0 0.0
        %1808 = vmatpush.msra.mxu0 0.0
        %1809 = vmatpush.msra.mxu0 0.0
        %1810 = vmatpush.msra.mxu0 0.0
        %1811 = vmatpush.msra.mxu0 0.0
        %1812 = vmatpush.msra.mxu0 0.0
        %1813 = vmatpush.msra.mxu0 0.0
        %1814 = vmatpush.msra.mxu0 %v1725
        %1815 = vmatmul.f32.gmra.mxu0 %v1713
        %v1816 = vpop.f32.mrf.mxu0
        %v1817 = vadd.f32 0.0, %v1816
        %1818 = vdwg.mxu0
        %1819 = vmatpush.msra.mxu0 0.0
        %1820 = vmatpush.msra.mxu0 0.0
        %1821 = vmatpush.msra.mxu0 0.0
        %1822 = vmatpush.msra.mxu0 0.0
        %1823 = vmatpush.msra.mxu0 0.0
        %1824 = vmatpush.msra.mxu0 0.0
        %1825 = vmatpush.msra.mxu0 0.0
        %1826 = vmatpush.msra.mxu0 0.0
        %1827 = vmatpush.msra.mxu0 0.0
        %1828 = vmatpush.msra.mxu0 0.0
        %1829 = vmatpush.msra.mxu0 0.0
        %1830 = vmatpush.msra.mxu0 0.0
        %1831 = vmatpush.msra.mxu0 0.0
        %1832 = vmatpush.msra.mxu0 0.0
        %1833 = vmatpush.msra.mxu0 0.0
        %1834 = vmatpush.msra.mxu0 %v1728
        %1835 = vmatmul.f32.gmra.mxu0 %v1713
        %v1836 = vpop.f32.mrf.mxu0
        %v1837 = vadd.f32 0.0, %v1836
        %1838 = vdwg.mxu0
        %1839 = vmatpush.msra.mxu0 0.0
        %1840 = vmatpush.msra.mxu0 0.0
        %1841 = vmatpush.msra.mxu0 0.0
        %1842 = vmatpush.msra.mxu0 0.0
        %1843 = vmatpush.msra.mxu0 0.0
        %1844 = vmatpush.msra.mxu0 0.0
        %1845 = vmatpush.msra.mxu0 0.0
        %1846 = vmatpush.msra.mxu0 0.0
        %1847 = vmatpush.msra.mxu0 0.0
        %1848 = vmatpush.msra.mxu0 0.0
        %1849 = vmatpush.msra.mxu0 0.0
        %1850 = vmatpush.msra.mxu0 0.0
        %1851 = vmatpush.msra.mxu0 0.0
        %1852 = vmatpush.msra.mxu0 0.0
        %1853 = vmatpush.msra.mxu0 0.0
        %1854 = vmatpush.msra.mxu0 %v1731
        %1855 = vmatmul.f32.gmra.mxu0 %v1713
        %v1856 = vpop.f32.mrf.mxu0
        %v1857 = vadd.f32 0.0, %v1856
        %1858 = vdwg.mxu0
        %1859 = vmatpush.msra.mxu0 0.0
        %1860 = vmatpush.msra.mxu0 0.0
        %1861 = vmatpush.msra.mxu0 0.0
        %1862 = vmatpush.msra.mxu0 0.0
        %1863 = vmatpush.msra.mxu0 0.0
        %1864 = vmatpush.msra.mxu0 0.0
        %1865 = vmatpush.msra.mxu0 0.0
        %1866 = vmatpush.msra.mxu0 0.0
        %1867 = vmatpush.msra.mxu0 0.0
        %1868 = vmatpush.msra.mxu0 0.0
        %1869 = vmatpush.msra.mxu0 0.0
        %1870 = vmatpush.msra.mxu0 0.0
        %1871 = vmatpush.msra.mxu0 0.0
        %1872 = vmatpush.msra.mxu0 0.0
        %1873 = vmatpush.msra.mxu0 0.0
        %1874 = vmatpush.msra.mxu0 %v1734
        %1875 = vmatmul.f32.gmra.mxu0 %v1713
        %v1876 = vpop.f32.mrf.mxu0
        %v1877 = vadd.f32 0.0, %v1876
        %1878 = vdwg.mxu0
        %1879 = vmatpush.msra.mxu0 0.0
        %1880 = vmatpush.msra.mxu0 0.0
        %1881 = vmatpush.msra.mxu0 0.0
        %1882 = vmatpush.msra.mxu0 0.0
        %1883 = vmatpush.msra.mxu0 0.0
        %1884 = vmatpush.msra.mxu0 0.0
        %1885 = vmatpush.msra.mxu0 0.0
        %1886 = vmatpush.msra.mxu0 0.0
        %1887 = vmatpush.msra.mxu0 0.0
        %1888 = vmatpush.msra.mxu0 0.0
        %1889 = vmatpush.msra.mxu0 0.0
        %1890 = vmatpush.msra.mxu0 0.0
        %1891 = vmatpush.msra.mxu0 0.0
        %1892 = vmatpush.msra.mxu0 0.0
        %1893 = vmatpush.msra.mxu0 0.0
        %1894 = vmatpush.msra.mxu0 %v1737
        %1895 = vmatmul.f32.gmra.mxu0 %v1713
        %v1896 = vpop.f32.mrf.mxu0
        %v1897 = vadd.f32 0.0, %v1896
        %1898 = vdwg.mxu0
        %v1899 = vadd.f32 %v1630, %v1757
        %v1900 = vadd.f32 %v1631, %v1777
        %v1901 = vadd.f32 %v1632, %v1797
        %v1902 = vadd.f32 %v1633, %v1817
        %v1903 = vadd.f32 %v1634, %v1837
        %v1904 = vadd.f32 %v1635, %v1857
        %v1905 = vadd.f32 %v1636, %v1877
        %v1906 = vadd.f32 %v1637, %v1897
        %1907 = vst [vmem:[#allocation1] ss:$2 sm:$0xff] %v325
        %s1908 = scalar_lea.vmem [#allocation1], 16
        %1909 = vst [vmem:[%s1908] ss:$2 sm:$0xff] %v326
        %s1910 = scalar_lea.vmem [#allocation1], 32
        %1911 = vst [vmem:[%s1910] ss:$2 sm:$0xff] %v327
        %s1912 = scalar_lea.vmem [#allocation1], 48
        %1913 = vst [vmem:[%s1912] ss:$2 sm:$0xff] %v328
        %v1914 = vld.sshfl [vmem:[#allocation1] sm:$0xff pattern:$0x75316420]
        %v1915 = vld.sshfl [vmem:[#allocation1 + $0x8] sm:$0xff pattern:$0x75316420]
        %v1916 = vld.sshfl [vmem:[#allocation1 + $0x10] sm:$0xff pattern:$0x75316420]
        %v1917 = vld.sshfl [vmem:[#allocation1 + $0x18] sm:$0xff pattern:$0x75316420]
        %v1918 = vld.sshfl [vmem:[#allocation1 + $0x20] sm:$0xff pattern:$0x75316420]
        %v1919 = vld.sshfl [vmem:[#allocation1 + $0x28] sm:$0xff pattern:$0x75316420]
        %v1920 = vld.sshfl [vmem:[#allocation1 + $0x30] sm:$0xff pattern:$0x75316420]
        %v1921 = vld.sshfl [vmem:[#allocation1 + $0x38] sm:$0xff pattern:$0x75316420]
        %1930 = vrot.lane.b32.xlu0 %v1914, 97
        %v1931 = vpop.permute.xlu0 %1930
        %1932 = vrot.lane.b32.xlu0 %v1915, 97
        %v1933 = vpop.permute.xlu0 %1932
        %1934 = vrot.lane.b32.xlu0 %v1916, 97
        %v1935 = vpop.permute.xlu0 %1934
        %1936 = vrot.lane.b32.xlu0 %v1917, 97
        %v1937 = vpop.permute.xlu0 %1936
        %1938 = vrot.lane.b32.xlu0 %v1918, 97
        %v1939 = vpop.permute.xlu0 %1938
        %1940 = vrot.lane.b32.xlu0 %v1919, 97
        %v1941 = vpop.permute.xlu0 %1940
        %1942 = vrot.lane.b32.xlu0 %v1920, 97
        %v1943 = vpop.permute.xlu0 %1942
        %1944 = vrot.lane.b32.xlu0 %v1921, 97
        %v1945 = vpop.permute.xlu0 %1944
        %vm1946 = vcmp.lt.s32.totalorder %v277, 97
        %v1947 = vsel %vm1946, %v1943, %v1945
        %v1948 = vsel %vm1946, %v1941, %v1943
        %v1949 = vsel %vm1946, %v1939, %v1941
        %v1950 = vsel %vm1946, %v1937, %v1939
        %v1951 = vsel %vm1946, %v1935, %v1937
        %v1952 = vsel %vm1946, %v1933, %v1935
        %v1953 = vsel %vm1946, %v1931, %v1933
        %v1954 = vsel %vm1946, %v1945, %v1931
        %vm1955 = vcmp.le.s32.totalorder %v285, 30
        %vm1956 = vcmp.le.s32.totalorder %v286, 30
        %vm1957 = vcmp.le.s32.totalorder %v287, 30
        %vm1958 = vcmp.le.s32.totalorder %v288, 30
        %vm1959 = vcmp.le.s32.totalorder %v289, 30
        %vm1960 = vcmp.le.s32.totalorder %v290, 30
        %vm1961 = vcmp.le.s32.totalorder %v291, 30
        %vm1962 = vcmp.le.s32.totalorder %v292, 30
        %vm1963 = vmand %vm1955, %vm389
        %vm1964 = vmand %vm1956, %vm390
        %vm1965 = vmand %vm1957, %vm391
        %vm1966 = vmand %vm1958, %vm392
        %vm1967 = vmand %vm1959, %vm393
        %vm1968 = vmand %vm1960, %vm394
        %vm1969 = vmand %vm1961, %vm395
        %vm1970 = vmand %vm1962, %vm396
        %v1971 = vsel %vm1963, 1, 0
        %v1972 = vsel %vm1964, 1, 0
        %v1973 = vsel %vm1965, 1, 0
        %v1974 = vsel %vm1966, 1, 0
        %v1975 = vsel %vm1967, 1, 0
        %v1976 = vsel %vm1968, 1, 0
        %v1977 = vsel %vm1969, 1, 0
        %v1978 = vsel %vm1970, 1, 0
        %v1979 = vcvt.s32.f32 %v1971
        %v1980 = vcvt.s32.f32 %v1972
        %v1981 = vcvt.s32.f32 %v1973
        %v1982 = vcvt.s32.f32 %v1974
        %v1983 = vcvt.s32.f32 %v1975
        %v1984 = vcvt.s32.f32 %v1976
        %v1985 = vcvt.s32.f32 %v1977
        %v1986 = vcvt.s32.f32 %v1978
        %v1987 = vmul.f32 %v1953, %v1979
        %v1988 = vmul.f32 %v1952, %v1980
        %v1989 = vmul.f32 %v1951, %v1981
        %v1990 = vmul.f32 %v1950, %v1982
        %v1991 = vmul.f32 %v1949, %v1983
        %v1992 = vmul.f32 %v1948, %v1984
        %v1993 = vmul.f32 %v1947, %v1985
        %v1994 = vmul.f32 %v1954, %v1986
        %s1995 = scalar_lea.vmem %s1, 24
        %v1996 = vld [vmem:[%s1995] sm:$0xf]
        %v1998 = vsel %vm504, %v1996, 0
        %v2001 = vsel %vm508, %v1987, 0
        %v2004 = vsel %vm508, %v1988, 0
        %v2007 = vsel %vm508, %v1989, 0
        %v2010 = vsel %vm508, %v1990, 0
        %v2013 = vsel %vm508, %v1991, 0
        %v2016 = vsel %vm508, %v1992, 0
        %v2019 = vsel %vm508, %v1993, 0
        %v2022 = vsel %vm508, %v1994, 0
        %2024 = vmatpush.msra.mxu0 0.0
        %2025 = vmatpush.msra.mxu0 0.0
        %2026 = vmatpush.msra.mxu0 0.0
        %2027 = vmatpush.msra.mxu0 0.0
        %2028 = vmatpush.msra.mxu0 0.0
        %2029 = vmatpush.msra.mxu0 0.0
        %2030 = vmatpush.msra.mxu0 0.0
        %2031 = vmatpush.msra.mxu0 0.0
        %2032 = vmatpush.msra.mxu0 0.0
        %2033 = vmatpush.msra.mxu0 0.0
        %2034 = vmatpush.msra.mxu0 0.0
        %2035 = vmatpush.msra.mxu0 0.0
        %2036 = vmatpush.msra.mxu0 0.0
        %2037 = vmatpush.msra.mxu0 0.0
        %2038 = vmatpush.msra.mxu0 0.0
        %2039 = vmatpush.msra.mxu0 %v2001
        %2040 = vmatmul.f32.gmra.mxu0 %v1998
        %v2041 = vpop.f32.mrf.mxu0
        %v2042 = vadd.f32 0.0, %v2041
        %2043 = vdwg.mxu0
        %2044 = vmatpush.msra.mxu0 0.0
        %2045 = vmatpush.msra.mxu0 0.0
        %2046 = vmatpush.msra.mxu0 0.0
        %2047 = vmatpush.msra.mxu0 0.0
        %2048 = vmatpush.msra.mxu0 0.0
        %2049 = vmatpush.msra.mxu0 0.0
        %2050 = vmatpush.msra.mxu0 0.0
        %2051 = vmatpush.msra.mxu0 0.0
        %2052 = vmatpush.msra.mxu0 0.0
        %2053 = vmatpush.msra.mxu0 0.0
        %2054 = vmatpush.msra.mxu0 0.0
        %2055 = vmatpush.msra.mxu0 0.0
        %2056 = vmatpush.msra.mxu0 0.0
        %2057 = vmatpush.msra.mxu0 0.0
        %2058 = vmatpush.msra.mxu0 0.0
        %2059 = vmatpush.msra.mxu0 %v2004
        %2060 = vmatmul.f32.gmra.mxu0 %v1998
        %v2061 = vpop.f32.mrf.mxu0
        %v2062 = vadd.f32 0.0, %v2061
        %2063 = vdwg.mxu0
        %2064 = vmatpush.msra.mxu0 0.0
        %2065 = vmatpush.msra.mxu0 0.0
        %2066 = vmatpush.msra.mxu0 0.0
        %2067 = vmatpush.msra.mxu0 0.0
        %2068 = vmatpush.msra.mxu0 0.0
        %2069 = vmatpush.msra.mxu0 0.0
        %2070 = vmatpush.msra.mxu0 0.0
        %2071 = vmatpush.msra.mxu0 0.0
        %2072 = vmatpush.msra.mxu0 0.0
        %2073 = vmatpush.msra.mxu0 0.0
        %2074 = vmatpush.msra.mxu0 0.0
        %2075 = vmatpush.msra.mxu0 0.0
        %2076 = vmatpush.msra.mxu0 0.0
        %2077 = vmatpush.msra.mxu0 0.0
        %2078 = vmatpush.msra.mxu0 0.0
        %2079 = vmatpush.msra.mxu0 %v2007
        %2080 = vmatmul.f32.gmra.mxu0 %v1998
        %v2081 = vpop.f32.mrf.mxu0
        %v2082 = vadd.f32 0.0, %v2081
        %2083 = vdwg.mxu0
        %2084 = vmatpush.msra.mxu0 0.0
        %2085 = vmatpush.msra.mxu0 0.0
        %2086 = vmatpush.msra.mxu0 0.0
        %2087 = vmatpush.msra.mxu0 0.0
        %2088 = vmatpush.msra.mxu0 0.0
        %2089 = vmatpush.msra.mxu0 0.0
        %2090 = vmatpush.msra.mxu0 0.0
        %2091 = vmatpush.msra.mxu0 0.0
        %2092 = vmatpush.msra.mxu0 0.0
        %2093 = vmatpush.msra.mxu0 0.0
        %2094 = vmatpush.msra.mxu0 0.0
        %2095 = vmatpush.msra.mxu0 0.0
        %2096 = vmatpush.msra.mxu0 0.0
        %2097 = vmatpush.msra.mxu0 0.0
        %2098 = vmatpush.msra.mxu0 0.0
        %2099 = vmatpush.msra.mxu0 %v2010
        %2100 = vmatmul.f32.gmra.mxu0 %v1998
        %v2101 = vpop.f32.mrf.mxu0
        %v2102 = vadd.f32 0.0, %v2101
        %2103 = vdwg.mxu0
        %2104 = vmatpush.msra.mxu0 0.0
        %2105 = vmatpush.msra.mxu0 0.0
        %2106 = vmatpush.msra.mxu0 0.0
        %2107 = vmatpush.msra.mxu0 0.0
        %2108 = vmatpush.msra.mxu0 0.0
        %2109 = vmatpush.msra.mxu0 0.0
        %2110 = vmatpush.msra.mxu0 0.0
        %2111 = vmatpush.msra.mxu0 0.0
        %2112 = vmatpush.msra.mxu0 0.0
        %2113 = vmatpush.msra.mxu0 0.0
        %2114 = vmatpush.msra.mxu0 0.0
        %2115 = vmatpush.msra.mxu0 0.0
        %2116 = vmatpush.msra.mxu0 0.0
        %2117 = vmatpush.msra.mxu0 0.0
        %2118 = vmatpush.msra.mxu0 0.0
        %2119 = vmatpush.msra.mxu0 %v2013
        %2120 = vmatmul.f32.gmra.mxu0 %v1998
        %v2121 = vpop.f32.mrf.mxu0
        %v2122 = vadd.f32 0.0, %v2121
        %2123 = vdwg.mxu0
        %2124 = vmatpush.msra.mxu0 0.0
        %2125 = vmatpush.msra.mxu0 0.0
        %2126 = vmatpush.msra.mxu0 0.0
        %2127 = vmatpush.msra.mxu0 0.0
        %2128 = vmatpush.msra.mxu0 0.0
        %2129 = vmatpush.msra.mxu0 0.0
        %2130 = vmatpush.msra.mxu0 0.0
        %2131 = vmatpush.msra.mxu0 0.0
        %2132 = vmatpush.msra.mxu0 0.0
        %2133 = vmatpush.msra.mxu0 0.0
        %2134 = vmatpush.msra.mxu0 0.0
        %2135 = vmatpush.msra.mxu0 0.0
        %2136 = vmatpush.msra.mxu0 0.0
        %2137 = vmatpush.msra.mxu0 0.0
        %2138 = vmatpush.msra.mxu0 0.0
        %2139 = vmatpush.msra.mxu0 %v2016
        %2140 = vmatmul.f32.gmra.mxu0 %v1998
        %v2141 = vpop.f32.mrf.mxu0
        %v2142 = vadd.f32 0.0, %v2141
        %2143 = vdwg.mxu0
        %2144 = vmatpush.msra.mxu0 0.0
        %2145 = vmatpush.msra.mxu0 0.0
        %2146 = vmatpush.msra.mxu0 0.0
        %2147 = vmatpush.msra.mxu0 0.0
        %2148 = vmatpush.msra.mxu0 0.0
        %2149 = vmatpush.msra.mxu0 0.0
        %2150 = vmatpush.msra.mxu0 0.0
        %2151 = vmatpush.msra.mxu0 0.0
        %2152 = vmatpush.msra.mxu0 0.0
        %2153 = vmatpush.msra.mxu0 0.0
        %2154 = vmatpush.msra.mxu0 0.0
        %2155 = vmatpush.msra.mxu0 0.0
        %2156 = vmatpush.msra.mxu0 0.0
        %2157 = vmatpush.msra.mxu0 0.0
        %2158 = vmatpush.msra.mxu0 0.0
        %2159 = vmatpush.msra.mxu0 %v2019
        %2160 = vmatmul.f32.gmra.mxu0 %v1998
        %v2161 = vpop.f32.mrf.mxu0
        %v2162 = vadd.f32 0.0, %v2161
        %2163 = vdwg.mxu0
        %2164 = vmatpush.msra.mxu0 0.0
        %2165 = vmatpush.msra.mxu0 0.0
        %2166 = vmatpush.msra.mxu0 0.0
        %2167 = vmatpush.msra.mxu0 0.0
        %2168 = vmatpush.msra.mxu0 0.0
        %2169 = vmatpush.msra.mxu0 0.0
        %2170 = vmatpush.msra.mxu0 0.0
        %2171 = vmatpush.msra.mxu0 0.0
        %2172 = vmatpush.msra.mxu0 0.0
        %2173 = vmatpush.msra.mxu0 0.0
        %2174 = vmatpush.msra.mxu0 0.0
        %2175 = vmatpush.msra.mxu0 0.0
        %2176 = vmatpush.msra.mxu0 0.0
        %2177 = vmatpush.msra.mxu0 0.0
        %2178 = vmatpush.msra.mxu0 0.0
        %2179 = vmatpush.msra.mxu0 %v2022
        %2180 = vmatmul.f32.gmra.mxu0 %v1998
        %v2181 = vpop.f32.mrf.mxu0
        %v2182 = vadd.f32 0.0, %v2181
        %2183 = vdwg.mxu0
        %v2184 = vadd.f32 %v1899, %v2042
        %v2185 = vadd.f32 %v1900, %v2062
        %v2186 = vadd.f32 %v1901, %v2082
        %v2187 = vadd.f32 %v1902, %v2102
        %v2188 = vadd.f32 %v1903, %v2122
        %v2189 = vadd.f32 %v1904, %v2142
        %v2190 = vadd.f32 %v1905, %v2162
        %v2191 = vadd.f32 %v1906, %v2182
        %2192 = vst [vmem:[#allocation1] ss:$2 sm:$0xff] %v325
        %s2193 = scalar_lea.vmem [#allocation1], 16
        %2194 = vst [vmem:[%s2193] ss:$2 sm:$0xff] %v326
        %s2195 = scalar_lea.vmem [#allocation1], 32
        %2196 = vst [vmem:[%s2195] ss:$2 sm:$0xff] %v327
        %s2197 = scalar_lea.vmem [#allocation1], 48
        %2198 = vst [vmem:[%s2197] ss:$2 sm:$0xff] %v328
        %v2199 = vld.sshfl [vmem:[#allocation1] sm:$0xff pattern:$0x75316420]
        %v2200 = vld.sshfl [vmem:[#allocation1 + $0x8] sm:$0xff pattern:$0x75316420]
        %v2201 = vld.sshfl [vmem:[#allocation1 + $0x10] sm:$0xff pattern:$0x75316420]
        %v2202 = vld.sshfl [vmem:[#allocation1 + $0x18] sm:$0xff pattern:$0x75316420]
        %v2203 = vld.sshfl [vmem:[#allocation1 + $0x20] sm:$0xff pattern:$0x75316420]
        %v2204 = vld.sshfl [vmem:[#allocation1 + $0x28] sm:$0xff pattern:$0x75316420]
        %v2205 = vld.sshfl [vmem:[#allocation1 + $0x30] sm:$0xff pattern:$0x75316420]
        %v2206 = vld.sshfl [vmem:[#allocation1 + $0x38] sm:$0xff pattern:$0x75316420]
        %2215 = vrot.lane.b32.xlu0 %v2199, 96
        %v2216 = vpop.permute.xlu0 %2215
        %2217 = vrot.lane.b32.xlu0 %v2200, 96
        %v2218 = vpop.permute.xlu0 %2217
        %2219 = vrot.lane.b32.xlu0 %v2201, 96
        %v2220 = vpop.permute.xlu0 %2219
        %2221 = vrot.lane.b32.xlu0 %v2202, 96
        %v2222 = vpop.permute.xlu0 %2221
        %2223 = vrot.lane.b32.xlu0 %v2203, 96
        %v2224 = vpop.permute.xlu0 %2223
        %2225 = vrot.lane.b32.xlu0 %v2204, 96
        %v2226 = vpop.permute.xlu0 %2225
        %2227 = vrot.lane.b32.xlu0 %v2205, 96
        %v2228 = vpop.permute.xlu0 %2227
        %2229 = vrot.lane.b32.xlu0 %v2206, 96
        %v2230 = vpop.permute.xlu0 %2229
        %vm2231 = vcmp.lt.s32.totalorder %v277, 96
        %v2232 = vsel %vm2231, %v2228, %v2230
        %v2233 = vsel %vm2231, %v2226, %v2228
        %v2234 = vsel %vm2231, %v2224, %v2226
        %v2235 = vsel %vm2231, %v2222, %v2224
        %v2236 = vsel %vm2231, %v2220, %v2222
        %v2237 = vsel %vm2231, %v2218, %v2220
        %v2238 = vsel %vm2231, %v2216, %v2218
        %v2239 = vsel %vm2231, %v2230, %v2216
        %v2240 = vsel %vm1955, 1, 0
        %v2241 = vsel %vm1956, 1, 0
        %v2242 = vsel %vm1957, 1, 0
        %v2243 = vsel %vm1958, 1, 0
        %v2244 = vsel %vm1959, 1, 0
        %v2245 = vsel %vm1960, 1, 0
        %v2246 = vsel %vm1961, 1, 0
        %v2247 = vsel %vm1962, 1, 0
        %v2248 = vcvt.s32.f32 %v2240
        %v2249 = vcvt.s32.f32 %v2241
        %v2250 = vcvt.s32.f32 %v2242
        %v2251 = vcvt.s32.f32 %v2243
        %v2252 = vcvt.s32.f32 %v2244
        %v2253 = vcvt.s32.f32 %v2245
        %v2254 = vcvt.s32.f32 %v2246
        %v2255 = vcvt.s32.f32 %v2247
        %v2256 = vmul.f32 %v2238, %v2248
        %v2257 = vmul.f32 %v2237, %v2249
        %v2258 = vmul.f32 %v2236, %v2250
        %v2259 = vmul.f32 %v2235, %v2251
        %v2260 = vmul.f32 %v2234, %v2252
        %v2261 = vmul.f32 %v2233, %v2253
        %v2262 = vmul.f32 %v2232, %v2254
        %v2263 = vmul.f32 %v2239, %v2255
        %s2264 = scalar_lea.vmem %s1, 28
        %v2265 = vld [vmem:[%s2264] sm:$0xf]
        %v2267 = vsel %vm504, %v2265, 0
        %v2270 = vsel %vm508, %v2256, 0
        %v2273 = vsel %vm508, %v2257, 0
        %v2276 = vsel %vm508, %v2258, 0
        %v2279 = vsel %vm508, %v2259, 0
        %v2282 = vsel %vm508, %v2260, 0
        %v2285 = vsel %vm508, %v2261, 0
        %v2288 = vsel %vm508, %v2262, 0
        %v2291 = vsel %vm508, %v2263, 0
        %2293 = vmatpush.msra.mxu0 0.0
        %2294 = vmatpush.msra.mxu0 0.0
        %2295 = vmatpush.msra.mxu0 0.0
        %2296 = vmatpush.msra.mxu0 0.0
        %2297 = vmatpush.msra.mxu0 0.0
        %2298 = vmatpush.msra.mxu0 0.0
        %2299 = vmatpush.msra.mxu0 0.0
        %2300 = vmatpush.msra.mxu0 0.0
        %2301 = vmatpush.msra.mxu0 0.0
        %2302 = vmatpush.msra.mxu0 0.0
        %2303 = vmatpush.msra.mxu0 0.0
        %2304 = vmatpush.msra.mxu0 0.0
        %2305 = vmatpush.msra.mxu0 0.0
        %2306 = vmatpush.msra.mxu0 0.0
        %2307 = vmatpush.msra.mxu0 0.0
        %2308 = vmatpush.msra.mxu0 %v2270
        %2309 = vmatmul.f32.gmra.mxu0 %v2267
        %v2310 = vpop.f32.mrf.mxu0
        %v2311 = vadd.f32 0.0, %v2310
        %2312 = vdwg.mxu0
        %2313 = vmatpush.msra.mxu0 0.0
        %2314 = vmatpush.msra.mxu0 0.0
        %2315 = vmatpush.msra.mxu0 0.0
        %2316 = vmatpush.msra.mxu0 0.0
        %2317 = vmatpush.msra.mxu0 0.0
        %2318 = vmatpush.msra.mxu0 0.0
        %2319 = vmatpush.msra.mxu0 0.0
        %2320 = vmatpush.msra.mxu0 0.0
        %2321 = vmatpush.msra.mxu0 0.0
        %2322 = vmatpush.msra.mxu0 0.0
        %2323 = vmatpush.msra.mxu0 0.0
        %2324 = vmatpush.msra.mxu0 0.0
        %2325 = vmatpush.msra.mxu0 0.0
        %2326 = vmatpush.msra.mxu0 0.0
        %2327 = vmatpush.msra.mxu0 0.0
        %2328 = vmatpush.msra.mxu0 %v2273
        %2329 = vmatmul.f32.gmra.mxu0 %v2267
        %v2330 = vpop.f32.mrf.mxu0
        %v2331 = vadd.f32 0.0, %v2330
        %2332 = vdwg.mxu0
        %2333 = vmatpush.msra.mxu0 0.0
        %2334 = vmatpush.msra.mxu0 0.0
        %2335 = vmatpush.msra.mxu0 0.0
        %2336 = vmatpush.msra.mxu0 0.0
        %2337 = vmatpush.msra.mxu0 0.0
        %2338 = vmatpush.msra.mxu0 0.0
        %2339 = vmatpush.msra.mxu0 0.0
        %2340 = vmatpush.msra.mxu0 0.0
        %2341 = vmatpush.msra.mxu0 0.0
        %2342 = vmatpush.msra.mxu0 0.0
        %2343 = vmatpush.msra.mxu0 0.0
        %2344 = vmatpush.msra.mxu0 0.0
        %2345 = vmatpush.msra.mxu0 0.0
        %2346 = vmatpush.msra.mxu0 0.0
        %2347 = vmatpush.msra.mxu0 0.0
        %2348 = vmatpush.msra.mxu0 %v2276
        %2349 = vmatmul.f32.gmra.mxu0 %v2267
        %v2350 = vpop.f32.mrf.mxu0
        %v2351 = vadd.f32 0.0, %v2350
        %2352 = vdwg.mxu0
        %2353 = vmatpush.msra.mxu0 0.0
        %2354 = vmatpush.msra.mxu0 0.0
        %2355 = vmatpush.msra.mxu0 0.0
        %2356 = vmatpush.msra.mxu0 0.0
        %2357 = vmatpush.msra.mxu0 0.0
        %2358 = vmatpush.msra.mxu0 0.0
        %2359 = vmatpush.msra.mxu0 0.0
        %2360 = vmatpush.msra.mxu0 0.0
        %2361 = vmatpush.msra.mxu0 0.0
        %2362 = vmatpush.msra.mxu0 0.0
        %2363 = vmatpush.msra.mxu0 0.0
        %2364 = vmatpush.msra.mxu0 0.0
        %2365 = vmatpush.msra.mxu0 0.0
        %2366 = vmatpush.msra.mxu0 0.0
        %2367 = vmatpush.msra.mxu0 0.0
        %2368 = vmatpush.msra.mxu0 %v2279
        %2369 = vmatmul.f32.gmra.mxu0 %v2267
        %v2370 = vpop.f32.mrf.mxu0
        %v2371 = vadd.f32 0.0, %v2370
        %2372 = vdwg.mxu0
        %2373 = vmatpush.msra.mxu0 0.0
        %2374 = vmatpush.msra.mxu0 0.0
        %2375 = vmatpush.msra.mxu0 0.0
        %2376 = vmatpush.msra.mxu0 0.0
        %2377 = vmatpush.msra.mxu0 0.0
        %2378 = vmatpush.msra.mxu0 0.0
        %2379 = vmatpush.msra.mxu0 0.0
        %2380 = vmatpush.msra.mxu0 0.0
        %2381 = vmatpush.msra.mxu0 0.0
        %2382 = vmatpush.msra.mxu0 0.0
        %2383 = vmatpush.msra.mxu0 0.0
        %2384 = vmatpush.msra.mxu0 0.0
        %2385 = vmatpush.msra.mxu0 0.0
        %2386 = vmatpush.msra.mxu0 0.0
        %2387 = vmatpush.msra.mxu0 0.0
        %2388 = vmatpush.msra.mxu0 %v2282
        %2389 = vmatmul.f32.gmra.mxu0 %v2267
        %v2390 = vpop.f32.mrf.mxu0
        %v2391 = vadd.f32 0.0, %v2390
        %2392 = vdwg.mxu0
        %2393 = vmatpush.msra.mxu0 0.0
        %2394 = vmatpush.msra.mxu0 0.0
        %2395 = vmatpush.msra.mxu0 0.0
        %2396 = vmatpush.msra.mxu0 0.0
        %2397 = vmatpush.msra.mxu0 0.0
        %2398 = vmatpush.msra.mxu0 0.0
        %2399 = vmatpush.msra.mxu0 0.0
        %2400 = vmatpush.msra.mxu0 0.0
        %2401 = vmatpush.msra.mxu0 0.0
        %2402 = vmatpush.msra.mxu0 0.0
        %2403 = vmatpush.msra.mxu0 0.0
        %2404 = vmatpush.msra.mxu0 0.0
        %2405 = vmatpush.msra.mxu0 0.0
        %2406 = vmatpush.msra.mxu0 0.0
        %2407 = vmatpush.msra.mxu0 0.0
        %2408 = vmatpush.msra.mxu0 %v2285
        %2409 = vmatmul.f32.gmra.mxu0 %v2267
        %v2410 = vpop.f32.mrf.mxu0
        %v2411 = vadd.f32 0.0, %v2410
        %2412 = vdwg.mxu0
        %2413 = vmatpush.msra.mxu0 0.0
        %2414 = vmatpush.msra.mxu0 0.0
        %2415 = vmatpush.msra.mxu0 0.0
        %2416 = vmatpush.msra.mxu0 0.0
        %2417 = vmatpush.msra.mxu0 0.0
        %2418 = vmatpush.msra.mxu0 0.0
        %2419 = vmatpush.msra.mxu0 0.0
        %2420 = vmatpush.msra.mxu0 0.0
        %2421 = vmatpush.msra.mxu0 0.0
        %2422 = vmatpush.msra.mxu0 0.0
        %2423 = vmatpush.msra.mxu0 0.0
        %2424 = vmatpush.msra.mxu0 0.0
        %2425 = vmatpush.msra.mxu0 0.0
        %2426 = vmatpush.msra.mxu0 0.0
        %2427 = vmatpush.msra.mxu0 0.0
        %2428 = vmatpush.msra.mxu0 %v2288
        %2429 = vmatmul.f32.gmra.mxu0 %v2267
        %v2430 = vpop.f32.mrf.mxu0
        %v2431 = vadd.f32 0.0, %v2430
        %2432 = vdwg.mxu0
        %2433 = vmatpush.msra.mxu0 0.0
        %2434 = vmatpush.msra.mxu0 0.0
        %2435 = vmatpush.msra.mxu0 0.0
        %2436 = vmatpush.msra.mxu0 0.0
        %2437 = vmatpush.msra.mxu0 0.0
        %2438 = vmatpush.msra.mxu0 0.0
        %2439 = vmatpush.msra.mxu0 0.0
        %2440 = vmatpush.msra.mxu0 0.0
        %2441 = vmatpush.msra.mxu0 0.0
        %2442 = vmatpush.msra.mxu0 0.0
        %2443 = vmatpush.msra.mxu0 0.0
        %2444 = vmatpush.msra.mxu0 0.0
        %2445 = vmatpush.msra.mxu0 0.0
        %2446 = vmatpush.msra.mxu0 0.0
        %2447 = vmatpush.msra.mxu0 0.0
        %2448 = vmatpush.msra.mxu0 %v2291
        %2449 = vmatmul.f32.gmra.mxu0 %v2267
        %v2450 = vpop.f32.mrf.mxu0
        %v2451 = vadd.f32 0.0, %v2450
        %2452 = vdwg.mxu0
        %v2453 = vadd.f32 %v2184, %v2311
        %v2454 = vadd.f32 %v2185, %v2331
        %v2455 = vadd.f32 %v2186, %v2351
        %v2456 = vadd.f32 %v2187, %v2371
        %v2457 = vadd.f32 %v2188, %v2391
        %v2458 = vadd.f32 %v2189, %v2411
        %v2459 = vadd.f32 %v2190, %v2431
        %v2460 = vadd.f32 %v2191, %v2451
        %2461 = vst [vmem:[#allocation1] ss:$2 sm:$0xff] %v325
        %s2462 = scalar_lea.vmem [#allocation1], 16
        %2463 = vst [vmem:[%s2462] ss:$2 sm:$0xff] %v326
        %s2464 = scalar_lea.vmem [#allocation1], 32
        %2465 = vst [vmem:[%s2464] ss:$2 sm:$0xff] %v327
        %s2466 = scalar_lea.vmem [#allocation1], 48
        %2467 = vst [vmem:[%s2466] ss:$2 sm:$0xff] %v328
        %v2468 = vld.sshfl [vmem:[#allocation1] sm:$0xff pattern:$0x75316420]
        %v2469 = vld.sshfl [vmem:[#allocation1 + $0x8] sm:$0xff pattern:$0x75316420]
        %v2470 = vld.sshfl [vmem:[#allocation1 + $0x10] sm:$0xff pattern:$0x75316420]
        %v2471 = vld.sshfl [vmem:[#allocation1 + $0x18] sm:$0xff pattern:$0x75316420]
        %v2472 = vld.sshfl [vmem:[#allocation1 + $0x20] sm:$0xff pattern:$0x75316420]
        %v2473 = vld.sshfl [vmem:[#allocation1 + $0x28] sm:$0xff pattern:$0x75316420]
        %v2474 = vld.sshfl [vmem:[#allocation1 + $0x30] sm:$0xff pattern:$0x75316420]
        %v2475 = vld.sshfl [vmem:[#allocation1 + $0x38] sm:$0xff pattern:$0x75316420]
        %2484 = vrot.lane.b32.xlu0 %v2468, 95
        %v2485 = vpop.permute.xlu0 %2484
        %2486 = vrot.lane.b32.xlu0 %v2469, 95
        %v2487 = vpop.permute.xlu0 %2486
        %2488 = vrot.lane.b32.xlu0 %v2470, 95
        %v2489 = vpop.permute.xlu0 %2488
        %2490 = vrot.lane.b32.xlu0 %v2471, 95
        %v2491 = vpop.permute.xlu0 %2490
        %2492 = vrot.lane.b32.xlu0 %v2472, 95
        %v2493 = vpop.permute.xlu0 %2492
        %2494 = vrot.lane.b32.xlu0 %v2473, 95
        %v2495 = vpop.permute.xlu0 %2494
        %2496 = vrot.lane.b32.xlu0 %v2474, 95
        %v2497 = vpop.permute.xlu0 %2496
        %2498 = vrot.lane.b32.xlu0 %v2475, 95
        %v2499 = vpop.permute.xlu0 %2498
        %vm2500 = vcmp.lt.s32.totalorder %v277, 95
        %v2501 = vsel %vm2500, %v2497, %v2499
        %v2502 = vsel %vm2500, %v2495, %v2497
        %v2503 = vsel %vm2500, %v2493, %v2495
        %v2504 = vsel %vm2500, %v2491, %v2493
        %v2505 = vsel %vm2500, %v2489, %v2491
        %v2506 = vsel %vm2500, %v2487, %v2489
        %v2507 = vsel %vm2500, %v2485, %v2487
        %v2508 = vsel %vm2500, %v2499, %v2485
        %vm2509 = vmand %vm1955, %vm928
        %vm2510 = vmand %vm1956, %vm929
        %vm2511 = vmand %vm1957, %vm930
        %vm2512 = vmand %vm1958, %vm931
        %vm2513 = vmand %vm1959, %vm932
        %vm2514 = vmand %vm1960, %vm933
        %vm2515 = vmand %vm1961, %vm934
        %vm2516 = vmand %vm1962, %vm935
        %v2517 = vsel %vm2509, 1, 0
        %v2518 = vsel %vm2510, 1, 0
        %v2519 = vsel %vm2511, 1, 0
        %v2520 = vsel %vm2512, 1, 0
        %v2521 = vsel %vm2513, 1, 0
        %v2522 = vsel %vm2514, 1, 0
        %v2523 = vsel %vm2515, 1, 0
        %v2524 = vsel %vm2516, 1, 0
        %v2525 = vcvt.s32.f32 %v2517
        %v2526 = vcvt.s32.f32 %v2518
        %v2527 = vcvt.s32.f32 %v2519
        %v2528 = vcvt.s32.f32 %v2520
        %v2529 = vcvt.s32.f32 %v2521
        %v2530 = vcvt.s32.f32 %v2522
        %v2531 = vcvt.s32.f32 %v2523
        %v2532 = vcvt.s32.f32 %v2524
        %v2533 = vmul.f32 %v2507, %v2525
        %v2534 = vmul.f32 %v2506, %v2526
        %v2535 = vmul.f32 %v2505, %v2527
        %v2536 = vmul.f32 %v2504, %v2528
        %v2537 = vmul.f32 %v2503, %v2529
        %v2538 = vmul.f32 %v2502, %v2530
        %v2539 = vmul.f32 %v2501, %v2531
        %v2540 = vmul.f32 %v2508, %v2532
        %s2541 = scalar_lea.vmem %s1, 32
        %v2542 = vld [vmem:[%s2541] sm:$0xf]
        %v2544 = vsel %vm504, %v2542, 0
        %v2547 = vsel %vm508, %v2533, 0
        %v2550 = vsel %vm508, %v2534, 0
        %v2553 = vsel %vm508, %v2535, 0
        %v2556 = vsel %vm508, %v2536, 0
        %v2559 = vsel %vm508, %v2537, 0
        %v2562 = vsel %vm508, %v2538, 0
        %v2565 = vsel %vm508, %v2539, 0
        %v2568 = vsel %vm508, %v2540, 0
        %2570 = vmatpush.msra.mxu0 0.0
        %2571 = vmatpush.msra.mxu0 0.0
        %2572 = vmatpush.msra.mxu0 0.0
        %2573 = vmatpush.msra.mxu0 0.0
        %2574 = vmatpush.msra.mxu0 0.0
        %2575 = vmatpush.msra.mxu0 0.0
        %2576 = vmatpush.msra.mxu0 0.0
        %2577 = vmatpush.msra.mxu0 0.0
        %2578 = vmatpush.msra.mxu0 0.0
        %2579 = vmatpush.msra.mxu0 0.0
        %2580 = vmatpush.msra.mxu0 0.0
        %2581 = vmatpush.msra.mxu0 0.0
        %2582 = vmatpush.msra.mxu0 0.0
        %2583 = vmatpush.msra.mxu0 0.0
        %2584 = vmatpush.msra.mxu0 0.0
        %2585 = vmatpush.msra.mxu0 %v2547
        %2586 = vmatmul.f32.gmra.mxu0 %v2544
        %v2587 = vpop.f32.mrf.mxu0
        %v2588 = vadd.f32 0.0, %v2587
        %2589 = vdwg.mxu0
        %2590 = vmatpush.msra.mxu0 0.0
        %2591 = vmatpush.msra.mxu0 0.0
        %2592 = vmatpush.msra.mxu0 0.0
        %2593 = vmatpush.msra.mxu0 0.0
        %2594 = vmatpush.msra.mxu0 0.0
        %2595 = vmatpush.msra.mxu0 0.0
        %2596 = vmatpush.msra.mxu0 0.0
        %2597 = vmatpush.msra.mxu0 0.0
        %2598 = vmatpush.msra.mxu0 0.0
        %2599 = vmatpush.msra.mxu0 0.0
        %2600 = vmatpush.msra.mxu0 0.0
        %2601 = vmatpush.msra.mxu0 0.0
        %2602 = vmatpush.msra.mxu0 0.0
        %2603 = vmatpush.msra.mxu0 0.0
        %2604 = vmatpush.msra.mxu0 0.0
        %2605 = vmatpush.msra.mxu0 %v2550
        %2606 = vmatmul.f32.gmra.mxu0 %v2544
        %v2607 = vpop.f32.mrf.mxu0
        %v2608 = vadd.f32 0.0, %v2607
        %2609 = vdwg.mxu0
        %2610 = vmatpush.msra.mxu0 0.0
        %2611 = vmatpush.msra.mxu0 0.0
        %2612 = vmatpush.msra.mxu0 0.0
        %2613 = vmatpush.msra.mxu0 0.0
        %2614 = vmatpush.msra.mxu0 0.0
        %2615 = vmatpush.msra.mxu0 0.0
        %2616 = vmatpush.msra.mxu0 0.0
        %2617 = vmatpush.msra.mxu0 0.0
        %2618 = vmatpush.msra.mxu0 0.0
        %2619 = vmatpush.msra.mxu0 0.0
        %2620 = vmatpush.msra.mxu0 0.0
        %2621 = vmatpush.msra.mxu0 0.0
        %2622 = vmatpush.msra.mxu0 0.0
        %2623 = vmatpush.msra.mxu0 0.0
        %2624 = vmatpush.msra.mxu0 0.0
        %2625 = vmatpush.msra.mxu0 %v2553
        %2626 = vmatmul.f32.gmra.mxu0 %v2544
        %v2627 = vpop.f32.mrf.mxu0
        %v2628 = vadd.f32 0.0, %v2627
        %2629 = vdwg.mxu0
        %2630 = vmatpush.msra.mxu0 0.0
        %2631 = vmatpush.msra.mxu0 0.0
        %2632 = vmatpush.msra.mxu0 0.0
        %2633 = vmatpush.msra.mxu0 0.0
        %2634 = vmatpush.msra.mxu0 0.0
        %2635 = vmatpush.msra.mxu0 0.0
        %2636 = vmatpush.msra.mxu0 0.0
        %2637 = vmatpush.msra.mxu0 0.0
        %2638 = vmatpush.msra.mxu0 0.0
        %2639 = vmatpush.msra.mxu0 0.0
        %2640 = vmatpush.msra.mxu0 0.0
        %2641 = vmatpush.msra.mxu0 0.0
        %2642 = vmatpush.msra.mxu0 0.0
        %2643 = vmatpush.msra.mxu0 0.0
        %2644 = vmatpush.msra.mxu0 0.0
        %2645 = vmatpush.msra.mxu0 %v2556
        %2646 = vmatmul.f32.gmra.mxu0 %v2544
        %v2647 = vpop.f32.mrf.mxu0
        %v2648 = vadd.f32 0.0, %v2647
        %2649 = vdwg.mxu0
        %2650 = vmatpush.msra.mxu0 0.0
        %2651 = vmatpush.msra.mxu0 0.0
        %2652 = vmatpush.msra.mxu0 0.0
        %2653 = vmatpush.msra.mxu0 0.0
        %2654 = vmatpush.msra.mxu0 0.0
        %2655 = vmatpush.msra.mxu0 0.0
        %2656 = vmatpush.msra.mxu0 0.0
        %2657 = vmatpush.msra.mxu0 0.0
        %2658 = vmatpush.msra.mxu0 0.0
        %2659 = vmatpush.msra.mxu0 0.0
        %2660 = vmatpush.msra.mxu0 0.0
        %2661 = vmatpush.msra.mxu0 0.0
        %2662 = vmatpush.msra.mxu0 0.0
        %2663 = vmatpush.msra.mxu0 0.0
        %2664 = vmatpush.msra.mxu0 0.0
        %2665 = vmatpush.msra.mxu0 %v2559
        %2666 = vmatmul.f32.gmra.mxu0 %v2544
        %v2667 = vpop.f32.mrf.mxu0
        %v2668 = vadd.f32 0.0, %v2667
        %2669 = vdwg.mxu0
        %2670 = vmatpush.msra.mxu0 0.0
        %2671 = vmatpush.msra.mxu0 0.0
        %2672 = vmatpush.msra.mxu0 0.0
        %2673 = vmatpush.msra.mxu0 0.0
        %2674 = vmatpush.msra.mxu0 0.0
        %2675 = vmatpush.msra.mxu0 0.0
        %2676 = vmatpush.msra.mxu0 0.0
        %2677 = vmatpush.msra.mxu0 0.0
        %2678 = vmatpush.msra.mxu0 0.0
        %2679 = vmatpush.msra.mxu0 0.0
        %2680 = vmatpush.msra.mxu0 0.0
        %2681 = vmatpush.msra.mxu0 0.0
        %2682 = vmatpush.msra.mxu0 0.0
        %2683 = vmatpush.msra.mxu0 0.0
        %2684 = vmatpush.msra.mxu0 0.0
        %2685 = vmatpush.msra.mxu0 %v2562
        %2686 = vmatmul.f32.gmra.mxu0 %v2544
        %v2687 = vpop.f32.mrf.mxu0
        %v2688 = vadd.f32 0.0, %v2687
        %2689 = vdwg.mxu0
        %2690 = vmatpush.msra.mxu0 0.0
        %2691 = vmatpush.msra.mxu0 0.0
        %2692 = vmatpush.msra.mxu0 0.0
        %2693 = vmatpush.msra.mxu0 0.0
        %2694 = vmatpush.msra.mxu0 0.0
        %2695 = vmatpush.msra.mxu0 0.0
        %2696 = vmatpush.msra.mxu0 0.0
        %2697 = vmatpush.msra.mxu0 0.0
        %2698 = vmatpush.msra.mxu0 0.0
        %2699 = vmatpush.msra.mxu0 0.0
        %2700 = vmatpush.msra.mxu0 0.0
        %2701 = vmatpush.msra.mxu0 0.0
        %2702 = vmatpush.msra.mxu0 0.0
        %2703 = vmatpush.msra.mxu0 0.0
        %2704 = vmatpush.msra.mxu0 0.0
        %2705 = vmatpush.msra.mxu0 %v2565
        %2706 = vmatmul.f32.gmra.mxu0 %v2544
        %v2707 = vpop.f32.mrf.mxu0
        %v2708 = vadd.f32 0.0, %v2707
        %2709 = vdwg.mxu0
        %2710 = vmatpush.msra.mxu0 0.0
        %2711 = vmatpush.msra.mxu0 0.0
        %2712 = vmatpush.msra.mxu0 0.0
        %2713 = vmatpush.msra.mxu0 0.0
        %2714 = vmatpush.msra.mxu0 0.0
        %2715 = vmatpush.msra.mxu0 0.0
        %2716 = vmatpush.msra.mxu0 0.0
        %2717 = vmatpush.msra.mxu0 0.0
        %2718 = vmatpush.msra.mxu0 0.0
        %2719 = vmatpush.msra.mxu0 0.0
        %2720 = vmatpush.msra.mxu0 0.0
        %2721 = vmatpush.msra.mxu0 0.0
        %2722 = vmatpush.msra.mxu0 0.0
        %2723 = vmatpush.msra.mxu0 0.0
        %2724 = vmatpush.msra.mxu0 0.0
        %2725 = vmatpush.msra.mxu0 %v2568
        %2726 = vmatmul.f32.gmra.mxu0 %v2544
        %v2727 = vpop.f32.mrf.mxu0
        %v2728 = vadd.f32 0.0, %v2727
        %2729 = vdwg.mxu0
        %v2730 = vadd.f32 %v2453, %v2588
        %v2731 = vadd.f32 %v2454, %v2608
        %v2732 = vadd.f32 %v2455, %v2628
        %v2733 = vadd.f32 %v2456, %v2648
        %v2734 = vadd.f32 %v2457, %v2668
        %v2735 = vadd.f32 %v2458, %v2688
        %v2736 = vadd.f32 %v2459, %v2708
        %v2737 = vadd.f32 %v2460, %v2728
        %v2738 = vld [vmem:[%s2] sm:$0xf]
        %2740 = vset.pattern.permute.xlu0 0
        %2741 = vperm.xlu0 %2740, %v2738
        %v2742 = vpop.permute.xlu0 %2741
        %v2744 = vadd.f32 %v2730, %v2742
        %v2745 = vadd.f32 %v2731, %v2742
        %v2746 = vadd.f32 %v2732, %v2742
        %v2747 = vadd.f32 %v2733, %v2742
        %v2748 = vadd.f32 %v2734, %v2742
        %v2749 = vadd.f32 %v2735, %v2742
        %v2750 = vadd.f32 %v2736, %v2742
        %v2751 = vadd.f32 %v2737, %v2742
        %v2752 = vmax.f32 %v2744, 0.0
        %v2753 = vmax.f32 %v2745, 0.0
        %v2754 = vmax.f32 %v2746, 0.0
        %v2755 = vmax.f32 %v2747, 0.0
        %v2756 = vmax.f32 %v2748, 0.0
        %v2757 = vmax.f32 %v2749, 0.0
        %v2758 = vmax.f32 %v2750, 0.0
        %v2759 = vmax.f32 %v2751, 0.0
        %2760 = vrot.lane.b32.xlu0 %v2752, 127
        %v2761 = vpop.permute.xlu0 %2760
        %2762 = vrot.lane.b32.xlu0 %v2753, 127
        %v2763 = vpop.permute.xlu0 %2762
        %2764 = vrot.lane.b32.xlu0 %v2754, 127
        %v2765 = vpop.permute.xlu0 %2764
        %2766 = vrot.lane.b32.xlu0 %v2755, 127
        %v2767 = vpop.permute.xlu0 %2766
        %2768 = vrot.lane.b32.xlu0 %v2756, 127
        %v2769 = vpop.permute.xlu0 %2768
        %2770 = vrot.lane.b32.xlu0 %v2757, 127
        %v2771 = vpop.permute.xlu0 %2770
        %2772 = vrot.lane.b32.xlu0 %v2758, 127
        %v2773 = vpop.permute.xlu0 %2772
        %2774 = vrot.lane.b32.xlu0 %v2759, 127
        %v2775 = vpop.permute.xlu0 %2774
        %v2776 = vsel %vm1677, %v2773, %v2775
        %v2777 = vsel %vm1677, %v2771, %v2773
        %v2778 = vsel %vm1677, %v2769, %v2771
        %v2779 = vsel %vm1677, %v2767, %v2769
        %v2780 = vsel %vm1677, %v2765, %v2767
        %v2781 = vsel %vm1677, %v2763, %v2765
        %v2782 = vsel %vm1677, %v2761, %v2763
        %v2783 = vsel %vm1677, %v2775, %v2761
        %v2784 = vmax.f32 %v2752, %v2782
        %v2785 = vmax.f32 %v2753, %v2781
        %v2786 = vmax.f32 %v2754, %v2780
        %v2787 = vmax.f32 %v2755, %v2779
        %v2788 = vmax.f32 %v2756, %v2778
        %v2789 = vmax.f32 %v2757, %v2777
        %v2790 = vmax.f32 %v2758, %v2776
        %v2791 = vmax.f32 %v2759, %v2783
        %2792 = vrot.lane.b32.xlu0 %v2752, 96
        %v2793 = vpop.permute.xlu0 %2792
        %2794 = vrot.lane.b32.xlu0 %v2753, 96
        %v2795 = vpop.permute.xlu0 %2794
        %2796 = vrot.lane.b32.xlu0 %v2754, 96
        %v2797 = vpop.permute.xlu0 %2796
        %2798 = vrot.lane.b32.xlu0 %v2755, 96
        %v2799 = vpop.permute.xlu0 %2798
        %2800 = vrot.lane.b32.xlu0 %v2756, 96
        %v2801 = vpop.permute.xlu0 %2800
        %2802 = vrot.lane.b32.xlu0 %v2757, 96
        %v2803 = vpop.permute.xlu0 %2802
        %2804 = vrot.lane.b32.xlu0 %v2758, 96
        %v2805 = vpop.permute.xlu0 %2804
        %2806 = vrot.lane.b32.xlu0 %v2759, 96
        %v2807 = vpop.permute.xlu0 %2806
        %v2808 = vsel %vm2231, %v2805, %v2807
        %v2809 = vsel %vm2231, %v2803, %v2805
        %v2810 = vsel %vm2231, %v2801, %v2803
        %v2811 = vsel %vm2231, %v2799, %v2801
        %v2812 = vsel %vm2231, %v2797, %v2799
        %v2813 = vsel %vm2231, %v2795, %v2797
        %v2814 = vsel %vm2231, %v2793, %v2795
        %v2815 = vsel %vm2231, %v2807, %v2793
        %v2816 = vmax.f32 %v2784, %v2814
        %v2817 = vmax.f32 %v2785, %v2813
        %v2818 = vmax.f32 %v2786, %v2812
        %v2819 = vmax.f32 %v2787, %v2811
        %v2820 = vmax.f32 %v2788, %v2810
        %v2821 = vmax.f32 %v2789, %v2809
        %v2822 = vmax.f32 %v2790, %v2808
        %v2823 = vmax.f32 %v2791, %v2815
        %2824 = vrot.lane.b32.xlu0 %v2752, 95
        %v2825 = vpop.permute.xlu0 %2824
        %2826 = vrot.lane.b32.xlu0 %v2753, 95
        %v2827 = vpop.permute.xlu0 %2826
        %2828 = vrot.lane.b32.xlu0 %v2754, 95
        %v2829 = vpop.permute.xlu0 %2828
        %2830 = vrot.lane.b32.xlu0 %v2755, 95
        %v2831 = vpop.permute.xlu0 %2830
        %2832 = vrot.lane.b32.xlu0 %v2756, 95
        %v2833 = vpop.permute.xlu0 %2832
        %2834 = vrot.lane.b32.xlu0 %v2757, 95
        %v2835 = vpop.permute.xlu0 %2834
        %2836 = vrot.lane.b32.xlu0 %v2758, 95
        %v2837 = vpop.permute.xlu0 %2836
        %2838 = vrot.lane.b32.xlu0 %v2759, 95
        %v2839 = vpop.permute.xlu0 %2838
        %v2840 = vsel %vm2500, %v2837, %v2839
        %v2841 = vsel %vm2500, %v2835, %v2837
        %v2842 = vsel %vm2500, %v2833, %v2835
        %v2843 = vsel %vm2500, %v2831, %v2833
        %v2844 = vsel %vm2500, %v2829, %v2831
        %v2845 = vsel %vm2500, %v2827, %v2829
        %v2846 = vsel %vm2500, %v2825, %v2827
        %v2847 = vsel %vm2500, %v2839, %v2825
        %v2848 = vmax.f32 %v2816, %v2846
        %v2849 = vmax.f32 %v2817, %v2845
        %v2850 = vmax.f32 %v2818, %v2844
        %v2851 = vmax.f32 %v2819, %v2843
        %v2852 = vmax.f32 %v2820, %v2842
        %v2853 = vmax.f32 %v2821, %v2841
        %v2854 = vmax.f32 %v2822, %v2840
        %v2855 = vmax.f32 %v2823, %v2847
        %2856 = vrot.lane.b32.xlu0 %v2848, 66
        %v2857 = vpop.permute.xlu0 %2856
        %2858 = vrot.lane.b32.xlu0 %v2849, 66
        %v2859 = vpop.permute.xlu0 %2858
        %2860 = vrot.lane.b32.xlu0 %v2850, 66
        %v2861 = vpop.permute.xlu0 %2860
        %2862 = vrot.lane.b32.xlu0 %v2851, 66
        %v2863 = vpop.permute.xlu0 %2862
        %2864 = vrot.lane.b32.xlu0 %v2852, 66
        %v2865 = vpop.permute.xlu0 %2864
        %2866 = vrot.lane.b32.xlu0 %v2853, 66
        %v2867 = vpop.permute.xlu0 %2866
        %2868 = vrot.lane.b32.xlu0 %v2854, 66
        %v2869 = vpop.permute.xlu0 %2868
        %2870 = vrot.lane.b32.xlu0 %v2855, 66
        %v2871 = vpop.permute.xlu0 %2870
        %vm2872 = vcmp.lt.s32.totalorder %v277, 66
        %v2873 = vsel %vm2872, %v2869, %v2871
        %v2874 = vsel %vm2872, %v2867, %v2869
        %v2875 = vsel %vm2872, %v2865, %v2867
        %v2876 = vsel %vm2872, %v2863, %v2865
        %v2877 = vsel %vm2872, %v2861, %v2863
        %v2878 = vsel %vm2872, %v2859, %v2861
        %v2879 = vsel %vm2872, %v2857, %v2859
        %v2880 = vsel %vm2872, %v2871, %v2857
        %vm2881 = vcmp.ge.s32.totalorder %v301, 1
        %vm2882 = vcmp.ge.s32.totalorder %v302, 1
        %vm2883 = vcmp.ge.s32.totalorder %v303, 1
        %vm2884 = vcmp.ge.s32.totalorder %v304, 1
        %vm2885 = vcmp.ge.s32.totalorder %v305, 1
        %vm2886 = vcmp.ge.s32.totalorder %v306, 1
        %vm2887 = vcmp.ge.s32.totalorder %v307, 1
        %vm2888 = vcmp.ge.s32.totalorder %v308, 1
        %vm2889 = vcmp.ge.s32.totalorder %v317, 1
        %vm2890 = vcmp.ge.s32.totalorder %v318, 1
        %vm2891 = vcmp.ge.s32.totalorder %v319, 1
        %vm2892 = vcmp.ge.s32.totalorder %v320, 1
        %vm2893 = vcmp.ge.s32.totalorder %v321, 1
        %vm2894 = vcmp.ge.s32.totalorder %v322, 1
        %vm2895 = vcmp.ge.s32.totalorder %v323, 1
        %vm2896 = vcmp.ge.s32.totalorder %v324, 1
        %vm2897 = vmand %vm2881, %vm2889
        %vm2898 = vmand %vm2882, %vm2890
        %vm2899 = vmand %vm2883, %vm2891
        %vm2900 = vmand %vm2884, %vm2892
        %vm2901 = vmand %vm2885, %vm2893
        %vm2902 = vmand %vm2886, %vm2894
        %vm2903 = vmand %vm2887, %vm2895
        %vm2904 = vmand %vm2888, %vm2896
        %v2905 = vsel %vm2897, 1, 0
        %v2906 = vsel %vm2898, 1, 0
        %v2907 = vsel %vm2899, 1, 0
        %v2908 = vsel %vm2900, 1, 0
        %v2909 = vsel %vm2901, 1, 0
        %v2910 = vsel %vm2902, 1, 0
        %v2911 = vsel %vm2903, 1, 0
        %v2912 = vsel %vm2904, 1, 0
        %v2913 = vcvt.s32.f32 %v2905
        %v2914 = vcvt.s32.f32 %v2906
        %v2915 = vcvt.s32.f32 %v2907
        %v2916 = vcvt.s32.f32 %v2908
        %v2917 = vcvt.s32.f32 %v2909
        %v2918 = vcvt.s32.f32 %v2910
        %v2919 = vcvt.s32.f32 %v2911
        %v2920 = vcvt.s32.f32 %v2912
        %v2921 = vmul.f32 %v2880, %v2913
        %v2922 = vmul.f32 %v2879, %v2914
        %v2923 = vmul.f32 %v2878, %v2915
        %v2924 = vmul.f32 %v2877, %v2916
        %v2925 = vmul.f32 %v2876, %v2917
        %v2926 = vmul.f32 %v2875, %v2918
        %v2927 = vmul.f32 %v2874, %v2919
        %v2928 = vmul.f32 %v2873, %v2920
        %v2929 = vld [vmem:[%s3] sm:$0xff]
        %2930 = vrot.lane.b32.xlu0 %v2848, 64
        %v2931 = vpop.permute.xlu0 %2930
        %2932 = vrot.lane.b32.xlu0 %v2849, 64
        %v2933 = vpop.permute.xlu0 %2932
        %2934 = vrot.lane.b32.xlu0 %v2850, 64
        %v2935 = vpop.permute.xlu0 %2934
        %2936 = vrot.lane.b32.xlu0 %v2851, 64
        %v2937 = vpop.permute.xlu0 %2936
        %2938 = vrot.lane.b32.xlu0 %v2852, 64
        %v2939 = vpop.permute.xlu0 %2938
        %2940 = vrot.lane.b32.xlu0 %v2853, 64
        %v2941 = vpop.permute.xlu0 %2940
        %2942 = vrot.lane.b32.xlu0 %v2854, 64
        %v2943 = vpop.permute.xlu0 %2942
        %2944 = vrot.lane.b32.xlu0 %v2855, 64
        %v2945 = vpop.permute.xlu0 %2944
        %vm2946 = vcmp.lt.s32.totalorder %v277, 64
        %v2947 = vsel %vm2946, %v2943, %v2945
        %v2948 = vsel %vm2946, %v2941, %v2943
        %v2949 = vsel %vm2946, %v2939, %v2941
        %v2950 = vsel %vm2946, %v2937, %v2939
        %v2951 = vsel %vm2946, %v2935, %v2937
        %v2952 = vsel %vm2946, %v2933, %v2935
        %v2953 = vsel %vm2946, %v2931, %v2933
        %v2954 = vsel %vm2946, %v2945, %v2931
        %v2955 = vsel %vm2881, 1, 0
        %v2956 = vsel %vm2882, 1, 0
        %v2957 = vsel %vm2883, 1, 0
        %v2958 = vsel %vm2884, 1, 0
        %v2959 = vsel %vm2885, 1, 0
        %v2960 = vsel %vm2886, 1, 0
        %v2961 = vsel %vm2887, 1, 0
        %v2962 = vsel %vm2888, 1, 0
        %v2963 = vcvt.s32.f32 %v2955
        %v2964 = vcvt.s32.f32 %v2956
        %v2965 = vcvt.s32.f32 %v2957
        %v2966 = vcvt.s32.f32 %v2958
        %v2967 = vcvt.s32.f32 %v2959
        %v2968 = vcvt.s32.f32 %v2960
        %v2969 = vcvt.s32.f32 %v2961
        %v2970 = vcvt.s32.f32 %v2962
        %v2971 = vmul.f32 %v2954, %v2963
        %v2972 = vmul.f32 %v2953, %v2964
        %v2973 = vmul.f32 %v2952, %v2965
        %v2974 = vmul.f32 %v2951, %v2966
        %v2975 = vmul.f32 %v2950, %v2967
        %v2976 = vmul.f32 %v2949, %v2968
        %v2977 = vmul.f32 %v2948, %v2969
        %v2978 = vmul.f32 %v2947, %v2970
        %s2979 = scalar_lea.vmem %s3, 8
        %v2980 = vld [vmem:[%s2979] sm:$0xff]
        %vm2981 = vcmask 31744
        %v2983 = vsel %vm2981, %v2980, 0
        %vm2985 = vcmask 1043456
        %v2987 = vsel %vm2985, %v2971, 0
        %v2990 = vsel %vm2985, %v2972, 0
        %v2993 = vsel %vm2985, %v2973, 0
        %v2996 = vsel %vm2985, %v2974, 0
        %v2999 = vsel %vm2985, %v2975, 0
        %v3002 = vsel %vm2985, %v2976, 0
        %v3005 = vsel %vm2985, %v2977, 0
        %v3008 = vsel %vm2985, %v2978, 0
        %3010 = vmatpush.msra.mxu0 0.0
        %3011 = vmatpush.msra.mxu0 0.0
        %3012 = vmatpush.msra.mxu0 0.0
        %3013 = vmatpush.msra.mxu0 0.0
        %3014 = vmatpush.msra.mxu0 0.0
        %3015 = vmatpush.msra.mxu0 0.0
        %3016 = vmatpush.msra.mxu0 0.0
        %3017 = vmatpush.msra.mxu0 0.0
        %3018 = vmatpush.msra.mxu0 0.0
        %3019 = vmatpush.msra.mxu0 0.0
        %3020 = vmatpush.msra.mxu0 0.0
        %3021 = vmatpush.msra.mxu0 0.0
        %3022 = vmatpush.msra.mxu0 0.0
        %3023 = vmatpush.msra.mxu0 0.0
        %3024 = vmatpush.msra.mxu0 0.0
        %3025 = vmatpush.msra.mxu0 %v2987
        %3026 = vmatmul.f32.gmra.mxu0 %v2983
        %v3027 = vpop.f32.mrf.mxu0
        %v3028 = vadd.f32 0.0, %v3027
        %3029 = vdwg.mxu0
        %3030 = vmatpush.msra.mxu0 0.0
        %3031 = vmatpush.msra.mxu0 0.0
        %3032 = vmatpush.msra.mxu0 0.0
        %3033 = vmatpush.msra.mxu0 0.0
        %3034 = vmatpush.msra.mxu0 0.0
        %3035 = vmatpush.msra.mxu0 0.0
        %3036 = vmatpush.msra.mxu0 0.0
        %3037 = vmatpush.msra.mxu0 0.0
        %3038 = vmatpush.msra.mxu0 0.0
        %3039 = vmatpush.msra.mxu0 0.0
        %3040 = vmatpush.msra.mxu0 0.0
        %3041 = vmatpush.msra.mxu0 0.0
        %3042 = vmatpush.msra.mxu0 0.0
        %3043 = vmatpush.msra.mxu0 0.0
        %3044 = vmatpush.msra.mxu0 0.0
        %3045 = vmatpush.msra.mxu0 %v2990
        %3046 = vmatmul.f32.gmra.mxu0 %v2983
        %v3047 = vpop.f32.mrf.mxu0
        %v3048 = vadd.f32 0.0, %v3047
        %3049 = vdwg.mxu0
        %3050 = vmatpush.msra.mxu0 0.0
        %3051 = vmatpush.msra.mxu0 0.0
        %3052 = vmatpush.msra.mxu0 0.0
        %3053 = vmatpush.msra.mxu0 0.0
        %3054 = vmatpush.msra.mxu0 0.0
        %3055 = vmatpush.msra.mxu0 0.0
        %3056 = vmatpush.msra.mxu0 0.0
        %3057 = vmatpush.msra.mxu0 0.0
        %3058 = vmatpush.msra.mxu0 0.0
        %3059 = vmatpush.msra.mxu0 0.0
        %3060 = vmatpush.msra.mxu0 0.0
        %3061 = vmatpush.msra.mxu0 0.0
        %3062 = vmatpush.msra.mxu0 0.0
        %3063 = vmatpush.msra.mxu0 0.0
        %3064 = vmatpush.msra.mxu0 0.0
        %3065 = vmatpush.msra.mxu0 %v2993
        %3066 = vmatmul.f32.gmra.mxu0 %v2983
        %v3067 = vpop.f32.mrf.mxu0
        %v3068 = vadd.f32 0.0, %v3067
        %3069 = vdwg.mxu0
        %3070 = vmatpush.msra.mxu0 0.0
        %3071 = vmatpush.msra.mxu0 0.0
        %3072 = vmatpush.msra.mxu0 0.0
        %3073 = vmatpush.msra.mxu0 0.0
        %3074 = vmatpush.msra.mxu0 0.0
        %3075 = vmatpush.msra.mxu0 0.0
        %3076 = vmatpush.msra.mxu0 0.0
        %3077 = vmatpush.msra.mxu0 0.0
        %3078 = vmatpush.msra.mxu0 0.0
        %3079 = vmatpush.msra.mxu0 0.0
        %3080 = vmatpush.msra.mxu0 0.0
        %3081 = vmatpush.msra.mxu0 0.0
        %3082 = vmatpush.msra.mxu0 0.0
        %3083 = vmatpush.msra.mxu0 0.0
        %3084 = vmatpush.msra.mxu0 0.0
        %3085 = vmatpush.msra.mxu0 %v2996
        %3086 = vmatmul.f32.gmra.mxu0 %v2983
        %v3087 = vpop.f32.mrf.mxu0
        %v3088 = vadd.f32 0.0, %v3087
        %3089 = vdwg.mxu0
        %3090 = vmatpush.msra.mxu0 0.0
        %3091 = vmatpush.msra.mxu0 0.0
        %3092 = vmatpush.msra.mxu0 0.0
        %3093 = vmatpush.msra.mxu0 0.0
        %3094 = vmatpush.msra.mxu0 0.0
        %3095 = vmatpush.msra.mxu0 0.0
        %3096 = vmatpush.msra.mxu0 0.0
        %3097 = vmatpush.msra.mxu0 0.0
        %3098 = vmatpush.msra.mxu0 0.0
        %3099 = vmatpush.msra.mxu0 0.0
        %3100 = vmatpush.msra.mxu0 0.0
        %3101 = vmatpush.msra.mxu0 0.0
        %3102 = vmatpush.msra.mxu0 0.0
        %3103 = vmatpush.msra.mxu0 0.0
        %3104 = vmatpush.msra.mxu0 0.0
        %3105 = vmatpush.msra.mxu0 %v2999
        %3106 = vmatmul.f32.gmra.mxu0 %v2983
        %v3107 = vpop.f32.mrf.mxu0
        %v3108 = vadd.f32 0.0, %v3107
        %3109 = vdwg.mxu0
        %3110 = vmatpush.msra.mxu0 0.0
        %3111 = vmatpush.msra.mxu0 0.0
        %3112 = vmatpush.msra.mxu0 0.0
        %3113 = vmatpush.msra.mxu0 0.0
        %3114 = vmatpush.msra.mxu0 0.0
        %3115 = vmatpush.msra.mxu0 0.0
        %3116 = vmatpush.msra.mxu0 0.0
        %3117 = vmatpush.msra.mxu0 0.0
        %3118 = vmatpush.msra.mxu0 0.0
        %3119 = vmatpush.msra.mxu0 0.0
        %3120 = vmatpush.msra.mxu0 0.0
        %3121 = vmatpush.msra.mxu0 0.0
        %3122 = vmatpush.msra.mxu0 0.0
        %3123 = vmatpush.msra.mxu0 0.0
        %3124 = vmatpush.msra.mxu0 0.0
        %3125 = vmatpush.msra.mxu0 %v3002
        %3126 = vmatmul.f32.gmra.mxu0 %v2983
        %v3127 = vpop.f32.mrf.mxu0
        %v3128 = vadd.f32 0.0, %v3127
        %3129 = vdwg.mxu0
        %3130 = vmatpush.msra.mxu0 0.0
        %3131 = vmatpush.msra.mxu0 0.0
        %3132 = vmatpush.msra.mxu0 0.0
        %3133 = vmatpush.msra.mxu0 0.0
        %3134 = vmatpush.msra.mxu0 0.0
        %3135 = vmatpush.msra.mxu0 0.0
        %3136 = vmatpush.msra.mxu0 0.0
        %3137 = vmatpush.msra.mxu0 0.0
        %3138 = vmatpush.msra.mxu0 0.0
        %3139 = vmatpush.msra.mxu0 0.0
        %3140 = vmatpush.msra.mxu0 0.0
        %3141 = vmatpush.msra.mxu0 0.0
        %3142 = vmatpush.msra.mxu0 0.0
        %3143 = vmatpush.msra.mxu0 0.0
        %3144 = vmatpush.msra.mxu0 0.0
        %3145 = vmatpush.msra.mxu0 %v3005
        %3146 = vmatmul.f32.gmra.mxu0 %v2983
        %v3147 = vpop.f32.mrf.mxu0
        %v3148 = vadd.f32 0.0, %v3147
        %3149 = vdwg.mxu0
        %3150 = vmatpush.msra.mxu0 0.0
        %3151 = vmatpush.msra.mxu0 0.0
        %3152 = vmatpush.msra.mxu0 0.0
        %3153 = vmatpush.msra.mxu0 0.0
        %3154 = vmatpush.msra.mxu0 0.0
        %3155 = vmatpush.msra.mxu0 0.0
        %3156 = vmatpush.msra.mxu0 0.0
        %3157 = vmatpush.msra.mxu0 0.0
        %3158 = vmatpush.msra.mxu0 0.0
        %3159 = vmatpush.msra.mxu0 0.0
        %3160 = vmatpush.msra.mxu0 0.0
        %3161 = vmatpush.msra.mxu0 0.0
        %3162 = vmatpush.msra.mxu0 0.0
        %3163 = vmatpush.msra.mxu0 0.0
        %3164 = vmatpush.msra.mxu0 0.0
        %3165 = vmatpush.msra.mxu0 %v3008
        %3166 = vmatmul.f32.gmra.mxu0 %v2983
        %v3167 = vpop.f32.mrf.mxu0
        %v3168 = vadd.f32 0.0, %v3167
        %3169 = vdwg.mxu0
        %v3171 = vsel %vm2981, %v2929, 0
        %v3174 = vsel %vm2985, %v2921, 0
        %v3177 = vsel %vm2985, %v2922, 0
        %v3180 = vsel %vm2985, %v2923, 0
        %v3183 = vsel %vm2985, %v2924, 0
        %v3186 = vsel %vm2985, %v2925, 0
        %v3189 = vsel %vm2985, %v2926, 0
        %v3192 = vsel %vm2985, %v2927, 0
        %v3195 = vsel %vm2985, %v2928, 0
        %3197 = vmatpush.msra.mxu0 0.0
        %3198 = vmatpush.msra.mxu0 0.0
        %3199 = vmatpush.msra.mxu0 0.0
        %3200 = vmatpush.msra.mxu0 0.0
        %3201 = vmatpush.msra.mxu0 0.0
        %3202 = vmatpush.msra.mxu0 0.0
        %3203 = vmatpush.msra.mxu0 0.0
        %3204 = vmatpush.msra.mxu0 0.0
        %3205 = vmatpush.msra.mxu0 0.0
        %3206 = vmatpush.msra.mxu0 0.0
        %3207 = vmatpush.msra.mxu0 0.0
        %3208 = vmatpush.msra.mxu0 0.0
        %3209 = vmatpush.msra.mxu0 0.0
        %3210 = vmatpush.msra.mxu0 0.0
        %3211 = vmatpush.msra.mxu0 0.0
        %3212 = vmatpush.msra.mxu0 %v3174
        %3213 = vmatmul.f32.gmra.mxu0 %v3171
        %v3214 = vpop.f32.mrf.mxu0
        %v3215 = vadd.f32 %v3028, %v3214
        %3216 = vdwg.mxu0
        %3217 = vmatpush.msra.mxu0 0.0
        %3218 = vmatpush.msra.mxu0 0.0
        %3219 = vmatpush.msra.mxu0 0.0
        %3220 = vmatpush.msra.mxu0 0.0
        %3221 = vmatpush.msra.mxu0 0.0
        %3222 = vmatpush.msra.mxu0 0.0
        %3223 = vmatpush.msra.mxu0 0.0
        %3224 = vmatpush.msra.mxu0 0.0
        %3225 = vmatpush.msra.mxu0 0.0
        %3226 = vmatpush.msra.mxu0 0.0
        %3227 = vmatpush.msra.mxu0 0.0
        %3228 = vmatpush.msra.mxu0 0.0
        %3229 = vmatpush.msra.mxu0 0.0
        %3230 = vmatpush.msra.mxu0 0.0
        %3231 = vmatpush.msra.mxu0 0.0
        %3232 = vmatpush.msra.mxu0 %v3177
        %3233 = vmatmul.f32.gmra.mxu0 %v3171
        %v3234 = vpop.f32.mrf.mxu0
        %v3235 = vadd.f32 %v3048, %v3234
        %3236 = vdwg.mxu0
        %3237 = vmatpush.msra.mxu0 0.0
        %3238 = vmatpush.msra.mxu0 0.0
        %3239 = vmatpush.msra.mxu0 0.0
        %3240 = vmatpush.msra.mxu0 0.0
        %3241 = vmatpush.msra.mxu0 0.0
        %3242 = vmatpush.msra.mxu0 0.0
        %3243 = vmatpush.msra.mxu0 0.0
        %3244 = vmatpush.msra.mxu0 0.0
        %3245 = vmatpush.msra.mxu0 0.0
        %3246 = vmatpush.msra.mxu0 0.0
        %3247 = vmatpush.msra.mxu0 0.0
        %3248 = vmatpush.msra.mxu0 0.0
        %3249 = vmatpush.msra.mxu0 0.0
        %3250 = vmatpush.msra.mxu0 0.0
        %3251 = vmatpush.msra.mxu0 0.0
        %3252 = vmatpush.msra.mxu0 %v3180
        %3253 = vmatmul.f32.gmra.mxu0 %v3171
        %v3254 = vpop.f32.mrf.mxu0
        %v3255 = vadd.f32 %v3068, %v3254
        %3256 = vdwg.mxu0
        %3257 = vmatpush.msra.mxu0 0.0
        %3258 = vmatpush.msra.mxu0 0.0
        %3259 = vmatpush.msra.mxu0 0.0
        %3260 = vmatpush.msra.mxu0 0.0
        %3261 = vmatpush.msra.mxu0 0.0
        %3262 = vmatpush.msra.mxu0 0.0
        %3263 = vmatpush.msra.mxu0 0.0
        %3264 = vmatpush.msra.mxu0 0.0
        %3265 = vmatpush.msra.mxu0 0.0
        %3266 = vmatpush.msra.mxu0 0.0
        %3267 = vmatpush.msra.mxu0 0.0
        %3268 = vmatpush.msra.mxu0 0.0
        %3269 = vmatpush.msra.mxu0 0.0
        %3270 = vmatpush.msra.mxu0 0.0
        %3271 = vmatpush.msra.mxu0 0.0
        %3272 = vmatpush.msra.mxu0 %v3183
        %3273 = vmatmul.f32.gmra.mxu0 %v3171
        %v3274 = vpop.f32.mrf.mxu0
        %v3275 = vadd.f32 %v3088, %v3274
        %3276 = vdwg.mxu0
        %3277 = vmatpush.msra.mxu0 0.0
        %3278 = vmatpush.msra.mxu0 0.0
        %3279 = vmatpush.msra.mxu0 0.0
        %3280 = vmatpush.msra.mxu0 0.0
        %3281 = vmatpush.msra.mxu0 0.0
        %3282 = vmatpush.msra.mxu0 0.0
        %3283 = vmatpush.msra.mxu0 0.0
        %3284 = vmatpush.msra.mxu0 0.0
        %3285 = vmatpush.msra.mxu0 0.0
        %3286 = vmatpush.msra.mxu0 0.0
        %3287 = vmatpush.msra.mxu0 0.0
        %3288 = vmatpush.msra.mxu0 0.0
        %3289 = vmatpush.msra.mxu0 0.0
        %3290 = vmatpush.msra.mxu0 0.0
        %3291 = vmatpush.msra.mxu0 0.0
        %3292 = vmatpush.msra.mxu0 %v3186
        %3293 = vmatmul.f32.gmra.mxu0 %v3171
        %v3294 = vpop.f32.mrf.mxu0
        %v3295 = vadd.f32 %v3108, %v3294
        %3296 = vdwg.mxu0
        %3297 = vmatpush.msra.mxu0 0.0
        %3298 = vmatpush.msra.mxu0 0.0
        %3299 = vmatpush.msra.mxu0 0.0
        %3300 = vmatpush.msra.mxu0 0.0
        %3301 = vmatpush.msra.mxu0 0.0
        %3302 = vmatpush.msra.mxu0 0.0
        %3303 = vmatpush.msra.mxu0 0.0
        %3304 = vmatpush.msra.mxu0 0.0
        %3305 = vmatpush.msra.mxu0 0.0
        %3306 = vmatpush.msra.mxu0 0.0
        %3307 = vmatpush.msra.mxu0 0.0
        %3308 = vmatpush.msra.mxu0 0.0
        %3309 = vmatpush.msra.mxu0 0.0
        %3310 = vmatpush.msra.mxu0 0.0
        %3311 = vmatpush.msra.mxu0 0.0
        %3312 = vmatpush.msra.mxu0 %v3189
        %3313 = vmatmul.f32.gmra.mxu0 %v3171
        %v3314 = vpop.f32.mrf.mxu0
        %v3315 = vadd.f32 %v3128, %v3314
        %3316 = vdwg.mxu0
        %3317 = vmatpush.msra.mxu0 0.0
        %3318 = vmatpush.msra.mxu0 0.0
        %3319 = vmatpush.msra.mxu0 0.0
        %3320 = vmatpush.msra.mxu0 0.0
        %3321 = vmatpush.msra.mxu0 0.0
        %3322 = vmatpush.msra.mxu0 0.0
        %3323 = vmatpush.msra.mxu0 0.0
        %3324 = vmatpush.msra.mxu0 0.0
        %3325 = vmatpush.msra.mxu0 0.0
        %3326 = vmatpush.msra.mxu0 0.0
        %3327 = vmatpush.msra.mxu0 0.0
        %3328 = vmatpush.msra.mxu0 0.0
        %3329 = vmatpush.msra.mxu0 0.0
        %3330 = vmatpush.msra.mxu0 0.0
        %3331 = vmatpush.msra.mxu0 0.0
        %3332 = vmatpush.msra.mxu0 %v3192
        %3333 = vmatmul.f32.gmra.mxu0 %v3171
        %v3334 = vpop.f32.mrf.mxu0
        %v3335 = vadd.f32 %v3148, %v3334
        %3336 = vdwg.mxu0
        %3337 = vmatpush.msra.mxu0 0.0
        %3338 = vmatpush.msra.mxu0 0.0
        %3339 = vmatpush.msra.mxu0 0.0
        %3340 = vmatpush.msra.mxu0 0.0
        %3341 = vmatpush.msra.mxu0 0.0
        %3342 = vmatpush.msra.mxu0 0.0
        %3343 = vmatpush.msra.mxu0 0.0
        %3344 = vmatpush.msra.mxu0 0.0
        %3345 = vmatpush.msra.mxu0 0.0
        %3346 = vmatpush.msra.mxu0 0.0
        %3347 = vmatpush.msra.mxu0 0.0
        %3348 = vmatpush.msra.mxu0 0.0
        %3349 = vmatpush.msra.mxu0 0.0
        %3350 = vmatpush.msra.mxu0 0.0
        %3351 = vmatpush.msra.mxu0 0.0
        %3352 = vmatpush.msra.mxu0 %v3195
        %3353 = vmatmul.f32.gmra.mxu0 %v3171
        %v3354 = vpop.f32.mrf.mxu0
        %v3355 = vadd.f32 %v3168, %v3354
        %3356 = vdwg.mxu0
        %3357 = vrot.lane.b32.xlu0 %v2848, 62
        %v3358 = vpop.permute.xlu0 %3357
        %3359 = vrot.lane.b32.xlu0 %v2849, 62
        %v3360 = vpop.permute.xlu0 %3359
        %3361 = vrot.lane.b32.xlu0 %v2850, 62
        %v3362 = vpop.permute.xlu0 %3361
        %3363 = vrot.lane.b32.xlu0 %v2851, 62
        %v3364 = vpop.permute.xlu0 %3363
        %3365 = vrot.lane.b32.xlu0 %v2852, 62
        %v3366 = vpop.permute.xlu0 %3365
        %3367 = vrot.lane.b32.xlu0 %v2853, 62
        %v3368 = vpop.permute.xlu0 %3367
        %3369 = vrot.lane.b32.xlu0 %v2854, 62
        %v3370 = vpop.permute.xlu0 %3369
        %3371 = vrot.lane.b32.xlu0 %v2855, 62
        %v3372 = vpop.permute.xlu0 %3371
        %vm3373 = vcmp.lt.s32.totalorder %v277, 62
        %v3374 = vsel %vm3373, %v3370, %v3372
        %v3375 = vsel %vm3373, %v3368, %v3370
        %v3376 = vsel %vm3373, %v3366, %v3368
        %v3377 = vsel %vm3373, %v3364, %v3366
        %v3378 = vsel %vm3373, %v3362, %v3364
        %v3379 = vsel %vm3373, %v3360, %v3362
        %v3380 = vsel %vm3373, %v3358, %v3360
        %v3381 = vsel %vm3373, %v3372, %v3358
        %vm3382 = vcmp.le.s32.totalorder %v317, 14
        %vm3383 = vcmp.le.s32.totalorder %v318, 14
        %vm3384 = vcmp.le.s32.totalorder %v319, 14
        %vm3385 = vcmp.le.s32.totalorder %v320, 14
        %vm3386 = vcmp.le.s32.totalorder %v321, 14
        %vm3387 = vcmp.le.s32.totalorder %v322, 14
        %vm3388 = vcmp.le.s32.totalorder %v323, 14
        %vm3389 = vcmp.le.s32.totalorder %v324, 14
        %vm3390 = vmand %vm2881, %vm3382
        %vm3391 = vmand %vm2882, %vm3383
        %vm3392 = vmand %vm2883, %vm3384
        %vm3393 = vmand %vm2884, %vm3385
        %vm3394 = vmand %vm2885, %vm3386
        %vm3395 = vmand %vm2886, %vm3387
        %vm3396 = vmand %vm2887, %vm3388
        %vm3397 = vmand %vm2888, %vm3389
        %v3398 = vsel %vm3390, 1, 0
        %v3399 = vsel %vm3391, 1, 0
        %v3400 = vsel %vm3392, 1, 0
        %v3401 = vsel %vm3393, 1, 0
        %v3402 = vsel %vm3394, 1, 0
        %v3403 = vsel %vm3395, 1, 0
        %v3404 = vsel %vm3396, 1, 0
        %v3405 = vsel %vm3397, 1, 0
        %v3406 = vcvt.s32.f32 %v3398
        %v3407 = vcvt.s32.f32 %v3399
        %v3408 = vcvt.s32.f32 %v3400
        %v3409 = vcvt.s32.f32 %v3401
        %v3410 = vcvt.s32.f32 %v3402
        %v3411 = vcvt.s32.f32 %v3403
        %v3412 = vcvt.s32.f32 %v3404
        %v3413 = vcvt.s32.f32 %v3405
        %v3414 = vmul.f32 %v3381, %v3406
        %v3415 = vmul.f32 %v3380, %v3407
        %v3416 = vmul.f32 %v3379, %v3408
        %v3417 = vmul.f32 %v3378, %v3409
        %v3418 = vmul.f32 %v3377, %v3410
        %v3419 = vmul.f32 %v3376, %v3411
        %v3420 = vmul.f32 %v3375, %v3412
        %v3421 = vmul.f32 %v3374, %v3413
        %s3422 = scalar_lea.vmem %s3, 16
        %v3423 = vld [vmem:[%s3422] sm:$0xff]
        %v3425 = vsel %vm2981, %v3423, 0
        %v3428 = vsel %vm2985, %v3414, 0
        %v3431 = vsel %vm2985, %v3415, 0
        %v3434 = vsel %vm2985, %v3416, 0
        %v3437 = vsel %vm2985, %v3417, 0
        %v3440 = vsel %vm2985, %v3418, 0
        %v3443 = vsel %vm2985, %v3419, 0
        %v3446 = vsel %vm2985, %v3420, 0
        %v3449 = vsel %vm2985, %v3421, 0
        %3451 = vmatpush.msra.mxu0 0.0
        %3452 = vmatpush.msra.mxu0 0.0
        %3453 = vmatpush.msra.mxu0 0.0
        %3454 = vmatpush.msra.mxu0 0.0
        %3455 = vmatpush.msra.mxu0 0.0
        %3456 = vmatpush.msra.mxu0 0.0
        %3457 = vmatpush.msra.mxu0 0.0
        %3458 = vmatpush.msra.mxu0 0.0
        %3459 = vmatpush.msra.mxu0 0.0
        %3460 = vmatpush.msra.mxu0 0.0
        %3461 = vmatpush.msra.mxu0 0.0
        %3462 = vmatpush.msra.mxu0 0.0
        %3463 = vmatpush.msra.mxu0 0.0
        %3464 = vmatpush.msra.mxu0 0.0
        %3465 = vmatpush.msra.mxu0 0.0
        %3466 = vmatpush.msra.mxu0 %v3428
        %3467 = vmatmul.f32.gmra.mxu0 %v3425
        %v3468 = vpop.f32.mrf.mxu0
        %v3469 = vadd.f32 0.0, %v3468
        %3470 = vdwg.mxu0
        %3471 = vmatpush.msra.mxu0 0.0
        %3472 = vmatpush.msra.mxu0 0.0
        %3473 = vmatpush.msra.mxu0 0.0
        %3474 = vmatpush.msra.mxu0 0.0
        %3475 = vmatpush.msra.mxu0 0.0
        %3476 = vmatpush.msra.mxu0 0.0
        %3477 = vmatpush.msra.mxu0 0.0
        %3478 = vmatpush.msra.mxu0 0.0
        %3479 = vmatpush.msra.mxu0 0.0
        %3480 = vmatpush.msra.mxu0 0.0
        %3481 = vmatpush.msra.mxu0 0.0
        %3482 = vmatpush.msra.mxu0 0.0
        %3483 = vmatpush.msra.mxu0 0.0
        %3484 = vmatpush.msra.mxu0 0.0
        %3485 = vmatpush.msra.mxu0 0.0
        %3486 = vmatpush.msra.mxu0 %v3431
        %3487 = vmatmul.f32.gmra.mxu0 %v3425
        %v3488 = vpop.f32.mrf.mxu0
        %v3489 = vadd.f32 0.0, %v3488
        %3490 = vdwg.mxu0
        %3491 = vmatpush.msra.mxu0 0.0
        %3492 = vmatpush.msra.mxu0 0.0
        %3493 = vmatpush.msra.mxu0 0.0
        %3494 = vmatpush.msra.mxu0 0.0
        %3495 = vmatpush.msra.mxu0 0.0
        %3496 = vmatpush.msra.mxu0 0.0
        %3497 = vmatpush.msra.mxu0 0.0
        %3498 = vmatpush.msra.mxu0 0.0
        %3499 = vmatpush.msra.mxu0 0.0
        %3500 = vmatpush.msra.mxu0 0.0
        %3501 = vmatpush.msra.mxu0 0.0
        %3502 = vmatpush.msra.mxu0 0.0
        %3503 = vmatpush.msra.mxu0 0.0
        %3504 = vmatpush.msra.mxu0 0.0
        %3505 = vmatpush.msra.mxu0 0.0
        %3506 = vmatpush.msra.mxu0 %v3434
        %3507 = vmatmul.f32.gmra.mxu0 %v3425
        %v3508 = vpop.f32.mrf.mxu0
        %v3509 = vadd.f32 0.0, %v3508
        %3510 = vdwg.mxu0
        %3511 = vmatpush.msra.mxu0 0.0
        %3512 = vmatpush.msra.mxu0 0.0
        %3513 = vmatpush.msra.mxu0 0.0
        %3514 = vmatpush.msra.mxu0 0.0
        %3515 = vmatpush.msra.mxu0 0.0
        %3516 = vmatpush.msra.mxu0 0.0
        %3517 = vmatpush.msra.mxu0 0.0
        %3518 = vmatpush.msra.mxu0 0.0
        %3519 = vmatpush.msra.mxu0 0.0
        %3520 = vmatpush.msra.mxu0 0.0
        %3521 = vmatpush.msra.mxu0 0.0
        %3522 = vmatpush.msra.mxu0 0.0
        %3523 = vmatpush.msra.mxu0 0.0
        %3524 = vmatpush.msra.mxu0 0.0
        %3525 = vmatpush.msra.mxu0 0.0
        %3526 = vmatpush.msra.mxu0 %v3437
        %3527 = vmatmul.f32.gmra.mxu0 %v3425
        %v3528 = vpop.f32.mrf.mxu0
        %v3529 = vadd.f32 0.0, %v3528
        %3530 = vdwg.mxu0
        %3531 = vmatpush.msra.mxu0 0.0
        %3532 = vmatpush.msra.mxu0 0.0
        %3533 = vmatpush.msra.mxu0 0.0
        %3534 = vmatpush.msra.mxu0 0.0
        %3535 = vmatpush.msra.mxu0 0.0
        %3536 = vmatpush.msra.mxu0 0.0
        %3537 = vmatpush.msra.mxu0 0.0
        %3538 = vmatpush.msra.mxu0 0.0
        %3539 = vmatpush.msra.mxu0 0.0
        %3540 = vmatpush.msra.mxu0 0.0
        %3541 = vmatpush.msra.mxu0 0.0
        %3542 = vmatpush.msra.mxu0 0.0
        %3543 = vmatpush.msra.mxu0 0.0
        %3544 = vmatpush.msra.mxu0 0.0
        %3545 = vmatpush.msra.mxu0 0.0
        %3546 = vmatpush.msra.mxu0 %v3440
        %3547 = vmatmul.f32.gmra.mxu0 %v3425
        %v3548 = vpop.f32.mrf.mxu0
        %v3549 = vadd.f32 0.0, %v3548
        %3550 = vdwg.mxu0
        %3551 = vmatpush.msra.mxu0 0.0
        %3552 = vmatpush.msra.mxu0 0.0
        %3553 = vmatpush.msra.mxu0 0.0
        %3554 = vmatpush.msra.mxu0 0.0
        %3555 = vmatpush.msra.mxu0 0.0
        %3556 = vmatpush.msra.mxu0 0.0
        %3557 = vmatpush.msra.mxu0 0.0
        %3558 = vmatpush.msra.mxu0 0.0
        %3559 = vmatpush.msra.mxu0 0.0
        %3560 = vmatpush.msra.mxu0 0.0
        %3561 = vmatpush.msra.mxu0 0.0
        %3562 = vmatpush.msra.mxu0 0.0
        %3563 = vmatpush.msra.mxu0 0.0
        %3564 = vmatpush.msra.mxu0 0.0
        %3565 = vmatpush.msra.mxu0 0.0
        %3566 = vmatpush.msra.mxu0 %v3443
        %3567 = vmatmul.f32.gmra.mxu0 %v3425
        %v3568 = vpop.f32.mrf.mxu0
        %v3569 = vadd.f32 0.0, %v3568
        %3570 = vdwg.mxu0
        %3571 = vmatpush.msra.mxu0 0.0
        %3572 = vmatpush.msra.mxu0 0.0
        %3573 = vmatpush.msra.mxu0 0.0
        %3574 = vmatpush.msra.mxu0 0.0
        %3575 = vmatpush.msra.mxu0 0.0
        %3576 = vmatpush.msra.mxu0 0.0
        %3577 = vmatpush.msra.mxu0 0.0
        %3578 = vmatpush.msra.mxu0 0.0
        %3579 = vmatpush.msra.mxu0 0.0
        %3580 = vmatpush.msra.mxu0 0.0
        %3581 = vmatpush.msra.mxu0 0.0
        %3582 = vmatpush.msra.mxu0 0.0
        %3583 = vmatpush.msra.mxu0 0.0
        %3584 = vmatpush.msra.mxu0 0.0
        %3585 = vmatpush.msra.mxu0 0.0
        %3586 = vmatpush.msra.mxu0 %v3446
        %3587 = vmatmul.f32.gmra.mxu0 %v3425
        %v3588 = vpop.f32.mrf.mxu0
        %v3589 = vadd.f32 0.0, %v3588
        %3590 = vdwg.mxu0
        %3591 = vmatpush.msra.mxu0 0.0
        %3592 = vmatpush.msra.mxu0 0.0
        %3593 = vmatpush.msra.mxu0 0.0
        %3594 = vmatpush.msra.mxu0 0.0
        %3595 = vmatpush.msra.mxu0 0.0
        %3596 = vmatpush.msra.mxu0 0.0
        %3597 = vmatpush.msra.mxu0 0.0
        %3598 = vmatpush.msra.mxu0 0.0
        %3599 = vmatpush.msra.mxu0 0.0
        %3600 = vmatpush.msra.mxu0 0.0
        %3601 = vmatpush.msra.mxu0 0.0
        %3602 = vmatpush.msra.mxu0 0.0
        %3603 = vmatpush.msra.mxu0 0.0
        %3604 = vmatpush.msra.mxu0 0.0
        %3605 = vmatpush.msra.mxu0 0.0
        %3606 = vmatpush.msra.mxu0 %v3449
        %3607 = vmatmul.f32.gmra.mxu0 %v3425
        %v3608 = vpop.f32.mrf.mxu0
        %v3609 = vadd.f32 0.0, %v3608
        %3610 = vdwg.mxu0
        %v3611 = vadd.f32 %v3215, %v3469
        %v3612 = vadd.f32 %v3235, %v3489
        %v3613 = vadd.f32 %v3255, %v3509
        %v3614 = vadd.f32 %v3275, %v3529
        %v3615 = vadd.f32 %v3295, %v3549
        %v3616 = vadd.f32 %v3315, %v3569
        %v3617 = vadd.f32 %v3335, %v3589
        %v3618 = vadd.f32 %v3355, %v3609
        %3619 = vrot.lane.b32.xlu0 %v2848, 2
        %v3620 = vpop.permute.xlu0 %3619
        %3621 = vrot.lane.b32.xlu0 %v2849, 2
        %v3622 = vpop.permute.xlu0 %3621
        %3623 = vrot.lane.b32.xlu0 %v2850, 2
        %v3624 = vpop.permute.xlu0 %3623
        %3625 = vrot.lane.b32.xlu0 %v2851, 2
        %v3626 = vpop.permute.xlu0 %3625
        %3627 = vrot.lane.b32.xlu0 %v2852, 2
        %v3628 = vpop.permute.xlu0 %3627
        %3629 = vrot.lane.b32.xlu0 %v2853, 2
        %v3630 = vpop.permute.xlu0 %3629
        %3631 = vrot.lane.b32.xlu0 %v2854, 2
        %v3632 = vpop.permute.xlu0 %3631
        %3633 = vrot.lane.b32.xlu0 %v2855, 2
        %v3634 = vpop.permute.xlu0 %3633
        %vm3635 = vcmp.lt.s32.totalorder %v277, 2
        %v3636 = vsel %vm3635, %v3632, %v3634
        %v3637 = vsel %vm3635, %v3630, %v3632
        %v3638 = vsel %vm3635, %v3628, %v3630
        %v3639 = vsel %vm3635, %v3626, %v3628
        %v3640 = vsel %vm3635, %v3624, %v3626
        %v3641 = vsel %vm3635, %v3622, %v3624
        %v3642 = vsel %vm3635, %v3620, %v3622
        %v3643 = vsel %vm3635, %v3634, %v3620
        %v3644 = vsel %vm2889, 1, 0
        %v3645 = vsel %vm2890, 1, 0
        %v3646 = vsel %vm2891, 1, 0
        %v3647 = vsel %vm2892, 1, 0
        %v3648 = vsel %vm2893, 1, 0
        %v3649 = vsel %vm2894, 1, 0
        %v3650 = vsel %vm2895, 1, 0
        %v3651 = vsel %vm2896, 1, 0
        %v3652 = vcvt.s32.f32 %v3644
        %v3653 = vcvt.s32.f32 %v3645
        %v3654 = vcvt.s32.f32 %v3646
        %v3655 = vcvt.s32.f32 %v3647
        %v3656 = vcvt.s32.f32 %v3648
        %v3657 = vcvt.s32.f32 %v3649
        %v3658 = vcvt.s32.f32 %v3650
        %v3659 = vcvt.s32.f32 %v3651
        %v3660 = vmul.f32 %v3643, %v3652
        %v3661 = vmul.f32 %v3642, %v3653
        %v3662 = vmul.f32 %v3641, %v3654
        %v3663 = vmul.f32 %v3640, %v3655
        %v3664 = vmul.f32 %v3639, %v3656
        %v3665 = vmul.f32 %v3638, %v3657
        %v3666 = vmul.f32 %v3637, %v3658
        %v3667 = vmul.f32 %v3636, %v3659
        %s3668 = scalar_lea.vmem %s3, 24
        %v3669 = vld [vmem:[%s3668] sm:$0xff]
        %v3671 = vsel %vm2981, %v3669, 0
        %v3674 = vsel %vm2985, %v3660, 0
        %v3677 = vsel %vm2985, %v3661, 0
        %v3680 = vsel %vm2985, %v3662, 0
        %v3683 = vsel %vm2985, %v3663, 0
        %v3686 = vsel %vm2985, %v3664, 0
        %v3689 = vsel %vm2985, %v3665, 0
        %v3692 = vsel %vm2985, %v3666, 0
        %v3695 = vsel %vm2985, %v3667, 0
        %3697 = vmatpush.msra.mxu0 0.0
        %3698 = vmatpush.msra.mxu0 0.0
        %3699 = vmatpush.msra.mxu0 0.0
        %3700 = vmatpush.msra.mxu0 0.0
        %3701 = vmatpush.msra.mxu0 0.0
        %3702 = vmatpush.msra.mxu0 0.0
        %3703 = vmatpush.msra.mxu0 0.0
        %3704 = vmatpush.msra.mxu0 0.0
        %3705 = vmatpush.msra.mxu0 0.0
        %3706 = vmatpush.msra.mxu0 0.0
        %3707 = vmatpush.msra.mxu0 0.0
        %3708 = vmatpush.msra.mxu0 0.0
        %3709 = vmatpush.msra.mxu0 0.0
        %3710 = vmatpush.msra.mxu0 0.0
        %3711 = vmatpush.msra.mxu0 0.0
        %3712 = vmatpush.msra.mxu0 %v3674
        %3713 = vmatmul.f32.gmra.mxu0 %v3671
        %v3714 = vpop.f32.mrf.mxu0
        %v3715 = vadd.f32 0.0, %v3714
        %3716 = vdwg.mxu0
        %3717 = vmatpush.msra.mxu0 0.0
        %3718 = vmatpush.msra.mxu0 0.0
        %3719 = vmatpush.msra.mxu0 0.0
        %3720 = vmatpush.msra.mxu0 0.0
        %3721 = vmatpush.msra.mxu0 0.0
        %3722 = vmatpush.msra.mxu0 0.0
        %3723 = vmatpush.msra.mxu0 0.0
        %3724 = vmatpush.msra.mxu0 0.0
        %3725 = vmatpush.msra.mxu0 0.0
        %3726 = vmatpush.msra.mxu0 0.0
        %3727 = vmatpush.msra.mxu0 0.0
        %3728 = vmatpush.msra.mxu0 0.0
        %3729 = vmatpush.msra.mxu0 0.0
        %3730 = vmatpush.msra.mxu0 0.0
        %3731 = vmatpush.msra.mxu0 0.0
        %3732 = vmatpush.msra.mxu0 %v3677
        %3733 = vmatmul.f32.gmra.mxu0 %v3671
        %v3734 = vpop.f32.mrf.mxu0
        %v3735 = vadd.f32 0.0, %v3734
        %3736 = vdwg.mxu0
        %3737 = vmatpush.msra.mxu0 0.0
        %3738 = vmatpush.msra.mxu0 0.0
        %3739 = vmatpush.msra.mxu0 0.0
        %3740 = vmatpush.msra.mxu0 0.0
        %3741 = vmatpush.msra.mxu0 0.0
        %3742 = vmatpush.msra.mxu0 0.0
        %3743 = vmatpush.msra.mxu0 0.0
        %3744 = vmatpush.msra.mxu0 0.0
        %3745 = vmatpush.msra.mxu0 0.0
        %3746 = vmatpush.msra.mxu0 0.0
        %3747 = vmatpush.msra.mxu0 0.0
        %3748 = vmatpush.msra.mxu0 0.0
        %3749 = vmatpush.msra.mxu0 0.0
        %3750 = vmatpush.msra.mxu0 0.0
        %3751 = vmatpush.msra.mxu0 0.0
        %3752 = vmatpush.msra.mxu0 %v3680
        %3753 = vmatmul.f32.gmra.mxu0 %v3671
        %v3754 = vpop.f32.mrf.mxu0
        %v3755 = vadd.f32 0.0, %v3754
        %3756 = vdwg.mxu0
        %3757 = vmatpush.msra.mxu0 0.0
        %3758 = vmatpush.msra.mxu0 0.0
        %3759 = vmatpush.msra.mxu0 0.0
        %3760 = vmatpush.msra.mxu0 0.0
        %3761 = vmatpush.msra.mxu0 0.0
        %3762 = vmatpush.msra.mxu0 0.0
        %3763 = vmatpush.msra.mxu0 0.0
        %3764 = vmatpush.msra.mxu0 0.0
        %3765 = vmatpush.msra.mxu0 0.0
        %3766 = vmatpush.msra.mxu0 0.0
        %3767 = vmatpush.msra.mxu0 0.0
        %3768 = vmatpush.msra.mxu0 0.0
        %3769 = vmatpush.msra.mxu0 0.0
        %3770 = vmatpush.msra.mxu0 0.0
        %3771 = vmatpush.msra.mxu0 0.0
        %3772 = vmatpush.msra.mxu0 %v3683
        %3773 = vmatmul.f32.gmra.mxu0 %v3671
        %v3774 = vpop.f32.mrf.mxu0
        %v3775 = vadd.f32 0.0, %v3774
        %3776 = vdwg.mxu0
        %3777 = vmatpush.msra.mxu0 0.0
        %3778 = vmatpush.msra.mxu0 0.0
        %3779 = vmatpush.msra.mxu0 0.0
        %3780 = vmatpush.msra.mxu0 0.0
        %3781 = vmatpush.msra.mxu0 0.0
        %3782 = vmatpush.msra.mxu0 0.0
        %3783 = vmatpush.msra.mxu0 0.0
        %3784 = vmatpush.msra.mxu0 0.0
        %3785 = vmatpush.msra.mxu0 0.0
        %3786 = vmatpush.msra.mxu0 0.0
        %3787 = vmatpush.msra.mxu0 0.0
        %3788 = vmatpush.msra.mxu0 0.0
        %3789 = vmatpush.msra.mxu0 0.0
        %3790 = vmatpush.msra.mxu0 0.0
        %3791 = vmatpush.msra.mxu0 0.0
        %3792 = vmatpush.msra.mxu0 %v3686
        %3793 = vmatmul.f32.gmra.mxu0 %v3671
        %v3794 = vpop.f32.mrf.mxu0
        %v3795 = vadd.f32 0.0, %v3794
        %3796 = vdwg.mxu0
        %3797 = vmatpush.msra.mxu0 0.0
        %3798 = vmatpush.msra.mxu0 0.0
        %3799 = vmatpush.msra.mxu0 0.0
        %3800 = vmatpush.msra.mxu0 0.0
        %3801 = vmatpush.msra.mxu0 0.0
        %3802 = vmatpush.msra.mxu0 0.0
        %3803 = vmatpush.msra.mxu0 0.0
        %3804 = vmatpush.msra.mxu0 0.0
        %3805 = vmatpush.msra.mxu0 0.0
        %3806 = vmatpush.msra.mxu0 0.0
        %3807 = vmatpush.msra.mxu0 0.0
        %3808 = vmatpush.msra.mxu0 0.0
        %3809 = vmatpush.msra.mxu0 0.0
        %3810 = vmatpush.msra.mxu0 0.0
        %3811 = vmatpush.msra.mxu0 0.0
        %3812 = vmatpush.msra.mxu0 %v3689
        %3813 = vmatmul.f32.gmra.mxu0 %v3671
        %v3814 = vpop.f32.mrf.mxu0
        %v3815 = vadd.f32 0.0, %v3814
        %3816 = vdwg.mxu0
        %3817 = vmatpush.msra.mxu0 0.0
        %3818 = vmatpush.msra.mxu0 0.0
        %3819 = vmatpush.msra.mxu0 0.0
        %3820 = vmatpush.msra.mxu0 0.0
        %3821 = vmatpush.msra.mxu0 0.0
        %3822 = vmatpush.msra.mxu0 0.0
        %3823 = vmatpush.msra.mxu0 0.0
        %3824 = vmatpush.msra.mxu0 0.0
        %3825 = vmatpush.msra.mxu0 0.0
        %3826 = vmatpush.msra.mxu0 0.0
        %3827 = vmatpush.msra.mxu0 0.0
        %3828 = vmatpush.msra.mxu0 0.0
        %3829 = vmatpush.msra.mxu0 0.0
        %3830 = vmatpush.msra.mxu0 0.0
        %3831 = vmatpush.msra.mxu0 0.0
        %3832 = vmatpush.msra.mxu0 %v3692
        %3833 = vmatmul.f32.gmra.mxu0 %v3671
        %v3834 = vpop.f32.mrf.mxu0
        %v3835 = vadd.f32 0.0, %v3834
        %3836 = vdwg.mxu0
        %3837 = vmatpush.msra.mxu0 0.0
        %3838 = vmatpush.msra.mxu0 0.0
        %3839 = vmatpush.msra.mxu0 0.0
        %3840 = vmatpush.msra.mxu0 0.0
        %3841 = vmatpush.msra.mxu0 0.0
        %3842 = vmatpush.msra.mxu0 0.0
        %3843 = vmatpush.msra.mxu0 0.0
        %3844 = vmatpush.msra.mxu0 0.0
        %3845 = vmatpush.msra.mxu0 0.0
        %3846 = vmatpush.msra.mxu0 0.0
        %3847 = vmatpush.msra.mxu0 0.0
        %3848 = vmatpush.msra.mxu0 0.0
        %3849 = vmatpush.msra.mxu0 0.0
        %3850 = vmatpush.msra.mxu0 0.0
        %3851 = vmatpush.msra.mxu0 0.0
        %3852 = vmatpush.msra.mxu0 %v3695
        %3853 = vmatmul.f32.gmra.mxu0 %v3671
        %v3854 = vpop.f32.mrf.mxu0
        %v3855 = vadd.f32 0.0, %v3854
        %3856 = vdwg.mxu0
        %v3857 = vadd.f32 %v3611, %v3715
        %v3858 = vadd.f32 %v3612, %v3735
        %v3859 = vadd.f32 %v3613, %v3755
        %v3860 = vadd.f32 %v3614, %v3775
        %v3861 = vadd.f32 %v3615, %v3795
        %v3862 = vadd.f32 %v3616, %v3815
        %v3863 = vadd.f32 %v3617, %v3835
        %v3864 = vadd.f32 %v3618, %v3855
        %s3865 = scalar_lea.vmem %s3, 32
        %v3866 = vld [vmem:[%s3865] sm:$0xff]
        %v3868 = vsel %vm2981, %v3866, 0
        %v3871 = vsel %vm2985, %v2848, 0
        %v3874 = vsel %vm2985, %v2849, 0
        %v3877 = vsel %vm2985, %v2850, 0
        %v3880 = vsel %vm2985, %v2851, 0
        %v3883 = vsel %vm2985, %v2852, 0
        %v3886 = vsel %vm2985, %v2853, 0
        %v3889 = vsel %vm2985, %v2854, 0
        %v3892 = vsel %vm2985, %v2855, 0
        %3894 = vmatpush.msra.mxu0 0.0
        %3895 = vmatpush.msra.mxu0 0.0
        %3896 = vmatpush.msra.mxu0 0.0
        %3897 = vmatpush.msra.mxu0 0.0
        %3898 = vmatpush.msra.mxu0 0.0
        %3899 = vmatpush.msra.mxu0 0.0
        %3900 = vmatpush.msra.mxu0 0.0
        %3901 = vmatpush.msra.mxu0 0.0
        %3902 = vmatpush.msra.mxu0 0.0
        %3903 = vmatpush.msra.mxu0 0.0
        %3904 = vmatpush.msra.mxu0 0.0
        %3905 = vmatpush.msra.mxu0 0.0
        %3906 = vmatpush.msra.mxu0 0.0
        %3907 = vmatpush.msra.mxu0 0.0
        %3908 = vmatpush.msra.mxu0 0.0
        %3909 = vmatpush.msra.mxu0 %v3871
        %3910 = vmatmul.f32.gmra.mxu0 %v3868
        %v3911 = vpop.f32.mrf.mxu0
        %v3912 = vadd.f32 0.0, %v3911
        %3913 = vdwg.mxu0
        %3914 = vmatpush.msra.mxu0 0.0
        %3915 = vmatpush.msra.mxu0 0.0
        %3916 = vmatpush.msra.mxu0 0.0
        %3917 = vmatpush.msra.mxu0 0.0
        %3918 = vmatpush.msra.mxu0 0.0
        %3919 = vmatpush.msra.mxu0 0.0
        %3920 = vmatpush.msra.mxu0 0.0
        %3921 = vmatpush.msra.mxu0 0.0
        %3922 = vmatpush.msra.mxu0 0.0
        %3923 = vmatpush.msra.mxu0 0.0
        %3924 = vmatpush.msra.mxu0 0.0
        %3925 = vmatpush.msra.mxu0 0.0
        %3926 = vmatpush.msra.mxu0 0.0
        %3927 = vmatpush.msra.mxu0 0.0
        %3928 = vmatpush.msra.mxu0 0.0
        %3929 = vmatpush.msra.mxu0 %v3874
        %3930 = vmatmul.f32.gmra.mxu0 %v3868
        %v3931 = vpop.f32.mrf.mxu0
        %v3932 = vadd.f32 0.0, %v3931
        %3933 = vdwg.mxu0
        %3934 = vmatpush.msra.mxu0 0.0
        %3935 = vmatpush.msra.mxu0 0.0
        %3936 = vmatpush.msra.mxu0 0.0
        %3937 = vmatpush.msra.mxu0 0.0
        %3938 = vmatpush.msra.mxu0 0.0
        %3939 = vmatpush.msra.mxu0 0.0
        %3940 = vmatpush.msra.mxu0 0.0
        %3941 = vmatpush.msra.mxu0 0.0
        %3942 = vmatpush.msra.mxu0 0.0
        %3943 = vmatpush.msra.mxu0 0.0
        %3944 = vmatpush.msra.mxu0 0.0
        %3945 = vmatpush.msra.mxu0 0.0
        %3946 = vmatpush.msra.mxu0 0.0
        %3947 = vmatpush.msra.mxu0 0.0
        %3948 = vmatpush.msra.mxu0 0.0
        %3949 = vmatpush.msra.mxu0 %v3877
        %3950 = vmatmul.f32.gmra.mxu0 %v3868
        %v3951 = vpop.f32.mrf.mxu0
        %v3952 = vadd.f32 0.0, %v3951
        %3953 = vdwg.mxu0
        %3954 = vmatpush.msra.mxu0 0.0
        %3955 = vmatpush.msra.mxu0 0.0
        %3956 = vmatpush.msra.mxu0 0.0
        %3957 = vmatpush.msra.mxu0 0.0
        %3958 = vmatpush.msra.mxu0 0.0
        %3959 = vmatpush.msra.mxu0 0.0
        %3960 = vmatpush.msra.mxu0 0.0
        %3961 = vmatpush.msra.mxu0 0.0
        %3962 = vmatpush.msra.mxu0 0.0
        %3963 = vmatpush.msra.mxu0 0.0
        %3964 = vmatpush.msra.mxu0 0.0
        %3965 = vmatpush.msra.mxu0 0.0
        %3966 = vmatpush.msra.mxu0 0.0
        %3967 = vmatpush.msra.mxu0 0.0
        %3968 = vmatpush.msra.mxu0 0.0
        %3969 = vmatpush.msra.mxu0 %v3880
        %3970 = vmatmul.f32.gmra.mxu0 %v3868
        %v3971 = vpop.f32.mrf.mxu0
        %v3972 = vadd.f32 0.0, %v3971
        %3973 = vdwg.mxu0
        %3974 = vmatpush.msra.mxu0 0.0
        %3975 = vmatpush.msra.mxu0 0.0
        %3976 = vmatpush.msra.mxu0 0.0
        %3977 = vmatpush.msra.mxu0 0.0
        %3978 = vmatpush.msra.mxu0 0.0
        %3979 = vmatpush.msra.mxu0 0.0
        %3980 = vmatpush.msra.mxu0 0.0
        %3981 = vmatpush.msra.mxu0 0.0
        %3982 = vmatpush.msra.mxu0 0.0
        %3983 = vmatpush.msra.mxu0 0.0
        %3984 = vmatpush.msra.mxu0 0.0
        %3985 = vmatpush.msra.mxu0 0.0
        %3986 = vmatpush.msra.mxu0 0.0
        %3987 = vmatpush.msra.mxu0 0.0
        %3988 = vmatpush.msra.mxu0 0.0
        %3989 = vmatpush.msra.mxu0 %v3883
        %3990 = vmatmul.f32.gmra.mxu0 %v3868
        %v3991 = vpop.f32.mrf.mxu0
        %v3992 = vadd.f32 0.0, %v3991
        %3993 = vdwg.mxu0
        %3994 = vmatpush.msra.mxu0 0.0
        %3995 = vmatpush.msra.mxu0 0.0
        %3996 = vmatpush.msra.mxu0 0.0
        %3997 = vmatpush.msra.mxu0 0.0
        %3998 = vmatpush.msra.mxu0 0.0
        %3999 = vmatpush.msra.mxu0 0.0
        %4000 = vmatpush.msra.mxu0 0.0
        %4001 = vmatpush.msra.mxu0 0.0
        %4002 = vmatpush.msra.mxu0 0.0
        %4003 = vmatpush.msra.mxu0 0.0
        %4004 = vmatpush.msra.mxu0 0.0
        %4005 = vmatpush.msra.mxu0 0.0
        %4006 = vmatpush.msra.mxu0 0.0
        %4007 = vmatpush.msra.mxu0 0.0
        %4008 = vmatpush.msra.mxu0 0.0
        %4009 = vmatpush.msra.mxu0 %v3886
        %4010 = vmatmul.f32.gmra.mxu0 %v3868
        %v4011 = vpop.f32.mrf.mxu0
        %v4012 = vadd.f32 0.0, %v4011
        %4013 = vdwg.mxu0
        %4014 = vmatpush.msra.mxu0 0.0
        %4015 = vmatpush.msra.mxu0 0.0
        %4016 = vmatpush.msra.mxu0 0.0
        %4017 = vmatpush.msra.mxu0 0.0
        %4018 = vmatpush.msra.mxu0 0.0
        %4019 = vmatpush.msra.mxu0 0.0
        %4020 = vmatpush.msra.mxu0 0.0
        %4021 = vmatpush.msra.mxu0 0.0
        %4022 = vmatpush.msra.mxu0 0.0
        %4023 = vmatpush.msra.mxu0 0.0
        %4024 = vmatpush.msra.mxu0 0.0
        %4025 = vmatpush.msra.mxu0 0.0
        %4026 = vmatpush.msra.mxu0 0.0
        %4027 = vmatpush.msra.mxu0 0.0
        %4028 = vmatpush.msra.mxu0 0.0
        %4029 = vmatpush.msra.mxu0 %v3889
        %4030 = vmatmul.f32.gmra.mxu0 %v3868
        %v4031 = vpop.f32.mrf.mxu0
        %v4032 = vadd.f32 0.0, %v4031
        %4033 = vdwg.mxu0
        %4034 = vmatpush.msra.mxu0 0.0
        %4035 = vmatpush.msra.mxu0 0.0
        %4036 = vmatpush.msra.mxu0 0.0
        %4037 = vmatpush.msra.mxu0 0.0
        %4038 = vmatpush.msra.mxu0 0.0
        %4039 = vmatpush.msra.mxu0 0.0
        %4040 = vmatpush.msra.mxu0 0.0
        %4041 = vmatpush.msra.mxu0 0.0
        %4042 = vmatpush.msra.mxu0 0.0
        %4043 = vmatpush.msra.mxu0 0.0
        %4044 = vmatpush.msra.mxu0 0.0
        %4045 = vmatpush.msra.mxu0 0.0
        %4046 = vmatpush.msra.mxu0 0.0
        %4047 = vmatpush.msra.mxu0 0.0
        %4048 = vmatpush.msra.mxu0 0.0
        %4049 = vmatpush.msra.mxu0 %v3892
        %4050 = vmatmul.f32.gmra.mxu0 %v3868
        %v4051 = vpop.f32.mrf.mxu0
        %v4052 = vadd.f32 0.0, %v4051
        %4053 = vdwg.mxu0
        %v4054 = vadd.f32 %v3857, %v3912
        %v4055 = vadd.f32 %v3858, %v3932
        %v4056 = vadd.f32 %v3859, %v3952
        %v4057 = vadd.f32 %v3860, %v3972
        %v4058 = vadd.f32 %v3861, %v3992
        %v4059 = vadd.f32 %v3862, %v4012
        %v4060 = vadd.f32 %v3863, %v4032
        %v4061 = vadd.f32 %v3864, %v4052
        %4062 = vrot.lane.b32.xlu0 %v2848, 126
        %v4063 = vpop.permute.xlu0 %4062
        %4064 = vrot.lane.b32.xlu0 %v2849, 126
        %v4065 = vpop.permute.xlu0 %4064
        %4066 = vrot.lane.b32.xlu0 %v2850, 126
        %v4067 = vpop.permute.xlu0 %4066
        %4068 = vrot.lane.b32.xlu0 %v2851, 126
        %v4069 = vpop.permute.xlu0 %4068
        %4070 = vrot.lane.b32.xlu0 %v2852, 126
        %v4071 = vpop.permute.xlu0 %4070
        %4072 = vrot.lane.b32.xlu0 %v2853, 126
        %v4073 = vpop.permute.xlu0 %4072
        %4074 = vrot.lane.b32.xlu0 %v2854, 126
        %v4075 = vpop.permute.xlu0 %4074
        %4076 = vrot.lane.b32.xlu0 %v2855, 126
        %v4077 = vpop.permute.xlu0 %4076
        %vm4078 = vcmp.lt.s32.totalorder %v277, 126
        %v4079 = vsel %vm4078, %v4075, %v4077
        %v4080 = vsel %vm4078, %v4073, %v4075
        %v4081 = vsel %vm4078, %v4071, %v4073
        %v4082 = vsel %vm4078, %v4069, %v4071
        %v4083 = vsel %vm4078, %v4067, %v4069
        %v4084 = vsel %vm4078, %v4065, %v4067
        %v4085 = vsel %vm4078, %v4063, %v4065
        %v4086 = vsel %vm4078, %v4077, %v4063
        %v4087 = vsel %vm3382, 1, 0
        %v4088 = vsel %vm3383, 1, 0
        %v4089 = vsel %vm3384, 1, 0
        %v4090 = vsel %vm3385, 1, 0
        %v4091 = vsel %vm3386, 1, 0
        %v4092 = vsel %vm3387, 1, 0
        %v4093 = vsel %vm3388, 1, 0
        %v4094 = vsel %vm3389, 1, 0
        %v4095 = vcvt.s32.f32 %v4087
        %v4096 = vcvt.s32.f32 %v4088
        %v4097 = vcvt.s32.f32 %v4089
        %v4098 = vcvt.s32.f32 %v4090
        %v4099 = vcvt.s32.f32 %v4091
        %v4100 = vcvt.s32.f32 %v4092
        %v4101 = vcvt.s32.f32 %v4093
        %v4102 = vcvt.s32.f32 %v4094
        %v4103 = vmul.f32 %v4085, %v4095
        %v4104 = vmul.f32 %v4084, %v4096
        %v4105 = vmul.f32 %v4083, %v4097
        %v4106 = vmul.f32 %v4082, %v4098
        %v4107 = vmul.f32 %v4081, %v4099
        %v4108 = vmul.f32 %v4080, %v4100
        %v4109 = vmul.f32 %v4079, %v4101
        %v4110 = vmul.f32 %v4086, %v4102
        %s4111 = scalar_lea.vmem %s3, 40
        %v4112 = vld [vmem:[%s4111] sm:$0xff]
        %v4114 = vsel %vm2981, %v4112, 0
        %v4117 = vsel %vm2985, %v4103, 0
        %v4120 = vsel %vm2985, %v4104, 0
        %v4123 = vsel %vm2985, %v4105, 0
        %v4126 = vsel %vm2985, %v4106, 0
        %v4129 = vsel %vm2985, %v4107, 0
        %v4132 = vsel %vm2985, %v4108, 0
        %v4135 = vsel %vm2985, %v4109, 0
        %v4138 = vsel %vm2985, %v4110, 0
        %4140 = vmatpush.msra.mxu0 0.0
        %4141 = vmatpush.msra.mxu0 0.0
        %4142 = vmatpush.msra.mxu0 0.0
        %4143 = vmatpush.msra.mxu0 0.0
        %4144 = vmatpush.msra.mxu0 0.0
        %4145 = vmatpush.msra.mxu0 0.0
        %4146 = vmatpush.msra.mxu0 0.0
        %4147 = vmatpush.msra.mxu0 0.0
        %4148 = vmatpush.msra.mxu0 0.0
        %4149 = vmatpush.msra.mxu0 0.0
        %4150 = vmatpush.msra.mxu0 0.0
        %4151 = vmatpush.msra.mxu0 0.0
        %4152 = vmatpush.msra.mxu0 0.0
        %4153 = vmatpush.msra.mxu0 0.0
        %4154 = vmatpush.msra.mxu0 0.0
        %4155 = vmatpush.msra.mxu0 %v4117
        %4156 = vmatmul.f32.gmra.mxu0 %v4114
        %v4157 = vpop.f32.mrf.mxu0
        %v4158 = vadd.f32 0.0, %v4157
        %4159 = vdwg.mxu0
        %4160 = vmatpush.msra.mxu0 0.0
        %4161 = vmatpush.msra.mxu0 0.0
        %4162 = vmatpush.msra.mxu0 0.0
        %4163 = vmatpush.msra.mxu0 0.0
        %4164 = vmatpush.msra.mxu0 0.0
        %4165 = vmatpush.msra.mxu0 0.0
        %4166 = vmatpush.msra.mxu0 0.0
        %4167 = vmatpush.msra.mxu0 0.0
        %4168 = vmatpush.msra.mxu0 0.0
        %4169 = vmatpush.msra.mxu0 0.0
        %4170 = vmatpush.msra.mxu0 0.0
        %4171 = vmatpush.msra.mxu0 0.0
        %4172 = vmatpush.msra.mxu0 0.0
        %4173 = vmatpush.msra.mxu0 0.0
        %4174 = vmatpush.msra.mxu0 0.0
        %4175 = vmatpush.msra.mxu0 %v4120
        %4176 = vmatmul.f32.gmra.mxu0 %v4114
        %v4177 = vpop.f32.mrf.mxu0
        %v4178 = vadd.f32 0.0, %v4177
        %4179 = vdwg.mxu0
        %4180 = vmatpush.msra.mxu0 0.0
        %4181 = vmatpush.msra.mxu0 0.0
        %4182 = vmatpush.msra.mxu0 0.0
        %4183 = vmatpush.msra.mxu0 0.0
        %4184 = vmatpush.msra.mxu0 0.0
        %4185 = vmatpush.msra.mxu0 0.0
        %4186 = vmatpush.msra.mxu0 0.0
        %4187 = vmatpush.msra.mxu0 0.0
        %4188 = vmatpush.msra.mxu0 0.0
        %4189 = vmatpush.msra.mxu0 0.0
        %4190 = vmatpush.msra.mxu0 0.0
        %4191 = vmatpush.msra.mxu0 0.0
        %4192 = vmatpush.msra.mxu0 0.0
        %4193 = vmatpush.msra.mxu0 0.0
        %4194 = vmatpush.msra.mxu0 0.0
        %4195 = vmatpush.msra.mxu0 %v4123
        %4196 = vmatmul.f32.gmra.mxu0 %v4114
        %v4197 = vpop.f32.mrf.mxu0
        %v4198 = vadd.f32 0.0, %v4197
        %4199 = vdwg.mxu0
        %4200 = vmatpush.msra.mxu0 0.0
        %4201 = vmatpush.msra.mxu0 0.0
        %4202 = vmatpush.msra.mxu0 0.0
        %4203 = vmatpush.msra.mxu0 0.0
        %4204 = vmatpush.msra.mxu0 0.0
        %4205 = vmatpush.msra.mxu0 0.0
        %4206 = vmatpush.msra.mxu0 0.0
        %4207 = vmatpush.msra.mxu0 0.0
        %4208 = vmatpush.msra.mxu0 0.0
        %4209 = vmatpush.msra.mxu0 0.0
        %4210 = vmatpush.msra.mxu0 0.0
        %4211 = vmatpush.msra.mxu0 0.0
        %4212 = vmatpush.msra.mxu0 0.0
        %4213 = vmatpush.msra.mxu0 0.0
        %4214 = vmatpush.msra.mxu0 0.0
        %4215 = vmatpush.msra.mxu0 %v4126
        %4216 = vmatmul.f32.gmra.mxu0 %v4114
        %v4217 = vpop.f32.mrf.mxu0
        %v4218 = vadd.f32 0.0, %v4217
        %4219 = vdwg.mxu0
        %4220 = vmatpush.msra.mxu0 0.0
        %4221 = vmatpush.msra.mxu0 0.0
        %4222 = vmatpush.msra.mxu0 0.0
        %4223 = vmatpush.msra.mxu0 0.0
        %4224 = vmatpush.msra.mxu0 0.0
        %4225 = vmatpush.msra.mxu0 0.0
        %4226 = vmatpush.msra.mxu0 0.0
        %4227 = vmatpush.msra.mxu0 0.0
        %4228 = vmatpush.msra.mxu0 0.0
        %4229 = vmatpush.msra.mxu0 0.0
        %4230 = vmatpush.msra.mxu0 0.0
        %4231 = vmatpush.msra.mxu0 0.0
        %4232 = vmatpush.msra.mxu0 0.0
        %4233 = vmatpush.msra.mxu0 0.0
        %4234 = vmatpush.msra.mxu0 0.0
        %4235 = vmatpush.msra.mxu0 %v4129
        %4236 = vmatmul.f32.gmra.mxu0 %v4114
        %v4237 = vpop.f32.mrf.mxu0
        %v4238 = vadd.f32 0.0, %v4237
        %4239 = vdwg.mxu0
        %4240 = vmatpush.msra.mxu0 0.0
        %4241 = vmatpush.msra.mxu0 0.0
        %4242 = vmatpush.msra.mxu0 0.0
        %4243 = vmatpush.msra.mxu0 0.0
        %4244 = vmatpush.msra.mxu0 0.0
        %4245 = vmatpush.msra.mxu0 0.0
        %4246 = vmatpush.msra.mxu0 0.0
        %4247 = vmatpush.msra.mxu0 0.0
        %4248 = vmatpush.msra.mxu0 0.0
        %4249 = vmatpush.msra.mxu0 0.0
        %4250 = vmatpush.msra.mxu0 0.0
        %4251 = vmatpush.msra.mxu0 0.0
        %4252 = vmatpush.msra.mxu0 0.0
        %4253 = vmatpush.msra.mxu0 0.0
        %4254 = vmatpush.msra.mxu0 0.0
        %4255 = vmatpush.msra.mxu0 %v4132
        %4256 = vmatmul.f32.gmra.mxu0 %v4114
        %v4257 = vpop.f32.mrf.mxu0
        %v4258 = vadd.f32 0.0, %v4257
        %4259 = vdwg.mxu0
        %4260 = vmatpush.msra.mxu0 0.0
        %4261 = vmatpush.msra.mxu0 0.0
        %4262 = vmatpush.msra.mxu0 0.0
        %4263 = vmatpush.msra.mxu0 0.0
        %4264 = vmatpush.msra.mxu0 0.0
        %4265 = vmatpush.msra.mxu0 0.0
        %4266 = vmatpush.msra.mxu0 0.0
        %4267 = vmatpush.msra.mxu0 0.0
        %4268 = vmatpush.msra.mxu0 0.0
        %4269 = vmatpush.msra.mxu0 0.0
        %4270 = vmatpush.msra.mxu0 0.0
        %4271 = vmatpush.msra.mxu0 0.0
        %4272 = vmatpush.msra.mxu0 0.0
        %4273 = vmatpush.msra.mxu0 0.0
        %4274 = vmatpush.msra.mxu0 0.0
        %4275 = vmatpush.msra.mxu0 %v4135
        %4276 = vmatmul.f32.gmra.mxu0 %v4114
        %v4277 = vpop.f32.mrf.mxu0
        %v4278 = vadd.f32 0.0, %v4277
        %4279 = vdwg.mxu0
        %4280 = vmatpush.msra.mxu0 0.0
        %4281 = vmatpush.msra.mxu0 0.0
        %4282 = vmatpush.msra.mxu0 0.0
        %4283 = vmatpush.msra.mxu0 0.0
        %4284 = vmatpush.msra.mxu0 0.0
        %4285 = vmatpush.msra.mxu0 0.0
        %4286 = vmatpush.msra.mxu0 0.0
        %4287 = vmatpush.msra.mxu0 0.0
        %4288 = vmatpush.msra.mxu0 0.0
        %4289 = vmatpush.msra.mxu0 0.0
        %4290 = vmatpush.msra.mxu0 0.0
        %4291 = vmatpush.msra.mxu0 0.0
        %4292 = vmatpush.msra.mxu0 0.0
        %4293 = vmatpush.msra.mxu0 0.0
        %4294 = vmatpush.msra.mxu0 0.0
        %4295 = vmatpush.msra.mxu0 %v4138
        %4296 = vmatmul.f32.gmra.mxu0 %v4114
        %v4297 = vpop.f32.mrf.mxu0
        %v4298 = vadd.f32 0.0, %v4297
        %4299 = vdwg.mxu0
        %v4300 = vadd.f32 %v4054, %v4158
        %v4301 = vadd.f32 %v4055, %v4178
        %v4302 = vadd.f32 %v4056, %v4198
        %v4303 = vadd.f32 %v4057, %v4218
        %v4304 = vadd.f32 %v4058, %v4238
        %v4305 = vadd.f32 %v4059, %v4258
        %v4306 = vadd.f32 %v4060, %v4278
        %v4307 = vadd.f32 %v4061, %v4298
        %vm4308 = vcmp.le.s32.totalorder %v301, 14
        %vm4309 = vcmp.le.s32.totalorder %v302, 14
        %vm4310 = vcmp.le.s32.totalorder %v303, 14
        %vm4311 = vcmp.le.s32.totalorder %v304, 14
        %vm4312 = vcmp.le.s32.totalorder %v305, 14
        %vm4313 = vcmp.le.s32.totalorder %v306, 14
        %vm4314 = vcmp.le.s32.totalorder %v307, 14
        %vm4315 = vcmp.le.s32.totalorder %v308, 14
        %vm4316 = vmand %vm4308, %vm2889
        %vm4317 = vmand %vm4309, %vm2890
        %vm4318 = vmand %vm4310, %vm2891
        %vm4319 = vmand %vm4311, %vm2892
        %vm4320 = vmand %vm4312, %vm2893
        %vm4321 = vmand %vm4313, %vm2894
        %vm4322 = vmand %vm4314, %vm2895
        %vm4323 = vmand %vm4315, %vm2896
        %v4324 = vsel %vm4316, 1, 0
        %v4325 = vsel %vm4317, 1, 0
        %v4326 = vsel %vm4318, 1, 0
        %v4327 = vsel %vm4319, 1, 0
        %v4328 = vsel %vm4320, 1, 0
        %v4329 = vsel %vm4321, 1, 0
        %v4330 = vsel %vm4322, 1, 0
        %v4331 = vsel %vm4323, 1, 0
        %v4332 = vcvt.s32.f32 %v4324
        %v4333 = vcvt.s32.f32 %v4325
        %v4334 = vcvt.s32.f32 %v4326
        %v4335 = vcvt.s32.f32 %v4327
        %v4336 = vcvt.s32.f32 %v4328
        %v4337 = vcvt.s32.f32 %v4329
        %v4338 = vcvt.s32.f32 %v4330
        %v4339 = vcvt.s32.f32 %v4331
        %v4340 = vmul.f32 %v2879, %v4332
        %v4341 = vmul.f32 %v2878, %v4333
        %v4342 = vmul.f32 %v2877, %v4334
        %v4343 = vmul.f32 %v2876, %v4335
        %v4344 = vmul.f32 %v2875, %v4336
        %v4345 = vmul.f32 %v2874, %v4337
        %v4346 = vmul.f32 %v2873, %v4338
        %v4347 = vmul.f32 %v2880, %v4339
        %s4348 = scalar_lea.vmem %s3, 48
        %v4349 = vld [vmem:[%s4348] sm:$0xff]
        %v4351 = vsel %vm2981, %v4349, 0
        %v4354 = vsel %vm2985, %v4340, 0
        %v4357 = vsel %vm2985, %v4341, 0
        %v4360 = vsel %vm2985, %v4342, 0
        %v4363 = vsel %vm2985, %v4343, 0
        %v4366 = vsel %vm2985, %v4344, 0
        %v4369 = vsel %vm2985, %v4345, 0
        %v4372 = vsel %vm2985, %v4346, 0
        %v4375 = vsel %vm2985, %v4347, 0
        %4377 = vmatpush.msra.mxu0 0.0
        %4378 = vmatpush.msra.mxu0 0.0
        %4379 = vmatpush.msra.mxu0 0.0
        %4380 = vmatpush.msra.mxu0 0.0
        %4381 = vmatpush.msra.mxu0 0.0
        %4382 = vmatpush.msra.mxu0 0.0
        %4383 = vmatpush.msra.mxu0 0.0
        %4384 = vmatpush.msra.mxu0 0.0
        %4385 = vmatpush.msra.mxu0 0.0
        %4386 = vmatpush.msra.mxu0 0.0
        %4387 = vmatpush.msra.mxu0 0.0
        %4388 = vmatpush.msra.mxu0 0.0
        %4389 = vmatpush.msra.mxu0 0.0
        %4390 = vmatpush.msra.mxu0 0.0
        %4391 = vmatpush.msra.mxu0 0.0
        %4392 = vmatpush.msra.mxu0 %v4354
        %4393 = vmatmul.f32.gmra.mxu0 %v4351
        %v4394 = vpop.f32.mrf.mxu0
        %v4395 = vadd.f32 0.0, %v4394
        %4396 = vdwg.mxu0
        %4397 = vmatpush.msra.mxu0 0.0
        %4398 = vmatpush.msra.mxu0 0.0
        %4399 = vmatpush.msra.mxu0 0.0
        %4400 = vmatpush.msra.mxu0 0.0
        %4401 = vmatpush.msra.mxu0 0.0
        %4402 = vmatpush.msra.mxu0 0.0
        %4403 = vmatpush.msra.mxu0 0.0
        %4404 = vmatpush.msra.mxu0 0.0
        %4405 = vmatpush.msra.mxu0 0.0
        %4406 = vmatpush.msra.mxu0 0.0
        %4407 = vmatpush.msra.mxu0 0.0
        %4408 = vmatpush.msra.mxu0 0.0
        %4409 = vmatpush.msra.mxu0 0.0
        %4410 = vmatpush.msra.mxu0 0.0
        %4411 = vmatpush.msra.mxu0 0.0
        %4412 = vmatpush.msra.mxu0 %v4357
        %4413 = vmatmul.f32.gmra.mxu0 %v4351
        %v4414 = vpop.f32.mrf.mxu0
        %v4415 = vadd.f32 0.0, %v4414
        %4416 = vdwg.mxu0
        %4417 = vmatpush.msra.mxu0 0.0
        %4418 = vmatpush.msra.mxu0 0.0
        %4419 = vmatpush.msra.mxu0 0.0
        %4420 = vmatpush.msra.mxu0 0.0
        %4421 = vmatpush.msra.mxu0 0.0
        %4422 = vmatpush.msra.mxu0 0.0
        %4423 = vmatpush.msra.mxu0 0.0
        %4424 = vmatpush.msra.mxu0 0.0
        %4425 = vmatpush.msra.mxu0 0.0
        %4426 = vmatpush.msra.mxu0 0.0
        %4427 = vmatpush.msra.mxu0 0.0
        %4428 = vmatpush.msra.mxu0 0.0
        %4429 = vmatpush.msra.mxu0 0.0
        %4430 = vmatpush.msra.mxu0 0.0
        %4431 = vmatpush.msra.mxu0 0.0
        %4432 = vmatpush.msra.mxu0 %v4360
        %4433 = vmatmul.f32.gmra.mxu0 %v4351
        %v4434 = vpop.f32.mrf.mxu0
        %v4435 = vadd.f32 0.0, %v4434
        %4436 = vdwg.mxu0
        %4437 = vmatpush.msra.mxu0 0.0
        %4438 = vmatpush.msra.mxu0 0.0
        %4439 = vmatpush.msra.mxu0 0.0
        %4440 = vmatpush.msra.mxu0 0.0
        %4441 = vmatpush.msra.mxu0 0.0
        %4442 = vmatpush.msra.mxu0 0.0
        %4443 = vmatpush.msra.mxu0 0.0
        %4444 = vmatpush.msra.mxu0 0.0
        %4445 = vmatpush.msra.mxu0 0.0
        %4446 = vmatpush.msra.mxu0 0.0
        %4447 = vmatpush.msra.mxu0 0.0
        %4448 = vmatpush.msra.mxu0 0.0
        %4449 = vmatpush.msra.mxu0 0.0
        %4450 = vmatpush.msra.mxu0 0.0
        %4451 = vmatpush.msra.mxu0 0.0
        %4452 = vmatpush.msra.mxu0 %v4363
        %4453 = vmatmul.f32.gmra.mxu0 %v4351
        %v4454 = vpop.f32.mrf.mxu0
        %v4455 = vadd.f32 0.0, %v4454
        %4456 = vdwg.mxu0
        %4457 = vmatpush.msra.mxu0 0.0
        %4458 = vmatpush.msra.mxu0 0.0
        %4459 = vmatpush.msra.mxu0 0.0
        %4460 = vmatpush.msra.mxu0 0.0
        %4461 = vmatpush.msra.mxu0 0.0
        %4462 = vmatpush.msra.mxu0 0.0
        %4463 = vmatpush.msra.mxu0 0.0
        %4464 = vmatpush.msra.mxu0 0.0
        %4465 = vmatpush.msra.mxu0 0.0
        %4466 = vmatpush.msra.mxu0 0.0
        %4467 = vmatpush.msra.mxu0 0.0
        %4468 = vmatpush.msra.mxu0 0.0
        %4469 = vmatpush.msra.mxu0 0.0
        %4470 = vmatpush.msra.mxu0 0.0
        %4471 = vmatpush.msra.mxu0 0.0
        %4472 = vmatpush.msra.mxu0 %v4366
        %4473 = vmatmul.f32.gmra.mxu0 %v4351
        %v4474 = vpop.f32.mrf.mxu0
        %v4475 = vadd.f32 0.0, %v4474
        %4476 = vdwg.mxu0
        %4477 = vmatpush.msra.mxu0 0.0
        %4478 = vmatpush.msra.mxu0 0.0
        %4479 = vmatpush.msra.mxu0 0.0
        %4480 = vmatpush.msra.mxu0 0.0
        %4481 = vmatpush.msra.mxu0 0.0
        %4482 = vmatpush.msra.mxu0 0.0
        %4483 = vmatpush.msra.mxu0 0.0
        %4484 = vmatpush.msra.mxu0 0.0
        %4485 = vmatpush.msra.mxu0 0.0
        %4486 = vmatpush.msra.mxu0 0.0
        %4487 = vmatpush.msra.mxu0 0.0
        %4488 = vmatpush.msra.mxu0 0.0
        %4489 = vmatpush.msra.mxu0 0.0
        %4490 = vmatpush.msra.mxu0 0.0
        %4491 = vmatpush.msra.mxu0 0.0
        %4492 = vmatpush.msra.mxu0 %v4369
        %4493 = vmatmul.f32.gmra.mxu0 %v4351
        %v4494 = vpop.f32.mrf.mxu0
        %v4495 = vadd.f32 0.0, %v4494
        %4496 = vdwg.mxu0
        %4497 = vmatpush.msra.mxu0 0.0
        %4498 = vmatpush.msra.mxu0 0.0
        %4499 = vmatpush.msra.mxu0 0.0
        %4500 = vmatpush.msra.mxu0 0.0
        %4501 = vmatpush.msra.mxu0 0.0
        %4502 = vmatpush.msra.mxu0 0.0
        %4503 = vmatpush.msra.mxu0 0.0
        %4504 = vmatpush.msra.mxu0 0.0
        %4505 = vmatpush.msra.mxu0 0.0
        %4506 = vmatpush.msra.mxu0 0.0
        %4507 = vmatpush.msra.mxu0 0.0
        %4508 = vmatpush.msra.mxu0 0.0
        %4509 = vmatpush.msra.mxu0 0.0
        %4510 = vmatpush.msra.mxu0 0.0
        %4511 = vmatpush.msra.mxu0 0.0
        %4512 = vmatpush.msra.mxu0 %v4372
        %4513 = vmatmul.f32.gmra.mxu0 %v4351
        %v4514 = vpop.f32.mrf.mxu0
        %v4515 = vadd.f32 0.0, %v4514
        %4516 = vdwg.mxu0
        %4517 = vmatpush.msra.mxu0 0.0
        %4518 = vmatpush.msra.mxu0 0.0
        %4519 = vmatpush.msra.mxu0 0.0
        %4520 = vmatpush.msra.mxu0 0.0
        %4521 = vmatpush.msra.mxu0 0.0
        %4522 = vmatpush.msra.mxu0 0.0
        %4523 = vmatpush.msra.mxu0 0.0
        %4524 = vmatpush.msra.mxu0 0.0
        %4525 = vmatpush.msra.mxu0 0.0
        %4526 = vmatpush.msra.mxu0 0.0
        %4527 = vmatpush.msra.mxu0 0.0
        %4528 = vmatpush.msra.mxu0 0.0
        %4529 = vmatpush.msra.mxu0 0.0
        %4530 = vmatpush.msra.mxu0 0.0
        %4531 = vmatpush.msra.mxu0 0.0
        %4532 = vmatpush.msra.mxu0 %v4375
        %4533 = vmatmul.f32.gmra.mxu0 %v4351
        %v4534 = vpop.f32.mrf.mxu0
        %v4535 = vadd.f32 0.0, %v4534
        %4536 = vdwg.mxu0
        %v4537 = vadd.f32 %v4300, %v4395
        %v4538 = vadd.f32 %v4301, %v4415
        %v4539 = vadd.f32 %v4302, %v4435
        %v4540 = vadd.f32 %v4303, %v4455
        %v4541 = vadd.f32 %v4304, %v4475
        %v4542 = vadd.f32 %v4305, %v4495
        %v4543 = vadd.f32 %v4306, %v4515
        %v4544 = vadd.f32 %v4307, %v4535
        %v4545 = vsel %vm4308, 1, 0
        %v4546 = vsel %vm4309, 1, 0
        %v4547 = vsel %vm4310, 1, 0
        %v4548 = vsel %vm4311, 1, 0
        %v4549 = vsel %vm4312, 1, 0
        %v4550 = vsel %vm4313, 1, 0
        %v4551 = vsel %vm4314, 1, 0
        %v4552 = vsel %vm4315, 1, 0
        %v4553 = vcvt.s32.f32 %v4545
        %v4554 = vcvt.s32.f32 %v4546
        %v4555 = vcvt.s32.f32 %v4547
        %v4556 = vcvt.s32.f32 %v4548
        %v4557 = vcvt.s32.f32 %v4549
        %v4558 = vcvt.s32.f32 %v4550
        %v4559 = vcvt.s32.f32 %v4551
        %v4560 = vcvt.s32.f32 %v4552
        %v4561 = vmul.f32 %v2953, %v4553
        %v4562 = vmul.f32 %v2952, %v4554
        %v4563 = vmul.f32 %v2951, %v4555
        %v4564 = vmul.f32 %v2950, %v4556
        %v4565 = vmul.f32 %v2949, %v4557
        %v4566 = vmul.f32 %v2948, %v4558
        %v4567 = vmul.f32 %v2947, %v4559
        %v4568 = vmul.f32 %v2954, %v4560
        %s4569 = scalar_lea.vmem %s3, 56
        %v4570 = vld [vmem:[%s4569] sm:$0xff]
        %v4572 = vsel %vm2981, %v4570, 0
        %v4575 = vsel %vm2985, %v4561, 0
        %v4578 = vsel %vm2985, %v4562, 0
        %v4581 = vsel %vm2985, %v4563, 0
        %v4584 = vsel %vm2985, %v4564, 0
        %v4587 = vsel %vm2985, %v4565, 0
        %v4590 = vsel %vm2985, %v4566, 0
        %v4593 = vsel %vm2985, %v4567, 0
        %v4596 = vsel %vm2985, %v4568, 0
        %4598 = vmatpush.msra.mxu0 0.0
        %4599 = vmatpush.msra.mxu0 0.0
        %4600 = vmatpush.msra.mxu0 0.0
        %4601 = vmatpush.msra.mxu0 0.0
        %4602 = vmatpush.msra.mxu0 0.0
        %4603 = vmatpush.msra.mxu0 0.0
        %4604 = vmatpush.msra.mxu0 0.0
        %4605 = vmatpush.msra.mxu0 0.0
        %4606 = vmatpush.msra.mxu0 0.0
        %4607 = vmatpush.msra.mxu0 0.0
        %4608 = vmatpush.msra.mxu0 0.0
        %4609 = vmatpush.msra.mxu0 0.0
        %4610 = vmatpush.msra.mxu0 0.0
        %4611 = vmatpush.msra.mxu0 0.0
        %4612 = vmatpush.msra.mxu0 0.0
        %4613 = vmatpush.msra.mxu0 %v4575
        %4614 = vmatmul.f32.gmra.mxu0 %v4572
        %v4615 = vpop.f32.mrf.mxu0
        %v4616 = vadd.f32 0.0, %v4615
        %4617 = vdwg.mxu0
        %4618 = vmatpush.msra.mxu0 0.0
        %4619 = vmatpush.msra.mxu0 0.0
        %4620 = vmatpush.msra.mxu0 0.0
        %4621 = vmatpush.msra.mxu0 0.0
        %4622 = vmatpush.msra.mxu0 0.0
        %4623 = vmatpush.msra.mxu0 0.0
        %4624 = vmatpush.msra.mxu0 0.0
        %4625 = vmatpush.msra.mxu0 0.0
        %4626 = vmatpush.msra.mxu0 0.0
        %4627 = vmatpush.msra.mxu0 0.0
        %4628 = vmatpush.msra.mxu0 0.0
        %4629 = vmatpush.msra.mxu0 0.0
        %4630 = vmatpush.msra.mxu0 0.0
        %4631 = vmatpush.msra.mxu0 0.0
        %4632 = vmatpush.msra.mxu0 0.0
        %4633 = vmatpush.msra.mxu0 %v4578
        %4634 = vmatmul.f32.gmra.mxu0 %v4572
        %v4635 = vpop.f32.mrf.mxu0
        %v4636 = vadd.f32 0.0, %v4635
        %4637 = vdwg.mxu0
        %4638 = vmatpush.msra.mxu0 0.0
        %4639 = vmatpush.msra.mxu0 0.0
        %4640 = vmatpush.msra.mxu0 0.0
        %4641 = vmatpush.msra.mxu0 0.0
        %4642 = vmatpush.msra.mxu0 0.0
        %4643 = vmatpush.msra.mxu0 0.0
        %4644 = vmatpush.msra.mxu0 0.0
        %4645 = vmatpush.msra.mxu0 0.0
        %4646 = vmatpush.msra.mxu0 0.0
        %4647 = vmatpush.msra.mxu0 0.0
        %4648 = vmatpush.msra.mxu0 0.0
        %4649 = vmatpush.msra.mxu0 0.0
        %4650 = vmatpush.msra.mxu0 0.0
        %4651 = vmatpush.msra.mxu0 0.0
        %4652 = vmatpush.msra.mxu0 0.0
        %4653 = vmatpush.msra.mxu0 %v4581
        %4654 = vmatmul.f32.gmra.mxu0 %v4572
        %v4655 = vpop.f32.mrf.mxu0
        %v4656 = vadd.f32 0.0, %v4655
        %4657 = vdwg.mxu0
        %4658 = vmatpush.msra.mxu0 0.0
        %4659 = vmatpush.msra.mxu0 0.0
        %4660 = vmatpush.msra.mxu0 0.0
        %4661 = vmatpush.msra.mxu0 0.0
        %4662 = vmatpush.msra.mxu0 0.0
        %4663 = vmatpush.msra.mxu0 0.0
        %4664 = vmatpush.msra.mxu0 0.0
        %4665 = vmatpush.msra.mxu0 0.0
        %4666 = vmatpush.msra.mxu0 0.0
        %4667 = vmatpush.msra.mxu0 0.0
        %4668 = vmatpush.msra.mxu0 0.0
        %4669 = vmatpush.msra.mxu0 0.0
        %4670 = vmatpush.msra.mxu0 0.0
        %4671 = vmatpush.msra.mxu0 0.0
        %4672 = vmatpush.msra.mxu0 0.0
        %4673 = vmatpush.msra.mxu0 %v4584
        %4674 = vmatmul.f32.gmra.mxu0 %v4572
        %v4675 = vpop.f32.mrf.mxu0
        %v4676 = vadd.f32 0.0, %v4675
        %4677 = vdwg.mxu0
        %4678 = vmatpush.msra.mxu0 0.0
        %4679 = vmatpush.msra.mxu0 0.0
        %4680 = vmatpush.msra.mxu0 0.0
        %4681 = vmatpush.msra.mxu0 0.0
        %4682 = vmatpush.msra.mxu0 0.0
        %4683 = vmatpush.msra.mxu0 0.0
        %4684 = vmatpush.msra.mxu0 0.0
        %4685 = vmatpush.msra.mxu0 0.0
        %4686 = vmatpush.msra.mxu0 0.0
        %4687 = vmatpush.msra.mxu0 0.0
        %4688 = vmatpush.msra.mxu0 0.0
        %4689 = vmatpush.msra.mxu0 0.0
        %4690 = vmatpush.msra.mxu0 0.0
        %4691 = vmatpush.msra.mxu0 0.0
        %4692 = vmatpush.msra.mxu0 0.0
        %4693 = vmatpush.msra.mxu0 %v4587
        %4694 = vmatmul.f32.gmra.mxu0 %v4572
        %v4695 = vpop.f32.mrf.mxu0
        %v4696 = vadd.f32 0.0, %v4695
        %4697 = vdwg.mxu0
        %4698 = vmatpush.msra.mxu0 0.0
        %4699 = vmatpush.msra.mxu0 0.0
        %4700 = vmatpush.msra.mxu0 0.0
        %4701 = vmatpush.msra.mxu0 0.0
        %4702 = vmatpush.msra.mxu0 0.0
        %4703 = vmatpush.msra.mxu0 0.0
        %4704 = vmatpush.msra.mxu0 0.0
        %4705 = vmatpush.msra.mxu0 0.0
        %4706 = vmatpush.msra.mxu0 0.0
        %4707 = vmatpush.msra.mxu0 0.0
        %4708 = vmatpush.msra.mxu0 0.0
        %4709 = vmatpush.msra.mxu0 0.0
        %4710 = vmatpush.msra.mxu0 0.0
        %4711 = vmatpush.msra.mxu0 0.0
        %4712 = vmatpush.msra.mxu0 0.0
        %4713 = vmatpush.msra.mxu0 %v4590
        %4714 = vmatmul.f32.gmra.mxu0 %v4572
        %v4715 = vpop.f32.mrf.mxu0
        %v4716 = vadd.f32 0.0, %v4715
        %4717 = vdwg.mxu0
        %4718 = vmatpush.msra.mxu0 0.0
        %4719 = vmatpush.msra.mxu0 0.0
        %4720 = vmatpush.msra.mxu0 0.0
        %4721 = vmatpush.msra.mxu0 0.0
        %4722 = vmatpush.msra.mxu0 0.0
        %4723 = vmatpush.msra.mxu0 0.0
        %4724 = vmatpush.msra.mxu0 0.0
        %4725 = vmatpush.msra.mxu0 0.0
        %4726 = vmatpush.msra.mxu0 0.0
        %4727 = vmatpush.msra.mxu0 0.0
        %4728 = vmatpush.msra.mxu0 0.0
        %4729 = vmatpush.msra.mxu0 0.0
        %4730 = vmatpush.msra.mxu0 0.0
        %4731 = vmatpush.msra.mxu0 0.0
        %4732 = vmatpush.msra.mxu0 0.0
        %4733 = vmatpush.msra.mxu0 %v4593
        %4734 = vmatmul.f32.gmra.mxu0 %v4572
        %v4735 = vpop.f32.mrf.mxu0
        %v4736 = vadd.f32 0.0, %v4735
        %4737 = vdwg.mxu0
        %4738 = vmatpush.msra.mxu0 0.0
        %4739 = vmatpush.msra.mxu0 0.0
        %4740 = vmatpush.msra.mxu0 0.0
        %4741 = vmatpush.msra.mxu0 0.0
        %4742 = vmatpush.msra.mxu0 0.0
        %4743 = vmatpush.msra.mxu0 0.0
        %4744 = vmatpush.msra.mxu0 0.0
        %4745 = vmatpush.msra.mxu0 0.0
        %4746 = vmatpush.msra.mxu0 0.0
        %4747 = vmatpush.msra.mxu0 0.0
        %4748 = vmatpush.msra.mxu0 0.0
        %4749 = vmatpush.msra.mxu0 0.0
        %4750 = vmatpush.msra.mxu0 0.0
        %4751 = vmatpush.msra.mxu0 0.0
        %4752 = vmatpush.msra.mxu0 0.0
        %4753 = vmatpush.msra.mxu0 %v4596
        %4754 = vmatmul.f32.gmra.mxu0 %v4572
        %v4755 = vpop.f32.mrf.mxu0
        %v4756 = vadd.f32 0.0, %v4755
        %4757 = vdwg.mxu0
        %v4758 = vadd.f32 %v4537, %v4616
        %v4759 = vadd.f32 %v4538, %v4636
        %v4760 = vadd.f32 %v4539, %v4656
        %v4761 = vadd.f32 %v4540, %v4676
        %v4762 = vadd.f32 %v4541, %v4696
        %v4763 = vadd.f32 %v4542, %v4716
        %v4764 = vadd.f32 %v4543, %v4736
        %v4765 = vadd.f32 %v4544, %v4756
        %vm4766 = vmand %vm4308, %vm3382
        %vm4767 = vmand %vm4309, %vm3383
        %vm4768 = vmand %vm4310, %vm3384
        %vm4769 = vmand %vm4311, %vm3385
        %vm4770 = vmand %vm4312, %vm3386
        %vm4771 = vmand %vm4313, %vm3387
        %vm4772 = vmand %vm4314, %vm3388
        %vm4773 = vmand %vm4315, %vm3389
        %v4774 = vsel %vm4766, 1, 0
        %v4775 = vsel %vm4767, 1, 0
        %v4776 = vsel %vm4768, 1, 0
        %v4777 = vsel %vm4769, 1, 0
        %v4778 = vsel %vm4770, 1, 0
        %v4779 = vsel %vm4771, 1, 0
        %v4780 = vsel %vm4772, 1, 0
        %v4781 = vsel %vm4773, 1, 0
        %v4782 = vcvt.s32.f32 %v4774
        %v4783 = vcvt.s32.f32 %v4775
        %v4784 = vcvt.s32.f32 %v4776
        %v4785 = vcvt.s32.f32 %v4777
        %v4786 = vcvt.s32.f32 %v4778
        %v4787 = vcvt.s32.f32 %v4779
        %v4788 = vcvt.s32.f32 %v4780
        %v4789 = vcvt.s32.f32 %v4781
        %v4790 = vmul.f32 %v3380, %v4782
        %v4791 = vmul.f32 %v3379, %v4783
        %v4792 = vmul.f32 %v3378, %v4784
        %v4793 = vmul.f32 %v3377, %v4785
        %v4794 = vmul.f32 %v3376, %v4786
        %v4795 = vmul.f32 %v3375, %v4787
        %v4796 = vmul.f32 %v3374, %v4788
        %v4797 = vmul.f32 %v3381, %v4789
        %s4798 = scalar_lea.vmem %s3, 64
        %v4799 = vld [vmem:[%s4798] sm:$0xff]
        %v4801 = vsel %vm2981, %v4799, 0
        %v4804 = vsel %vm2985, %v4790, 0
        %v4807 = vsel %vm2985, %v4791, 0
        %v4810 = vsel %vm2985, %v4792, 0
        %v4813 = vsel %vm2985, %v4793, 0
        %v4816 = vsel %vm2985, %v4794, 0
        %v4819 = vsel %vm2985, %v4795, 0
        %v4822 = vsel %vm2985, %v4796, 0
        %v4825 = vsel %vm2985, %v4797, 0
        %4827 = vmatpush.msra.mxu0 0.0
        %4828 = vmatpush.msra.mxu0 0.0
        %4829 = vmatpush.msra.mxu0 0.0
        %4830 = vmatpush.msra.mxu0 0.0
        %4831 = vmatpush.msra.mxu0 0.0
        %4832 = vmatpush.msra.mxu0 0.0
        %4833 = vmatpush.msra.mxu0 0.0
        %4834 = vmatpush.msra.mxu0 0.0
        %4835 = vmatpush.msra.mxu0 0.0
        %4836 = vmatpush.msra.mxu0 0.0
        %4837 = vmatpush.msra.mxu0 0.0
        %4838 = vmatpush.msra.mxu0 0.0
        %4839 = vmatpush.msra.mxu0 0.0
        %4840 = vmatpush.msra.mxu0 0.0
        %4841 = vmatpush.msra.mxu0 0.0
        %4842 = vmatpush.msra.mxu0 %v4804
        %4843 = vmatmul.f32.gmra.mxu0 %v4801
        %v4844 = vpop.f32.mrf.mxu0
        %v4845 = vadd.f32 0.0, %v4844
        %4846 = vdwg.mxu0
        %4847 = vmatpush.msra.mxu0 0.0
        %4848 = vmatpush.msra.mxu0 0.0
        %4849 = vmatpush.msra.mxu0 0.0
        %4850 = vmatpush.msra.mxu0 0.0
        %4851 = vmatpush.msra.mxu0 0.0
        %4852 = vmatpush.msra.mxu0 0.0
        %4853 = vmatpush.msra.mxu0 0.0
        %4854 = vmatpush.msra.mxu0 0.0
        %4855 = vmatpush.msra.mxu0 0.0
        %4856 = vmatpush.msra.mxu0 0.0
        %4857 = vmatpush.msra.mxu0 0.0
        %4858 = vmatpush.msra.mxu0 0.0
        %4859 = vmatpush.msra.mxu0 0.0
        %4860 = vmatpush.msra.mxu0 0.0
        %4861 = vmatpush.msra.mxu0 0.0
        %4862 = vmatpush.msra.mxu0 %v4807
        %4863 = vmatmul.f32.gmra.mxu0 %v4801
        %v4864 = vpop.f32.mrf.mxu0
        %v4865 = vadd.f32 0.0, %v4864
        %4866 = vdwg.mxu0
        %4867 = vmatpush.msra.mxu0 0.0
        %4868 = vmatpush.msra.mxu0 0.0
        %4869 = vmatpush.msra.mxu0 0.0
        %4870 = vmatpush.msra.mxu0 0.0
        %4871 = vmatpush.msra.mxu0 0.0
        %4872 = vmatpush.msra.mxu0 0.0
        %4873 = vmatpush.msra.mxu0 0.0
        %4874 = vmatpush.msra.mxu0 0.0
        %4875 = vmatpush.msra.mxu0 0.0
        %4876 = vmatpush.msra.mxu0 0.0
        %4877 = vmatpush.msra.mxu0 0.0
        %4878 = vmatpush.msra.mxu0 0.0
        %4879 = vmatpush.msra.mxu0 0.0
        %4880 = vmatpush.msra.mxu0 0.0
        %4881 = vmatpush.msra.mxu0 0.0
        %4882 = vmatpush.msra.mxu0 %v4810
        %4883 = vmatmul.f32.gmra.mxu0 %v4801
        %v4884 = vpop.f32.mrf.mxu0
        %v4885 = vadd.f32 0.0, %v4884
        %4886 = vdwg.mxu0
        %4887 = vmatpush.msra.mxu0 0.0
        %4888 = vmatpush.msra.mxu0 0.0
        %4889 = vmatpush.msra.mxu0 0.0
        %4890 = vmatpush.msra.mxu0 0.0
        %4891 = vmatpush.msra.mxu0 0.0
        %4892 = vmatpush.msra.mxu0 0.0
        %4893 = vmatpush.msra.mxu0 0.0
        %4894 = vmatpush.msra.mxu0 0.0
        %4895 = vmatpush.msra.mxu0 0.0
        %4896 = vmatpush.msra.mxu0 0.0
        %4897 = vmatpush.msra.mxu0 0.0
        %4898 = vmatpush.msra.mxu0 0.0
        %4899 = vmatpush.msra.mxu0 0.0
        %4900 = vmatpush.msra.mxu0 0.0
        %4901 = vmatpush.msra.mxu0 0.0
        %4902 = vmatpush.msra.mxu0 %v4813
        %4903 = vmatmul.f32.gmra.mxu0 %v4801
        %v4904 = vpop.f32.mrf.mxu0
        %v4905 = vadd.f32 0.0, %v4904
        %4906 = vdwg.mxu0
        %4907 = vmatpush.msra.mxu0 0.0
        %4908 = vmatpush.msra.mxu0 0.0
        %4909 = vmatpush.msra.mxu0 0.0
        %4910 = vmatpush.msra.mxu0 0.0
        %4911 = vmatpush.msra.mxu0 0.0
        %4912 = vmatpush.msra.mxu0 0.0
        %4913 = vmatpush.msra.mxu0 0.0
        %4914 = vmatpush.msra.mxu0 0.0
        %4915 = vmatpush.msra.mxu0 0.0
        %4916 = vmatpush.msra.mxu0 0.0
        %4917 = vmatpush.msra.mxu0 0.0
        %4918 = vmatpush.msra.mxu0 0.0
        %4919 = vmatpush.msra.mxu0 0.0
        %4920 = vmatpush.msra.mxu0 0.0
        %4921 = vmatpush.msra.mxu0 0.0
        %4922 = vmatpush.msra.mxu0 %v4816
        %4923 = vmatmul.f32.gmra.mxu0 %v4801
        %v4924 = vpop.f32.mrf.mxu0
        %v4925 = vadd.f32 0.0, %v4924
        %4926 = vdwg.mxu0
        %4927 = vmatpush.msra.mxu0 0.0
        %4928 = vmatpush.msra.mxu0 0.0
        %4929 = vmatpush.msra.mxu0 0.0
        %4930 = vmatpush.msra.mxu0 0.0
        %4931 = vmatpush.msra.mxu0 0.0
        %4932 = vmatpush.msra.mxu0 0.0
        %4933 = vmatpush.msra.mxu0 0.0
        %4934 = vmatpush.msra.mxu0 0.0
        %4935 = vmatpush.msra.mxu0 0.0
        %4936 = vmatpush.msra.mxu0 0.0
        %4937 = vmatpush.msra.mxu0 0.0
        %4938 = vmatpush.msra.mxu0 0.0
        %4939 = vmatpush.msra.mxu0 0.0
        %4940 = vmatpush.msra.mxu0 0.0
        %4941 = vmatpush.msra.mxu0 0.0
        %4942 = vmatpush.msra.mxu0 %v4819
        %4943 = vmatmul.f32.gmra.mxu0 %v4801
        %v4944 = vpop.f32.mrf.mxu0
        %v4945 = vadd.f32 0.0, %v4944
        %4946 = vdwg.mxu0
        %4947 = vmatpush.msra.mxu0 0.0
        %4948 = vmatpush.msra.mxu0 0.0
        %4949 = vmatpush.msra.mxu0 0.0
        %4950 = vmatpush.msra.mxu0 0.0
        %4951 = vmatpush.msra.mxu0 0.0
        %4952 = vmatpush.msra.mxu0 0.0
        %4953 = vmatpush.msra.mxu0 0.0
        %4954 = vmatpush.msra.mxu0 0.0
        %4955 = vmatpush.msra.mxu0 0.0
        %4956 = vmatpush.msra.mxu0 0.0
        %4957 = vmatpush.msra.mxu0 0.0
        %4958 = vmatpush.msra.mxu0 0.0
        %4959 = vmatpush.msra.mxu0 0.0
        %4960 = vmatpush.msra.mxu0 0.0
        %4961 = vmatpush.msra.mxu0 0.0
        %4962 = vmatpush.msra.mxu0 %v4822
        %4963 = vmatmul.f32.gmra.mxu0 %v4801
        %v4964 = vpop.f32.mrf.mxu0
        %v4965 = vadd.f32 0.0, %v4964
        %4966 = vdwg.mxu0
        %4967 = vmatpush.msra.mxu0 0.0
        %4968 = vmatpush.msra.mxu0 0.0
        %4969 = vmatpush.msra.mxu0 0.0
        %4970 = vmatpush.msra.mxu0 0.0
        %4971 = vmatpush.msra.mxu0 0.0
        %4972 = vmatpush.msra.mxu0 0.0
        %4973 = vmatpush.msra.mxu0 0.0
        %4974 = vmatpush.msra.mxu0 0.0
        %4975 = vmatpush.msra.mxu0 0.0
        %4976 = vmatpush.msra.mxu0 0.0
        %4977 = vmatpush.msra.mxu0 0.0
        %4978 = vmatpush.msra.mxu0 0.0
        %4979 = vmatpush.msra.mxu0 0.0
        %4980 = vmatpush.msra.mxu0 0.0
        %4981 = vmatpush.msra.mxu0 0.0
        %4982 = vmatpush.msra.mxu0 %v4825
        %4983 = vmatmul.f32.gmra.mxu0 %v4801
        %v4984 = vpop.f32.mrf.mxu0
        %v4985 = vadd.f32 0.0, %v4984
        %4986 = vdwg.mxu0
        %v4987 = vadd.f32 %v4758, %v4845
        %v4988 = vadd.f32 %v4759, %v4865
        %v4989 = vadd.f32 %v4760, %v4885
        %v4990 = vadd.f32 %v4761, %v4905
        %v4991 = vadd.f32 %v4762, %v4925
        %v4992 = vadd.f32 %v4763, %v4945
        %v4993 = vadd.f32 %v4764, %v4965
        %v4994 = vadd.f32 %v4765, %v4985
        %v4995 = vld [vmem:[%s4] sm:$0xff]
        %4997 = vset.pattern.permute.xlu0 0
        %4998 = vperm.xlu0 %4997, %v4995
        %v4999 = vpop.permute.xlu0 %4998
        %v5001 = vadd.f32 %v4987, %v4999
        %v5002 = vadd.f32 %v4988, %v4999
        %v5003 = vadd.f32 %v4989, %v4999
        %v5004 = vadd.f32 %v4990, %v4999
        %v5005 = vadd.f32 %v4991, %v4999
        %v5006 = vadd.f32 %v4992, %v4999
        %v5007 = vadd.f32 %v4993, %v4999
        %v5008 = vadd.f32 %v4994, %v4999
        %v5009 = vmax.f32 %v5001, 0.0
        %v5010 = vmax.f32 %v5002, 0.0
        %v5011 = vmax.f32 %v5003, 0.0
        %v5012 = vmax.f32 %v5004, 0.0
        %v5013 = vmax.f32 %v5005, 0.0
        %v5014 = vmax.f32 %v5006, 0.0
        %v5015 = vmax.f32 %v5007, 0.0
        %v5016 = vmax.f32 %v5008, 0.0
        %5017 = vrot.lane.b32.xlu0 %v5009, 126
        %v5018 = vpop.permute.xlu0 %5017
        %5019 = vrot.lane.b32.xlu0 %v5010, 126
        %v5020 = vpop.permute.xlu0 %5019
        %5021 = vrot.lane.b32.xlu0 %v5011, 126
        %v5022 = vpop.permute.xlu0 %5021
        %5023 = vrot.lane.b32.xlu0 %v5012, 126
        %v5024 = vpop.permute.xlu0 %5023
        %5025 = vrot.lane.b32.xlu0 %v5013, 126
        %v5026 = vpop.permute.xlu0 %5025
        %5027 = vrot.lane.b32.xlu0 %v5014, 126
        %v5028 = vpop.permute.xlu0 %5027
        %5029 = vrot.lane.b32.xlu0 %v5015, 126
        %v5030 = vpop.permute.xlu0 %5029
        %5031 = vrot.lane.b32.xlu0 %v5016, 126
        %v5032 = vpop.permute.xlu0 %5031
        %v5033 = vsel %vm4078, %v5030, %v5032
        %v5034 = vsel %vm4078, %v5028, %v5030
        %v5035 = vsel %vm4078, %v5026, %v5028
        %v5036 = vsel %vm4078, %v5024, %v5026
        %v5037 = vsel %vm4078, %v5022, %v5024
        %v5038 = vsel %vm4078, %v5020, %v5022
        %v5039 = vsel %vm4078, %v5018, %v5020
        %v5040 = vsel %vm4078, %v5032, %v5018
        %v5041 = vmax.f32 %v5009, %v5039
        %v5042 = vmax.f32 %v5010, %v5038
        %v5043 = vmax.f32 %v5011, %v5037
        %v5044 = vmax.f32 %v5012, %v5036
        %v5045 = vmax.f32 %v5013, %v5035
        %v5046 = vmax.f32 %v5014, %v5034
        %v5047 = vmax.f32 %v5015, %v5033
        %v5048 = vmax.f32 %v5016, %v5040
        %5049 = vrot.lane.b32.xlu0 %v5009, 64
        %v5050 = vpop.permute.xlu0 %5049
        %5051 = vrot.lane.b32.xlu0 %v5010, 64
        %v5052 = vpop.permute.xlu0 %5051
        %5053 = vrot.lane.b32.xlu0 %v5011, 64
        %v5054 = vpop.permute.xlu0 %5053
        %5055 = vrot.lane.b32.xlu0 %v5012, 64
        %v5056 = vpop.permute.xlu0 %5055
        %5057 = vrot.lane.b32.xlu0 %v5013, 64
        %v5058 = vpop.permute.xlu0 %5057
        %5059 = vrot.lane.b32.xlu0 %v5014, 64
        %v5060 = vpop.permute.xlu0 %5059
        %5061 = vrot.lane.b32.xlu0 %v5015, 64
        %v5062 = vpop.permute.xlu0 %5061
        %5063 = vrot.lane.b32.xlu0 %v5016, 64
        %v5064 = vpop.permute.xlu0 %5063
        %v5065 = vsel %vm2946, %v5062, %v5064
        %v5066 = vsel %vm2946, %v5060, %v5062
        %v5067 = vsel %vm2946, %v5058, %v5060
        %v5068 = vsel %vm2946, %v5056, %v5058
        %v5069 = vsel %vm2946, %v5054, %v5056
        %v5070 = vsel %vm2946, %v5052, %v5054
        %v5071 = vsel %vm2946, %v5050, %v5052
        %v5072 = vsel %vm2946, %v5064, %v5050
        %v5073 = vmax.f32 %v5041, %v5071
        %v5074 = vmax.f32 %v5042, %v5070
        %v5075 = vmax.f32 %v5043, %v5069
        %v5076 = vmax.f32 %v5044, %v5068
        %v5077 = vmax.f32 %v5045, %v5067
        %v5078 = vmax.f32 %v5046, %v5066
        %v5079 = vmax.f32 %v5047, %v5065
        %v5080 = vmax.f32 %v5048, %v5072
        %5081 = vrot.lane.b32.xlu0 %v5009, 62
        %v5082 = vpop.permute.xlu0 %5081
        %5083 = vrot.lane.b32.xlu0 %v5010, 62
        %v5084 = vpop.permute.xlu0 %5083
        %5085 = vrot.lane.b32.xlu0 %v5011, 62
        %v5086 = vpop.permute.xlu0 %5085
        %5087 = vrot.lane.b32.xlu0 %v5012, 62
        %v5088 = vpop.permute.xlu0 %5087
        %5089 = vrot.lane.b32.xlu0 %v5013, 62
        %v5090 = vpop.permute.xlu0 %5089
        %5091 = vrot.lane.b32.xlu0 %v5014, 62
        %v5092 = vpop.permute.xlu0 %5091
        %5093 = vrot.lane.b32.xlu0 %v5015, 62
        %v5094 = vpop.permute.xlu0 %5093
        %5095 = vrot.lane.b32.xlu0 %v5016, 62
        %v5096 = vpop.permute.xlu0 %5095
        %v5097 = vsel %vm3373, %v5094, %v5096
        %v5098 = vsel %vm3373, %v5092, %v5094
        %v5099 = vsel %vm3373, %v5090, %v5092
        %v5100 = vsel %vm3373, %v5088, %v5090
        %v5101 = vsel %vm3373, %v5086, %v5088
        %v5102 = vsel %vm3373, %v5084, %v5086
        %v5103 = vsel %vm3373, %v5082, %v5084
        %v5104 = vsel %vm3373, %v5096, %v5082
        %v5105 = vmax.f32 %v5073, %v5103
        %v5106 = vmax.f32 %v5074, %v5102
        %v5107 = vmax.f32 %v5075, %v5101
        %v5108 = vmax.f32 %v5076, %v5100
        %v5109 = vmax.f32 %v5077, %v5099
        %v5110 = vmax.f32 %v5078, %v5098
        %v5111 = vmax.f32 %v5079, %v5097
        %v5112 = vmax.f32 %v5080, %v5104
        %v5113 = vld [vmem:[%s6] sm:$0x1]
        %v5114 = vld [vmem:[%s5] sm:$0xff]
        %v5115 = vld [vmem:[%s5 + $0x8] sm:$0xff]
        %v5116 = vld [vmem:[%s5 + $0x10] sm:$0xff]
        %v5117 = vld [vmem:[%s5 + $0x18] sm:$0xff]
        %v5118 = vld [vmem:[%s5 + $0x20] sm:$0xff]
        %v5119 = vld [vmem:[%s5 + $0x28] sm:$0xff]
        %v5120 = vld [vmem:[%s5 + $0x30] sm:$0xff]
        %v5121 = vld [vmem:[%s5 + $0x38] sm:$0xff]
        %v5122 = vld [vmem:[%s5 + $0x40] sm:$0xff]
        %v5123 = vld [vmem:[%s5 + $0x48] sm:$0xff]
        %v5124 = vld [vmem:[%s5 + $0x50] sm:$0xff]
        %v5125 = vld [vmem:[%s5 + $0x58] sm:$0xff]
        %v5126 = vld [vmem:[%s5 + $0x60] sm:$0xff]
        %v5127 = vld [vmem:[%s5 + $0x68] sm:$0xff]
        %v5128 = vld [vmem:[%s5 + $0x70] sm:$0xff]
        %v5129 = vld [vmem:[%s5 + $0x78] sm:$0xff]
        %v5130 = vld [vmem:[%s5 + $0x80] sm:$0xff]
        %v5131 = vld [vmem:[%s5 + $0x88] sm:$0xff]
        %v5132 = vld [vmem:[%s5 + $0x90] sm:$0xff]
        %v5133 = vld [vmem:[%s5 + $0x98] sm:$0xff]
        %v5134 = vld [vmem:[%s5 + $0xa0] sm:$0xff]
        %v5135 = vld [vmem:[%s5 + $0xa8] sm:$0xff]
        %v5136 = vld [vmem:[%s5 + $0xb0] sm:$0xff]
        %v5137 = vld [vmem:[%s5 + $0xb8] sm:$0xff]
        %v5138 = vld [vmem:[%s5 + $0xc0] sm:$0xff]
        %v5139 = vld [vmem:[%s5 + $0xc8] sm:$0xff]
        %v5140 = vld [vmem:[%s5 + $0xd0] sm:$0xff]
        %v5141 = vld [vmem:[%s5 + $0xd8] sm:$0xff]
        %v5142 = vld [vmem:[%s5 + $0xe0] sm:$0xff]
        %v5143 = vld [vmem:[%s5 + $0xe8] sm:$0xff]
        %v5144 = vld [vmem:[%s5 + $0xf0] sm:$0xff]
        %v5145 = vld [vmem:[%s5 + $0xf8] sm:$0xff]
        %v5146 = vld [vmem:[%s5 + $0x100] sm:$0xff]
        %v5147 = vld [vmem:[%s5 + $0x108] sm:$0xff]
        %v5148 = vld [vmem:[%s5 + $0x110] sm:$0xff]
        %v5149 = vld [vmem:[%s5 + $0x118] sm:$0xff]
        %v5150 = vld [vmem:[%s5 + $0x120] sm:$0xff]
        %v5151 = vld [vmem:[%s5 + $0x128] sm:$0xff]
        %v5152 = vld [vmem:[%s5 + $0x130] sm:$0xff]
        %v5153 = vld [vmem:[%s5 + $0x138] sm:$0xff]
        %v5154 = vld [vmem:[%s5 + $0x140] sm:$0xff]
        %v5155 = vld [vmem:[%s5 + $0x148] sm:$0xff]
        %v5156 = vld [vmem:[%s5 + $0x150] sm:$0xff]
        %v5157 = vld [vmem:[%s5 + $0x158] sm:$0xff]
        %v5158 = vld [vmem:[%s5 + $0x160] sm:$0xff]
        %v5159 = vld [vmem:[%s5 + $0x168] sm:$0xff]
        %v5160 = vld [vmem:[%s5 + $0x170] sm:$0xff]
        %v5161 = vld [vmem:[%s5 + $0x178] sm:$0xff]
        %v5162 = vld [vmem:[%s5 + $0x180] sm:$0xff]
        %v5163 = vld [vmem:[%s5 + $0x188] sm:$0xff]
        %v5164 = vld [vmem:[%s5 + $0x190] sm:$0xff]
        %v5165 = vld [vmem:[%s5 + $0x198] sm:$0xff]
        %v5166 = vld [vmem:[%s5 + $0x1a0] sm:$0xff]
        %v5167 = vld [vmem:[%s5 + $0x1a8] sm:$0xff]
        %v5168 = vld [vmem:[%s5 + $0x1b0] sm:$0xff]
        %v5169 = vld [vmem:[%s5 + $0x1b8] sm:$0xff]
        %v5170 = vld [vmem:[%s5 + $0x1c0] sm:$0xff]
        %v5171 = vld [vmem:[%s5 + $0x1c8] sm:$0xff]
        %v5172 = vld [vmem:[%s5 + $0x1d0] sm:$0xff]
        %v5173 = vld [vmem:[%s5 + $0x1d8] sm:$0xff]
        %v5174 = vld [vmem:[%s5 + $0x1e0] sm:$0xff]
        %v5175 = vld [vmem:[%s5 + $0x1e8] sm:$0xff]
        %v5176 = vld [vmem:[%s5 + $0x1f0] sm:$0xff]
        %v5177 = vld [vmem:[%s5 + $0x1f8] sm:$0xff]
        %v5178 = vld [vmem:[%s5 + $0x200] sm:$0xff]
        %v5179 = vld [vmem:[%s5 + $0x208] sm:$0xff]
        %v5180 = vld [vmem:[%s5 + $0x210] sm:$0xff]
        %v5181 = vld [vmem:[%s5 + $0x218] sm:$0xff]
        %v5182 = vld [vmem:[%s5 + $0x220] sm:$0xff]
        %v5183 = vld [vmem:[%s5 + $0x228] sm:$0xff]
        %v5184 = vld [vmem:[%s5 + $0x230] sm:$0xff]
        %v5185 = vld [vmem:[%s5 + $0x238] sm:$0xff]
        %v5186 = vld [vmem:[%s5 + $0x240] sm:$0xff]
        %v5187 = vld [vmem:[%s5 + $0x248] sm:$0xff]
        %v5188 = vld [vmem:[%s5 + $0x250] sm:$0xff]
        %v5189 = vld [vmem:[%s5 + $0x258] sm:$0xff]
        %v5190 = vld [vmem:[%s5 + $0x260] sm:$0xff]
        %v5191 = vld [vmem:[%s5 + $0x268] sm:$0xff]
        %v5192 = vld [vmem:[%s5 + $0x270] sm:$0xff]
        %v5193 = vld [vmem:[%s5 + $0x278] sm:$0xff]
        %v5194 = vld [vmem:[%s5 + $0x280] sm:$0xff]
        %v5195 = vld [vmem:[%s5 + $0x288] sm:$0xff]
        %v5196 = vld [vmem:[%s5 + $0x290] sm:$0xff]
        %v5197 = vld [vmem:[%s5 + $0x298] sm:$0xff]
        %v5198 = vld [vmem:[%s5 + $0x2a0] sm:$0xff]
        %v5199 = vld [vmem:[%s5 + $0x2a8] sm:$0xff]
        %v5200 = vld [vmem:[%s5 + $0x2b0] sm:$0xff]
        %v5201 = vld [vmem:[%s5 + $0x2b8] sm:$0xff]
        %v5202 = vld [vmem:[%s5 + $0x2c0] sm:$0xff]
        %v5203 = vld [vmem:[%s5 + $0x2c8] sm:$0xff]
        %v5204 = vld [vmem:[%s5 + $0x2d0] sm:$0xff]
        %v5205 = vld [vmem:[%s5 + $0x2d8] sm:$0xff]
        %v5206 = vld [vmem:[%s5 + $0x2e0] sm:$0xff]
        %v5207 = vld [vmem:[%s5 + $0x2e8] sm:$0xff]
        %v5208 = vld [vmem:[%s5 + $0x2f0] sm:$0xff]
        %v5209 = vld [vmem:[%s5 + $0x2f8] sm:$0xff]
        %v5210 = vld [vmem:[%s5 + $0x300] sm:$0xff]
        %v5211 = vld [vmem:[%s5 + $0x308] sm:$0xff]
        %v5212 = vld [vmem:[%s5 + $0x310] sm:$0xff]
        %v5213 = vld [vmem:[%s5 + $0x318] sm:$0xff]
        %v5214 = vld [vmem:[%s5 + $0x320] sm:$0xff]
        %v5215 = vld [vmem:[%s5 + $0x328] sm:$0xff]
        %v5216 = vld [vmem:[%s5 + $0x330] sm:$0xff]
        %v5217 = vld [vmem:[%s5 + $0x338] sm:$0xff]
        %v5218 = vld [vmem:[%s5 + $0x340] sm:$0xff]
        %v5219 = vld [vmem:[%s5 + $0x348] sm:$0xff]
        %v5220 = vld [vmem:[%s5 + $0x350] sm:$0xff]
        %v5221 = vld [vmem:[%s5 + $0x358] sm:$0xff]
        %v5222 = vld [vmem:[%s5 + $0x360] sm:$0xff]
        %v5223 = vld [vmem:[%s5 + $0x368] sm:$0xff]
        %v5224 = vld [vmem:[%s5 + $0x370] sm:$0xff]
        %v5225 = vld [vmem:[%s5 + $0x378] sm:$0xff]
        %v5226 = vld [vmem:[%s5 + $0x380] sm:$0xff]
        %v5227 = vld [vmem:[%s5 + $0x388] sm:$0xff]
        %v5228 = vld [vmem:[%s5 + $0x390] sm:$0xff]
        %v5229 = vld [vmem:[%s5 + $0x398] sm:$0xff]
        %v5230 = vld [vmem:[%s5 + $0x3a0] sm:$0xff]
        %v5231 = vld [vmem:[%s5 + $0x3a8] sm:$0xff]
        %v5232 = vld [vmem:[%s5 + $0x3b0] sm:$0xff]
        %v5233 = vld [vmem:[%s5 + $0x3b8] sm:$0xff]
        %v5234 = vld [vmem:[%s5 + $0x3c0] sm:$0xff]
        %v5235 = vld [vmem:[%s5 + $0x3c8] sm:$0xff]
        %v5236 = vld [vmem:[%s5 + $0x3d0] sm:$0xff]
        %v5237 = vld [vmem:[%s5 + $0x3d8] sm:$0xff]
        %v5238 = vld [vmem:[%s5 + $0x3e0] sm:$0xff]
        %v5239 = vld [vmem:[%s5 + $0x3e8] sm:$0xff]
        %v5240 = vld [vmem:[%s5 + $0x3f0] sm:$0xff]
        %v5241 = vld [vmem:[%s5 + $0x3f8] sm:$0xff]
        %5242 = vmatpush.msra.mxu0 %v5129
        %5243 = vmatpush.msra.mxu0 %v5128
        %5244 = vmatpush.msra.mxu0 %v5127
        %5245 = vmatpush.msra.mxu0 %v5126
        %5246 = vmatpush.msra.mxu0 %v5125
        %5247 = vmatpush.msra.mxu0 %v5124
        %5248 = vmatpush.msra.mxu0 %v5123
        %5249 = vmatpush.msra.mxu0 %v5122
        %5250 = vmatpush.msra.mxu0 %v5121
        %5251 = vmatpush.msra.mxu0 %v5120
        %5252 = vmatpush.msra.mxu0 %v5119
        %5253 = vmatpush.msra.mxu0 %v5118
        %5254 = vmatpush.msra.mxu0 %v5117
        %5255 = vmatpush.msra.mxu0 %v5116
        %5256 = vmatpush.msra.mxu0 %v5115
        %5257 = vmatpush.msra.mxu0 %v5114
        %5258 = vmatmul.f32.gmra.mxu0 %v5105
        %v5259 = vpop.f32.mrf.mxu0
        %v5260 = vadd.f32 0.0, %v5259
        %5261 = vdwg.mxu0
        %5262 = vmatpush.msra.mxu0 %v5145
        %5263 = vmatpush.msra.mxu0 %v5144
        %5264 = vmatpush.msra.mxu0 %v5143
        %5265 = vmatpush.msra.mxu0 %v5142
        %5266 = vmatpush.msra.mxu0 %v5141
        %5267 = vmatpush.msra.mxu0 %v5140
        %5268 = vmatpush.msra.mxu0 %v5139
        %5269 = vmatpush.msra.mxu0 %v5138
        %5270 = vmatpush.msra.mxu0 %v5137
        %5271 = vmatpush.msra.mxu0 %v5136
        %5272 = vmatpush.msra.mxu0 %v5135
        %5273 = vmatpush.msra.mxu0 %v5134
        %5274 = vmatpush.msra.mxu0 %v5133
        %5275 = vmatpush.msra.mxu0 %v5132
        %5276 = vmatpush.msra.mxu0 %v5131
        %5277 = vmatpush.msra.mxu0 %v5130
        %5278 = vmatmul.f32.gmra.mxu0 %v5106
        %v5279 = vpop.f32.mrf.mxu0
        %v5280 = vadd.f32 %v5260, %v5279
        %5281 = vdwg.mxu0
        %5282 = vmatpush.msra.mxu0 %v5161
        %5283 = vmatpush.msra.mxu0 %v5160
        %5284 = vmatpush.msra.mxu0 %v5159
        %5285 = vmatpush.msra.mxu0 %v5158
        %5286 = vmatpush.msra.mxu0 %v5157
        %5287 = vmatpush.msra.mxu0 %v5156
        %5288 = vmatpush.msra.mxu0 %v5155
        %5289 = vmatpush.msra.mxu0 %v5154
        %5290 = vmatpush.msra.mxu0 %v5153
        %5291 = vmatpush.msra.mxu0 %v5152
        %5292 = vmatpush.msra.mxu0 %v5151
        %5293 = vmatpush.msra.mxu0 %v5150
        %5294 = vmatpush.msra.mxu0 %v5149
        %5295 = vmatpush.msra.mxu0 %v5148
        %5296 = vmatpush.msra.mxu0 %v5147
        %5297 = vmatpush.msra.mxu0 %v5146
        %5298 = vmatmul.f32.gmra.mxu0 %v5107
        %v5299 = vpop.f32.mrf.mxu0
        %v5300 = vadd.f32 %v5280, %v5299
        %5301 = vdwg.mxu0
        %5302 = vmatpush.msra.mxu0 %v5177
        %5303 = vmatpush.msra.mxu0 %v5176
        %5304 = vmatpush.msra.mxu0 %v5175
        %5305 = vmatpush.msra.mxu0 %v5174
        %5306 = vmatpush.msra.mxu0 %v5173
        %5307 = vmatpush.msra.mxu0 %v5172
        %5308 = vmatpush.msra.mxu0 %v5171
        %5309 = vmatpush.msra.mxu0 %v5170
        %5310 = vmatpush.msra.mxu0 %v5169
        %5311 = vmatpush.msra.mxu0 %v5168
        %5312 = vmatpush.msra.mxu0 %v5167
        %5313 = vmatpush.msra.mxu0 %v5166
        %5314 = vmatpush.msra.mxu0 %v5165
        %5315 = vmatpush.msra.mxu0 %v5164
        %5316 = vmatpush.msra.mxu0 %v5163
        %5317 = vmatpush.msra.mxu0 %v5162
        %5318 = vmatmul.f32.gmra.mxu0 %v5108
        %v5319 = vpop.f32.mrf.mxu0
        %v5320 = vadd.f32 %v5300, %v5319
        %5321 = vdwg.mxu0
        %5322 = vmatpush.msra.mxu0 %v5193
        %5323 = vmatpush.msra.mxu0 %v5192
        %5324 = vmatpush.msra.mxu0 %v5191
        %5325 = vmatpush.msra.mxu0 %v5190
        %5326 = vmatpush.msra.mxu0 %v5189
        %5327 = vmatpush.msra.mxu0 %v5188
        %5328 = vmatpush.msra.mxu0 %v5187
        %5329 = vmatpush.msra.mxu0 %v5186
        %5330 = vmatpush.msra.mxu0 %v5185
        %5331 = vmatpush.msra.mxu0 %v5184
        %5332 = vmatpush.msra.mxu0 %v5183
        %5333 = vmatpush.msra.mxu0 %v5182
        %5334 = vmatpush.msra.mxu0 %v5181
        %5335 = vmatpush.msra.mxu0 %v5180
        %5336 = vmatpush.msra.mxu0 %v5179
        %5337 = vmatpush.msra.mxu0 %v5178
        %5338 = vmatmul.f32.gmra.mxu0 %v5109
        %v5339 = vpop.f32.mrf.mxu0
        %v5340 = vadd.f32 %v5320, %v5339
        %5341 = vdwg.mxu0
        %5342 = vmatpush.msra.mxu0 %v5209
        %5343 = vmatpush.msra.mxu0 %v5208
        %5344 = vmatpush.msra.mxu0 %v5207
        %5345 = vmatpush.msra.mxu0 %v5206
        %5346 = vmatpush.msra.mxu0 %v5205
        %5347 = vmatpush.msra.mxu0 %v5204
        %5348 = vmatpush.msra.mxu0 %v5203
        %5349 = vmatpush.msra.mxu0 %v5202
        %5350 = vmatpush.msra.mxu0 %v5201
        %5351 = vmatpush.msra.mxu0 %v5200
        %5352 = vmatpush.msra.mxu0 %v5199
        %5353 = vmatpush.msra.mxu0 %v5198
        %5354 = vmatpush.msra.mxu0 %v5197
        %5355 = vmatpush.msra.mxu0 %v5196
        %5356 = vmatpush.msra.mxu0 %v5195
        %5357 = vmatpush.msra.mxu0 %v5194
        %5358 = vmatmul.f32.gmra.mxu0 %v5110
        %v5359 = vpop.f32.mrf.mxu0
        %v5360 = vadd.f32 %v5340, %v5359
        %5361 = vdwg.mxu0
        %5362 = vmatpush.msra.mxu0 %v5225
        %5363 = vmatpush.msra.mxu0 %v5224
        %5364 = vmatpush.msra.mxu0 %v5223
        %5365 = vmatpush.msra.mxu0 %v5222
        %5366 = vmatpush.msra.mxu0 %v5221
        %5367 = vmatpush.msra.mxu0 %v5220
        %5368 = vmatpush.msra.mxu0 %v5219
        %5369 = vmatpush.msra.mxu0 %v5218
        %5370 = vmatpush.msra.mxu0 %v5217
        %5371 = vmatpush.msra.mxu0 %v5216
        %5372 = vmatpush.msra.mxu0 %v5215
        %5373 = vmatpush.msra.mxu0 %v5214
        %5374 = vmatpush.msra.mxu0 %v5213
        %5375 = vmatpush.msra.mxu0 %v5212
        %5376 = vmatpush.msra.mxu0 %v5211
        %5377 = vmatpush.msra.mxu0 %v5210
        %5378 = vmatmul.f32.gmra.mxu0 %v5111
        %v5379 = vpop.f32.mrf.mxu0
        %v5380 = vadd.f32 %v5360, %v5379
        %5381 = vdwg.mxu0
        %5382 = vmatpush.msra.mxu0 %v5241
        %5383 = vmatpush.msra.mxu0 %v5240
        %5384 = vmatpush.msra.mxu0 %v5239
        %5385 = vmatpush.msra.mxu0 %v5238
        %5386 = vmatpush.msra.mxu0 %v5237
        %5387 = vmatpush.msra.mxu0 %v5236
        %5388 = vmatpush.msra.mxu0 %v5235
        %5389 = vmatpush.msra.mxu0 %v5234
        %5390 = vmatpush.msra.mxu0 %v5233
        %5391 = vmatpush.msra.mxu0 %v5232
        %5392 = vmatpush.msra.mxu0 %v5231
        %5393 = vmatpush.msra.mxu0 %v5230
        %5394 = vmatpush.msra.mxu0 %v5229
        %5395 = vmatpush.msra.mxu0 %v5228
        %5396 = vmatpush.msra.mxu0 %v5227
        %5397 = vmatpush.msra.mxu0 %v5226
        %5398 = vmatmul.f32.gmra.mxu0 %v5112
        %v5399 = vpop.f32.mrf.mxu0
        %v5400 = vadd.f32 %v5380, %v5399
        %5401 = vdwg.mxu0
        %v5402 = vadd.f32 %v5113, %v5400
        %s5403 = scalar_lea.vmem %s5, 1024
        %v5404 = vld [vmem:[%s5403] sm:$0xff]
        %v5405 = vld [vmem:[%s5403 + $0x8] sm:$0xff]
        %v5406 = vld [vmem:[%s5403 + $0x10] sm:$0xff]
        %v5407 = vld [vmem:[%s5403 + $0x18] sm:$0xff]
        %v5408 = vld [vmem:[%s5403 + $0x20] sm:$0xff]
        %v5409 = vld [vmem:[%s5403 + $0x28] sm:$0xff]
        %v5410 = vld [vmem:[%s5403 + $0x30] sm:$0xff]
        %v5411 = vld [vmem:[%s5403 + $0x38] sm:$0xff]
        %v5412 = vld [vmem:[%s5403 + $0x40] sm:$0xff]
        %v5413 = vld [vmem:[%s5403 + $0x48] sm:$0xff]
        %v5414 = vld [vmem:[%s5403 + $0x50] sm:$0xff]
        %v5415 = vld [vmem:[%s5403 + $0x58] sm:$0xff]
        %v5416 = vld [vmem:[%s5403 + $0x60] sm:$0xff]
        %v5417 = vld [vmem:[%s5403 + $0x68] sm:$0xff]
        %v5418 = vld [vmem:[%s5403 + $0x70] sm:$0xff]
        %v5419 = vld [vmem:[%s5403 + $0x78] sm:$0xff]
        %v5420 = vld [vmem:[%s5403 + $0x80] sm:$0xff]
        %v5421 = vld [vmem:[%s5403 + $0x88] sm:$0xff]
        %v5422 = vld [vmem:[%s5403 + $0x90] sm:$0xff]
        %v5423 = vld [vmem:[%s5403 + $0x98] sm:$0xff]
        %v5424 = vld [vmem:[%s5403 + $0xa0] sm:$0xff]
        %v5425 = vld [vmem:[%s5403 + $0xa8] sm:$0xff]
        %v5426 = vld [vmem:[%s5403 + $0xb0] sm:$0xff]
        %v5427 = vld [vmem:[%s5403 + $0xb8] sm:$0xff]
        %v5428 = vld [vmem:[%s5403 + $0xc0] sm:$0xff]
        %v5429 = vld [vmem:[%s5403 + $0xc8] sm:$0xff]
        %v5430 = vld [vmem:[%s5403 + $0xd0] sm:$0xff]
        %v5431 = vld [vmem:[%s5403 + $0xd8] sm:$0xff]
        %v5432 = vld [vmem:[%s5403 + $0xe0] sm:$0xff]
        %v5433 = vld [vmem:[%s5403 + $0xe8] sm:$0xff]
        %v5434 = vld [vmem:[%s5403 + $0xf0] sm:$0xff]
        %v5435 = vld [vmem:[%s5403 + $0xf8] sm:$0xff]
        %v5436 = vld [vmem:[%s5403 + $0x100] sm:$0xff]
        %v5437 = vld [vmem:[%s5403 + $0x108] sm:$0xff]
        %v5438 = vld [vmem:[%s5403 + $0x110] sm:$0xff]
        %v5439 = vld [vmem:[%s5403 + $0x118] sm:$0xff]
        %v5440 = vld [vmem:[%s5403 + $0x120] sm:$0xff]
        %v5441 = vld [vmem:[%s5403 + $0x128] sm:$0xff]
        %v5442 = vld [vmem:[%s5403 + $0x130] sm:$0xff]
        %v5443 = vld [vmem:[%s5403 + $0x138] sm:$0xff]
        %v5444 = vld [vmem:[%s5403 + $0x140] sm:$0xff]
        %v5445 = vld [vmem:[%s5403 + $0x148] sm:$0xff]
        %v5446 = vld [vmem:[%s5403 + $0x150] sm:$0xff]
        %v5447 = vld [vmem:[%s5403 + $0x158] sm:$0xff]
        %v5448 = vld [vmem:[%s5403 + $0x160] sm:$0xff]
        %v5449 = vld [vmem:[%s5403 + $0x168] sm:$0xff]
        %v5450 = vld [vmem:[%s5403 + $0x170] sm:$0xff]
        %v5451 = vld [vmem:[%s5403 + $0x178] sm:$0xff]
        %v5452 = vld [vmem:[%s5403 + $0x180] sm:$0xff]
        %v5453 = vld [vmem:[%s5403 + $0x188] sm:$0xff]
        %v5454 = vld [vmem:[%s5403 + $0x190] sm:$0xff]
        %v5455 = vld [vmem:[%s5403 + $0x198] sm:$0xff]
        %v5456 = vld [vmem:[%s5403 + $0x1a0] sm:$0xff]
        %v5457 = vld [vmem:[%s5403 + $0x1a8] sm:$0xff]
        %v5458 = vld [vmem:[%s5403 + $0x1b0] sm:$0xff]
        %v5459 = vld [vmem:[%s5403 + $0x1b8] sm:$0xff]
        %v5460 = vld [vmem:[%s5403 + $0x1c0] sm:$0xff]
        %v5461 = vld [vmem:[%s5403 + $0x1c8] sm:$0xff]
        %v5462 = vld [vmem:[%s5403 + $0x1d0] sm:$0xff]
        %v5463 = vld [vmem:[%s5403 + $0x1d8] sm:$0xff]
        %v5464 = vld [vmem:[%s5403 + $0x1e0] sm:$0xff]
        %v5465 = vld [vmem:[%s5403 + $0x1e8] sm:$0xff]
        %v5466 = vld [vmem:[%s5403 + $0x1f0] sm:$0xff]
        %v5467 = vld [vmem:[%s5403 + $0x1f8] sm:$0xff]
        %v5468 = vld [vmem:[%s5403 + $0x200] sm:$0xff]
        %v5469 = vld [vmem:[%s5403 + $0x208] sm:$0xff]
        %v5470 = vld [vmem:[%s5403 + $0x210] sm:$0xff]
        %v5471 = vld [vmem:[%s5403 + $0x218] sm:$0xff]
        %v5472 = vld [vmem:[%s5403 + $0x220] sm:$0xff]
        %v5473 = vld [vmem:[%s5403 + $0x228] sm:$0xff]
        %v5474 = vld [vmem:[%s5403 + $0x230] sm:$0xff]
        %v5475 = vld [vmem:[%s5403 + $0x238] sm:$0xff]
        %v5476 = vld [vmem:[%s5403 + $0x240] sm:$0xff]
        %v5477 = vld [vmem:[%s5403 + $0x248] sm:$0xff]
        %v5478 = vld [vmem:[%s5403 + $0x250] sm:$0xff]
        %v5479 = vld [vmem:[%s5403 + $0x258] sm:$0xff]
        %v5480 = vld [vmem:[%s5403 + $0x260] sm:$0xff]
        %v5481 = vld [vmem:[%s5403 + $0x268] sm:$0xff]
        %v5482 = vld [vmem:[%s5403 + $0x270] sm:$0xff]
        %v5483 = vld [vmem:[%s5403 + $0x278] sm:$0xff]
        %v5484 = vld [vmem:[%s5403 + $0x280] sm:$0xff]
        %v5485 = vld [vmem:[%s5403 + $0x288] sm:$0xff]
        %v5486 = vld [vmem:[%s5403 + $0x290] sm:$0xff]
        %v5487 = vld [vmem:[%s5403 + $0x298] sm:$0xff]
        %v5488 = vld [vmem:[%s5403 + $0x2a0] sm:$0xff]
        %v5489 = vld [vmem:[%s5403 + $0x2a8] sm:$0xff]
        %v5490 = vld [vmem:[%s5403 + $0x2b0] sm:$0xff]
        %v5491 = vld [vmem:[%s5403 + $0x2b8] sm:$0xff]
        %v5492 = vld [vmem:[%s5403 + $0x2c0] sm:$0xff]
        %v5493 = vld [vmem:[%s5403 + $0x2c8] sm:$0xff]
        %v5494 = vld [vmem:[%s5403 + $0x2d0] sm:$0xff]
        %v5495 = vld [vmem:[%s5403 + $0x2d8] sm:$0xff]
        %v5496 = vld [vmem:[%s5403 + $0x2e0] sm:$0xff]
        %v5497 = vld [vmem:[%s5403 + $0x2e8] sm:$0xff]
        %v5498 = vld [vmem:[%s5403 + $0x2f0] sm:$0xff]
        %v5499 = vld [vmem:[%s5403 + $0x2f8] sm:$0xff]
        %v5500 = vld [vmem:[%s5403 + $0x300] sm:$0xff]
        %v5501 = vld [vmem:[%s5403 + $0x308] sm:$0xff]
        %v5502 = vld [vmem:[%s5403 + $0x310] sm:$0xff]
        %v5503 = vld [vmem:[%s5403 + $0x318] sm:$0xff]
        %v5504 = vld [vmem:[%s5403 + $0x320] sm:$0xff]
        %v5505 = vld [vmem:[%s5403 + $0x328] sm:$0xff]
        %v5506 = vld [vmem:[%s5403 + $0x330] sm:$0xff]
        %v5507 = vld [vmem:[%s5403 + $0x338] sm:$0xff]
        %v5508 = vld [vmem:[%s5403 + $0x340] sm:$0xff]
        %v5509 = vld [vmem:[%s5403 + $0x348] sm:$0xff]
        %v5510 = vld [vmem:[%s5403 + $0x350] sm:$0xff]
        %v5511 = vld [vmem:[%s5403 + $0x358] sm:$0xff]
        %v5512 = vld [vmem:[%s5403 + $0x360] sm:$0xff]
        %v5513 = vld [vmem:[%s5403 + $0x368] sm:$0xff]
        %v5514 = vld [vmem:[%s5403 + $0x370] sm:$0xff]
        %v5515 = vld [vmem:[%s5403 + $0x378] sm:$0xff]
        %v5516 = vld [vmem:[%s5403 + $0x380] sm:$0xff]
        %v5517 = vld [vmem:[%s5403 + $0x388] sm:$0xff]
        %v5518 = vld [vmem:[%s5403 + $0x390] sm:$0xff]
        %v5519 = vld [vmem:[%s5403 + $0x398] sm:$0xff]
        %v5520 = vld [vmem:[%s5403 + $0x3a0] sm:$0xff]
        %v5521 = vld [vmem:[%s5403 + $0x3a8] sm:$0xff]
        %v5522 = vld [vmem:[%s5403 + $0x3b0] sm:$0xff]
        %v5523 = vld [vmem:[%s5403 + $0x3b8] sm:$0xff]
        %v5524 = vld [vmem:[%s5403 + $0x3c0] sm:$0xff]
        %v5525 = vld [vmem:[%s5403 + $0x3c8] sm:$0xff]
        %v5526 = vld [vmem:[%s5403 + $0x3d0] sm:$0xff]
        %v5527 = vld [vmem:[%s5403 + $0x3d8] sm:$0xff]
        %v5528 = vld [vmem:[%s5403 + $0x3e0] sm:$0xff]
        %v5529 = vld [vmem:[%s5403 + $0x3e8] sm:$0xff]
        %v5530 = vld [vmem:[%s5403 + $0x3f0] sm:$0xff]
        %v5531 = vld [vmem:[%s5403 + $0x3f8] sm:$0xff]
        %v5540 = vrot.slane %v5105, 1
        %v5541 = vrot.slane %v5106, 1
        %v5542 = vrot.slane %v5107, 1
        %v5543 = vrot.slane %v5108, 1
        %v5544 = vrot.slane %v5109, 1
        %v5545 = vrot.slane %v5110, 1
        %v5546 = vrot.slane %v5111, 1
        %v5547 = vrot.slane %v5112, 1
        %5556 = vmatpush.msra.mxu0 %v5419
        %5557 = vmatpush.msra.mxu0 %v5418
        %5558 = vmatpush.msra.mxu0 %v5417
        %5559 = vmatpush.msra.mxu0 %v5416
        %5560 = vmatpush.msra.mxu0 %v5415
        %5561 = vmatpush.msra.mxu0 %v5414
        %5562 = vmatpush.msra.mxu0 %v5413
        %5563 = vmatpush.msra.mxu0 %v5412
        %5564 = vmatpush.msra.mxu0 %v5411
        %5565 = vmatpush.msra.mxu0 %v5410
        %5566 = vmatpush.msra.mxu0 %v5409
        %5567 = vmatpush.msra.mxu0 %v5408
        %5568 = vmatpush.msra.mxu0 %v5407
        %5569 = vmatpush.msra.mxu0 %v5406
        %5570 = vmatpush.msra.mxu0 %v5405
        %5571 = vmatpush.msra.mxu0 %v5404
        %5572 = vmatmul.f32.gmra.mxu0 %v5540
        %v5573 = vpop.f32.mrf.mxu0
        %v5574 = vadd.f32 0.0, %v5573
        %5575 = vdwg.mxu0
        %5576 = vmatpush.msra.mxu0 %v5435
        %5577 = vmatpush.msra.mxu0 %v5434
        %5578 = vmatpush.msra.mxu0 %v5433
        %5579 = vmatpush.msra.mxu0 %v5432
        %5580 = vmatpush.msra.mxu0 %v5431
        %5581 = vmatpush.msra.mxu0 %v5430
        %5582 = vmatpush.msra.mxu0 %v5429
        %5583 = vmatpush.msra.mxu0 %v5428
        %5584 = vmatpush.msra.mxu0 %v5427
        %5585 = vmatpush.msra.mxu0 %v5426
        %5586 = vmatpush.msra.mxu0 %v5425
        %5587 = vmatpush.msra.mxu0 %v5424
        %5588 = vmatpush.msra.mxu0 %v5423
        %5589 = vmatpush.msra.mxu0 %v5422
        %5590 = vmatpush.msra.mxu0 %v5421
        %5591 = vmatpush.msra.mxu0 %v5420
        %5592 = vmatmul.f32.gmra.mxu0 %v5541
        %v5593 = vpop.f32.mrf.mxu0
        %v5594 = vadd.f32 %v5574, %v5593
        %5595 = vdwg.mxu0
        %5596 = vmatpush.msra.mxu0 %v5451
        %5597 = vmatpush.msra.mxu0 %v5450
        %5598 = vmatpush.msra.mxu0 %v5449
        %5599 = vmatpush.msra.mxu0 %v5448
        %5600 = vmatpush.msra.mxu0 %v5447
        %5601 = vmatpush.msra.mxu0 %v5446
        %5602 = vmatpush.msra.mxu0 %v5445
        %5603 = vmatpush.msra.mxu0 %v5444
        %5604 = vmatpush.msra.mxu0 %v5443
        %5605 = vmatpush.msra.mxu0 %v5442
        %5606 = vmatpush.msra.mxu0 %v5441
        %5607 = vmatpush.msra.mxu0 %v5440
        %5608 = vmatpush.msra.mxu0 %v5439
        %5609 = vmatpush.msra.mxu0 %v5438
        %5610 = vmatpush.msra.mxu0 %v5437
        %5611 = vmatpush.msra.mxu0 %v5436
        %5612 = vmatmul.f32.gmra.mxu0 %v5542
        %v5613 = vpop.f32.mrf.mxu0
        %v5614 = vadd.f32 %v5594, %v5613
        %5615 = vdwg.mxu0
        %5616 = vmatpush.msra.mxu0 %v5467
        %5617 = vmatpush.msra.mxu0 %v5466
        %5618 = vmatpush.msra.mxu0 %v5465
        %5619 = vmatpush.msra.mxu0 %v5464
        %5620 = vmatpush.msra.mxu0 %v5463
        %5621 = vmatpush.msra.mxu0 %v5462
        %5622 = vmatpush.msra.mxu0 %v5461
        %5623 = vmatpush.msra.mxu0 %v5460
        %5624 = vmatpush.msra.mxu0 %v5459
        %5625 = vmatpush.msra.mxu0 %v5458
        %5626 = vmatpush.msra.mxu0 %v5457
        %5627 = vmatpush.msra.mxu0 %v5456
        %5628 = vmatpush.msra.mxu0 %v5455
        %5629 = vmatpush.msra.mxu0 %v5454
        %5630 = vmatpush.msra.mxu0 %v5453
        %5631 = vmatpush.msra.mxu0 %v5452
        %5632 = vmatmul.f32.gmra.mxu0 %v5543
        %v5633 = vpop.f32.mrf.mxu0
        %v5634 = vadd.f32 %v5614, %v5633
        %5635 = vdwg.mxu0
        %5636 = vmatpush.msra.mxu0 %v5483
        %5637 = vmatpush.msra.mxu0 %v5482
        %5638 = vmatpush.msra.mxu0 %v5481
        %5639 = vmatpush.msra.mxu0 %v5480
        %5640 = vmatpush.msra.mxu0 %v5479
        %5641 = vmatpush.msra.mxu0 %v5478
        %5642 = vmatpush.msra.mxu0 %v5477
        %5643 = vmatpush.msra.mxu0 %v5476
        %5644 = vmatpush.msra.mxu0 %v5475
        %5645 = vmatpush.msra.mxu0 %v5474
        %5646 = vmatpush.msra.mxu0 %v5473
        %5647 = vmatpush.msra.mxu0 %v5472
        %5648 = vmatpush.msra.mxu0 %v5471
        %5649 = vmatpush.msra.mxu0 %v5470
        %5650 = vmatpush.msra.mxu0 %v5469
        %5651 = vmatpush.msra.mxu0 %v5468
        %5652 = vmatmul.f32.gmra.mxu0 %v5544
        %v5653 = vpop.f32.mrf.mxu0
        %v5654 = vadd.f32 %v5634, %v5653
        %5655 = vdwg.mxu0
        %5656 = vmatpush.msra.mxu0 %v5499
        %5657 = vmatpush.msra.mxu0 %v5498
        %5658 = vmatpush.msra.mxu0 %v5497
        %5659 = vmatpush.msra.mxu0 %v5496
        %5660 = vmatpush.msra.mxu0 %v5495
        %5661 = vmatpush.msra.mxu0 %v5494
        %5662 = vmatpush.msra.mxu0 %v5493
        %5663 = vmatpush.msra.mxu0 %v5492
        %5664 = vmatpush.msra.mxu0 %v5491
        %5665 = vmatpush.msra.mxu0 %v5490
        %5666 = vmatpush.msra.mxu0 %v5489
        %5667 = vmatpush.msra.mxu0 %v5488
        %5668 = vmatpush.msra.mxu0 %v5487
        %5669 = vmatpush.msra.mxu0 %v5486
        %5670 = vmatpush.msra.mxu0 %v5485
        %5671 = vmatpush.msra.mxu0 %v5484
        %5672 = vmatmul.f32.gmra.mxu0 %v5545
        %v5673 = vpop.f32.mrf.mxu0
        %v5674 = vadd.f32 %v5654, %v5673
        %5675 = vdwg.mxu0
        %5676 = vmatpush.msra.mxu0 %v5515
        %5677 = vmatpush.msra.mxu0 %v5514
        %5678 = vmatpush.msra.mxu0 %v5513
        %5679 = vmatpush.msra.mxu0 %v5512
        %5680 = vmatpush.msra.mxu0 %v5511
        %5681 = vmatpush.msra.mxu0 %v5510
        %5682 = vmatpush.msra.mxu0 %v5509
        %5683 = vmatpush.msra.mxu0 %v5508
        %5684 = vmatpush.msra.mxu0 %v5507
        %5685 = vmatpush.msra.mxu0 %v5506
        %5686 = vmatpush.msra.mxu0 %v5505
        %5687 = vmatpush.msra.mxu0 %v5504
        %5688 = vmatpush.msra.mxu0 %v5503
        %5689 = vmatpush.msra.mxu0 %v5502
        %5690 = vmatpush.msra.mxu0 %v5501
        %5691 = vmatpush.msra.mxu0 %v5500
        %5692 = vmatmul.f32.gmra.mxu0 %v5546
        %v5693 = vpop.f32.mrf.mxu0
        %v5694 = vadd.f32 %v5674, %v5693
        %5695 = vdwg.mxu0
        %5696 = vmatpush.msra.mxu0 %v5531
        %5697 = vmatpush.msra.mxu0 %v5530
        %5698 = vmatpush.msra.mxu0 %v5529
        %5699 = vmatpush.msra.mxu0 %v5528
        %5700 = vmatpush.msra.mxu0 %v5527
        %5701 = vmatpush.msra.mxu0 %v5526
        %5702 = vmatpush.msra.mxu0 %v5525
        %5703 = vmatpush.msra.mxu0 %v5524
        %5704 = vmatpush.msra.mxu0 %v5523
        %5705 = vmatpush.msra.mxu0 %v5522
        %5706 = vmatpush.msra.mxu0 %v5521
        %5707 = vmatpush.msra.mxu0 %v5520
        %5708 = vmatpush.msra.mxu0 %v5519
        %5709 = vmatpush.msra.mxu0 %v5518
        %5710 = vmatpush.msra.mxu0 %v5517
        %5711 = vmatpush.msra.mxu0 %v5516
        %5712 = vmatmul.f32.gmra.mxu0 %v5547
        %v5713 = vpop.f32.mrf.mxu0
        %v5714 = vadd.f32 %v5694, %v5713
        %5715 = vdwg.mxu0
        %v5716 = vadd.f32 %v5402, %v5714
        %s5717 = scalar_lea.vmem %s5, 2048
        %v5718 = vld [vmem:[%s5717] sm:$0xff]
        %v5719 = vld [vmem:[%s5717 + $0x8] sm:$0xff]
        %v5720 = vld [vmem:[%s5717 + $0x10] sm:$0xff]
        %v5721 = vld [vmem:[%s5717 + $0x18] sm:$0xff]
        %v5722 = vld [vmem:[%s5717 + $0x20] sm:$0xff]
        %v5723 = vld [vmem:[%s5717 + $0x28] sm:$0xff]
        %v5724 = vld [vmem:[%s5717 + $0x30] sm:$0xff]
        %v5725 = vld [vmem:[%s5717 + $0x38] sm:$0xff]
        %v5726 = vld [vmem:[%s5717 + $0x40] sm:$0xff]
        %v5727 = vld [vmem:[%s5717 + $0x48] sm:$0xff]
        %v5728 = vld [vmem:[%s5717 + $0x50] sm:$0xff]
        %v5729 = vld [vmem:[%s5717 + $0x58] sm:$0xff]
        %v5730 = vld [vmem:[%s5717 + $0x60] sm:$0xff]
        %v5731 = vld [vmem:[%s5717 + $0x68] sm:$0xff]
        %v5732 = vld [vmem:[%s5717 + $0x70] sm:$0xff]
        %v5733 = vld [vmem:[%s5717 + $0x78] sm:$0xff]
        %v5734 = vld [vmem:[%s5717 + $0x80] sm:$0xff]
        %v5735 = vld [vmem:[%s5717 + $0x88] sm:$0xff]
        %v5736 = vld [vmem:[%s5717 + $0x90] sm:$0xff]
        %v5737 = vld [vmem:[%s5717 + $0x98] sm:$0xff]
        %v5738 = vld [vmem:[%s5717 + $0xa0] sm:$0xff]
        %v5739 = vld [vmem:[%s5717 + $0xa8] sm:$0xff]
        %v5740 = vld [vmem:[%s5717 + $0xb0] sm:$0xff]
        %v5741 = vld [vmem:[%s5717 + $0xb8] sm:$0xff]
        %v5742 = vld [vmem:[%s5717 + $0xc0] sm:$0xff]
        %v5743 = vld [vmem:[%s5717 + $0xc8] sm:$0xff]
        %v5744 = vld [vmem:[%s5717 + $0xd0] sm:$0xff]
        %v5745 = vld [vmem:[%s5717 + $0xd8] sm:$0xff]
        %v5746 = vld [vmem:[%s5717 + $0xe0] sm:$0xff]
        %v5747 = vld [vmem:[%s5717 + $0xe8] sm:$0xff]
        %v5748 = vld [vmem:[%s5717 + $0xf0] sm:$0xff]
        %v5749 = vld [vmem:[%s5717 + $0xf8] sm:$0xff]
        %v5750 = vld [vmem:[%s5717 + $0x100] sm:$0xff]
        %v5751 = vld [vmem:[%s5717 + $0x108] sm:$0xff]
        %v5752 = vld [vmem:[%s5717 + $0x110] sm:$0xff]
        %v5753 = vld [vmem:[%s5717 + $0x118] sm:$0xff]
        %v5754 = vld [vmem:[%s5717 + $0x120] sm:$0xff]
        %v5755 = vld [vmem:[%s5717 + $0x128] sm:$0xff]
        %v5756 = vld [vmem:[%s5717 + $0x130] sm:$0xff]
        %v5757 = vld [vmem:[%s5717 + $0x138] sm:$0xff]
        %v5758 = vld [vmem:[%s5717 + $0x140] sm:$0xff]
        %v5759 = vld [vmem:[%s5717 + $0x148] sm:$0xff]
        %v5760 = vld [vmem:[%s5717 + $0x150] sm:$0xff]
        %v5761 = vld [vmem:[%s5717 + $0x158] sm:$0xff]
        %v5762 = vld [vmem:[%s5717 + $0x160] sm:$0xff]
        %v5763 = vld [vmem:[%s5717 + $0x168] sm:$0xff]
        %v5764 = vld [vmem:[%s5717 + $0x170] sm:$0xff]
        %v5765 = vld [vmem:[%s5717 + $0x178] sm:$0xff]
        %v5766 = vld [vmem:[%s5717 + $0x180] sm:$0xff]
        %v5767 = vld [vmem:[%s5717 + $0x188] sm:$0xff]
        %v5768 = vld [vmem:[%s5717 + $0x190] sm:$0xff]
        %v5769 = vld [vmem:[%s5717 + $0x198] sm:$0xff]
        %v5770 = vld [vmem:[%s5717 + $0x1a0] sm:$0xff]
        %v5771 = vld [vmem:[%s5717 + $0x1a8] sm:$0xff]
        %v5772 = vld [vmem:[%s5717 + $0x1b0] sm:$0xff]
        %v5773 = vld [vmem:[%s5717 + $0x1b8] sm:$0xff]
        %v5774 = vld [vmem:[%s5717 + $0x1c0] sm:$0xff]
        %v5775 = vld [vmem:[%s5717 + $0x1c8] sm:$0xff]
        %v5776 = vld [vmem:[%s5717 + $0x1d0] sm:$0xff]
        %v5777 = vld [vmem:[%s5717 + $0x1d8] sm:$0xff]
        %v5778 = vld [vmem:[%s5717 + $0x1e0] sm:$0xff]
        %v5779 = vld [vmem:[%s5717 + $0x1e8] sm:$0xff]
        %v5780 = vld [vmem:[%s5717 + $0x1f0] sm:$0xff]
        %v5781 = vld [vmem:[%s5717 + $0x1f8] sm:$0xff]
        %v5782 = vld [vmem:[%s5717 + $0x200] sm:$0xff]
        %v5783 = vld [vmem:[%s5717 + $0x208] sm:$0xff]
        %v5784 = vld [vmem:[%s5717 + $0x210] sm:$0xff]
        %v5785 = vld [vmem:[%s5717 + $0x218] sm:$0xff]
        %v5786 = vld [vmem:[%s5717 + $0x220] sm:$0xff]
        %v5787 = vld [vmem:[%s5717 + $0x228] sm:$0xff]
        %v5788 = vld [vmem:[%s5717 + $0x230] sm:$0xff]
        %v5789 = vld [vmem:[%s5717 + $0x238] sm:$0xff]
        %v5790 = vld [vmem:[%s5717 + $0x240] sm:$0xff]
        %v5791 = vld [vmem:[%s5717 + $0x248] sm:$0xff]
        %v5792 = vld [vmem:[%s5717 + $0x250] sm:$0xff]
        %v5793 = vld [vmem:[%s5717 + $0x258] sm:$0xff]
        %v5794 = vld [vmem:[%s5717 + $0x260] sm:$0xff]
        %v5795 = vld [vmem:[%s5717 + $0x268] sm:$0xff]
        %v5796 = vld [vmem:[%s5717 + $0x270] sm:$0xff]
        %v5797 = vld [vmem:[%s5717 + $0x278] sm:$0xff]
        %v5798 = vld [vmem:[%s5717 + $0x280] sm:$0xff]
        %v5799 = vld [vmem:[%s5717 + $0x288] sm:$0xff]
        %v5800 = vld [vmem:[%s5717 + $0x290] sm:$0xff]
        %v5801 = vld [vmem:[%s5717 + $0x298] sm:$0xff]
        %v5802 = vld [vmem:[%s5717 + $0x2a0] sm:$0xff]
        %v5803 = vld [vmem:[%s5717 + $0x2a8] sm:$0xff]
        %v5804 = vld [vmem:[%s5717 + $0x2b0] sm:$0xff]
        %v5805 = vld [vmem:[%s5717 + $0x2b8] sm:$0xff]
        %v5806 = vld [vmem:[%s5717 + $0x2c0] sm:$0xff]
        %v5807 = vld [vmem:[%s5717 + $0x2c8] sm:$0xff]
        %v5808 = vld [vmem:[%s5717 + $0x2d0] sm:$0xff]
        %v5809 = vld [vmem:[%s5717 + $0x2d8] sm:$0xff]
        %v5810 = vld [vmem:[%s5717 + $0x2e0] sm:$0xff]
        %v5811 = vld [vmem:[%s5717 + $0x2e8] sm:$0xff]
        %v5812 = vld [vmem:[%s5717 + $0x2f0] sm:$0xff]
        %v5813 = vld [vmem:[%s5717 + $0x2f8] sm:$0xff]
        %v5814 = vld [vmem:[%s5717 + $0x300] sm:$0xff]
        %v5815 = vld [vmem:[%s5717 + $0x308] sm:$0xff]
        %v5816 = vld [vmem:[%s5717 + $0x310] sm:$0xff]
        %v5817 = vld [vmem:[%s5717 + $0x318] sm:$0xff]
        %v5818 = vld [vmem:[%s5717 + $0x320] sm:$0xff]
        %v5819 = vld [vmem:[%s5717 + $0x328] sm:$0xff]
        %v5820 = vld [vmem:[%s5717 + $0x330] sm:$0xff]
        %v5821 = vld [vmem:[%s5717 + $0x338] sm:$0xff]
        %v5822 = vld [vmem:[%s5717 + $0x340] sm:$0xff]
        %v5823 = vld [vmem:[%s5717 + $0x348] sm:$0xff]
        %v5824 = vld [vmem:[%s5717 + $0x350] sm:$0xff]
        %v5825 = vld [vmem:[%s5717 + $0x358] sm:$0xff]
        %v5826 = vld [vmem:[%s5717 + $0x360] sm:$0xff]
        %v5827 = vld [vmem:[%s5717 + $0x368] sm:$0xff]
        %v5828 = vld [vmem:[%s5717 + $0x370] sm:$0xff]
        %v5829 = vld [vmem:[%s5717 + $0x378] sm:$0xff]
        %v5830 = vld [vmem:[%s5717 + $0x380] sm:$0xff]
        %v5831 = vld [vmem:[%s5717 + $0x388] sm:$0xff]
        %v5832 = vld [vmem:[%s5717 + $0x390] sm:$0xff]
        %v5833 = vld [vmem:[%s5717 + $0x398] sm:$0xff]
        %v5834 = vld [vmem:[%s5717 + $0x3a0] sm:$0xff]
        %v5835 = vld [vmem:[%s5717 + $0x3a8] sm:$0xff]
        %v5836 = vld [vmem:[%s5717 + $0x3b0] sm:$0xff]
        %v5837 = vld [vmem:[%s5717 + $0x3b8] sm:$0xff]
        %v5838 = vld [vmem:[%s5717 + $0x3c0] sm:$0xff]
        %v5839 = vld [vmem:[%s5717 + $0x3c8] sm:$0xff]
        %v5840 = vld [vmem:[%s5717 + $0x3d0] sm:$0xff]
        %v5841 = vld [vmem:[%s5717 + $0x3d8] sm:$0xff]
        %v5842 = vld [vmem:[%s5717 + $0x3e0] sm:$0xff]
        %v5843 = vld [vmem:[%s5717 + $0x3e8] sm:$0xff]
        %v5844 = vld [vmem:[%s5717 + $0x3f0] sm:$0xff]
        %v5845 = vld [vmem:[%s5717 + $0x3f8] sm:$0xff]
        %v5846 = vrot.slane %v5105, 2
        %v5847 = vrot.slane %v5106, 2
        %v5848 = vrot.slane %v5107, 2
        %v5849 = vrot.slane %v5108, 2
        %v5850 = vrot.slane %v5109, 2
        %v5851 = vrot.slane %v5110, 2
        %v5852 = vrot.slane %v5111, 2
        %v5853 = vrot.slane %v5112, 2
        %5862 = vmatpush.msra.mxu0 %v5733
        %5863 = vmatpush.msra.mxu0 %v5732
        %5864 = vmatpush.msra.mxu0 %v5731
        %5865 = vmatpush.msra.mxu0 %v5730
        %5866 = vmatpush.msra.mxu0 %v5729
        %5867 = vmatpush.msra.mxu0 %v5728
        %5868 = vmatpush.msra.mxu0 %v5727
        %5869 = vmatpush.msra.mxu0 %v5726
        %5870 = vmatpush.msra.mxu0 %v5725
        %5871 = vmatpush.msra.mxu0 %v5724
        %5872 = vmatpush.msra.mxu0 %v5723
        %5873 = vmatpush.msra.mxu0 %v5722
        %5874 = vmatpush.msra.mxu0 %v5721
        %5875 = vmatpush.msra.mxu0 %v5720
        %5876 = vmatpush.msra.mxu0 %v5719
        %5877 = vmatpush.msra.mxu0 %v5718
        %5878 = vmatmul.f32.gmra.mxu0 %v5846
        %v5879 = vpop.f32.mrf.mxu0
        %v5880 = vadd.f32 0.0, %v5879
        %5881 = vdwg.mxu0
        %5882 = vmatpush.msra.mxu0 %v5749
        %5883 = vmatpush.msra.mxu0 %v5748
        %5884 = vmatpush.msra.mxu0 %v5747
        %5885 = vmatpush.msra.mxu0 %v5746
        %5886 = vmatpush.msra.mxu0 %v5745
        %5887 = vmatpush.msra.mxu0 %v5744
        %5888 = vmatpush.msra.mxu0 %v5743
        %5889 = vmatpush.msra.mxu0 %v5742
        %5890 = vmatpush.msra.mxu0 %v5741
        %5891 = vmatpush.msra.mxu0 %v5740
        %5892 = vmatpush.msra.mxu0 %v5739
        %5893 = vmatpush.msra.mxu0 %v5738
        %5894 = vmatpush.msra.mxu0 %v5737
        %5895 = vmatpush.msra.mxu0 %v5736
        %5896 = vmatpush.msra.mxu0 %v5735
        %5897 = vmatpush.msra.mxu0 %v5734
        %5898 = vmatmul.f32.gmra.mxu0 %v5847
        %v5899 = vpop.f32.mrf.mxu0
        %v5900 = vadd.f32 %v5880, %v5899
        %5901 = vdwg.mxu0
        %5902 = vmatpush.msra.mxu0 %v5765
        %5903 = vmatpush.msra.mxu0 %v5764
        %5904 = vmatpush.msra.mxu0 %v5763
        %5905 = vmatpush.msra.mxu0 %v5762
        %5906 = vmatpush.msra.mxu0 %v5761
        %5907 = vmatpush.msra.mxu0 %v5760
        %5908 = vmatpush.msra.mxu0 %v5759
        %5909 = vmatpush.msra.mxu0 %v5758
        %5910 = vmatpush.msra.mxu0 %v5757
        %5911 = vmatpush.msra.mxu0 %v5756
        %5912 = vmatpush.msra.mxu0 %v5755
        %5913 = vmatpush.msra.mxu0 %v5754
        %5914 = vmatpush.msra.mxu0 %v5753
        %5915 = vmatpush.msra.mxu0 %v5752
        %5916 = vmatpush.msra.mxu0 %v5751
        %5917 = vmatpush.msra.mxu0 %v5750
        %5918 = vmatmul.f32.gmra.mxu0 %v5848
        %v5919 = vpop.f32.mrf.mxu0
        %v5920 = vadd.f32 %v5900, %v5919
        %5921 = vdwg.mxu0
        %5922 = vmatpush.msra.mxu0 %v5781
        %5923 = vmatpush.msra.mxu0 %v5780
        %5924 = vmatpush.msra.mxu0 %v5779
        %5925 = vmatpush.msra.mxu0 %v5778
        %5926 = vmatpush.msra.mxu0 %v5777
        %5927 = vmatpush.msra.mxu0 %v5776
        %5928 = vmatpush.msra.mxu0 %v5775
        %5929 = vmatpush.msra.mxu0 %v5774
        %5930 = vmatpush.msra.mxu0 %v5773
        %5931 = vmatpush.msra.mxu0 %v5772
        %5932 = vmatpush.msra.mxu0 %v5771
        %5933 = vmatpush.msra.mxu0 %v5770
        %5934 = vmatpush.msra.mxu0 %v5769
        %5935 = vmatpush.msra.mxu0 %v5768
        %5936 = vmatpush.msra.mxu0 %v5767
        %5937 = vmatpush.msra.mxu0 %v5766
        %5938 = vmatmul.f32.gmra.mxu0 %v5849
        %v5939 = vpop.f32.mrf.mxu0
        %v5940 = vadd.f32 %v5920, %v5939
        %5941 = vdwg.mxu0
        %5942 = vmatpush.msra.mxu0 %v5797
        %5943 = vmatpush.msra.mxu0 %v5796
        %5944 = vmatpush.msra.mxu0 %v5795
        %5945 = vmatpush.msra.mxu0 %v5794
        %5946 = vmatpush.msra.mxu0 %v5793
        %5947 = vmatpush.msra.mxu0 %v5792
        %5948 = vmatpush.msra.mxu0 %v5791
        %5949 = vmatpush.msra.mxu0 %v5790
        %5950 = vmatpush.msra.mxu0 %v5789
        %5951 = vmatpush.msra.mxu0 %v5788
        %5952 = vmatpush.msra.mxu0 %v5787
        %5953 = vmatpush.msra.mxu0 %v5786
        %5954 = vmatpush.msra.mxu0 %v5785
        %5955 = vmatpush.msra.mxu0 %v5784
        %5956 = vmatpush.msra.mxu0 %v5783
        %5957 = vmatpush.msra.mxu0 %v5782
        %5958 = vmatmul.f32.gmra.mxu0 %v5850
        %v5959 = vpop.f32.mrf.mxu0
        %v5960 = vadd.f32 %v5940, %v5959
        %5961 = vdwg.mxu0
        %5962 = vmatpush.msra.mxu0 %v5813
        %5963 = vmatpush.msra.mxu0 %v5812
        %5964 = vmatpush.msra.mxu0 %v5811
        %5965 = vmatpush.msra.mxu0 %v5810
        %5966 = vmatpush.msra.mxu0 %v5809
        %5967 = vmatpush.msra.mxu0 %v5808
        %5968 = vmatpush.msra.mxu0 %v5807
        %5969 = vmatpush.msra.mxu0 %v5806
        %5970 = vmatpush.msra.mxu0 %v5805
        %5971 = vmatpush.msra.mxu0 %v5804
        %5972 = vmatpush.msra.mxu0 %v5803
        %5973 = vmatpush.msra.mxu0 %v5802
        %5974 = vmatpush.msra.mxu0 %v5801
        %5975 = vmatpush.msra.mxu0 %v5800
        %5976 = vmatpush.msra.mxu0 %v5799
        %5977 = vmatpush.msra.mxu0 %v5798
        %5978 = vmatmul.f32.gmra.mxu0 %v5851
        %v5979 = vpop.f32.mrf.mxu0
        %v5980 = vadd.f32 %v5960, %v5979
        %5981 = vdwg.mxu0
        %5982 = vmatpush.msra.mxu0 %v5829
        %5983 = vmatpush.msra.mxu0 %v5828
        %5984 = vmatpush.msra.mxu0 %v5827
        %5985 = vmatpush.msra.mxu0 %v5826
        %5986 = vmatpush.msra.mxu0 %v5825
        %5987 = vmatpush.msra.mxu0 %v5824
        %5988 = vmatpush.msra.mxu0 %v5823
        %5989 = vmatpush.msra.mxu0 %v5822
        %5990 = vmatpush.msra.mxu0 %v5821
        %5991 = vmatpush.msra.mxu0 %v5820
        %5992 = vmatpush.msra.mxu0 %v5819
        %5993 = vmatpush.msra.mxu0 %v5818
        %5994 = vmatpush.msra.mxu0 %v5817
        %5995 = vmatpush.msra.mxu0 %v5816
        %5996 = vmatpush.msra.mxu0 %v5815
        %5997 = vmatpush.msra.mxu0 %v5814
        %5998 = vmatmul.f32.gmra.mxu0 %v5852
        %v5999 = vpop.f32.mrf.mxu0
        %v6000 = vadd.f32 %v5980, %v5999
        %6001 = vdwg.mxu0
        %6002 = vmatpush.msra.mxu0 %v5845
        %6003 = vmatpush.msra.mxu0 %v5844
        %6004 = vmatpush.msra.mxu0 %v5843
        %6005 = vmatpush.msra.mxu0 %v5842
        %6006 = vmatpush.msra.mxu0 %v5841
        %6007 = vmatpush.msra.mxu0 %v5840
        %6008 = vmatpush.msra.mxu0 %v5839
        %6009 = vmatpush.msra.mxu0 %v5838
        %6010 = vmatpush.msra.mxu0 %v5837
        %6011 = vmatpush.msra.mxu0 %v5836
        %6012 = vmatpush.msra.mxu0 %v5835
        %6013 = vmatpush.msra.mxu0 %v5834
        %6014 = vmatpush.msra.mxu0 %v5833
        %6015 = vmatpush.msra.mxu0 %v5832
        %6016 = vmatpush.msra.mxu0 %v5831
        %6017 = vmatpush.msra.mxu0 %v5830
        %6018 = vmatmul.f32.gmra.mxu0 %v5853
        %v6019 = vpop.f32.mrf.mxu0
        %v6020 = vadd.f32 %v6000, %v6019
        %6021 = vdwg.mxu0
        %v6022 = vadd.f32 %v5716, %v6020
        %s6023 = scalar_lea.vmem %s5, 3072
        %v6024 = vld [vmem:[%s6023] sm:$0xff]
        %v6025 = vld [vmem:[%s6023 + $0x8] sm:$0xff]
        %v6026 = vld [vmem:[%s6023 + $0x10] sm:$0xff]
        %v6027 = vld [vmem:[%s6023 + $0x18] sm:$0xff]
        %v6028 = vld [vmem:[%s6023 + $0x20] sm:$0xff]
        %v6029 = vld [vmem:[%s6023 + $0x28] sm:$0xff]
        %v6030 = vld [vmem:[%s6023 + $0x30] sm:$0xff]
        %v6031 = vld [vmem:[%s6023 + $0x38] sm:$0xff]
        %v6032 = vld [vmem:[%s6023 + $0x40] sm:$0xff]
        %v6033 = vld [vmem:[%s6023 + $0x48] sm:$0xff]
        %v6034 = vld [vmem:[%s6023 + $0x50] sm:$0xff]
        %v6035 = vld [vmem:[%s6023 + $0x58] sm:$0xff]
        %v6036 = vld [vmem:[%s6023 + $0x60] sm:$0xff]
        %v6037 = vld [vmem:[%s6023 + $0x68] sm:$0xff]
        %v6038 = vld [vmem:[%s6023 + $0x70] sm:$0xff]
        %v6039 = vld [vmem:[%s6023 + $0x78] sm:$0xff]
        %v6040 = vld [vmem:[%s6023 + $0x80] sm:$0xff]
        %v6041 = vld [vmem:[%s6023 + $0x88] sm:$0xff]
        %v6042 = vld [vmem:[%s6023 + $0x90] sm:$0xff]
        %v6043 = vld [vmem:[%s6023 + $0x98] sm:$0xff]
        %v6044 = vld [vmem:[%s6023 + $0xa0] sm:$0xff]
        %v6045 = vld [vmem:[%s6023 + $0xa8] sm:$0xff]
        %v6046 = vld [vmem:[%s6023 + $0xb0] sm:$0xff]
        %v6047 = vld [vmem:[%s6023 + $0xb8] sm:$0xff]
        %v6048 = vld [vmem:[%s6023 + $0xc0] sm:$0xff]
        %v6049 = vld [vmem:[%s6023 + $0xc8] sm:$0xff]
        %v6050 = vld [vmem:[%s6023 + $0xd0] sm:$0xff]
        %v6051 = vld [vmem:[%s6023 + $0xd8] sm:$0xff]
        %v6052 = vld [vmem:[%s6023 + $0xe0] sm:$0xff]
        %v6053 = vld [vmem:[%s6023 + $0xe8] sm:$0xff]
        %v6054 = vld [vmem:[%s6023 + $0xf0] sm:$0xff]
        %v6055 = vld [vmem:[%s6023 + $0xf8] sm:$0xff]
        %v6056 = vld [vmem:[%s6023 + $0x100] sm:$0xff]
        %v6057 = vld [vmem:[%s6023 + $0x108] sm:$0xff]
        %v6058 = vld [vmem:[%s6023 + $0x110] sm:$0xff]
        %v6059 = vld [vmem:[%s6023 + $0x118] sm:$0xff]
        %v6060 = vld [vmem:[%s6023 + $0x120] sm:$0xff]
        %v6061 = vld [vmem:[%s6023 + $0x128] sm:$0xff]
        %v6062 = vld [vmem:[%s6023 + $0x130] sm:$0xff]
        %v6063 = vld [vmem:[%s6023 + $0x138] sm:$0xff]
        %v6064 = vld [vmem:[%s6023 + $0x140] sm:$0xff]
        %v6065 = vld [vmem:[%s6023 + $0x148] sm:$0xff]
        %v6066 = vld [vmem:[%s6023 + $0x150] sm:$0xff]
        %v6067 = vld [vmem:[%s6023 + $0x158] sm:$0xff]
        %v6068 = vld [vmem:[%s6023 + $0x160] sm:$0xff]
        %v6069 = vld [vmem:[%s6023 + $0x168] sm:$0xff]
        %v6070 = vld [vmem:[%s6023 + $0x170] sm:$0xff]
        %v6071 = vld [vmem:[%s6023 + $0x178] sm:$0xff]
        %v6072 = vld [vmem:[%s6023 + $0x180] sm:$0xff]
        %v6073 = vld [vmem:[%s6023 + $0x188] sm:$0xff]
        %v6074 = vld [vmem:[%s6023 + $0x190] sm:$0xff]
        %v6075 = vld [vmem:[%s6023 + $0x198] sm:$0xff]
        %v6076 = vld [vmem:[%s6023 + $0x1a0] sm:$0xff]
        %v6077 = vld [vmem:[%s6023 + $0x1a8] sm:$0xff]
        %v6078 = vld [vmem:[%s6023 + $0x1b0] sm:$0xff]
        %v6079 = vld [vmem:[%s6023 + $0x1b8] sm:$0xff]
        %v6080 = vld [vmem:[%s6023 + $0x1c0] sm:$0xff]
        %v6081 = vld [vmem:[%s6023 + $0x1c8] sm:$0xff]
        %v6082 = vld [vmem:[%s6023 + $0x1d0] sm:$0xff]
        %v6083 = vld [vmem:[%s6023 + $0x1d8] sm:$0xff]
        %v6084 = vld [vmem:[%s6023 + $0x1e0] sm:$0xff]
        %v6085 = vld [vmem:[%s6023 + $0x1e8] sm:$0xff]
        %v6086 = vld [vmem:[%s6023 + $0x1f0] sm:$0xff]
        %v6087 = vld [vmem:[%s6023 + $0x1f8] sm:$0xff]
        %v6088 = vld [vmem:[%s6023 + $0x200] sm:$0xff]
        %v6089 = vld [vmem:[%s6023 + $0x208] sm:$0xff]
        %v6090 = vld [vmem:[%s6023 + $0x210] sm:$0xff]
        %v6091 = vld [vmem:[%s6023 + $0x218] sm:$0xff]
        %v6092 = vld [vmem:[%s6023 + $0x220] sm:$0xff]
        %v6093 = vld [vmem:[%s6023 + $0x228] sm:$0xff]
        %v6094 = vld [vmem:[%s6023 + $0x230] sm:$0xff]
        %v6095 = vld [vmem:[%s6023 + $0x238] sm:$0xff]
        %v6096 = vld [vmem:[%s6023 + $0x240] sm:$0xff]
        %v6097 = vld [vmem:[%s6023 + $0x248] sm:$0xff]
        %v6098 = vld [vmem:[%s6023 + $0x250] sm:$0xff]
        %v6099 = vld [vmem:[%s6023 + $0x258] sm:$0xff]
        %v6100 = vld [vmem:[%s6023 + $0x260] sm:$0xff]
        %v6101 = vld [vmem:[%s6023 + $0x268] sm:$0xff]
        %v6102 = vld [vmem:[%s6023 + $0x270] sm:$0xff]
        %v6103 = vld [vmem:[%s6023 + $0x278] sm:$0xff]
        %v6104 = vld [vmem:[%s6023 + $0x280] sm:$0xff]
        %v6105 = vld [vmem:[%s6023 + $0x288] sm:$0xff]
        %v6106 = vld [vmem:[%s6023 + $0x290] sm:$0xff]
        %v6107 = vld [vmem:[%s6023 + $0x298] sm:$0xff]
        %v6108 = vld [vmem:[%s6023 + $0x2a0] sm:$0xff]
        %v6109 = vld [vmem:[%s6023 + $0x2a8] sm:$0xff]
        %v6110 = vld [vmem:[%s6023 + $0x2b0] sm:$0xff]
        %v6111 = vld [vmem:[%s6023 + $0x2b8] sm:$0xff]
        %v6112 = vld [vmem:[%s6023 + $0x2c0] sm:$0xff]
        %v6113 = vld [vmem:[%s6023 + $0x2c8] sm:$0xff]
        %v6114 = vld [vmem:[%s6023 + $0x2d0] sm:$0xff]
        %v6115 = vld [vmem:[%s6023 + $0x2d8] sm:$0xff]
        %v6116 = vld [vmem:[%s6023 + $0x2e0] sm:$0xff]
        %v6117 = vld [vmem:[%s6023 + $0x2e8] sm:$0xff]
        %v6118 = vld [vmem:[%s6023 + $0x2f0] sm:$0xff]
        %v6119 = vld [vmem:[%s6023 + $0x2f8] sm:$0xff]
        %v6120 = vld [vmem:[%s6023 + $0x300] sm:$0xff]
        %v6121 = vld [vmem:[%s6023 + $0x308] sm:$0xff]
        %v6122 = vld [vmem:[%s6023 + $0x310] sm:$0xff]
        %v6123 = vld [vmem:[%s6023 + $0x318] sm:$0xff]
        %v6124 = vld [vmem:[%s6023 + $0x320] sm:$0xff]
        %v6125 = vld [vmem:[%s6023 + $0x328] sm:$0xff]
        %v6126 = vld [vmem:[%s6023 + $0x330] sm:$0xff]
        %v6127 = vld [vmem:[%s6023 + $0x338] sm:$0xff]
        %v6128 = vld [vmem:[%s6023 + $0x340] sm:$0xff]
        %v6129 = vld [vmem:[%s6023 + $0x348] sm:$0xff]
        %v6130 = vld [vmem:[%s6023 + $0x350] sm:$0xff]
        %v6131 = vld [vmem:[%s6023 + $0x358] sm:$0xff]
        %v6132 = vld [vmem:[%s6023 + $0x360] sm:$0xff]
        %v6133 = vld [vmem:[%s6023 + $0x368] sm:$0xff]
        %v6134 = vld [vmem:[%s6023 + $0x370] sm:$0xff]
        %v6135 = vld [vmem:[%s6023 + $0x378] sm:$0xff]
        %v6136 = vld [vmem:[%s6023 + $0x380] sm:$0xff]
        %v6137 = vld [vmem:[%s6023 + $0x388] sm:$0xff]
        %v6138 = vld [vmem:[%s6023 + $0x390] sm:$0xff]
        %v6139 = vld [vmem:[%s6023 + $0x398] sm:$0xff]
        %v6140 = vld [vmem:[%s6023 + $0x3a0] sm:$0xff]
        %v6141 = vld [vmem:[%s6023 + $0x3a8] sm:$0xff]
        %v6142 = vld [vmem:[%s6023 + $0x3b0] sm:$0xff]
        %v6143 = vld [vmem:[%s6023 + $0x3b8] sm:$0xff]
        %v6144 = vld [vmem:[%s6023 + $0x3c0] sm:$0xff]
        %v6145 = vld [vmem:[%s6023 + $0x3c8] sm:$0xff]
        %v6146 = vld [vmem:[%s6023 + $0x3d0] sm:$0xff]
        %v6147 = vld [vmem:[%s6023 + $0x3d8] sm:$0xff]
        %v6148 = vld [vmem:[%s6023 + $0x3e0] sm:$0xff]
        %v6149 = vld [vmem:[%s6023 + $0x3e8] sm:$0xff]
        %v6150 = vld [vmem:[%s6023 + $0x3f0] sm:$0xff]
        %v6151 = vld [vmem:[%s6023 + $0x3f8] sm:$0xff]
        %v6152 = vrot.slane %v5105, 3
        %v6153 = vrot.slane %v5106, 3
        %v6154 = vrot.slane %v5107, 3
        %v6155 = vrot.slane %v5108, 3
        %v6156 = vrot.slane %v5109, 3
        %v6157 = vrot.slane %v5110, 3
        %v6158 = vrot.slane %v5111, 3
        %v6159 = vrot.slane %v5112, 3
        %6168 = vmatpush.msra.mxu0 %v6039
        %6169 = vmatpush.msra.mxu0 %v6038
        %6170 = vmatpush.msra.mxu0 %v6037
        %6171 = vmatpush.msra.mxu0 %v6036
        %6172 = vmatpush.msra.mxu0 %v6035
        %6173 = vmatpush.msra.mxu0 %v6034
        %6174 = vmatpush.msra.mxu0 %v6033
        %6175 = vmatpush.msra.mxu0 %v6032
        %6176 = vmatpush.msra.mxu0 %v6031
        %6177 = vmatpush.msra.mxu0 %v6030
        %6178 = vmatpush.msra.mxu0 %v6029
        %6179 = vmatpush.msra.mxu0 %v6028
        %6180 = vmatpush.msra.mxu0 %v6027
        %6181 = vmatpush.msra.mxu0 %v6026
        %6182 = vmatpush.msra.mxu0 %v6025
        %6183 = vmatpush.msra.mxu0 %v6024
        %6184 = vmatmul.f32.gmra.mxu0 %v6152
        %v6185 = vpop.f32.mrf.mxu0
        %v6186 = vadd.f32 0.0, %v6185
        %6187 = vdwg.mxu0
        %6188 = vmatpush.msra.mxu0 %v6055
        %6189 = vmatpush.msra.mxu0 %v6054
        %6190 = vmatpush.msra.mxu0 %v6053
        %6191 = vmatpush.msra.mxu0 %v6052
        %6192 = vmatpush.msra.mxu0 %v6051
        %6193 = vmatpush.msra.mxu0 %v6050
        %6194 = vmatpush.msra.mxu0 %v6049
        %6195 = vmatpush.msra.mxu0 %v6048
        %6196 = vmatpush.msra.mxu0 %v6047
        %6197 = vmatpush.msra.mxu0 %v6046
        %6198 = vmatpush.msra.mxu0 %v6045
        %6199 = vmatpush.msra.mxu0 %v6044
        %6200 = vmatpush.msra.mxu0 %v6043
        %6201 = vmatpush.msra.mxu0 %v6042
        %6202 = vmatpush.msra.mxu0 %v6041
        %6203 = vmatpush.msra.mxu0 %v6040
        %6204 = vmatmul.f32.gmra.mxu0 %v6153
        %v6205 = vpop.f32.mrf.mxu0
        %v6206 = vadd.f32 %v6186, %v6205
        %6207 = vdwg.mxu0
        %6208 = vmatpush.msra.mxu0 %v6071
        %6209 = vmatpush.msra.mxu0 %v6070
        %6210 = vmatpush.msra.mxu0 %v6069
        %6211 = vmatpush.msra.mxu0 %v6068
        %6212 = vmatpush.msra.mxu0 %v6067
        %6213 = vmatpush.msra.mxu0 %v6066
        %6214 = vmatpush.msra.mxu0 %v6065
        %6215 = vmatpush.msra.mxu0 %v6064
        %6216 = vmatpush.msra.mxu0 %v6063
        %6217 = vmatpush.msra.mxu0 %v6062
        %6218 = vmatpush.msra.mxu0 %v6061
        %6219 = vmatpush.msra.mxu0 %v6060
        %6220 = vmatpush.msra.mxu0 %v6059
        %6221 = vmatpush.msra.mxu0 %v6058
        %6222 = vmatpush.msra.mxu0 %v6057
        %6223 = vmatpush.msra.mxu0 %v6056
        %6224 = vmatmul.f32.gmra.mxu0 %v6154
        %v6225 = vpop.f32.mrf.mxu0
        %v6226 = vadd.f32 %v6206, %v6225
        %6227 = vdwg.mxu0
        %6228 = vmatpush.msra.mxu0 %v6087
        %6229 = vmatpush.msra.mxu0 %v6086
        %6230 = vmatpush.msra.mxu0 %v6085
        %6231 = vmatpush.msra.mxu0 %v6084
        %6232 = vmatpush.msra.mxu0 %v6083
        %6233 = vmatpush.msra.mxu0 %v6082
        %6234 = vmatpush.msra.mxu0 %v6081
        %6235 = vmatpush.msra.mxu0 %v6080
        %6236 = vmatpush.msra.mxu0 %v6079
        %6237 = vmatpush.msra.mxu0 %v6078
        %6238 = vmatpush.msra.mxu0 %v6077
        %6239 = vmatpush.msra.mxu0 %v6076
        %6240 = vmatpush.msra.mxu0 %v6075
        %6241 = vmatpush.msra.mxu0 %v6074
        %6242 = vmatpush.msra.mxu0 %v6073
        %6243 = vmatpush.msra.mxu0 %v6072
        %6244 = vmatmul.f32.gmra.mxu0 %v6155
        %v6245 = vpop.f32.mrf.mxu0
        %v6246 = vadd.f32 %v6226, %v6245
        %6247 = vdwg.mxu0
        %6248 = vmatpush.msra.mxu0 %v6103
        %6249 = vmatpush.msra.mxu0 %v6102
        %6250 = vmatpush.msra.mxu0 %v6101
        %6251 = vmatpush.msra.mxu0 %v6100
        %6252 = vmatpush.msra.mxu0 %v6099
        %6253 = vmatpush.msra.mxu0 %v6098
        %6254 = vmatpush.msra.mxu0 %v6097
        %6255 = vmatpush.msra.mxu0 %v6096
        %6256 = vmatpush.msra.mxu0 %v6095
        %6257 = vmatpush.msra.mxu0 %v6094
        %6258 = vmatpush.msra.mxu0 %v6093
        %6259 = vmatpush.msra.mxu0 %v6092
        %6260 = vmatpush.msra.mxu0 %v6091
        %6261 = vmatpush.msra.mxu0 %v6090
        %6262 = vmatpush.msra.mxu0 %v6089
        %6263 = vmatpush.msra.mxu0 %v6088
        %6264 = vmatmul.f32.gmra.mxu0 %v6156
        %v6265 = vpop.f32.mrf.mxu0
        %v6266 = vadd.f32 %v6246, %v6265
        %6267 = vdwg.mxu0
        %6268 = vmatpush.msra.mxu0 %v6119
        %6269 = vmatpush.msra.mxu0 %v6118
        %6270 = vmatpush.msra.mxu0 %v6117
        %6271 = vmatpush.msra.mxu0 %v6116
        %6272 = vmatpush.msra.mxu0 %v6115
        %6273 = vmatpush.msra.mxu0 %v6114
        %6274 = vmatpush.msra.mxu0 %v6113
        %6275 = vmatpush.msra.mxu0 %v6112
        %6276 = vmatpush.msra.mxu0 %v6111
        %6277 = vmatpush.msra.mxu0 %v6110
        %6278 = vmatpush.msra.mxu0 %v6109
        %6279 = vmatpush.msra.mxu0 %v6108
        %6280 = vmatpush.msra.mxu0 %v6107
        %6281 = vmatpush.msra.mxu0 %v6106
        %6282 = vmatpush.msra.mxu0 %v6105
        %6283 = vmatpush.msra.mxu0 %v6104
        %6284 = vmatmul.f32.gmra.mxu0 %v6157
        %v6285 = vpop.f32.mrf.mxu0
        %v6286 = vadd.f32 %v6266, %v6285
        %6287 = vdwg.mxu0
        %6288 = vmatpush.msra.mxu0 %v6135
        %6289 = vmatpush.msra.mxu0 %v6134
        %6290 = vmatpush.msra.mxu0 %v6133
        %6291 = vmatpush.msra.mxu0 %v6132
        %6292 = vmatpush.msra.mxu0 %v6131
        %6293 = vmatpush.msra.mxu0 %v6130
        %6294 = vmatpush.msra.mxu0 %v6129
        %6295 = vmatpush.msra.mxu0 %v6128
        %6296 = vmatpush.msra.mxu0 %v6127
        %6297 = vmatpush.msra.mxu0 %v6126
        %6298 = vmatpush.msra.mxu0 %v6125
        %6299 = vmatpush.msra.mxu0 %v6124
        %6300 = vmatpush.msra.mxu0 %v6123
        %6301 = vmatpush.msra.mxu0 %v6122
        %6302 = vmatpush.msra.mxu0 %v6121
        %6303 = vmatpush.msra.mxu0 %v6120
        %6304 = vmatmul.f32.gmra.mxu0 %v6158
        %v6305 = vpop.f32.mrf.mxu0
        %v6306 = vadd.f32 %v6286, %v6305
        %6307 = vdwg.mxu0
        %6308 = vmatpush.msra.mxu0 %v6151
        %6309 = vmatpush.msra.mxu0 %v6150
        %6310 = vmatpush.msra.mxu0 %v6149
        %6311 = vmatpush.msra.mxu0 %v6148
        %6312 = vmatpush.msra.mxu0 %v6147
        %6313 = vmatpush.msra.mxu0 %v6146
        %6314 = vmatpush.msra.mxu0 %v6145
        %6315 = vmatpush.msra.mxu0 %v6144
        %6316 = vmatpush.msra.mxu0 %v6143
        %6317 = vmatpush.msra.mxu0 %v6142
        %6318 = vmatpush.msra.mxu0 %v6141
        %6319 = vmatpush.msra.mxu0 %v6140
        %6320 = vmatpush.msra.mxu0 %v6139
        %6321 = vmatpush.msra.mxu0 %v6138
        %6322 = vmatpush.msra.mxu0 %v6137
        %6323 = vmatpush.msra.mxu0 %v6136
        %6324 = vmatmul.f32.gmra.mxu0 %v6159
        %v6325 = vpop.f32.mrf.mxu0
        %v6326 = vadd.f32 %v6306, %v6325
        %6327 = vdwg.mxu0
        %v6328 = vadd.f32 %v6022, %v6326
        %s6329 = scalar_lea.vmem %s5, 4096
        %v6330 = vld [vmem:[%s6329] sm:$0xff]
        %v6331 = vld [vmem:[%s6329 + $0x8] sm:$0xff]
        %v6332 = vld [vmem:[%s6329 + $0x10] sm:$0xff]
        %v6333 = vld [vmem:[%s6329 + $0x18] sm:$0xff]
        %v6334 = vld [vmem:[%s6329 + $0x20] sm:$0xff]
        %v6335 = vld [vmem:[%s6329 + $0x28] sm:$0xff]
        %v6336 = vld [vmem:[%s6329 + $0x30] sm:$0xff]
        %v6337 = vld [vmem:[%s6329 + $0x38] sm:$0xff]
        %v6338 = vld [vmem:[%s6329 + $0x40] sm:$0xff]
        %v6339 = vld [vmem:[%s6329 + $0x48] sm:$0xff]
        %v6340 = vld [vmem:[%s6329 + $0x50] sm:$0xff]
        %v6341 = vld [vmem:[%s6329 + $0x58] sm:$0xff]
        %v6342 = vld [vmem:[%s6329 + $0x60] sm:$0xff]
        %v6343 = vld [vmem:[%s6329 + $0x68] sm:$0xff]
        %v6344 = vld [vmem:[%s6329 + $0x70] sm:$0xff]
        %v6345 = vld [vmem:[%s6329 + $0x78] sm:$0xff]
        %v6346 = vld [vmem:[%s6329 + $0x80] sm:$0xff]
        %v6347 = vld [vmem:[%s6329 + $0x88] sm:$0xff]
        %v6348 = vld [vmem:[%s6329 + $0x90] sm:$0xff]
        %v6349 = vld [vmem:[%s6329 + $0x98] sm:$0xff]
        %v6350 = vld [vmem:[%s6329 + $0xa0] sm:$0xff]
        %v6351 = vld [vmem:[%s6329 + $0xa8] sm:$0xff]
        %v6352 = vld [vmem:[%s6329 + $0xb0] sm:$0xff]
        %v6353 = vld [vmem:[%s6329 + $0xb8] sm:$0xff]
        %v6354 = vld [vmem:[%s6329 + $0xc0] sm:$0xff]
        %v6355 = vld [vmem:[%s6329 + $0xc8] sm:$0xff]
        %v6356 = vld [vmem:[%s6329 + $0xd0] sm:$0xff]
        %v6357 = vld [vmem:[%s6329 + $0xd8] sm:$0xff]
        %v6358 = vld [vmem:[%s6329 + $0xe0] sm:$0xff]
        %v6359 = vld [vmem:[%s6329 + $0xe8] sm:$0xff]
        %v6360 = vld [vmem:[%s6329 + $0xf0] sm:$0xff]
        %v6361 = vld [vmem:[%s6329 + $0xf8] sm:$0xff]
        %v6362 = vld [vmem:[%s6329 + $0x100] sm:$0xff]
        %v6363 = vld [vmem:[%s6329 + $0x108] sm:$0xff]
        %v6364 = vld [vmem:[%s6329 + $0x110] sm:$0xff]
        %v6365 = vld [vmem:[%s6329 + $0x118] sm:$0xff]
        %v6366 = vld [vmem:[%s6329 + $0x120] sm:$0xff]
        %v6367 = vld [vmem:[%s6329 + $0x128] sm:$0xff]
        %v6368 = vld [vmem:[%s6329 + $0x130] sm:$0xff]
        %v6369 = vld [vmem:[%s6329 + $0x138] sm:$0xff]
        %v6370 = vld [vmem:[%s6329 + $0x140] sm:$0xff]
        %v6371 = vld [vmem:[%s6329 + $0x148] sm:$0xff]
        %v6372 = vld [vmem:[%s6329 + $0x150] sm:$0xff]
        %v6373 = vld [vmem:[%s6329 + $0x158] sm:$0xff]
        %v6374 = vld [vmem:[%s6329 + $0x160] sm:$0xff]
        %v6375 = vld [vmem:[%s6329 + $0x168] sm:$0xff]
        %v6376 = vld [vmem:[%s6329 + $0x170] sm:$0xff]
        %v6377 = vld [vmem:[%s6329 + $0x178] sm:$0xff]
        %v6378 = vld [vmem:[%s6329 + $0x180] sm:$0xff]
        %v6379 = vld [vmem:[%s6329 + $0x188] sm:$0xff]
        %v6380 = vld [vmem:[%s6329 + $0x190] sm:$0xff]
        %v6381 = vld [vmem:[%s6329 + $0x198] sm:$0xff]
        %v6382 = vld [vmem:[%s6329 + $0x1a0] sm:$0xff]
        %v6383 = vld [vmem:[%s6329 + $0x1a8] sm:$0xff]
        %v6384 = vld [vmem:[%s6329 + $0x1b0] sm:$0xff]
        %v6385 = vld [vmem:[%s6329 + $0x1b8] sm:$0xff]
        %v6386 = vld [vmem:[%s6329 + $0x1c0] sm:$0xff]
        %v6387 = vld [vmem:[%s6329 + $0x1c8] sm:$0xff]
        %v6388 = vld [vmem:[%s6329 + $0x1d0] sm:$0xff]
        %v6389 = vld [vmem:[%s6329 + $0x1d8] sm:$0xff]
        %v6390 = vld [vmem:[%s6329 + $0x1e0] sm:$0xff]
        %v6391 = vld [vmem:[%s6329 + $0x1e8] sm:$0xff]
        %v6392 = vld [vmem:[%s6329 + $0x1f0] sm:$0xff]
        %v6393 = vld [vmem:[%s6329 + $0x1f8] sm:$0xff]
        %v6394 = vld [vmem:[%s6329 + $0x200] sm:$0xff]
        %v6395 = vld [vmem:[%s6329 + $0x208] sm:$0xff]
        %v6396 = vld [vmem:[%s6329 + $0x210] sm:$0xff]
        %v6397 = vld [vmem:[%s6329 + $0x218] sm:$0xff]
        %v6398 = vld [vmem:[%s6329 + $0x220] sm:$0xff]
        %v6399 = vld [vmem:[%s6329 + $0x228] sm:$0xff]
        %v6400 = vld [vmem:[%s6329 + $0x230] sm:$0xff]
        %v6401 = vld [vmem:[%s6329 + $0x238] sm:$0xff]
        %v6402 = vld [vmem:[%s6329 + $0x240] sm:$0xff]
        %v6403 = vld [vmem:[%s6329 + $0x248] sm:$0xff]
        %v6404 = vld [vmem:[%s6329 + $0x250] sm:$0xff]
        %v6405 = vld [vmem:[%s6329 + $0x258] sm:$0xff]
        %v6406 = vld [vmem:[%s6329 + $0x260] sm:$0xff]
        %v6407 = vld [vmem:[%s6329 + $0x268] sm:$0xff]
        %v6408 = vld [vmem:[%s6329 + $0x270] sm:$0xff]
        %v6409 = vld [vmem:[%s6329 + $0x278] sm:$0xff]
        %v6410 = vld [vmem:[%s6329 + $0x280] sm:$0xff]
        %v6411 = vld [vmem:[%s6329 + $0x288] sm:$0xff]
        %v6412 = vld [vmem:[%s6329 + $0x290] sm:$0xff]
        %v6413 = vld [vmem:[%s6329 + $0x298] sm:$0xff]
        %v6414 = vld [vmem:[%s6329 + $0x2a0] sm:$0xff]
        %v6415 = vld [vmem:[%s6329 + $0x2a8] sm:$0xff]
        %v6416 = vld [vmem:[%s6329 + $0x2b0] sm:$0xff]
        %v6417 = vld [vmem:[%s6329 + $0x2b8] sm:$0xff]
        %v6418 = vld [vmem:[%s6329 + $0x2c0] sm:$0xff]
        %v6419 = vld [vmem:[%s6329 + $0x2c8] sm:$0xff]
        %v6420 = vld [vmem:[%s6329 + $0x2d0] sm:$0xff]
        %v6421 = vld [vmem:[%s6329 + $0x2d8] sm:$0xff]
        %v6422 = vld [vmem:[%s6329 + $0x2e0] sm:$0xff]
        %v6423 = vld [vmem:[%s6329 + $0x2e8] sm:$0xff]
        %v6424 = vld [vmem:[%s6329 + $0x2f0] sm:$0xff]
        %v6425 = vld [vmem:[%s6329 + $0x2f8] sm:$0xff]
        %v6426 = vld [vmem:[%s6329 + $0x300] sm:$0xff]
        %v6427 = vld [vmem:[%s6329 + $0x308] sm:$0xff]
        %v6428 = vld [vmem:[%s6329 + $0x310] sm:$0xff]
        %v6429 = vld [vmem:[%s6329 + $0x318] sm:$0xff]
        %v6430 = vld [vmem:[%s6329 + $0x320] sm:$0xff]
        %v6431 = vld [vmem:[%s6329 + $0x328] sm:$0xff]
        %v6432 = vld [vmem:[%s6329 + $0x330] sm:$0xff]
        %v6433 = vld [vmem:[%s6329 + $0x338] sm:$0xff]
        %v6434 = vld [vmem:[%s6329 + $0x340] sm:$0xff]
        %v6435 = vld [vmem:[%s6329 + $0x348] sm:$0xff]
        %v6436 = vld [vmem:[%s6329 + $0x350] sm:$0xff]
        %v6437 = vld [vmem:[%s6329 + $0x358] sm:$0xff]
        %v6438 = vld [vmem:[%s6329 + $0x360] sm:$0xff]
        %v6439 = vld [vmem:[%s6329 + $0x368] sm:$0xff]
        %v6440 = vld [vmem:[%s6329 + $0x370] sm:$0xff]
        %v6441 = vld [vmem:[%s6329 + $0x378] sm:$0xff]
        %v6442 = vld [vmem:[%s6329 + $0x380] sm:$0xff]
        %v6443 = vld [vmem:[%s6329 + $0x388] sm:$0xff]
        %v6444 = vld [vmem:[%s6329 + $0x390] sm:$0xff]
        %v6445 = vld [vmem:[%s6329 + $0x398] sm:$0xff]
        %v6446 = vld [vmem:[%s6329 + $0x3a0] sm:$0xff]
        %v6447 = vld [vmem:[%s6329 + $0x3a8] sm:$0xff]
        %v6448 = vld [vmem:[%s6329 + $0x3b0] sm:$0xff]
        %v6449 = vld [vmem:[%s6329 + $0x3b8] sm:$0xff]
        %v6450 = vld [vmem:[%s6329 + $0x3c0] sm:$0xff]
        %v6451 = vld [vmem:[%s6329 + $0x3c8] sm:$0xff]
        %v6452 = vld [vmem:[%s6329 + $0x3d0] sm:$0xff]
        %v6453 = vld [vmem:[%s6329 + $0x3d8] sm:$0xff]
        %v6454 = vld [vmem:[%s6329 + $0x3e0] sm:$0xff]
        %v6455 = vld [vmem:[%s6329 + $0x3e8] sm:$0xff]
        %v6456 = vld [vmem:[%s6329 + $0x3f0] sm:$0xff]
        %v6457 = vld [vmem:[%s6329 + $0x3f8] sm:$0xff]
        %v6458 = vrot.slane %v5105, 4
        %v6459 = vrot.slane %v5106, 4
        %v6460 = vrot.slane %v5107, 4
        %v6461 = vrot.slane %v5108, 4
        %v6462 = vrot.slane %v5109, 4
        %v6463 = vrot.slane %v5110, 4
        %v6464 = vrot.slane %v5111, 4
        %v6465 = vrot.slane %v5112, 4
        %6474 = vmatpush.msra.mxu0 %v6345
        %6475 = vmatpush.msra.mxu0 %v6344
        %6476 = vmatpush.msra.mxu0 %v6343
        %6477 = vmatpush.msra.mxu0 %v6342
        %6478 = vmatpush.msra.mxu0 %v6341
        %6479 = vmatpush.msra.mxu0 %v6340
        %6480 = vmatpush.msra.mxu0 %v6339
        %6481 = vmatpush.msra.mxu0 %v6338
        %6482 = vmatpush.msra.mxu0 %v6337
        %6483 = vmatpush.msra.mxu0 %v6336
        %6484 = vmatpush.msra.mxu0 %v6335
        %6485 = vmatpush.msra.mxu0 %v6334
        %6486 = vmatpush.msra.mxu0 %v6333
        %6487 = vmatpush.msra.mxu0 %v6332
        %6488 = vmatpush.msra.mxu0 %v6331
        %6489 = vmatpush.msra.mxu0 %v6330
        %6490 = vmatmul.f32.gmra.mxu0 %v6458
        %v6491 = vpop.f32.mrf.mxu0
        %v6492 = vadd.f32 0.0, %v6491
        %6493 = vdwg.mxu0
        %6494 = vmatpush.msra.mxu0 %v6361
        %6495 = vmatpush.msra.mxu0 %v6360
        %6496 = vmatpush.msra.mxu0 %v6359
        %6497 = vmatpush.msra.mxu0 %v6358
        %6498 = vmatpush.msra.mxu0 %v6357
        %6499 = vmatpush.msra.mxu0 %v6356
        %6500 = vmatpush.msra.mxu0 %v6355
        %6501 = vmatpush.msra.mxu0 %v6354
        %6502 = vmatpush.msra.mxu0 %v6353
        %6503 = vmatpush.msra.mxu0 %v6352
        %6504 = vmatpush.msra.mxu0 %v6351
        %6505 = vmatpush.msra.mxu0 %v6350
        %6506 = vmatpush.msra.mxu0 %v6349
        %6507 = vmatpush.msra.mxu0 %v6348
        %6508 = vmatpush.msra.mxu0 %v6347
        %6509 = vmatpush.msra.mxu0 %v6346
        %6510 = vmatmul.f32.gmra.mxu0 %v6459
        %v6511 = vpop.f32.mrf.mxu0
        %v6512 = vadd.f32 %v6492, %v6511
        %6513 = vdwg.mxu0
        %6514 = vmatpush.msra.mxu0 %v6377
        %6515 = vmatpush.msra.mxu0 %v6376
        %6516 = vmatpush.msra.mxu0 %v6375
        %6517 = vmatpush.msra.mxu0 %v6374
        %6518 = vmatpush.msra.mxu0 %v6373
        %6519 = vmatpush.msra.mxu0 %v6372
        %6520 = vmatpush.msra.mxu0 %v6371
        %6521 = vmatpush.msra.mxu0 %v6370
        %6522 = vmatpush.msra.mxu0 %v6369
        %6523 = vmatpush.msra.mxu0 %v6368
        %6524 = vmatpush.msra.mxu0 %v6367
        %6525 = vmatpush.msra.mxu0 %v6366
        %6526 = vmatpush.msra.mxu0 %v6365
        %6527 = vmatpush.msra.mxu0 %v6364
        %6528 = vmatpush.msra.mxu0 %v6363
        %6529 = vmatpush.msra.mxu0 %v6362
        %6530 = vmatmul.f32.gmra.mxu0 %v6460
        %v6531 = vpop.f32.mrf.mxu0
        %v6532 = vadd.f32 %v6512, %v6531
        %6533 = vdwg.mxu0
        %6534 = vmatpush.msra.mxu0 %v6393
        %6535 = vmatpush.msra.mxu0 %v6392
        %6536 = vmatpush.msra.mxu0 %v6391
        %6537 = vmatpush.msra.mxu0 %v6390
        %6538 = vmatpush.msra.mxu0 %v6389
        %6539 = vmatpush.msra.mxu0 %v6388
        %6540 = vmatpush.msra.mxu0 %v6387
        %6541 = vmatpush.msra.mxu0 %v6386
        %6542 = vmatpush.msra.mxu0 %v6385
        %6543 = vmatpush.msra.mxu0 %v6384
        %6544 = vmatpush.msra.mxu0 %v6383
        %6545 = vmatpush.msra.mxu0 %v6382
        %6546 = vmatpush.msra.mxu0 %v6381
        %6547 = vmatpush.msra.mxu0 %v6380
        %6548 = vmatpush.msra.mxu0 %v6379
        %6549 = vmatpush.msra.mxu0 %v6378
        %6550 = vmatmul.f32.gmra.mxu0 %v6461
        %v6551 = vpop.f32.mrf.mxu0
        %v6552 = vadd.f32 %v6532, %v6551
        %6553 = vdwg.mxu0
        %6554 = vmatpush.msra.mxu0 %v6409
        %6555 = vmatpush.msra.mxu0 %v6408
        %6556 = vmatpush.msra.mxu0 %v6407
        %6557 = vmatpush.msra.mxu0 %v6406
        %6558 = vmatpush.msra.mxu0 %v6405
        %6559 = vmatpush.msra.mxu0 %v6404
        %6560 = vmatpush.msra.mxu0 %v6403
        %6561 = vmatpush.msra.mxu0 %v6402
        %6562 = vmatpush.msra.mxu0 %v6401
        %6563 = vmatpush.msra.mxu0 %v6400
        %6564 = vmatpush.msra.mxu0 %v6399
        %6565 = vmatpush.msra.mxu0 %v6398
        %6566 = vmatpush.msra.mxu0 %v6397
        %6567 = vmatpush.msra.mxu0 %v6396
        %6568 = vmatpush.msra.mxu0 %v6395
        %6569 = vmatpush.msra.mxu0 %v6394
        %6570 = vmatmul.f32.gmra.mxu0 %v6462
        %v6571 = vpop.f32.mrf.mxu0
        %v6572 = vadd.f32 %v6552, %v6571
        %6573 = vdwg.mxu0
        %6574 = vmatpush.msra.mxu0 %v6425
        %6575 = vmatpush.msra.mxu0 %v6424
        %6576 = vmatpush.msra.mxu0 %v6423
        %6577 = vmatpush.msra.mxu0 %v6422
        %6578 = vmatpush.msra.mxu0 %v6421
        %6579 = vmatpush.msra.mxu0 %v6420
        %6580 = vmatpush.msra.mxu0 %v6419
        %6581 = vmatpush.msra.mxu0 %v6418
        %6582 = vmatpush.msra.mxu0 %v6417
        %6583 = vmatpush.msra.mxu0 %v6416
        %6584 = vmatpush.msra.mxu0 %v6415
        %6585 = vmatpush.msra.mxu0 %v6414
        %6586 = vmatpush.msra.mxu0 %v6413
        %6587 = vmatpush.msra.mxu0 %v6412
        %6588 = vmatpush.msra.mxu0 %v6411
        %6589 = vmatpush.msra.mxu0 %v6410
        %6590 = vmatmul.f32.gmra.mxu0 %v6463
        %v6591 = vpop.f32.mrf.mxu0
        %v6592 = vadd.f32 %v6572, %v6591
        %6593 = vdwg.mxu0
        %6594 = vmatpush.msra.mxu0 %v6441
        %6595 = vmatpush.msra.mxu0 %v6440
        %6596 = vmatpush.msra.mxu0 %v6439
        %6597 = vmatpush.msra.mxu0 %v6438
        %6598 = vmatpush.msra.mxu0 %v6437
        %6599 = vmatpush.msra.mxu0 %v6436
        %6600 = vmatpush.msra.mxu0 %v6435
        %6601 = vmatpush.msra.mxu0 %v6434
        %6602 = vmatpush.msra.mxu0 %v6433
        %6603 = vmatpush.msra.mxu0 %v6432
        %6604 = vmatpush.msra.mxu0 %v6431
        %6605 = vmatpush.msra.mxu0 %v6430
        %6606 = vmatpush.msra.mxu0 %v6429
        %6607 = vmatpush.msra.mxu0 %v6428
        %6608 = vmatpush.msra.mxu0 %v6427
        %6609 = vmatpush.msra.mxu0 %v6426
        %6610 = vmatmul.f32.gmra.mxu0 %v6464
        %v6611 = vpop.f32.mrf.mxu0
        %v6612 = vadd.f32 %v6592, %v6611
        %6613 = vdwg.mxu0
        %6614 = vmatpush.msra.mxu0 %v6457
        %6615 = vmatpush.msra.mxu0 %v6456
        %6616 = vmatpush.msra.mxu0 %v6455
        %6617 = vmatpush.msra.mxu0 %v6454
        %6618 = vmatpush.msra.mxu0 %v6453
        %6619 = vmatpush.msra.mxu0 %v6452
        %6620 = vmatpush.msra.mxu0 %v6451
        %6621 = vmatpush.msra.mxu0 %v6450
        %6622 = vmatpush.msra.mxu0 %v6449
        %6623 = vmatpush.msra.mxu0 %v6448
        %6624 = vmatpush.msra.mxu0 %v6447
        %6625 = vmatpush.msra.mxu0 %v6446
        %6626 = vmatpush.msra.mxu0 %v6445
        %6627 = vmatpush.msra.mxu0 %v6444
        %6628 = vmatpush.msra.mxu0 %v6443
        %6629 = vmatpush.msra.mxu0 %v6442
        %6630 = vmatmul.f32.gmra.mxu0 %v6465
        %v6631 = vpop.f32.mrf.mxu0
        %v6632 = vadd.f32 %v6612, %v6631
        %6633 = vdwg.mxu0
        %v6634 = vadd.f32 %v6328, %v6632
        %s6635 = scalar_lea.vmem %s5, 5120
        %v6636 = vld [vmem:[%s6635] sm:$0xff]
        %v6637 = vld [vmem:[%s6635 + $0x8] sm:$0xff]
        %v6638 = vld [vmem:[%s6635 + $0x10] sm:$0xff]
        %v6639 = vld [vmem:[%s6635 + $0x18] sm:$0xff]
        %v6640 = vld [vmem:[%s6635 + $0x20] sm:$0xff]
        %v6641 = vld [vmem:[%s6635 + $0x28] sm:$0xff]
        %v6642 = vld [vmem:[%s6635 + $0x30] sm:$0xff]
        %v6643 = vld [vmem:[%s6635 + $0x38] sm:$0xff]
        %v6644 = vld [vmem:[%s6635 + $0x40] sm:$0xff]
        %v6645 = vld [vmem:[%s6635 + $0x48] sm:$0xff]
        %v6646 = vld [vmem:[%s6635 + $0x50] sm:$0xff]
        %v6647 = vld [vmem:[%s6635 + $0x58] sm:$0xff]
        %v6648 = vld [vmem:[%s6635 + $0x60] sm:$0xff]
        %v6649 = vld [vmem:[%s6635 + $0x68] sm:$0xff]
        %v6650 = vld [vmem:[%s6635 + $0x70] sm:$0xff]
        %v6651 = vld [vmem:[%s6635 + $0x78] sm:$0xff]
        %v6652 = vld [vmem:[%s6635 + $0x80] sm:$0xff]
        %v6653 = vld [vmem:[%s6635 + $0x88] sm:$0xff]
        %v6654 = vld [vmem:[%s6635 + $0x90] sm:$0xff]
        %v6655 = vld [vmem:[%s6635 + $0x98] sm:$0xff]
        %v6656 = vld [vmem:[%s6635 + $0xa0] sm:$0xff]
        %v6657 = vld [vmem:[%s6635 + $0xa8] sm:$0xff]
        %v6658 = vld [vmem:[%s6635 + $0xb0] sm:$0xff]
        %v6659 = vld [vmem:[%s6635 + $0xb8] sm:$0xff]
        %v6660 = vld [vmem:[%s6635 + $0xc0] sm:$0xff]
        %v6661 = vld [vmem:[%s6635 + $0xc8] sm:$0xff]
        %v6662 = vld [vmem:[%s6635 + $0xd0] sm:$0xff]
        %v6663 = vld [vmem:[%s6635 + $0xd8] sm:$0xff]
        %v6664 = vld [vmem:[%s6635 + $0xe0] sm:$0xff]
        %v6665 = vld [vmem:[%s6635 + $0xe8] sm:$0xff]
        %v6666 = vld [vmem:[%s6635 + $0xf0] sm:$0xff]
        %v6667 = vld [vmem:[%s6635 + $0xf8] sm:$0xff]
        %v6668 = vld [vmem:[%s6635 + $0x100] sm:$0xff]
        %v6669 = vld [vmem:[%s6635 + $0x108] sm:$0xff]
        %v6670 = vld [vmem:[%s6635 + $0x110] sm:$0xff]
        %v6671 = vld [vmem:[%s6635 + $0x118] sm:$0xff]
        %v6672 = vld [vmem:[%s6635 + $0x120] sm:$0xff]
        %v6673 = vld [vmem:[%s6635 + $0x128] sm:$0xff]
        %v6674 = vld [vmem:[%s6635 + $0x130] sm:$0xff]
        %v6675 = vld [vmem:[%s6635 + $0x138] sm:$0xff]
        %v6676 = vld [vmem:[%s6635 + $0x140] sm:$0xff]
        %v6677 = vld [vmem:[%s6635 + $0x148] sm:$0xff]
        %v6678 = vld [vmem:[%s6635 + $0x150] sm:$0xff]
        %v6679 = vld [vmem:[%s6635 + $0x158] sm:$0xff]
        %v6680 = vld [vmem:[%s6635 + $0x160] sm:$0xff]
        %v6681 = vld [vmem:[%s6635 + $0x168] sm:$0xff]
        %v6682 = vld [vmem:[%s6635 + $0x170] sm:$0xff]
        %v6683 = vld [vmem:[%s6635 + $0x178] sm:$0xff]
        %v6684 = vld [vmem:[%s6635 + $0x180] sm:$0xff]
        %v6685 = vld [vmem:[%s6635 + $0x188] sm:$0xff]
        %v6686 = vld [vmem:[%s6635 + $0x190] sm:$0xff]
        %v6687 = vld [vmem:[%s6635 + $0x198] sm:$0xff]
        %v6688 = vld [vmem:[%s6635 + $0x1a0] sm:$0xff]
        %v6689 = vld [vmem:[%s6635 + $0x1a8] sm:$0xff]
        %v6690 = vld [vmem:[%s6635 + $0x1b0] sm:$0xff]
        %v6691 = vld [vmem:[%s6635 + $0x1b8] sm:$0xff]
        %v6692 = vld [vmem:[%s6635 + $0x1c0] sm:$0xff]
        %v6693 = vld [vmem:[%s6635 + $0x1c8] sm:$0xff]
        %v6694 = vld [vmem:[%s6635 + $0x1d0] sm:$0xff]
        %v6695 = vld [vmem:[%s6635 + $0x1d8] sm:$0xff]
        %v6696 = vld [vmem:[%s6635 + $0x1e0] sm:$0xff]
        %v6697 = vld [vmem:[%s6635 + $0x1e8] sm:$0xff]
        %v6698 = vld [vmem:[%s6635 + $0x1f0] sm:$0xff]
        %v6699 = vld [vmem:[%s6635 + $0x1f8] sm:$0xff]
        %v6700 = vld [vmem:[%s6635 + $0x200] sm:$0xff]
        %v6701 = vld [vmem:[%s6635 + $0x208] sm:$0xff]
        %v6702 = vld [vmem:[%s6635 + $0x210] sm:$0xff]
        %v6703 = vld [vmem:[%s6635 + $0x218] sm:$0xff]
        %v6704 = vld [vmem:[%s6635 + $0x220] sm:$0xff]
        %v6705 = vld [vmem:[%s6635 + $0x228] sm:$0xff]
        %v6706 = vld [vmem:[%s6635 + $0x230] sm:$0xff]
        %v6707 = vld [vmem:[%s6635 + $0x238] sm:$0xff]
        %v6708 = vld [vmem:[%s6635 + $0x240] sm:$0xff]
        %v6709 = vld [vmem:[%s6635 + $0x248] sm:$0xff]
        %v6710 = vld [vmem:[%s6635 + $0x250] sm:$0xff]
        %v6711 = vld [vmem:[%s6635 + $0x258] sm:$0xff]
        %v6712 = vld [vmem:[%s6635 + $0x260] sm:$0xff]
        %v6713 = vld [vmem:[%s6635 + $0x268] sm:$0xff]
        %v6714 = vld [vmem:[%s6635 + $0x270] sm:$0xff]
        %v6715 = vld [vmem:[%s6635 + $0x278] sm:$0xff]
        %v6716 = vld [vmem:[%s6635 + $0x280] sm:$0xff]
        %v6717 = vld [vmem:[%s6635 + $0x288] sm:$0xff]
        %v6718 = vld [vmem:[%s6635 + $0x290] sm:$0xff]
        %v6719 = vld [vmem:[%s6635 + $0x298] sm:$0xff]
        %v6720 = vld [vmem:[%s6635 + $0x2a0] sm:$0xff]
        %v6721 = vld [vmem:[%s6635 + $0x2a8] sm:$0xff]
        %v6722 = vld [vmem:[%s6635 + $0x2b0] sm:$0xff]
        %v6723 = vld [vmem:[%s6635 + $0x2b8] sm:$0xff]
        %v6724 = vld [vmem:[%s6635 + $0x2c0] sm:$0xff]
        %v6725 = vld [vmem:[%s6635 + $0x2c8] sm:$0xff]
        %v6726 = vld [vmem:[%s6635 + $0x2d0] sm:$0xff]
        %v6727 = vld [vmem:[%s6635 + $0x2d8] sm:$0xff]
        %v6728 = vld [vmem:[%s6635 + $0x2e0] sm:$0xff]
        %v6729 = vld [vmem:[%s6635 + $0x2e8] sm:$0xff]
        %v6730 = vld [vmem:[%s6635 + $0x2f0] sm:$0xff]
        %v6731 = vld [vmem:[%s6635 + $0x2f8] sm:$0xff]
        %v6732 = vld [vmem:[%s6635 + $0x300] sm:$0xff]
        %v6733 = vld [vmem:[%s6635 + $0x308] sm:$0xff]
        %v6734 = vld [vmem:[%s6635 + $0x310] sm:$0xff]
        %v6735 = vld [vmem:[%s6635 + $0x318] sm:$0xff]
        %v6736 = vld [vmem:[%s6635 + $0x320] sm:$0xff]
        %v6737 = vld [vmem:[%s6635 + $0x328] sm:$0xff]
        %v6738 = vld [vmem:[%s6635 + $0x330] sm:$0xff]
        %v6739 = vld [vmem:[%s6635 + $0x338] sm:$0xff]
        %v6740 = vld [vmem:[%s6635 + $0x340] sm:$0xff]
        %v6741 = vld [vmem:[%s6635 + $0x348] sm:$0xff]
        %v6742 = vld [vmem:[%s6635 + $0x350] sm:$0xff]
        %v6743 = vld [vmem:[%s6635 + $0x358] sm:$0xff]
        %v6744 = vld [vmem:[%s6635 + $0x360] sm:$0xff]
        %v6745 = vld [vmem:[%s6635 + $0x368] sm:$0xff]
        %v6746 = vld [vmem:[%s6635 + $0x370] sm:$0xff]
        %v6747 = vld [vmem:[%s6635 + $0x378] sm:$0xff]
        %v6748 = vld [vmem:[%s6635 + $0x380] sm:$0xff]
        %v6749 = vld [vmem:[%s6635 + $0x388] sm:$0xff]
        %v6750 = vld [vmem:[%s6635 + $0x390] sm:$0xff]
        %v6751 = vld [vmem:[%s6635 + $0x398] sm:$0xff]
        %v6752 = vld [vmem:[%s6635 + $0x3a0] sm:$0xff]
        %v6753 = vld [vmem:[%s6635 + $0x3a8] sm:$0xff]
        %v6754 = vld [vmem:[%s6635 + $0x3b0] sm:$0xff]
        %v6755 = vld [vmem:[%s6635 + $0x3b8] sm:$0xff]
        %v6756 = vld [vmem:[%s6635 + $0x3c0] sm:$0xff]
        %v6757 = vld [vmem:[%s6635 + $0x3c8] sm:$0xff]
        %v6758 = vld [vmem:[%s6635 + $0x3d0] sm:$0xff]
        %v6759 = vld [vmem:[%s6635 + $0x3d8] sm:$0xff]
        %v6760 = vld [vmem:[%s6635 + $0x3e0] sm:$0xff]
        %v6761 = vld [vmem:[%s6635 + $0x3e8] sm:$0xff]
        %v6762 = vld [vmem:[%s6635 + $0x3f0] sm:$0xff]
        %v6763 = vld [vmem:[%s6635 + $0x3f8] sm:$0xff]
        %v6764 = vrot.slane %v5105, 5
        %v6765 = vrot.slane %v5106, 5
        %v6766 = vrot.slane %v5107, 5
        %v6767 = vrot.slane %v5108, 5
        %v6768 = vrot.slane %v5109, 5
        %v6769 = vrot.slane %v5110, 5
        %v6770 = vrot.slane %v5111, 5
        %v6771 = vrot.slane %v5112, 5
        %6780 = vmatpush.msra.mxu0 %v6651
        %6781 = vmatpush.msra.mxu0 %v6650
        %6782 = vmatpush.msra.mxu0 %v6649
        %6783 = vmatpush.msra.mxu0 %v6648
        %6784 = vmatpush.msra.mxu0 %v6647
        %6785 = vmatpush.msra.mxu0 %v6646
        %6786 = vmatpush.msra.mxu0 %v6645
        %6787 = vmatpush.msra.mxu0 %v6644
        %6788 = vmatpush.msra.mxu0 %v6643
        %6789 = vmatpush.msra.mxu0 %v6642
        %6790 = vmatpush.msra.mxu0 %v6641
        %6791 = vmatpush.msra.mxu0 %v6640
        %6792 = vmatpush.msra.mxu0 %v6639
        %6793 = vmatpush.msra.mxu0 %v6638
        %6794 = vmatpush.msra.mxu0 %v6637
        %6795 = vmatpush.msra.mxu0 %v6636
        %6796 = vmatmul.f32.gmra.mxu0 %v6764
        %v6797 = vpop.f32.mrf.mxu0
        %v6798 = vadd.f32 0.0, %v6797
        %6799 = vdwg.mxu0
        %6800 = vmatpush.msra.mxu0 %v6667
        %6801 = vmatpush.msra.mxu0 %v6666
        %6802 = vmatpush.msra.mxu0 %v6665
        %6803 = vmatpush.msra.mxu0 %v6664
        %6804 = vmatpush.msra.mxu0 %v6663
        %6805 = vmatpush.msra.mxu0 %v6662
        %6806 = vmatpush.msra.mxu0 %v6661
        %6807 = vmatpush.msra.mxu0 %v6660
        %6808 = vmatpush.msra.mxu0 %v6659
        %6809 = vmatpush.msra.mxu0 %v6658
        %6810 = vmatpush.msra.mxu0 %v6657
        %6811 = vmatpush.msra.mxu0 %v6656
        %6812 = vmatpush.msra.mxu0 %v6655
        %6813 = vmatpush.msra.mxu0 %v6654
        %6814 = vmatpush.msra.mxu0 %v6653
        %6815 = vmatpush.msra.mxu0 %v6652
        %6816 = vmatmul.f32.gmra.mxu0 %v6765
        %v6817 = vpop.f32.mrf.mxu0
        %v6818 = vadd.f32 %v6798, %v6817
        %6819 = vdwg.mxu0
        %6820 = vmatpush.msra.mxu0 %v6683
        %6821 = vmatpush.msra.mxu0 %v6682
        %6822 = vmatpush.msra.mxu0 %v6681
        %6823 = vmatpush.msra.mxu0 %v6680
        %6824 = vmatpush.msra.mxu0 %v6679
        %6825 = vmatpush.msra.mxu0 %v6678
        %6826 = vmatpush.msra.mxu0 %v6677
        %6827 = vmatpush.msra.mxu0 %v6676
        %6828 = vmatpush.msra.mxu0 %v6675
        %6829 = vmatpush.msra.mxu0 %v6674
        %6830 = vmatpush.msra.mxu0 %v6673
        %6831 = vmatpush.msra.mxu0 %v6672
        %6832 = vmatpush.msra.mxu0 %v6671
        %6833 = vmatpush.msra.mxu0 %v6670
        %6834 = vmatpush.msra.mxu0 %v6669
        %6835 = vmatpush.msra.mxu0 %v6668
        %6836 = vmatmul.f32.gmra.mxu0 %v6766
        %v6837 = vpop.f32.mrf.mxu0
        %v6838 = vadd.f32 %v6818, %v6837
        %6839 = vdwg.mxu0
        %6840 = vmatpush.msra.mxu0 %v6699
        %6841 = vmatpush.msra.mxu0 %v6698
        %6842 = vmatpush.msra.mxu0 %v6697
        %6843 = vmatpush.msra.mxu0 %v6696
        %6844 = vmatpush.msra.mxu0 %v6695
        %6845 = vmatpush.msra.mxu0 %v6694
        %6846 = vmatpush.msra.mxu0 %v6693
        %6847 = vmatpush.msra.mxu0 %v6692
        %6848 = vmatpush.msra.mxu0 %v6691
        %6849 = vmatpush.msra.mxu0 %v6690
        %6850 = vmatpush.msra.mxu0 %v6689
        %6851 = vmatpush.msra.mxu0 %v6688
        %6852 = vmatpush.msra.mxu0 %v6687
        %6853 = vmatpush.msra.mxu0 %v6686
        %6854 = vmatpush.msra.mxu0 %v6685
        %6855 = vmatpush.msra.mxu0 %v6684
        %6856 = vmatmul.f32.gmra.mxu0 %v6767
        %v6857 = vpop.f32.mrf.mxu0
        %v6858 = vadd.f32 %v6838, %v6857
        %6859 = vdwg.mxu0
        %6860 = vmatpush.msra.mxu0 %v6715
        %6861 = vmatpush.msra.mxu0 %v6714
        %6862 = vmatpush.msra.mxu0 %v6713
        %6863 = vmatpush.msra.mxu0 %v6712
        %6864 = vmatpush.msra.mxu0 %v6711
        %6865 = vmatpush.msra.mxu0 %v6710
        %6866 = vmatpush.msra.mxu0 %v6709
        %6867 = vmatpush.msra.mxu0 %v6708
        %6868 = vmatpush.msra.mxu0 %v6707
        %6869 = vmatpush.msra.mxu0 %v6706
        %6870 = vmatpush.msra.mxu0 %v6705
        %6871 = vmatpush.msra.mxu0 %v6704
        %6872 = vmatpush.msra.mxu0 %v6703
        %6873 = vmatpush.msra.mxu0 %v6702
        %6874 = vmatpush.msra.mxu0 %v6701
        %6875 = vmatpush.msra.mxu0 %v6700
        %6876 = vmatmul.f32.gmra.mxu0 %v6768
        %v6877 = vpop.f32.mrf.mxu0
        %v6878 = vadd.f32 %v6858, %v6877
        %6879 = vdwg.mxu0
        %6880 = vmatpush.msra.mxu0 %v6731
        %6881 = vmatpush.msra.mxu0 %v6730
        %6882 = vmatpush.msra.mxu0 %v6729
        %6883 = vmatpush.msra.mxu0 %v6728
        %6884 = vmatpush.msra.mxu0 %v6727
        %6885 = vmatpush.msra.mxu0 %v6726
        %6886 = vmatpush.msra.mxu0 %v6725
        %6887 = vmatpush.msra.mxu0 %v6724
        %6888 = vmatpush.msra.mxu0 %v6723
        %6889 = vmatpush.msra.mxu0 %v6722
        %6890 = vmatpush.msra.mxu0 %v6721
        %6891 = vmatpush.msra.mxu0 %v6720
        %6892 = vmatpush.msra.mxu0 %v6719
        %6893 = vmatpush.msra.mxu0 %v6718
        %6894 = vmatpush.msra.mxu0 %v6717
        %6895 = vmatpush.msra.mxu0 %v6716
        %6896 = vmatmul.f32.gmra.mxu0 %v6769
        %v6897 = vpop.f32.mrf.mxu0
        %v6898 = vadd.f32 %v6878, %v6897
        %6899 = vdwg.mxu0
        %6900 = vmatpush.msra.mxu0 %v6747
        %6901 = vmatpush.msra.mxu0 %v6746
        %6902 = vmatpush.msra.mxu0 %v6745
        %6903 = vmatpush.msra.mxu0 %v6744
        %6904 = vmatpush.msra.mxu0 %v6743
        %6905 = vmatpush.msra.mxu0 %v6742
        %6906 = vmatpush.msra.mxu0 %v6741
        %6907 = vmatpush.msra.mxu0 %v6740
        %6908 = vmatpush.msra.mxu0 %v6739
        %6909 = vmatpush.msra.mxu0 %v6738
        %6910 = vmatpush.msra.mxu0 %v6737
        %6911 = vmatpush.msra.mxu0 %v6736
        %6912 = vmatpush.msra.mxu0 %v6735
        %6913 = vmatpush.msra.mxu0 %v6734
        %6914 = vmatpush.msra.mxu0 %v6733
        %6915 = vmatpush.msra.mxu0 %v6732
        %6916 = vmatmul.f32.gmra.mxu0 %v6770
        %v6917 = vpop.f32.mrf.mxu0
        %v6918 = vadd.f32 %v6898, %v6917
        %6919 = vdwg.mxu0
        %6920 = vmatpush.msra.mxu0 %v6763
        %6921 = vmatpush.msra.mxu0 %v6762
        %6922 = vmatpush.msra.mxu0 %v6761
        %6923 = vmatpush.msra.mxu0 %v6760
        %6924 = vmatpush.msra.mxu0 %v6759
        %6925 = vmatpush.msra.mxu0 %v6758
        %6926 = vmatpush.msra.mxu0 %v6757
        %6927 = vmatpush.msra.mxu0 %v6756
        %6928 = vmatpush.msra.mxu0 %v6755
        %6929 = vmatpush.msra.mxu0 %v6754
        %6930 = vmatpush.msra.mxu0 %v6753
        %6931 = vmatpush.msra.mxu0 %v6752
        %6932 = vmatpush.msra.mxu0 %v6751
        %6933 = vmatpush.msra.mxu0 %v6750
        %6934 = vmatpush.msra.mxu0 %v6749
        %6935 = vmatpush.msra.mxu0 %v6748
        %6936 = vmatmul.f32.gmra.mxu0 %v6771
        %v6937 = vpop.f32.mrf.mxu0
        %v6938 = vadd.f32 %v6918, %v6937
        %6939 = vdwg.mxu0
        %v6940 = vadd.f32 %v6634, %v6938
        %s6941 = scalar_lea.vmem %s5, 6144
        %v6942 = vld [vmem:[%s6941] sm:$0xff]
        %v6943 = vld [vmem:[%s6941 + $0x8] sm:$0xff]
        %v6944 = vld [vmem:[%s6941 + $0x10] sm:$0xff]
        %v6945 = vld [vmem:[%s6941 + $0x18] sm:$0xff]
        %v6946 = vld [vmem:[%s6941 + $0x20] sm:$0xff]
        %v6947 = vld [vmem:[%s6941 + $0x28] sm:$0xff]
        %v6948 = vld [vmem:[%s6941 + $0x30] sm:$0xff]
        %v6949 = vld [vmem:[%s6941 + $0x38] sm:$0xff]
        %v6950 = vld [vmem:[%s6941 + $0x40] sm:$0xff]
        %v6951 = vld [vmem:[%s6941 + $0x48] sm:$0xff]
        %v6952 = vld [vmem:[%s6941 + $0x50] sm:$0xff]
        %v6953 = vld [vmem:[%s6941 + $0x58] sm:$0xff]
        %v6954 = vld [vmem:[%s6941 + $0x60] sm:$0xff]
        %v6955 = vld [vmem:[%s6941 + $0x68] sm:$0xff]
        %v6956 = vld [vmem:[%s6941 + $0x70] sm:$0xff]
        %v6957 = vld [vmem:[%s6941 + $0x78] sm:$0xff]
        %v6958 = vld [vmem:[%s6941 + $0x80] sm:$0xff]
        %v6959 = vld [vmem:[%s6941 + $0x88] sm:$0xff]
        %v6960 = vld [vmem:[%s6941 + $0x90] sm:$0xff]
        %v6961 = vld [vmem:[%s6941 + $0x98] sm:$0xff]
        %v6962 = vld [vmem:[%s6941 + $0xa0] sm:$0xff]
        %v6963 = vld [vmem:[%s6941 + $0xa8] sm:$0xff]
        %v6964 = vld [vmem:[%s6941 + $0xb0] sm:$0xff]
        %v6965 = vld [vmem:[%s6941 + $0xb8] sm:$0xff]
        %v6966 = vld [vmem:[%s6941 + $0xc0] sm:$0xff]
        %v6967 = vld [vmem:[%s6941 + $0xc8] sm:$0xff]
        %v6968 = vld [vmem:[%s6941 + $0xd0] sm:$0xff]
        %v6969 = vld [vmem:[%s6941 + $0xd8] sm:$0xff]
        %v6970 = vld [vmem:[%s6941 + $0xe0] sm:$0xff]
        %v6971 = vld [vmem:[%s6941 + $0xe8] sm:$0xff]
        %v6972 = vld [vmem:[%s6941 + $0xf0] sm:$0xff]
        %v6973 = vld [vmem:[%s6941 + $0xf8] sm:$0xff]
        %v6974 = vld [vmem:[%s6941 + $0x100] sm:$0xff]
        %v6975 = vld [vmem:[%s6941 + $0x108] sm:$0xff]
        %v6976 = vld [vmem:[%s6941 + $0x110] sm:$0xff]
        %v6977 = vld [vmem:[%s6941 + $0x118] sm:$0xff]
        %v6978 = vld [vmem:[%s6941 + $0x120] sm:$0xff]
        %v6979 = vld [vmem:[%s6941 + $0x128] sm:$0xff]
        %v6980 = vld [vmem:[%s6941 + $0x130] sm:$0xff]
        %v6981 = vld [vmem:[%s6941 + $0x138] sm:$0xff]
        %v6982 = vld [vmem:[%s6941 + $0x140] sm:$0xff]
        %v6983 = vld [vmem:[%s6941 + $0x148] sm:$0xff]
        %v6984 = vld [vmem:[%s6941 + $0x150] sm:$0xff]
        %v6985 = vld [vmem:[%s6941 + $0x158] sm:$0xff]
        %v6986 = vld [vmem:[%s6941 + $0x160] sm:$0xff]
        %v6987 = vld [vmem:[%s6941 + $0x168] sm:$0xff]
        %v6988 = vld [vmem:[%s6941 + $0x170] sm:$0xff]
        %v6989 = vld [vmem:[%s6941 + $0x178] sm:$0xff]
        %v6990 = vld [vmem:[%s6941 + $0x180] sm:$0xff]
        %v6991 = vld [vmem:[%s6941 + $0x188] sm:$0xff]
        %v6992 = vld [vmem:[%s6941 + $0x190] sm:$0xff]
        %v6993 = vld [vmem:[%s6941 + $0x198] sm:$0xff]
        %v6994 = vld [vmem:[%s6941 + $0x1a0] sm:$0xff]
        %v6995 = vld [vmem:[%s6941 + $0x1a8] sm:$0xff]
        %v6996 = vld [vmem:[%s6941 + $0x1b0] sm:$0xff]
        %v6997 = vld [vmem:[%s6941 + $0x1b8] sm:$0xff]
        %v6998 = vld [vmem:[%s6941 + $0x1c0] sm:$0xff]
        %v6999 = vld [vmem:[%s6941 + $0x1c8] sm:$0xff]
        %v7000 = vld [vmem:[%s6941 + $0x1d0] sm:$0xff]
        %v7001 = vld [vmem:[%s6941 + $0x1d8] sm:$0xff]
        %v7002 = vld [vmem:[%s6941 + $0x1e0] sm:$0xff]
        %v7003 = vld [vmem:[%s6941 + $0x1e8] sm:$0xff]
        %v7004 = vld [vmem:[%s6941 + $0x1f0] sm:$0xff]
        %v7005 = vld [vmem:[%s6941 + $0x1f8] sm:$0xff]
        %v7006 = vld [vmem:[%s6941 + $0x200] sm:$0xff]
        %v7007 = vld [vmem:[%s6941 + $0x208] sm:$0xff]
        %v7008 = vld [vmem:[%s6941 + $0x210] sm:$0xff]
        %v7009 = vld [vmem:[%s6941 + $0x218] sm:$0xff]
        %v7010 = vld [vmem:[%s6941 + $0x220] sm:$0xff]
        %v7011 = vld [vmem:[%s6941 + $0x228] sm:$0xff]
        %v7012 = vld [vmem:[%s6941 + $0x230] sm:$0xff]
        %v7013 = vld [vmem:[%s6941 + $0x238] sm:$0xff]
        %v7014 = vld [vmem:[%s6941 + $0x240] sm:$0xff]
        %v7015 = vld [vmem:[%s6941 + $0x248] sm:$0xff]
        %v7016 = vld [vmem:[%s6941 + $0x250] sm:$0xff]
        %v7017 = vld [vmem:[%s6941 + $0x258] sm:$0xff]
        %v7018 = vld [vmem:[%s6941 + $0x260] sm:$0xff]
        %v7019 = vld [vmem:[%s6941 + $0x268] sm:$0xff]
        %v7020 = vld [vmem:[%s6941 + $0x270] sm:$0xff]
        %v7021 = vld [vmem:[%s6941 + $0x278] sm:$0xff]
        %v7022 = vld [vmem:[%s6941 + $0x280] sm:$0xff]
        %v7023 = vld [vmem:[%s6941 + $0x288] sm:$0xff]
        %v7024 = vld [vmem:[%s6941 + $0x290] sm:$0xff]
        %v7025 = vld [vmem:[%s6941 + $0x298] sm:$0xff]
        %v7026 = vld [vmem:[%s6941 + $0x2a0] sm:$0xff]
        %v7027 = vld [vmem:[%s6941 + $0x2a8] sm:$0xff]
        %v7028 = vld [vmem:[%s6941 + $0x2b0] sm:$0xff]
        %v7029 = vld [vmem:[%s6941 + $0x2b8] sm:$0xff]
        %v7030 = vld [vmem:[%s6941 + $0x2c0] sm:$0xff]
        %v7031 = vld [vmem:[%s6941 + $0x2c8] sm:$0xff]
        %v7032 = vld [vmem:[%s6941 + $0x2d0] sm:$0xff]
        %v7033 = vld [vmem:[%s6941 + $0x2d8] sm:$0xff]
        %v7034 = vld [vmem:[%s6941 + $0x2e0] sm:$0xff]
        %v7035 = vld [vmem:[%s6941 + $0x2e8] sm:$0xff]
        %v7036 = vld [vmem:[%s6941 + $0x2f0] sm:$0xff]
        %v7037 = vld [vmem:[%s6941 + $0x2f8] sm:$0xff]
        %v7038 = vld [vmem:[%s6941 + $0x300] sm:$0xff]
        %v7039 = vld [vmem:[%s6941 + $0x308] sm:$0xff]
        %v7040 = vld [vmem:[%s6941 + $0x310] sm:$0xff]
        %v7041 = vld [vmem:[%s6941 + $0x318] sm:$0xff]
        %v7042 = vld [vmem:[%s6941 + $0x320] sm:$0xff]
        %v7043 = vld [vmem:[%s6941 + $0x328] sm:$0xff]
        %v7044 = vld [vmem:[%s6941 + $0x330] sm:$0xff]
        %v7045 = vld [vmem:[%s6941 + $0x338] sm:$0xff]
        %v7046 = vld [vmem:[%s6941 + $0x340] sm:$0xff]
        %v7047 = vld [vmem:[%s6941 + $0x348] sm:$0xff]
        %v7048 = vld [vmem:[%s6941 + $0x350] sm:$0xff]
        %v7049 = vld [vmem:[%s6941 + $0x358] sm:$0xff]
        %v7050 = vld [vmem:[%s6941 + $0x360] sm:$0xff]
        %v7051 = vld [vmem:[%s6941 + $0x368] sm:$0xff]
        %v7052 = vld [vmem:[%s6941 + $0x370] sm:$0xff]
        %v7053 = vld [vmem:[%s6941 + $0x378] sm:$0xff]
        %v7054 = vld [vmem:[%s6941 + $0x380] sm:$0xff]
        %v7055 = vld [vmem:[%s6941 + $0x388] sm:$0xff]
        %v7056 = vld [vmem:[%s6941 + $0x390] sm:$0xff]
        %v7057 = vld [vmem:[%s6941 + $0x398] sm:$0xff]
        %v7058 = vld [vmem:[%s6941 + $0x3a0] sm:$0xff]
        %v7059 = vld [vmem:[%s6941 + $0x3a8] sm:$0xff]
        %v7060 = vld [vmem:[%s6941 + $0x3b0] sm:$0xff]
        %v7061 = vld [vmem:[%s6941 + $0x3b8] sm:$0xff]
        %v7062 = vld [vmem:[%s6941 + $0x3c0] sm:$0xff]
        %v7063 = vld [vmem:[%s6941 + $0x3c8] sm:$0xff]
        %v7064 = vld [vmem:[%s6941 + $0x3d0] sm:$0xff]
        %v7065 = vld [vmem:[%s6941 + $0x3d8] sm:$0xff]
        %v7066 = vld [vmem:[%s6941 + $0x3e0] sm:$0xff]
        %v7067 = vld [vmem:[%s6941 + $0x3e8] sm:$0xff]
        %v7068 = vld [vmem:[%s6941 + $0x3f0] sm:$0xff]
        %v7069 = vld [vmem:[%s6941 + $0x3f8] sm:$0xff]
        %v7070 = vrot.slane %v5105, 6
        %v7071 = vrot.slane %v5106, 6
        %v7072 = vrot.slane %v5107, 6
        %v7073 = vrot.slane %v5108, 6
        %v7074 = vrot.slane %v5109, 6
        %v7075 = vrot.slane %v5110, 6
        %v7076 = vrot.slane %v5111, 6
        %v7077 = vrot.slane %v5112, 6
        %7086 = vmatpush.msra.mxu0 %v6957
        %7087 = vmatpush.msra.mxu0 %v6956
        %7088 = vmatpush.msra.mxu0 %v6955
        %7089 = vmatpush.msra.mxu0 %v6954
        %7090 = vmatpush.msra.mxu0 %v6953
        %7091 = vmatpush.msra.mxu0 %v6952
        %7092 = vmatpush.msra.mxu0 %v6951
        %7093 = vmatpush.msra.mxu0 %v6950
        %7094 = vmatpush.msra.mxu0 %v6949
        %7095 = vmatpush.msra.mxu0 %v6948
        %7096 = vmatpush.msra.mxu0 %v6947
        %7097 = vmatpush.msra.mxu0 %v6946
        %7098 = vmatpush.msra.mxu0 %v6945
        %7099 = vmatpush.msra.mxu0 %v6944
        %7100 = vmatpush.msra.mxu0 %v6943
        %7101 = vmatpush.msra.mxu0 %v6942
        %7102 = vmatmul.f32.gmra.mxu0 %v7070
        %v7103 = vpop.f32.mrf.mxu0
        %v7104 = vadd.f32 0.0, %v7103
        %7105 = vdwg.mxu0
        %7106 = vmatpush.msra.mxu0 %v6973
        %7107 = vmatpush.msra.mxu0 %v6972
        %7108 = vmatpush.msra.mxu0 %v6971
        %7109 = vmatpush.msra.mxu0 %v6970
        %7110 = vmatpush.msra.mxu0 %v6969
        %7111 = vmatpush.msra.mxu0 %v6968
        %7112 = vmatpush.msra.mxu0 %v6967
        %7113 = vmatpush.msra.mxu0 %v6966
        %7114 = vmatpush.msra.mxu0 %v6965
        %7115 = vmatpush.msra.mxu0 %v6964
        %7116 = vmatpush.msra.mxu0 %v6963
        %7117 = vmatpush.msra.mxu0 %v6962
        %7118 = vmatpush.msra.mxu0 %v6961
        %7119 = vmatpush.msra.mxu0 %v6960
        %7120 = vmatpush.msra.mxu0 %v6959
        %7121 = vmatpush.msra.mxu0 %v6958
        %7122 = vmatmul.f32.gmra.mxu0 %v7071
        %v7123 = vpop.f32.mrf.mxu0
        %v7124 = vadd.f32 %v7104, %v7123
        %7125 = vdwg.mxu0
        %7126 = vmatpush.msra.mxu0 %v6989
        %7127 = vmatpush.msra.mxu0 %v6988
        %7128 = vmatpush.msra.mxu0 %v6987
        %7129 = vmatpush.msra.mxu0 %v6986
        %7130 = vmatpush.msra.mxu0 %v6985
        %7131 = vmatpush.msra.mxu0 %v6984
        %7132 = vmatpush.msra.mxu0 %v6983
        %7133 = vmatpush.msra.mxu0 %v6982
        %7134 = vmatpush.msra.mxu0 %v6981
        %7135 = vmatpush.msra.mxu0 %v6980
        %7136 = vmatpush.msra.mxu0 %v6979
        %7137 = vmatpush.msra.mxu0 %v6978
        %7138 = vmatpush.msra.mxu0 %v6977
        %7139 = vmatpush.msra.mxu0 %v6976
        %7140 = vmatpush.msra.mxu0 %v6975
        %7141 = vmatpush.msra.mxu0 %v6974
        %7142 = vmatmul.f32.gmra.mxu0 %v7072
        %v7143 = vpop.f32.mrf.mxu0
        %v7144 = vadd.f32 %v7124, %v7143
        %7145 = vdwg.mxu0
        %7146 = vmatpush.msra.mxu0 %v7005
        %7147 = vmatpush.msra.mxu0 %v7004
        %7148 = vmatpush.msra.mxu0 %v7003
        %7149 = vmatpush.msra.mxu0 %v7002
        %7150 = vmatpush.msra.mxu0 %v7001
        %7151 = vmatpush.msra.mxu0 %v7000
        %7152 = vmatpush.msra.mxu0 %v6999
        %7153 = vmatpush.msra.mxu0 %v6998
        %7154 = vmatpush.msra.mxu0 %v6997
        %7155 = vmatpush.msra.mxu0 %v6996
        %7156 = vmatpush.msra.mxu0 %v6995
        %7157 = vmatpush.msra.mxu0 %v6994
        %7158 = vmatpush.msra.mxu0 %v6993
        %7159 = vmatpush.msra.mxu0 %v6992
        %7160 = vmatpush.msra.mxu0 %v6991
        %7161 = vmatpush.msra.mxu0 %v6990
        %7162 = vmatmul.f32.gmra.mxu0 %v7073
        %v7163 = vpop.f32.mrf.mxu0
        %v7164 = vadd.f32 %v7144, %v7163
        %7165 = vdwg.mxu0
        %7166 = vmatpush.msra.mxu0 %v7021
        %7167 = vmatpush.msra.mxu0 %v7020
        %7168 = vmatpush.msra.mxu0 %v7019
        %7169 = vmatpush.msra.mxu0 %v7018
        %7170 = vmatpush.msra.mxu0 %v7017
        %7171 = vmatpush.msra.mxu0 %v7016
        %7172 = vmatpush.msra.mxu0 %v7015
        %7173 = vmatpush.msra.mxu0 %v7014
        %7174 = vmatpush.msra.mxu0 %v7013
        %7175 = vmatpush.msra.mxu0 %v7012
        %7176 = vmatpush.msra.mxu0 %v7011
        %7177 = vmatpush.msra.mxu0 %v7010
        %7178 = vmatpush.msra.mxu0 %v7009
        %7179 = vmatpush.msra.mxu0 %v7008
        %7180 = vmatpush.msra.mxu0 %v7007
        %7181 = vmatpush.msra.mxu0 %v7006
        %7182 = vmatmul.f32.gmra.mxu0 %v7074
        %v7183 = vpop.f32.mrf.mxu0
        %v7184 = vadd.f32 %v7164, %v7183
        %7185 = vdwg.mxu0
        %7186 = vmatpush.msra.mxu0 %v7037
        %7187 = vmatpush.msra.mxu0 %v7036
        %7188 = vmatpush.msra.mxu0 %v7035
        %7189 = vmatpush.msra.mxu0 %v7034
        %7190 = vmatpush.msra.mxu0 %v7033
        %7191 = vmatpush.msra.mxu0 %v7032
        %7192 = vmatpush.msra.mxu0 %v7031
        %7193 = vmatpush.msra.mxu0 %v7030
        %7194 = vmatpush.msra.mxu0 %v7029
        %7195 = vmatpush.msra.mxu0 %v7028
        %7196 = vmatpush.msra.mxu0 %v7027
        %7197 = vmatpush.msra.mxu0 %v7026
        %7198 = vmatpush.msra.mxu0 %v7025
        %7199 = vmatpush.msra.mxu0 %v7024
        %7200 = vmatpush.msra.mxu0 %v7023
        %7201 = vmatpush.msra.mxu0 %v7022
        %7202 = vmatmul.f32.gmra.mxu0 %v7075
        %v7203 = vpop.f32.mrf.mxu0
        %v7204 = vadd.f32 %v7184, %v7203
        %7205 = vdwg.mxu0
        %7206 = vmatpush.msra.mxu0 %v7053
        %7207 = vmatpush.msra.mxu0 %v7052
        %7208 = vmatpush.msra.mxu0 %v7051
        %7209 = vmatpush.msra.mxu0 %v7050
        %7210 = vmatpush.msra.mxu0 %v7049
        %7211 = vmatpush.msra.mxu0 %v7048
        %7212 = vmatpush.msra.mxu0 %v7047
        %7213 = vmatpush.msra.mxu0 %v7046
        %7214 = vmatpush.msra.mxu0 %v7045
        %7215 = vmatpush.msra.mxu0 %v7044
        %7216 = vmatpush.msra.mxu0 %v7043
        %7217 = vmatpush.msra.mxu0 %v7042
        %7218 = vmatpush.msra.mxu0 %v7041
        %7219 = vmatpush.msra.mxu0 %v7040
        %7220 = vmatpush.msra.mxu0 %v7039
        %7221 = vmatpush.msra.mxu0 %v7038
        %7222 = vmatmul.f32.gmra.mxu0 %v7076
        %v7223 = vpop.f32.mrf.mxu0
        %v7224 = vadd.f32 %v7204, %v7223
        %7225 = vdwg.mxu0
        %7226 = vmatpush.msra.mxu0 %v7069
        %7227 = vmatpush.msra.mxu0 %v7068
        %7228 = vmatpush.msra.mxu0 %v7067
        %7229 = vmatpush.msra.mxu0 %v7066
        %7230 = vmatpush.msra.mxu0 %v7065
        %7231 = vmatpush.msra.mxu0 %v7064
        %7232 = vmatpush.msra.mxu0 %v7063
        %7233 = vmatpush.msra.mxu0 %v7062
        %7234 = vmatpush.msra.mxu0 %v7061
        %7235 = vmatpush.msra.mxu0 %v7060
        %7236 = vmatpush.msra.mxu0 %v7059
        %7237 = vmatpush.msra.mxu0 %v7058
        %7238 = vmatpush.msra.mxu0 %v7057
        %7239 = vmatpush.msra.mxu0 %v7056
        %7240 = vmatpush.msra.mxu0 %v7055
        %7241 = vmatpush.msra.mxu0 %v7054
        %7242 = vmatmul.f32.gmra.mxu0 %v7077
        %v7243 = vpop.f32.mrf.mxu0
        %v7244 = vadd.f32 %v7224, %v7243
        %7245 = vdwg.mxu0
        %v7246 = vadd.f32 %v6940, %v7244
        %s7247 = scalar_lea.vmem %s5, 7168
        %v7248 = vld [vmem:[%s7247] sm:$0xff]
        %v7249 = vld [vmem:[%s7247 + $0x8] sm:$0xff]
        %v7250 = vld [vmem:[%s7247 + $0x10] sm:$0xff]
        %v7251 = vld [vmem:[%s7247 + $0x18] sm:$0xff]
        %v7252 = vld [vmem:[%s7247 + $0x20] sm:$0xff]
        %v7253 = vld [vmem:[%s7247 + $0x28] sm:$0xff]
        %v7254 = vld [vmem:[%s7247 + $0x30] sm:$0xff]
        %v7255 = vld [vmem:[%s7247 + $0x38] sm:$0xff]
        %v7256 = vld [vmem:[%s7247 + $0x40] sm:$0xff]
        %v7257 = vld [vmem:[%s7247 + $0x48] sm:$0xff]
        %v7258 = vld [vmem:[%s7247 + $0x50] sm:$0xff]
        %v7259 = vld [vmem:[%s7247 + $0x58] sm:$0xff]
        %v7260 = vld [vmem:[%s7247 + $0x60] sm:$0xff]
        %v7261 = vld [vmem:[%s7247 + $0x68] sm:$0xff]
        %v7262 = vld [vmem:[%s7247 + $0x70] sm:$0xff]
        %v7263 = vld [vmem:[%s7247 + $0x78] sm:$0xff]
        %v7264 = vld [vmem:[%s7247 + $0x80] sm:$0xff]
        %v7265 = vld [vmem:[%s7247 + $0x88] sm:$0xff]
        %v7266 = vld [vmem:[%s7247 + $0x90] sm:$0xff]
        %v7267 = vld [vmem:[%s7247 + $0x98] sm:$0xff]
        %v7268 = vld [vmem:[%s7247 + $0xa0] sm:$0xff]
        %v7269 = vld [vmem:[%s7247 + $0xa8] sm:$0xff]
        %v7270 = vld [vmem:[%s7247 + $0xb0] sm:$0xff]
        %v7271 = vld [vmem:[%s7247 + $0xb8] sm:$0xff]
        %v7272 = vld [vmem:[%s7247 + $0xc0] sm:$0xff]
        %v7273 = vld [vmem:[%s7247 + $0xc8] sm:$0xff]
        %v7274 = vld [vmem:[%s7247 + $0xd0] sm:$0xff]
        %v7275 = vld [vmem:[%s7247 + $0xd8] sm:$0xff]
        %v7276 = vld [vmem:[%s7247 + $0xe0] sm:$0xff]
        %v7277 = vld [vmem:[%s7247 + $0xe8] sm:$0xff]
        %v7278 = vld [vmem:[%s7247 + $0xf0] sm:$0xff]
        %v7279 = vld [vmem:[%s7247 + $0xf8] sm:$0xff]
        %v7280 = vld [vmem:[%s7247 + $0x100] sm:$0xff]
        %v7281 = vld [vmem:[%s7247 + $0x108] sm:$0xff]
        %v7282 = vld [vmem:[%s7247 + $0x110] sm:$0xff]
        %v7283 = vld [vmem:[%s7247 + $0x118] sm:$0xff]
        %v7284 = vld [vmem:[%s7247 + $0x120] sm:$0xff]
        %v7285 = vld [vmem:[%s7247 + $0x128] sm:$0xff]
        %v7286 = vld [vmem:[%s7247 + $0x130] sm:$0xff]
        %v7287 = vld [vmem:[%s7247 + $0x138] sm:$0xff]
        %v7288 = vld [vmem:[%s7247 + $0x140] sm:$0xff]
        %v7289 = vld [vmem:[%s7247 + $0x148] sm:$0xff]
        %v7290 = vld [vmem:[%s7247 + $0x150] sm:$0xff]
        %v7291 = vld [vmem:[%s7247 + $0x158] sm:$0xff]
        %v7292 = vld [vmem:[%s7247 + $0x160] sm:$0xff]
        %v7293 = vld [vmem:[%s7247 + $0x168] sm:$0xff]
        %v7294 = vld [vmem:[%s7247 + $0x170] sm:$0xff]
        %v7295 = vld [vmem:[%s7247 + $0x178] sm:$0xff]
        %v7296 = vld [vmem:[%s7247 + $0x180] sm:$0xff]
        %v7297 = vld [vmem:[%s7247 + $0x188] sm:$0xff]
        %v7298 = vld [vmem:[%s7247 + $0x190] sm:$0xff]
        %v7299 = vld [vmem:[%s7247 + $0x198] sm:$0xff]
        %v7300 = vld [vmem:[%s7247 + $0x1a0] sm:$0xff]
        %v7301 = vld [vmem:[%s7247 + $0x1a8] sm:$0xff]
        %v7302 = vld [vmem:[%s7247 + $0x1b0] sm:$0xff]
        %v7303 = vld [vmem:[%s7247 + $0x1b8] sm:$0xff]
        %v7304 = vld [vmem:[%s7247 + $0x1c0] sm:$0xff]
        %v7305 = vld [vmem:[%s7247 + $0x1c8] sm:$0xff]
        %v7306 = vld [vmem:[%s7247 + $0x1d0] sm:$0xff]
        %v7307 = vld [vmem:[%s7247 + $0x1d8] sm:$0xff]
        %v7308 = vld [vmem:[%s7247 + $0x1e0] sm:$0xff]
        %v7309 = vld [vmem:[%s7247 + $0x1e8] sm:$0xff]
        %v7310 = vld [vmem:[%s7247 + $0x1f0] sm:$0xff]
        %v7311 = vld [vmem:[%s7247 + $0x1f8] sm:$0xff]
        %v7312 = vld [vmem:[%s7247 + $0x200] sm:$0xff]
        %v7313 = vld [vmem:[%s7247 + $0x208] sm:$0xff]
        %v7314 = vld [vmem:[%s7247 + $0x210] sm:$0xff]
        %v7315 = vld [vmem:[%s7247 + $0x218] sm:$0xff]
        %v7316 = vld [vmem:[%s7247 + $0x220] sm:$0xff]
        %v7317 = vld [vmem:[%s7247 + $0x228] sm:$0xff]
        %v7318 = vld [vmem:[%s7247 + $0x230] sm:$0xff]
        %v7319 = vld [vmem:[%s7247 + $0x238] sm:$0xff]
        %v7320 = vld [vmem:[%s7247 + $0x240] sm:$0xff]
        %v7321 = vld [vmem:[%s7247 + $0x248] sm:$0xff]
        %v7322 = vld [vmem:[%s7247 + $0x250] sm:$0xff]
        %v7323 = vld [vmem:[%s7247 + $0x258] sm:$0xff]
        %v7324 = vld [vmem:[%s7247 + $0x260] sm:$0xff]
        %v7325 = vld [vmem:[%s7247 + $0x268] sm:$0xff]
        %v7326 = vld [vmem:[%s7247 + $0x270] sm:$0xff]
        %v7327 = vld [vmem:[%s7247 + $0x278] sm:$0xff]
        %v7328 = vld [vmem:[%s7247 + $0x280] sm:$0xff]
        %v7329 = vld [vmem:[%s7247 + $0x288] sm:$0xff]
        %v7330 = vld [vmem:[%s7247 + $0x290] sm:$0xff]
        %v7331 = vld [vmem:[%s7247 + $0x298] sm:$0xff]
        %v7332 = vld [vmem:[%s7247 + $0x2a0] sm:$0xff]
        %v7333 = vld [vmem:[%s7247 + $0x2a8] sm:$0xff]
        %v7334 = vld [vmem:[%s7247 + $0x2b0] sm:$0xff]
        %v7335 = vld [vmem:[%s7247 + $0x2b8] sm:$0xff]
        %v7336 = vld [vmem:[%s7247 + $0x2c0] sm:$0xff]
        %v7337 = vld [vmem:[%s7247 + $0x2c8] sm:$0xff]
        %v7338 = vld [vmem:[%s7247 + $0x2d0] sm:$0xff]
        %v7339 = vld [vmem:[%s7247 + $0x2d8] sm:$0xff]
        %v7340 = vld [vmem:[%s7247 + $0x2e0] sm:$0xff]
        %v7341 = vld [vmem:[%s7247 + $0x2e8] sm:$0xff]
        %v7342 = vld [vmem:[%s7247 + $0x2f0] sm:$0xff]
        %v7343 = vld [vmem:[%s7247 + $0x2f8] sm:$0xff]
        %v7344 = vld [vmem:[%s7247 + $0x300] sm:$0xff]
        %v7345 = vld [vmem:[%s7247 + $0x308] sm:$0xff]
        %v7346 = vld [vmem:[%s7247 + $0x310] sm:$0xff]
        %v7347 = vld [vmem:[%s7247 + $0x318] sm:$0xff]
        %v7348 = vld [vmem:[%s7247 + $0x320] sm:$0xff]
        %v7349 = vld [vmem:[%s7247 + $0x328] sm:$0xff]
        %v7350 = vld [vmem:[%s7247 + $0x330] sm:$0xff]
        %v7351 = vld [vmem:[%s7247 + $0x338] sm:$0xff]
        %v7352 = vld [vmem:[%s7247 + $0x340] sm:$0xff]
        %v7353 = vld [vmem:[%s7247 + $0x348] sm:$0xff]
        %v7354 = vld [vmem:[%s7247 + $0x350] sm:$0xff]
        %v7355 = vld [vmem:[%s7247 + $0x358] sm:$0xff]
        %v7356 = vld [vmem:[%s7247 + $0x360] sm:$0xff]
        %v7357 = vld [vmem:[%s7247 + $0x368] sm:$0xff]
        %v7358 = vld [vmem:[%s7247 + $0x370] sm:$0xff]
        %v7359 = vld [vmem:[%s7247 + $0x378] sm:$0xff]
        %v7360 = vld [vmem:[%s7247 + $0x380] sm:$0xff]
        %v7361 = vld [vmem:[%s7247 + $0x388] sm:$0xff]
        %v7362 = vld [vmem:[%s7247 + $0x390] sm:$0xff]
        %v7363 = vld [vmem:[%s7247 + $0x398] sm:$0xff]
        %v7364 = vld [vmem:[%s7247 + $0x3a0] sm:$0xff]
        %v7365 = vld [vmem:[%s7247 + $0x3a8] sm:$0xff]
        %v7366 = vld [vmem:[%s7247 + $0x3b0] sm:$0xff]
        %v7367 = vld [vmem:[%s7247 + $0x3b8] sm:$0xff]
        %v7368 = vld [vmem:[%s7247 + $0x3c0] sm:$0xff]
        %v7369 = vld [vmem:[%s7247 + $0x3c8] sm:$0xff]
        %v7370 = vld [vmem:[%s7247 + $0x3d0] sm:$0xff]
        %v7371 = vld [vmem:[%s7247 + $0x3d8] sm:$0xff]
        %v7372 = vld [vmem:[%s7247 + $0x3e0] sm:$0xff]
        %v7373 = vld [vmem:[%s7247 + $0x3e8] sm:$0xff]
        %v7374 = vld [vmem:[%s7247 + $0x3f0] sm:$0xff]
        %v7375 = vld [vmem:[%s7247 + $0x3f8] sm:$0xff]
        %v7376 = vrot.slane %v5105, 7
        %v7377 = vrot.slane %v5106, 7
        %v7378 = vrot.slane %v5107, 7
        %v7379 = vrot.slane %v5108, 7
        %v7380 = vrot.slane %v5109, 7
        %v7381 = vrot.slane %v5110, 7
        %v7382 = vrot.slane %v5111, 7
        %v7383 = vrot.slane %v5112, 7
        %7392 = vmatpush.msra.mxu0 %v7263
        %7393 = vmatpush.msra.mxu0 %v7262
        %7394 = vmatpush.msra.mxu0 %v7261
        %7395 = vmatpush.msra.mxu0 %v7260
        %7396 = vmatpush.msra.mxu0 %v7259
        %7397 = vmatpush.msra.mxu0 %v7258
        %7398 = vmatpush.msra.mxu0 %v7257
        %7399 = vmatpush.msra.mxu0 %v7256
        %7400 = vmatpush.msra.mxu0 %v7255
        %7401 = vmatpush.msra.mxu0 %v7254
        %7402 = vmatpush.msra.mxu0 %v7253
        %7403 = vmatpush.msra.mxu0 %v7252
        %7404 = vmatpush.msra.mxu0 %v7251
        %7405 = vmatpush.msra.mxu0 %v7250
        %7406 = vmatpush.msra.mxu0 %v7249
        %7407 = vmatpush.msra.mxu0 %v7248
        %7408 = vmatmul.f32.gmra.mxu0 %v7376
        %v7409 = vpop.f32.mrf.mxu0
        %v7410 = vadd.f32 0.0, %v7409
        %7411 = vdwg.mxu0
        %7412 = vmatpush.msra.mxu0 %v7279
        %7413 = vmatpush.msra.mxu0 %v7278
        %7414 = vmatpush.msra.mxu0 %v7277
        %7415 = vmatpush.msra.mxu0 %v7276
        %7416 = vmatpush.msra.mxu0 %v7275
        %7417 = vmatpush.msra.mxu0 %v7274
        %7418 = vmatpush.msra.mxu0 %v7273
        %7419 = vmatpush.msra.mxu0 %v7272
        %7420 = vmatpush.msra.mxu0 %v7271
        %7421 = vmatpush.msra.mxu0 %v7270
        %7422 = vmatpush.msra.mxu0 %v7269
        %7423 = vmatpush.msra.mxu0 %v7268
        %7424 = vmatpush.msra.mxu0 %v7267
        %7425 = vmatpush.msra.mxu0 %v7266
        %7426 = vmatpush.msra.mxu0 %v7265
        %7427 = vmatpush.msra.mxu0 %v7264
        %7428 = vmatmul.f32.gmra.mxu0 %v7377
        %v7429 = vpop.f32.mrf.mxu0
        %v7430 = vadd.f32 %v7410, %v7429
        %7431 = vdwg.mxu0
        %7432 = vmatpush.msra.mxu0 %v7295
        %7433 = vmatpush.msra.mxu0 %v7294
        %7434 = vmatpush.msra.mxu0 %v7293
        %7435 = vmatpush.msra.mxu0 %v7292
        %7436 = vmatpush.msra.mxu0 %v7291
        %7437 = vmatpush.msra.mxu0 %v7290
        %7438 = vmatpush.msra.mxu0 %v7289
        %7439 = vmatpush.msra.mxu0 %v7288
        %7440 = vmatpush.msra.mxu0 %v7287
        %7441 = vmatpush.msra.mxu0 %v7286
        %7442 = vmatpush.msra.mxu0 %v7285
        %7443 = vmatpush.msra.mxu0 %v7284
        %7444 = vmatpush.msra.mxu0 %v7283
        %7445 = vmatpush.msra.mxu0 %v7282
        %7446 = vmatpush.msra.mxu0 %v7281
        %7447 = vmatpush.msra.mxu0 %v7280
        %7448 = vmatmul.f32.gmra.mxu0 %v7378
        %v7449 = vpop.f32.mrf.mxu0
        %v7450 = vadd.f32 %v7430, %v7449
        %7451 = vdwg.mxu0
        %7452 = vmatpush.msra.mxu0 %v7311
        %7453 = vmatpush.msra.mxu0 %v7310
        %7454 = vmatpush.msra.mxu0 %v7309
        %7455 = vmatpush.msra.mxu0 %v7308
        %7456 = vmatpush.msra.mxu0 %v7307
        %7457 = vmatpush.msra.mxu0 %v7306
        %7458 = vmatpush.msra.mxu0 %v7305
        %7459 = vmatpush.msra.mxu0 %v7304
        %7460 = vmatpush.msra.mxu0 %v7303
        %7461 = vmatpush.msra.mxu0 %v7302
        %7462 = vmatpush.msra.mxu0 %v7301
        %7463 = vmatpush.msra.mxu0 %v7300
        %7464 = vmatpush.msra.mxu0 %v7299
        %7465 = vmatpush.msra.mxu0 %v7298
        %7466 = vmatpush.msra.mxu0 %v7297
        %7467 = vmatpush.msra.mxu0 %v7296
        %7468 = vmatmul.f32.gmra.mxu0 %v7379
        %v7469 = vpop.f32.mrf.mxu0
        %v7470 = vadd.f32 %v7450, %v7469
        %7471 = vdwg.mxu0
        %7472 = vmatpush.msra.mxu0 %v7327
        %7473 = vmatpush.msra.mxu0 %v7326
        %7474 = vmatpush.msra.mxu0 %v7325
        %7475 = vmatpush.msra.mxu0 %v7324
        %7476 = vmatpush.msra.mxu0 %v7323
        %7477 = vmatpush.msra.mxu0 %v7322
        %7478 = vmatpush.msra.mxu0 %v7321
        %7479 = vmatpush.msra.mxu0 %v7320
        %7480 = vmatpush.msra.mxu0 %v7319
        %7481 = vmatpush.msra.mxu0 %v7318
        %7482 = vmatpush.msra.mxu0 %v7317
        %7483 = vmatpush.msra.mxu0 %v7316
        %7484 = vmatpush.msra.mxu0 %v7315
        %7485 = vmatpush.msra.mxu0 %v7314
        %7486 = vmatpush.msra.mxu0 %v7313
        %7487 = vmatpush.msra.mxu0 %v7312
        %7488 = vmatmul.f32.gmra.mxu0 %v7380
        %v7489 = vpop.f32.mrf.mxu0
        %v7490 = vadd.f32 %v7470, %v7489
        %7491 = vdwg.mxu0
        %7492 = vmatpush.msra.mxu0 %v7343
        %7493 = vmatpush.msra.mxu0 %v7342
        %7494 = vmatpush.msra.mxu0 %v7341
        %7495 = vmatpush.msra.mxu0 %v7340
        %7496 = vmatpush.msra.mxu0 %v7339
        %7497 = vmatpush.msra.mxu0 %v7338
        %7498 = vmatpush.msra.mxu0 %v7337
        %7499 = vmatpush.msra.mxu0 %v7336
        %7500 = vmatpush.msra.mxu0 %v7335
        %7501 = vmatpush.msra.mxu0 %v7334
        %7502 = vmatpush.msra.mxu0 %v7333
        %7503 = vmatpush.msra.mxu0 %v7332
        %7504 = vmatpush.msra.mxu0 %v7331
        %7505 = vmatpush.msra.mxu0 %v7330
        %7506 = vmatpush.msra.mxu0 %v7329
        %7507 = vmatpush.msra.mxu0 %v7328
        %7508 = vmatmul.f32.gmra.mxu0 %v7381
        %v7509 = vpop.f32.mrf.mxu0
        %v7510 = vadd.f32 %v7490, %v7509
        %7511 = vdwg.mxu0
        %7512 = vmatpush.msra.mxu0 %v7359
        %7513 = vmatpush.msra.mxu0 %v7358
        %7514 = vmatpush.msra.mxu0 %v7357
        %7515 = vmatpush.msra.mxu0 %v7356
        %7516 = vmatpush.msra.mxu0 %v7355
        %7517 = vmatpush.msra.mxu0 %v7354
        %7518 = vmatpush.msra.mxu0 %v7353
        %7519 = vmatpush.msra.mxu0 %v7352
        %7520 = vmatpush.msra.mxu0 %v7351
        %7521 = vmatpush.msra.mxu0 %v7350
        %7522 = vmatpush.msra.mxu0 %v7349
        %7523 = vmatpush.msra.mxu0 %v7348
        %7524 = vmatpush.msra.mxu0 %v7347
        %7525 = vmatpush.msra.mxu0 %v7346
        %7526 = vmatpush.msra.mxu0 %v7345
        %7527 = vmatpush.msra.mxu0 %v7344
        %7528 = vmatmul.f32.gmra.mxu0 %v7382
        %v7529 = vpop.f32.mrf.mxu0
        %v7530 = vadd.f32 %v7510, %v7529
        %7531 = vdwg.mxu0
        %7532 = vmatpush.msra.mxu0 %v7375
        %7533 = vmatpush.msra.mxu0 %v7374
        %7534 = vmatpush.msra.mxu0 %v7373
        %7535 = vmatpush.msra.mxu0 %v7372
        %7536 = vmatpush.msra.mxu0 %v7371
        %7537 = vmatpush.msra.mxu0 %v7370
        %7538 = vmatpush.msra.mxu0 %v7369
        %7539 = vmatpush.msra.mxu0 %v7368
        %7540 = vmatpush.msra.mxu0 %v7367
        %7541 = vmatpush.msra.mxu0 %v7366
        %7542 = vmatpush.msra.mxu0 %v7365
        %7543 = vmatpush.msra.mxu0 %v7364
        %7544 = vmatpush.msra.mxu0 %v7363
        %7545 = vmatpush.msra.mxu0 %v7362
        %7546 = vmatpush.msra.mxu0 %v7361
        %7547 = vmatpush.msra.mxu0 %v7360
        %7548 = vmatmul.f32.gmra.mxu0 %v7383
        %v7549 = vpop.f32.mrf.mxu0
        %v7550 = vadd.f32 %v7530, %v7549
        %7551 = vdwg.mxu0
        %v7552 = vadd.f32 %v7246, %v7550
        %vm7553 = vcmask 122880
        %7554 = vst.msk [vmem:[%s270] sm:$0x1] %vm7553, %v7552
        %s7555 = sand.u32 %s181, 1
        %s7556 = scalar_lea.sflag [#allocation3], %s7555
        %s7557 = sand.u32 %s181, 1
        %s7558 = scalar_lea.vmem [#allocation2], %s7557
        // Predicated region
        $region49: #{poor_cnn_forward_pallas.1} parent=47 // pred_check
          %p7559 = pneg %p191
        $region50: #{poor_cnn_forward_pallas.1} parent=47 // pred_check_branch
          %7561 = sbr.rel (%p7559) target = $region52
        $region51: #{poor_cnn_forward_pallas.1} parent=47 // pred_region
          %7563 = vsyncadd %s7556, 0
          %s7564 = scalar_lea.hbm %s7, %s21
          %s7566 = sshll.u32 %s7558, 4
          %s7567 = int_to_ptr.vmem [resolvable:$true] %s7566
          %s7568 = sshll.u32 %s7564, 4
          %s7569 = int_to_ptr.hbm [resolvable:$true] %s7568
          %7571 = dma.vmem_to_hbm [thread:$0]  %s7567, 16, %s7569, %s7556
        $region52: #{poor_cnn_forward_pallas.1} parent=47 // pred_fallthru
          _
      $region48: #{poor_cnn_forward_pallas.1} parent=5 // pred_fallthru
        _
      %p7572 = scmp.le.s32.totalorder 2, %s16
      // Predicated region
      $region53: #{poor_cnn_forward_pallas.1} parent=5 // pred_check
        %p7573 = pneg %p7572
      $region54: #{poor_cnn_forward_pallas.1} parent=5 // pred_check_branch
        %7575 = sbr.rel (%p7573) target = $region56
      $region55: #{poor_cnn_forward_pallas.1} parent=5 // pred_region
        %s7576 = ssub.s32 %s16, 2
        // Predicated region
        $region57: #{poor_cnn_forward_pallas.1} parent=55 // pred_check
          %p7577 = pneg %p197
        $region58: #{poor_cnn_forward_pallas.1} parent=55 // pred_check_branch
          %7579 = sbr.rel (%p7577) target = $region60
        $region59: #{poor_cnn_forward_pallas.1} parent=55 // pred_region
          %s7580 = sand.u32 %s182, 1
          %s7581 = scalar_lea.sflag [#allocation3], %s7580
          %s7582 = sand.u32 %s182, 1
          %s7583 = scalar_lea.vmem [#allocation2], %s7582
          %7585 = dma.done %s7581, 16
        $region60: #{poor_cnn_forward_pallas.1} parent=55 // pred_fallthru
          _
      $region56: #{poor_cnn_forward_pallas.1} parent=5 // pred_fallthru
        _
    $region6: #{poor_cnn_forward_pallas.1} parent=1 // loop_footer
      %s20 = sadd.s32 1, %s16
    $region7: #{poor_cnn_forward_pallas.1} parent=1 // loop_footer_branch
      %15 = sbr.rel target = $region3
    $region8: #{poor_cnn_forward_pallas.1} parent=1 // loop_exit
      _
    %7586 = vsyncpa [#allocation3], 1
    %s7587 = scalar_lea.sflag [#allocation3], 1
    %7588 = vsyncpa %s7587, 1

</llo_original>
